<compile_context>
chip_gen: v5e
topology: v5e:2x2
jax: 0.10.0
libtpu: 0.0.40
codegen_flags: <defaults>
</compile_context>

<pallas_src>
import numpy as np
import jax
import jax.numpy as jnp
from jax import lax
from jax.experimental import pallas as pl
from jax.experimental.pallas import tpu as pltpu

# Make the pure-JAX reference matmuls exact f32 so the correctness check can be tight.
jax.config.update("jax_default_matmul_precision", "highest")


def _round_up(x, m):
    return -(-x // m) * m


# ----------------------------------------------------------------------------- #
# GRU kernel (hidden path only).                                                 #
#   gates_ref : (TB, Bp, 3Hp) precomputed x_t @ Wih + bih  (gate order r, z, n)   #
#   whh_ref   : (Hp, 3Hp) fused hidden weights, bhh_ref: (1, 3Hp)                 #
#   h0_ref    : (Bp, Hp) initial hidden, h_scr carries hidden across grid steps.  #
# Matches torch.nn.GRU:  n = tanh(i_n + r * (W_hn h + b_hn)).                     #
# ----------------------------------------------------------------------------- #
def _gru_kernel(gates_ref, h0_ref, whh_ref, bhh_ref, out_ref, h_scr):
    Hp = h0_ref.shape[-1]
    TB = out_ref.shape[0]

    @pl.when(pl.program_id(0) == 0)
    def _():
        h_scr[...] = h0_ref[...]

    whh = whh_ref[...]          # hoisted out of the time loop (resident in vregs/VMEM)
    bhh = bhh_ref[...]

    def step(i, h):
        g = gates_ref[i]                                             # (Bp, 3Hp)
        hh = jnp.dot(h, whh, preferred_element_type=jnp.float32) + bhh
        # r and z share one fused sigmoid over a lane-aligned 2Hp slice.
        rz = jax.nn.sigmoid(g[:, :2 * Hp] + hh[:, :2 * Hp])
        r = rz[:, :Hp]
        z = rz[:, Hp:]
        n = jnp.tanh(g[:, 2 * Hp:] + r * hh[:, 2 * Hp:])
        h_new = (1.0 - z) * n + z * h
        out_ref[i] = h_new
        return h_new

    # fully unrolled inner time loop (TB <= 32) -> one grid step per TB timesteps
    h_last = lax.fori_loop(0, TB, step, h_scr[...], unroll=True)
    h_scr[...] = h_last


def gru_pallas(gates_tm, h0, whh_f, bhh_f, time_block=32):
    """gates_tm: (S, Bp, 3Hp) input-path pre-activations (x@Wih + bih), h0: (Bp, Hp),
    whh_f: (Hp, 3Hp), bhh_f: (1, 3Hp).  Returns per-step hidden states (S, Bp, Hp)."""
    S, Bp, threeHp = gates_tm.shape
    Hp = threeHp // 3
    Sp = _round_up(S, 8)
    TB = Sp if Sp <= time_block else time_block
    Sp = _round_up(Sp, TB)
    if Sp != S:
        gates_tm = jnp.zeros((Sp, Bp, threeHp), gates_tm.dtype).at[:S].set(gates_tm)

    out = pl.pallas_call(
        _gru_kernel,
        out_shape=jax.ShapeDtypeStruct((Sp, Bp, Hp), jnp.float32),
        grid_spec=pltpu.PrefetchScalarGridSpec(
            num_scalar_prefetch=0,
            grid=(Sp // TB,),
            in_specs=[
                pl.BlockSpec((TB, Bp, threeHp), lambda t: (t, 0, 0)),
                pl.BlockSpec((Bp, Hp), lambda t: (0, 0)),
                pl.BlockSpec((Hp, threeHp), lambda t: (0, 0)),
                pl.BlockSpec((1, threeHp), lambda t: (0, 0)),
            ],
            out_specs=pl.BlockSpec((TB, Bp, Hp), lambda t: (t, 0, 0)),
            scratch_shapes=[pltpu.VMEM((Bp, Hp), jnp.float32)],
        ),
        compiler_params=pltpu.CompilerParams(
            dimension_semantics=("arbitrary",)),      # sequential recurrence
    )(gates_tm, h0, whh_f, bhh_f)
    return out[:S]


# ----------------------------------------------------------------------------- #
# Attention-logit kernel: grid over batch, transposed lane-padded operands.      #
#   acT = Wenc @ ctx^T   (Ap, Ep)   adT = Wdec @ dec^T   (Ap, Dp)                 #
#   logits[d, :] = v^T @ tanh(acT + adT[:, d])   -> A-reduction on the MXU        #
# followed by masked_fill(mask, -inf).                                            #
# ----------------------------------------------------------------------------- #
def _attn_kernel(ctxT_ref, decT_ref, wenc_ref, wdec_ref, v_ref, mask_ref, out_ref):
    acT = jnp.dot(wenc_ref[...], ctxT_ref[0], preferred_element_type=jnp.float32)  # (Ap, Ep)
    adT = jnp.dot(wdec_ref[...], decT_ref[0], preferred_element_type=jnp.float32)  # (Ap, Dp)
    v = v_ref[...]                                                                  # (1, Ap)
    Dp = decT_ref.shape[-1]
    rows = []
    for d in range(Dp):   # static unroll over decoder steps (live intermediate is only (Ap, Ep))
        t_ae = jnp.tanh(acT + adT[:, d:d + 1])                                      # (Ap, Ep)
        rows.append(jnp.dot(v, t_ae, preferred_element_type=jnp.float32))           # (1, Ep)
    logits = jnp.concatenate(rows, axis=0)                                          # (Dp, Ep)
    out_ref[0] = jnp.where(mask_ref[0] > 0, -jnp.inf, logits)


def attention_logits_pallas(ctxT, decT, wenc_p, wdec_p, v_row, mask_i32):
    """ctxT: (B, Hp, Ep), decT: (B, Hp, Dp), wenc_p/wdec_p: (Ap, Hp), v_row: (1, Ap),
    mask_i32: (B, Dp, Ep).  Returns masked logits (B, Dp, Ep) (lane-dense last dim)."""
    B, Hp, Ep = ctxT.shape
    Dp = decT.shape[-1]
    Ap = wenc_p.shape[0]
    return pl.pallas_call(
        _attn_kernel,
        out_shape=jax.ShapeDtypeStruct((B, Dp, Ep), jnp.float32),
        grid_spec=pltpu.PrefetchScalarGridSpec(
            num_scalar_prefetch=0,
            grid=(B,),
            in_specs=[
                pl.BlockSpec((1, Hp, Ep), lambda b: (b, 0, 0)),
                pl.BlockSpec((1, Hp, Dp), lambda b: (b, 0, 0)),
                pl.BlockSpec((Ap, Hp), lambda b: (0, 0)),
                pl.BlockSpec((Ap, Hp), lambda b: (0, 0)),
                pl.BlockSpec((1, Ap), lambda b: (0, 0)),
                pl.BlockSpec((1, Dp, Ep), lambda b: (b, 0, 0)),
            ],
            out_specs=pl.BlockSpec((1, Dp, Ep), lambda b: (b, 0, 0)),
        ),
        compiler_params=pltpu.CompilerParams(
            dimension_semantics=("parallel",)),
    )(ctxT, decT, wenc_p, wdec_p, v_row, mask_i32)


# ----------------------------------------------------------------------------- #
# Parameter construction (deterministic, mirrors PointerNetwork.__init__).       #
# ----------------------------------------------------------------------------- #
def init_params(key, input_size, hidden_size, attn_hidden_size):
    ks = jax.random.split(key, 16)
    k = 1.0 / np.sqrt(hidden_size)

    def u(kk, shape):
        return jax.random.uniform(kk, shape, jnp.float32, minval=-k, maxval=k)

    params = dict(
        # encoder GRU (gate order r, z, n); stored transposed: (3, in, H)
        enc_wih=u(ks[0], (3, input_size, hidden_size)),
        enc_whh=u(ks[1], (3, hidden_size, hidden_size)),
        enc_bih=u(ks[2], (3, 1, hidden_size)),
        enc_bhh=u(ks[3], (3, 1, hidden_size)),
        # decoder GRU
        dec_wih=u(ks[4], (3, input_size, hidden_size)),
        dec_whh=u(ks[5], (3, hidden_size, hidden_size)),
        dec_bih=u(ks[6], (3, 1, hidden_size)),
        dec_bhh=u(ks[7], (3, 1, hidden_size)),
        # pointer-net parameters
        decoder_start=jax.random.normal(ks[8], (1, 1, input_size), jnp.float32),
        decoder_stop=jax.random.normal(ks[9], (1, 1, hidden_size), jnp.float32),
        Wenc=jax.random.normal(ks[10], (attn_hidden_size, hidden_size), jnp.float32),
        Wdec=jax.random.normal(ks[11], (attn_hidden_size, hidden_size), jnp.float32),
        v=jax.random.normal(ks[12], (attn_hidden_size,), jnp.float32),
    )
    return params


def _pack_gru_params(wih, whh, bih, bhh, Hp):
    """Fuse gate weights on the last axis (r|z|n), lane-padding each gate block to Hp.
    wih: (3, I, H), whh: (3, H, H), bih/bhh: (3, 1, H).
    Returns wih_f (I, 3Hp), bih_f (1, 3Hp), whh_f (Hp, 3Hp), bhh_f (1, 3Hp)."""
    I, H = wih.shape[1], wih.shape[2]
    wih_f = jnp.zeros((I, 3 * Hp), jnp.float32)
    whh_f = jnp.zeros((Hp, 3 * Hp), jnp.float32)
    bih_f = jnp.zeros((1, 3 * Hp), jnp.float32)
    bhh_f = jnp.zeros((1, 3 * Hp), jnp.float32)
    for g in range(3):
        lo = g * Hp
        wih_f = wih_f.at[:, lo:lo + H].set(wih[g])
        whh_f = whh_f.at[:H, lo:lo + H].set(whh[g])
        bih_f = bih_f.at[:, lo:lo + H].set(bih[g])
        bhh_f = bhh_f.at[:, lo:lo + H].set(bhh[g])
    return wih_f, bih_f, whh_f, bhh_f


# ----------------------------------------------------------------------------- #
# Forward pass (glue / padding in plain JAX, hot loops in the Pallas kernels).   #
# ----------------------------------------------------------------------------- #
def pointer_network_forward(params, sequence, lengths, targets):
    """sequence: (B, S, I) f32; lengths: (B,) i32 (sorted descending, lengths[0]==S);
    targets: (B, T) i32 with -1 padding.  Returns (logits (B, T+1, S+1), mask)."""
    B, S, I = sequence.shape
    T = targets.shape[1]
    H = params["enc_whh"].shape[-1]
    A = params["v"].shape[0]
    E, D = S + 1, T + 1
    f32 = jnp.float32

    # hardware-friendly padded sizes (lanes=128, sublanes=8)
    Hp = _round_up(H, 128)
    Ap = _round_up(A, 128)
    Bp = _round_up(B, 8)
    Ep = _round_up(E, 128)
    Dp = _round_up(D, 8)

    # ---- make_inputs_mask + cumulative target masking (index/boolean glue) ----
    max_len = lengths[0]
    e_idx = jnp.arange(E, dtype=jnp.int32)[None, :]                  # (1, E)
    base = (e_idx >= lengths[:, None]) & (e_idx < max_len)           # (B, E)
    base = base.at[0].set(False)                                     # torch loop starts at b=1
    tgt_mod = jnp.mod(targets, E)                                    # -1 -> E-1 (negative indexing)
    sel = jax.nn.one_hot(tgt_mod, E, dtype=jnp.int32)                # (B, T, E)
    cum = jnp.cumsum(sel, axis=1) > 0                                # targets[s] masked for steps > s
    mask = jnp.concatenate([jnp.zeros((B, 1, E), bool), cum], axis=1) | base[:, None, :]
    mask_pad = jnp.zeros((B, Dp, Ep), jnp.int32).at[:, :D, :E].set(mask.astype(jnp.int32))

    # ---- fused + lane-padded GRU weights ----
    enc_wih, enc_bih, enc_whh, enc_bhh = _pack_gru_params(
        params["enc_wih"], params["enc_whh"], params["enc_bih"], params["enc_bhh"], Hp)
    dec_wih, dec_bih, dec_whh, dec_bhh = _pack_gru_params(
        params["dec_wih"], params["dec_whh"], params["dec_bih"], params["dec_bhh"], Hp)

    # ---- encoder GRU ----
    seq_p = jnp.zeros((Bp, S, I), f32).at[:B].set(sequence)
    x_tm = jnp.transpose(seq_p, (1, 0, 2))                           # (S, Bp, I)
    # input-path projection hoisted out of the recurrence: one (S*Bp, I)x(I, 3Hp) matmul
    enc_g = (x_tm.reshape(S * Bp, I) @ enc_wih + enc_bih).reshape(S, Bp, 3 * Hp)
    enc_out = gru_pallas(enc_g, jnp.zeros((Bp, Hp), f32), enc_whh, enc_bhh)   # (S, Bp, Hp)

    # packed-sequence semantics (pad_packed): zero outputs past length,
    # final hidden per batch = hidden at its last valid step (gather, no in-kernel masking)
    len_b = jnp.zeros((Bp,), jnp.int32).at[:B].set(lengths.astype(jnp.int32))
    t_idx = jnp.arange(S, dtype=jnp.int32)[:, None, None]
    enc_out = enc_out * (t_idx < len_b[None, :, None]).astype(f32)
    gather_t = jnp.clip(len_b - 1, 0, S - 1)
    enc_final = enc_out[gather_t, jnp.arange(Bp)]                    # (Bp, Hp)

    context = jnp.transpose(enc_out[:, :B], (1, 0, 2))               # (B, S, Hp)
    stop_p = jnp.zeros((1, 1, Hp), f32).at[..., :H].set(params["decoder_stop"])
    context_states = jnp.concatenate([context, jnp.tile(stop_p, (B, 1, 1))], axis=1)  # (B, E, Hp)
    # (sequence_dropout is the identity in eval mode)

    # ---- make_decoder_input: gather encoder inputs at target indices, prepend start ----
    gidx = jnp.where(targets == -1, S - 1, targets)                  # (B, T)
    gathered = jnp.take_along_axis(sequence, gidx[:, :, None], axis=1)   # (B, T, I)
    dec_in = jnp.concatenate(
        [jnp.tile(params["decoder_start"], (B, 1, 1)), gathered], axis=1)  # (B, D, I)
    dec_in_p = jnp.zeros((Bp, D, I), f32).at[:B].set(dec_in)
    dec_tm = jnp.transpose(dec_in_p, (1, 0, 2))                      # (D, Bp, I)
    dec_g = (dec_tm.reshape(D * Bp, I) @ dec_wih + dec_bih).reshape(D, Bp, 3 * Hp)

    # ---- decoder GRU (initial state = encoder final state, no packing) ----
    dec_out = gru_pallas(dec_g, enc_final, dec_whh, dec_bhh)         # (D, Bp, Hp)
    decoder_states = jnp.transpose(dec_out[:, :B], (1, 0, 2))        # (B, D, Hp)

    # ---- attention logits + masked_fill(-inf) (transposed, lane-padded operands) ----
    ctxT = jnp.zeros((B, Hp, Ep), f32).at[:, :, :E].set(jnp.transpose(context_states, (0, 2, 1)))
    decT = jnp.zeros((B, Hp, Dp), f32).at[:, :, :D].set(jnp.transpose(decoder_states, (0, 2, 1)))
    wenc_p = jnp.zeros((Ap, Hp), f32).at[:A, :H].set(params["Wenc"])
    wdec_p = jnp.zeros((Ap, Hp), f32).at[:A, :H].set(params["Wdec"])
    v_row = jnp.zeros((1, Ap), f32).at[0, :A].set(params["v"])

    logits_pad = attention_logits_pallas(ctxT, decT, wenc_p, wdec_p, v_row, mask_pad)  # (B, Dp, Ep)
    logits = logits_pad[:, :D, :E]
    return logits, mask


# ----------------------------------------------------------------------------- #
# Pure-JAX reference (for a sanity check of the Pallas kernels).                 #
# ----------------------------------------------------------------------------- #
def _gru_ref(x_tm, lengths, h0, wih, whh, bih, bhh):
    S = x_tm.shape[0]

    def step(h, inp):
        x, t = inp
        i_r = x @ wih[0] + bih[0]
        i_z = x @ wih[1] + bih[1]
        i_n = x @ wih[2] + bih[2]
        h_r = h @ whh[0] + bhh[0]
        h_z = h @ whh[1] + bhh[1]
        h_n = h @ whh[2] + bhh[2]
        r = jax.nn.sigmoid(i_r + h_r)
        z = jax.nn.sigmoid(i_z + h_z)
        n = jnp.tanh(i_n + r * h_n)
        h_new = (1.0 - z) * n + z * h
        valid = t < lengths
        h_next = jnp.where(valid, h_new, h)
        out = jnp.where(valid, h_new, 0.0)
        return h_next, out

    h_fin, outs = jax.lax.scan(step, h0, (x_tm, jnp.arange(S, dtype=jnp.int32)))
    return outs, h_fin


def _forward_ref(params, sequence, lengths, targets, mask):
    B, S, I = sequence.shape
    T = targets.shape[1]
    H = params["enc_whh"].shape[-1]
    x_tm = jnp.transpose(sequence, (1, 0, 2))
    len_col = lengths.reshape(B, 1).astype(jnp.int32)
    enc_out, enc_fin = _gru_ref(x_tm, len_col, jnp.zeros((B, H), jnp.float32),
                                params["enc_wih"], params["enc_whh"],
                                params["enc_bih"], params["enc_bhh"])
    context = jnp.transpose(enc_out, (1, 0, 2))
    ctx_states = jnp.concatenate([context, jnp.tile(params["decoder_stop"], (B, 1, 1))], 1)
    gidx = jnp.where(targets == -1, S - 1, targets)
    gathered = jnp.take_along_axis(sequence, gidx[:, :, None], axis=1)
    dec_in = jnp.concatenate([jnp.tile(params["decoder_start"], (1, B, 1)),
                              jnp.transpose(gathered, (1, 0, 2))], 0)
    dec_out, _ = _gru_ref(dec_in, jnp.full((B, 1), T + 1, jnp.int32), enc_fin,
                          params["dec_wih"], params["dec_whh"],
                          params["dec_bih"], params["dec_bhh"])
    dec_states = jnp.transpose(dec_out, (1, 0, 2))
    ac = jnp.einsum("beh,ha->bea", ctx_states, params["Wenc"].T)
    ad = jnp.einsum("bdh,ha->bda", dec_states, params["Wdec"].T)
    t = jnp.tanh(ad[:, :, None, :] + ac[:, None, :, :])
    logits = jnp.einsum("bdea,a->bde", t, params["v"])
    return jnp.where(mask, -jnp.inf, logits)


if __name__ == "__main__":
    B, S, T = 2, 8, 5
    INPUT_SIZE, HIDDEN_SIZE, ATTN_HIDDEN = 16, 32, 128

    key = jax.random.PRNGKey(0)
    kp, kx = jax.random.split(key)
    params = init_params(kp, INPUT_SIZE, HIDDEN_SIZE, ATTN_HIDDEN)

    sequence = jax.random.normal(kx, (B, S, INPUT_SIZE), jnp.float32)
    lengths = jnp.array([8, 6], jnp.int32)                      # sorted descending, lengths[0] == S
    targets = jnp.array([[2, 0, 5, -1, -1],
                         [1, 3, -1, -1, -1]], jnp.int32)        # -1 = padding

    logits, mask = pointer_network_forward(params, sequence, lengths, targets)
    logits = jax.block_until_ready(logits)

    # sanity check against a pure-JAX reference (tight, all-f32 path)
    ref = jax.block_until_ready(_forward_ref(params, sequence, lengths, targets, mask))
    finite = ~np.asarray(mask)
    np.testing.assert_allclose(np.asarray(logits)[finite], np.asarray(ref)[finite],
                               rtol=1e-4, atol=1e-4)
    assert np.all(np.isneginf(np.asarray(logits)[np.asarray(mask)]))
    assert logits.shape == (B, T + 1, S + 1)

    print("KERNEL_OK")
</pallas_src>

<mosaic_0001>
module attributes {stable_mosaic.version = 11 : i64} {
  func.func @_gru_kernel(%arg0: i32, %arg1: memref<8x8x384xf32, #tpu.memory_space<vmem>>, %arg2: memref<8x128xf32, #tpu.memory_space<vmem>>, %arg3: memref<128x384xf32, #tpu.memory_space<vmem>>, %arg4: memref<1x384xf32, #tpu.memory_space<vmem>>, %arg5: memref<8x8x128xf32, #tpu.memory_space<vmem>>, %arg6: memref<8x128xf32, #tpu.memory_space<vmem>>) attributes {dimension_semantics = [#tpu.dimension_semantics<arbitrary>], iteration_bounds = array<i64: 1>, scalar_prefetch = 0 : i64, scratch_operands = 1 : i64, tpu.core_type = #tpu.core_type<tc>, window_params = [{transform_indices = @transform_0, window_bounds = array<i64: 8, 8, 384>}, {pipeline_mode = #tpu.pipeline_mode<synchronous>, transform_indices = @transform_1, window_bounds = array<i64: 8, 128>}, {pipeline_mode = #tpu.pipeline_mode<synchronous>, transform_indices = @transform_2, window_bounds = array<i64: 128, 384>}, {pipeline_mode = #tpu.pipeline_mode<synchronous>, transform_indices = @transform_3, window_bounds = array<i64: 1, 384>}, {transform_indices = @transform_4, window_bounds = array<i64: 8, 8, 128>}]} {
    %c0_i32 = arith.constant 0 : i32
    %0 = arith.cmpi eq, %arg0, %c0_i32 : i32
    %1 = arith.extui %0 : i1 to i32
    %c0_i32_0 = arith.constant 0 : i32
    %2 = arith.cmpi ne, %1, %c0_i32_0 : i32
    scf.if %2 {
      %c0_64 = arith.constant 0 : index
      %c0_65 = arith.constant 0 : index
      %247 = vector.load %arg2[%c0_64, %c0_65] : memref<8x128xf32, #tpu.memory_space<vmem>>, vector<8x128xf32>
      %c0_66 = arith.constant 0 : index
      %c0_67 = arith.constant 0 : index
      %248 = vector.load %arg6[%c0_66, %c0_67] : memref<8x128xf32, #tpu.memory_space<vmem>>, vector<8x128xf32>
      tpu.vector_store %arg6[%c0_66, %c0_67], %247 {strides = array<i32>} : memref<8x128xf32, #tpu.memory_space<vmem>>, vector<8x128xf32>,
    } else {
    }
    %c0 = arith.constant 0 : index
    %c0_1 = arith.constant 0 : index
    %3 = vector.load %arg3[%c0, %c0_1] : memref<128x384xf32, #tpu.memory_space<vmem>>, vector<128x384xf32>
    %c0_2 = arith.constant 0 : index
    %c0_3 = arith.constant 0 : index
    %4 = vector.load %arg4[%c0_2, %c0_3] : memref<1x384xf32, #tpu.memory_space<vmem>>, vector<1x384xf32>
    %c0_4 = arith.constant 0 : index
    %c0_5 = arith.constant 0 : index
    %5 = vector.load %arg6[%c0_4, %c0_5] : memref<8x128xf32, #tpu.memory_space<vmem>>, vector<8x128xf32>
    %c0_i32_6 = arith.constant 0 : i32
    %6 = arith.index_cast %c0_i32_6 : i32 to index
    %c0_7 = arith.constant 0 : index
    %c0_8 = arith.constant 0 : index
    %7 = vector.load %arg1[%6, %c0_7, %c0_8] : memref<8x8x384xf32, #tpu.memory_space<vmem>>, vector<1x8x384xf32>
    %8 = vector.shape_cast %7 : vector<1x8x384xf32> to vector<8x384xf32>
    %cst = arith.constant dense<0.000000e+00> : vector<8x384xf32>
    %9 = tpu.matmul %5, %3, %cst {dimension_numbers = #tpu.dot_dimension_numbers<[1], [0], [0], [1], [0, 0, 1, 1], [], []>, precision = #tpu.contract_precision<fp32>} : vector<8x128xf32>, vector<128x384xf32>, vector<8x384xf32> -> vector<8x384xf32>
    %10 = vector.broadcast %4 : vector<1x384xf32> to vector<8x384xf32>
    %11 = arith.addf %9, %10 : vector<8x384xf32>
    %12 = vector.extract_strided_slice %8 {offsets = [0, 0], sizes = [8, 256], strides = [1, 1]} : vector<8x384xf32> to vector<8x256xf32>
    %13 = vector.extract_strided_slice %11 {offsets = [0, 0], sizes = [8, 256], strides = [1, 1]} : vector<8x384xf32> to vector<8x256xf32>
    %14 = arith.addf %12, %13 : vector<8x256xf32>
    %15 = arith.negf %14 : vector<8x256xf32>
    %16 = math.exp %15 : vector<8x256xf32>
    %cst_9 = arith.constant 1.000000e+00 : f32
    %17 = vector.broadcast %cst_9 : f32 to vector<8x256xf32>
    %18 = arith.addf %17, %16 : vector<8x256xf32>
    %19 = arith.divf %17, %18 : vector<8x256xf32>
    %20 = vector.extract_strided_slice %19 {offsets = [0, 0], sizes = [8, 128], strides = [1, 1]} : vector<8x256xf32> to vector<8x128xf32>
    %21 = vector.extract_strided_slice %19 {offsets = [0, 128], sizes = [8, 128], strides = [1, 1]} : vector<8x256xf32> to vector<8x128xf32>
    %22 = vector.extract_strided_slice %8 {offsets = [0, 256], sizes = [8, 128], strides = [1, 1]} : vector<8x384xf32> to vector<8x128xf32>
    %23 = vector.extract_strided_slice %11 {offsets = [0, 256], sizes = [8, 128], strides = [1, 1]} : vector<8x384xf32> to vector<8x128xf32>
    %24 = arith.mulf %20, %23 : vector<8x128xf32>
    %25 = arith.addf %22, %24 : vector<8x128xf32>
    %26 = math.tanh %25 : vector<8x128xf32>
    %cst_10 = arith.constant 1.000000e+00 : f32
    %27 = vector.broadcast %cst_10 : f32 to vector<8x128xf32>
    %28 = arith.subf %27, %21 : vector<8x128xf32>
    %29 = arith.mulf %28, %26 : vector<8x128xf32>
    %30 = arith.mulf %21, %5 : vector<8x128xf32>
    %31 = arith.addf %29, %30 : vector<8x128xf32>
    %32 = arith.index_cast %c0_i32_6 : i32 to index
    %c0_11 = arith.constant 0 : index
    %c0_12 = arith.constant 0 : index
    %33 = vector.load %arg5[%32, %c0_11, %c0_12] : memref<8x8x128xf32, #tpu.memory_space<vmem>>, vector<1x8x128xf32>
    %34 = vector.shape_cast %33 : vector<1x8x128xf32> to vector<8x128xf32>
    %35 = vector.shape_cast %31 : vector<8x128xf32> to vector<1x8x128xf32>
    tpu.vector_store %arg5[%32, %c0_11, %c0_12], %35 {strides = array<i32>} : memref<8x8x128xf32, #tpu.memory_space<vmem>>, vector<1x8x128xf32>,
    %c1_i32 = arith.constant 1 : i32
    %36 = arith.index_cast %c1_i32 : i32 to index
    %c0_13 = arith.constant 0 : index
    %c0_14 = arith.constant 0 : index
    %37 = vector.load %arg1[%36, %c0_13, %c0_14] : memref<8x8x384xf32, #tpu.memory_space<vmem>>, vector<1x8x384xf32>
    %38 = vector.shape_cast %37 : vector<1x8x384xf32> to vector<8x384xf32>
    %cst_15 = arith.constant dense<0.000000e+00> : vector<8x384xf32>
    %39 = tpu.matmul %31, %3, %cst_15 {dimension_numbers = #tpu.dot_dimension_numbers<[1], [0], [0], [1], [0, 0, 1, 1], [], []>, precision = #tpu.contract_precision<fp32>} : vector<8x128xf32>, vector<128x384xf32>, vector<8x384xf32> -> vector<8x384xf32>
    %40 = vector.broadcast %4 : vector<1x384xf32> to vector<8x384xf32>
    %41 = arith.addf %39, %40 : vector<8x384xf32>
    %42 = vector.extract_strided_slice %38 {offsets = [0, 0], sizes = [8, 256], strides = [1, 1]} : vector<8x384xf32> to vector<8x256xf32>
    %43 = vector.extract_strided_slice %41 {offsets = [0, 0], sizes = [8, 256], strides = [1, 1]} : vector<8x384xf32> to vector<8x256xf32>
    %44 = arith.addf %42, %43 : vector<8x256xf32>
    %45 = arith.negf %44 : vector<8x256xf32>
    %46 = math.exp %45 : vector<8x256xf32>
    %cst_16 = arith.constant 1.000000e+00 : f32
    %47 = vector.broadcast %cst_16 : f32 to vector<8x256xf32>
    %48 = arith.addf %47, %46 : vector<8x256xf32>
    %49 = arith.divf %47, %48 : vector<8x256xf32>
    %50 = vector.extract_strided_slice %49 {offsets = [0, 0], sizes = [8, 128], strides = [1, 1]} : vector<8x256xf32> to vector<8x128xf32>
    %51 = vector.extract_strided_slice %49 {offsets = [0, 128], sizes = [8, 128], strides = [1, 1]} : vector<8x256xf32> to vector<8x128xf32>
    %52 = vector.extract_strided_slice %38 {offsets = [0, 256], sizes = [8, 128], strides = [1, 1]} : vector<8x384xf32> to vector<8x128xf32>
    %53 = vector.extract_strided_slice %41 {offsets = [0, 256], sizes = [8, 128], strides = [1, 1]} : vector<8x384xf32> to vector<8x128xf32>
    %54 = arith.mulf %50, %53 : vector<8x128xf32>
    %55 = arith.addf %52, %54 : vector<8x128xf32>
    %56 = math.tanh %55 : vector<8x128xf32>
    %cst_17 = arith.constant 1.000000e+00 : f32
    %57 = vector.broadcast %cst_17 : f32 to vector<8x128xf32>
    %58 = arith.subf %57, %51 : vector<8x128xf32>
    %59 = arith.mulf %58, %56 : vector<8x128xf32>
    %60 = arith.mulf %51, %31 : vector<8x128xf32>
    %61 = arith.addf %59, %60 : vector<8x128xf32>
    %62 = arith.index_cast %c1_i32 : i32 to index
    %c0_18 = arith.constant 0 : index
    %c0_19 = arith.constant 0 : index
    %63 = vector.load %arg5[%62, %c0_18, %c0_19] : memref<8x8x128xf32, #tpu.memory_space<vmem>>, vector<1x8x128xf32>
    %64 = vector.shape_cast %63 : vector<1x8x128xf32> to vector<8x128xf32>
    %65 = vector.shape_cast %61 : vector<8x128xf32> to vector<1x8x128xf32>
    tpu.vector_store %arg5[%62, %c0_18, %c0_19], %65 {strides = array<i32>} : memref<8x8x128xf32, #tpu.memory_space<vmem>>, vector<1x8x128xf32>,
    %c2_i32 = arith.constant 2 : i32
    %66 = arith.index_cast %c2_i32 : i32 to index
    %c0_20 = arith.constant 0 : index
    %c0_21 = arith.constant 0 : index
    %67 = vector.load %arg1[%66, %c0_20, %c0_21] : memref<8x8x384xf32, #tpu.memory_space<vmem>>, vector<1x8x384xf32>
    %68 = vector.shape_cast %67 : vector<1x8x384xf32> to vector<8x384xf32>
    %cst_22 = arith.constant dense<0.000000e+00> : vector<8x384xf32>
    %69 = tpu.matmul %61, %3, %cst_22 {dimension_numbers = #tpu.dot_dimension_numbers<[1], [0], [0], [1], [0, 0, 1, 1], [], []>, precision = #tpu.contract_precision<fp32>} : vector<8x128xf32>, vector<128x384xf32>, vector<8x384xf32> -> vector<8x384xf32>
    %70 = vector.broadcast %4 : vector<1x384xf32> to vector<8x384xf32>
    %71 = arith.addf %69, %70 : vector<8x384xf32>
    %72 = vector.extract_strided_slice %68 {offsets = [0, 0], sizes = [8, 256], strides = [1, 1]} : vector<8x384xf32> to vector<8x256xf32>
    %73 = vector.extract_strided_slice %71 {offsets = [0, 0], sizes = [8, 256], strides = [1, 1]} : vector<8x384xf32> to vector<8x256xf32>
    %74 = arith.addf %72, %73 : vector<8x256xf32>
    %75 = arith.negf %74 : vector<8x256xf32>
    %76 = math.exp %75 : vector<8x256xf32>
    %cst_23 = arith.constant 1.000000e+00 : f32
    %77 = vector.broadcast %cst_23 : f32 to vector<8x256xf32>
    %78 = arith.addf %77, %76 : vector<8x256xf32>
    %79 = arith.divf %77, %78 : vector<8x256xf32>
    %80 = vector.extract_strided_slice %79 {offsets = [0, 0], sizes = [8, 128], strides = [1, 1]} : vector<8x256xf32> to vector<8x128xf32>
    %81 = vector.extract_strided_slice %79 {offsets = [0, 128], sizes = [8, 128], strides = [1, 1]} : vector<8x256xf32> to vector<8x128xf32>
    %82 = vector.extract_strided_slice %68 {offsets = [0, 256], sizes = [8, 128], strides = [1, 1]} : vector<8x384xf32> to vector<8x128xf32>
    %83 = vector.extract_strided_slice %71 {offsets = [0, 256], sizes = [8, 128], strides = [1, 1]} : vector<8x384xf32> to vector<8x128xf32>
    %84 = arith.mulf %80, %83 : vector<8x128xf32>
    %85 = arith.addf %82, %84 : vector<8x128xf32>
    %86 = math.tanh %85 : vector<8x128xf32>
    %cst_24 = arith.constant 1.000000e+00 : f32
    %87 = vector.broadcast %cst_24 : f32 to vector<8x128xf32>
    %88 = arith.subf %87, %81 : vector<8x128xf32>
    %89 = arith.mulf %88, %86 : vector<8x128xf32>
    %90 = arith.mulf %81, %61 : vector<8x128xf32>
    %91 = arith.addf %89, %90 : vector<8x128xf32>
    %92 = arith.index_cast %c2_i32 : i32 to index
    %c0_25 = arith.constant 0 : index
    %c0_26 = arith.constant 0 : index
    %93 = vector.load %arg5[%92, %c0_25, %c0_26] : memref<8x8x128xf32, #tpu.memory_space<vmem>>, vector<1x8x128xf32>
    %94 = vector.shape_cast %93 : vector<1x8x128xf32> to vector<8x128xf32>
    %95 = vector.shape_cast %91 : vector<8x128xf32> to vector<1x8x128xf32>
    tpu.vector_store %arg5[%92, %c0_25, %c0_26], %95 {strides = array<i32>} : memref<8x8x128xf32, #tpu.memory_space<vmem>>, vector<1x8x128xf32>,
    %c3_i32 = arith.constant 3 : i32
    %96 = arith.index_cast %c3_i32 : i32 to index
    %c0_27 = arith.constant 0 : index
    %c0_28 = arith.constant 0 : index
    %97 = vector.load %arg1[%96, %c0_27, %c0_28] : memref<8x8x384xf32, #tpu.memory_space<vmem>>, vector<1x8x384xf32>
    %98 = vector.shape_cast %97 : vector<1x8x384xf32> to vector<8x384xf32>
    %cst_29 = arith.constant dense<0.000000e+00> : vector<8x384xf32>
    %99 = tpu.matmul %91, %3, %cst_29 {dimension_numbers = #tpu.dot_dimension_numbers<[1], [0], [0], [1], [0, 0, 1, 1], [], []>, precision = #tpu.contract_precision<fp32>} : vector<8x128xf32>, vector<128x384xf32>, vector<8x384xf32> -> vector<8x384xf32>
    %100 = vector.broadcast %4 : vector<1x384xf32> to vector<8x384xf32>
    %101 = arith.addf %99, %100 : vector<8x384xf32>
    %102 = vector.extract_strided_slice %98 {offsets = [0, 0], sizes = [8, 256], strides = [1, 1]} : vector<8x384xf32> to vector<8x256xf32>
    %103 = vector.extract_strided_slice %101 {offsets = [0, 0], sizes = [8, 256], strides = [1, 1]} : vector<8x384xf32> to vector<8x256xf32>
    %104 = arith.addf %102, %103 : vector<8x256xf32>
    %105 = arith.negf %104 : vector<8x256xf32>
    %106 = math.exp %105 : vector<8x256xf32>
    %cst_30 = arith.constant 1.000000e+00 : f32
    %107 = vector.broadcast %cst_30 : f32 to vector<8x256xf32>
    %108 = arith.addf %107, %106 : vector<8x256xf32>
    %109 = arith.divf %107, %108 : vector<8x256xf32>
    %110 = vector.extract_strided_slice %109 {offsets = [0, 0], sizes = [8, 128], strides = [1, 1]} : vector<8x256xf32> to vector<8x128xf32>
    %111 = vector.extract_strided_slice %109 {offsets = [0, 128], sizes = [8, 128], strides = [1, 1]} : vector<8x256xf32> to vector<8x128xf32>
    %112 = vector.extract_strided_slice %98 {offsets = [0, 256], sizes = [8, 128], strides = [1, 1]} : vector<8x384xf32> to vector<8x128xf32>
    %113 = vector.extract_strided_slice %101 {offsets = [0, 256], sizes = [8, 128], strides = [1, 1]} : vector<8x384xf32> to vector<8x128xf32>
    %114 = arith.mulf %110, %113 : vector<8x128xf32>
    %115 = arith.addf %112, %114 : vector<8x128xf32>
    %116 = math.tanh %115 : vector<8x128xf32>
    %cst_31 = arith.constant 1.000000e+00 : f32
    %117 = vector.broadcast %cst_31 : f32 to vector<8x128xf32>
    %118 = arith.subf %117, %111 : vector<8x128xf32>
    %119 = arith.mulf %118, %116 : vector<8x128xf32>
    %120 = arith.mulf %111, %91 : vector<8x128xf32>
    %121 = arith.addf %119, %120 : vector<8x128xf32>
    %122 = arith.index_cast %c3_i32 : i32 to index
    %c0_32 = arith.constant 0 : index
    %c0_33 = arith.constant 0 : index
    %123 = vector.load %arg5[%122, %c0_32, %c0_33] : memref<8x8x128xf32, #tpu.memory_space<vmem>>, vector<1x8x128xf32>
    %124 = vector.shape_cast %123 : vector<1x8x128xf32> to vector<8x128xf32>
    %125 = vector.shape_cast %121 : vector<8x128xf32> to vector<1x8x128xf32>
    tpu.vector_store %arg5[%122, %c0_32, %c0_33], %125 {strides = array<i32>} : memref<8x8x128xf32, #tpu.memory_space<vmem>>, vector<1x8x128xf32>,
    %c4_i32 = arith.constant 4 : i32
    %126 = arith.index_cast %c4_i32 : i32 to index
    %c0_34 = arith.constant 0 : index
    %c0_35 = arith.constant 0 : index
    %127 = vector.load %arg1[%126, %c0_34, %c0_35] : memref<8x8x384xf32, #tpu.memory_space<vmem>>, vector<1x8x384xf32>
    %128 = vector.shape_cast %127 : vector<1x8x384xf32> to vector<8x384xf32>
    %cst_36 = arith.constant dense<0.000000e+00> : vector<8x384xf32>
    %129 = tpu.matmul %121, %3, %cst_36 {dimension_numbers = #tpu.dot_dimension_numbers<[1], [0], [0], [1], [0, 0, 1, 1], [], []>, precision = #tpu.contract_precision<fp32>} : vector<8x128xf32>, vector<128x384xf32>, vector<8x384xf32> -> vector<8x384xf32>
    %130 = vector.broadcast %4 : vector<1x384xf32> to vector<8x384xf32>
    %131 = arith.addf %129, %130 : vector<8x384xf32>
    %132 = vector.extract_strided_slice %128 {offsets = [0, 0], sizes = [8, 256], strides = [1, 1]} : vector<8x384xf32> to vector<8x256xf32>
    %133 = vector.extract_strided_slice %131 {offsets = [0, 0], sizes = [8, 256], strides = [1, 1]} : vector<8x384xf32> to vector<8x256xf32>
    %134 = arith.addf %132, %133 : vector<8x256xf32>
    %135 = arith.negf %134 : vector<8x256xf32>
    %136 = math.exp %135 : vector<8x256xf32>
    %cst_37 = arith.constant 1.000000e+00 : f32
    %137 = vector.broadcast %cst_37 : f32 to vector<8x256xf32>
    %138 = arith.addf %137, %136 : vector<8x256xf32>
    %139 = arith.divf %137, %138 : vector<8x256xf32>
    %140 = vector.extract_strided_slice %139 {offsets = [0, 0], sizes = [8, 128], strides = [1, 1]} : vector<8x256xf32> to vector<8x128xf32>
    %141 = vector.extract_strided_slice %139 {offsets = [0, 128], sizes = [8, 128], strides = [1, 1]} : vector<8x256xf32> to vector<8x128xf32>
    %142 = vector.extract_strided_slice %128 {offsets = [0, 256], sizes = [8, 128], strides = [1, 1]} : vector<8x384xf32> to vector<8x128xf32>
    %143 = vector.extract_strided_slice %131 {offsets = [0, 256], sizes = [8, 128], strides = [1, 1]} : vector<8x384xf32> to vector<8x128xf32>
    %144 = arith.mulf %140, %143 : vector<8x128xf32>
    %145 = arith.addf %142, %144 : vector<8x128xf32>
    %146 = math.tanh %145 : vector<8x128xf32>
    %cst_38 = arith.constant 1.000000e+00 : f32
    %147 = vector.broadcast %cst_38 : f32 to vector<8x128xf32>
    %148 = arith.subf %147, %141 : vector<8x128xf32>
    %149 = arith.mulf %148, %146 : vector<8x128xf32>
    %150 = arith.mulf %141, %121 : vector<8x128xf32>
    %151 = arith.addf %149, %150 : vector<8x128xf32>
    %152 = arith.index_cast %c4_i32 : i32 to index
    %c0_39 = arith.constant 0 : index
    %c0_40 = arith.constant 0 : index
    %153 = vector.load %arg5[%152, %c0_39, %c0_40] : memref<8x8x128xf32, #tpu.memory_space<vmem>>, vector<1x8x128xf32>
    %154 = vector.shape_cast %153 : vector<1x8x128xf32> to vector<8x128xf32>
    %155 = vector.shape_cast %151 : vector<8x128xf32> to vector<1x8x128xf32>
    tpu.vector_store %arg5[%152, %c0_39, %c0_40], %155 {strides = array<i32>} : memref<8x8x128xf32, #tpu.memory_space<vmem>>, vector<1x8x128xf32>,
    %c5_i32 = arith.constant 5 : i32
    %156 = arith.index_cast %c5_i32 : i32 to index
    %c0_41 = arith.constant 0 : index
    %c0_42 = arith.constant 0 : index
    %157 = vector.load %arg1[%156, %c0_41, %c0_42] : memref<8x8x384xf32, #tpu.memory_space<vmem>>, vector<1x8x384xf32>
    %158 = vector.shape_cast %157 : vector<1x8x384xf32> to vector<8x384xf32>
    %cst_43 = arith.constant dense<0.000000e+00> : vector<8x384xf32>
    %159 = tpu.matmul %151, %3, %cst_43 {dimension_numbers = #tpu.dot_dimension_numbers<[1], [0], [0], [1], [0, 0, 1, 1], [], []>, precision = #tpu.contract_precision<fp32>} : vector<8x128xf32>, vector<128x384xf32>, vector<8x384xf32> -> vector<8x384xf32>
    %160 = vector.broadcast %4 : vector<1x384xf32> to vector<8x384xf32>
    %161 = arith.addf %159, %160 : vector<8x384xf32>
    %162 = vector.extract_strided_slice %158 {offsets = [0, 0], sizes = [8, 256], strides = [1, 1]} : vector<8x384xf32> to vector<8x256xf32>
    %163 = vector.extract_strided_slice %161 {offsets = [0, 0], sizes = [8, 256], strides = [1, 1]} : vector<8x384xf32> to vector<8x256xf32>
    %164 = arith.addf %162, %163 : vector<8x256xf32>
    %165 = arith.negf %164 : vector<8x256xf32>
    %166 = math.exp %165 : vector<8x256xf32>
    %cst_44 = arith.constant 1.000000e+00 : f32
    %167 = vector.broadcast %cst_44 : f32 to vector<8x256xf32>
    %168 = arith.addf %167, %166 : vector<8x256xf32>
    %169 = arith.divf %167, %168 : vector<8x256xf32>
    %170 = vector.extract_strided_slice %169 {offsets = [0, 0], sizes = [8, 128], strides = [1, 1]} : vector<8x256xf32> to vector<8x128xf32>
    %171 = vector.extract_strided_slice %169 {offsets = [0, 128], sizes = [8, 128], strides = [1, 1]} : vector<8x256xf32> to vector<8x128xf32>
    %172 = vector.extract_strided_slice %158 {offsets = [0, 256], sizes = [8, 128], strides = [1, 1]} : vector<8x384xf32> to vector<8x128xf32>
    %173 = vector.extract_strided_slice %161 {offsets = [0, 256], sizes = [8, 128], strides = [1, 1]} : vector<8x384xf32> to vector<8x128xf32>
    %174 = arith.mulf %170, %173 : vector<8x128xf32>
    %175 = arith.addf %172, %174 : vector<8x128xf32>
    %176 = math.tanh %175 : vector<8x128xf32>
    %cst_45 = arith.constant 1.000000e+00 : f32
    %177 = vector.broadcast %cst_45 : f32 to vector<8x128xf32>
    %178 = arith.subf %177, %171 : vector<8x128xf32>
    %179 = arith.mulf %178, %176 : vector<8x128xf32>
    %180 = arith.mulf %171, %151 : vector<8x128xf32>
    %181 = arith.addf %179, %180 : vector<8x128xf32>
    %182 = arith.index_cast %c5_i32 : i32 to index
    %c0_46 = arith.constant 0 : index
    %c0_47 = arith.constant 0 : index
    %183 = vector.load %arg5[%182, %c0_46, %c0_47] : memref<8x8x128xf32, #tpu.memory_space<vmem>>, vector<1x8x128xf32>
    %184 = vector.shape_cast %183 : vector<1x8x128xf32> to vector<8x128xf32>
    %185 = vector.shape_cast %181 : vector<8x128xf32> to vector<1x8x128xf32>
    tpu.vector_store %arg5[%182, %c0_46, %c0_47], %185 {strides = array<i32>} : memref<8x8x128xf32, #tpu.memory_space<vmem>>, vector<1x8x128xf32>,
    %c6_i32 = arith.constant 6 : i32
    %186 = arith.index_cast %c6_i32 : i32 to index
    %c0_48 = arith.constant 0 : index
    %c0_49 = arith.constant 0 : index
    %187 = vector.load %arg1[%186, %c0_48, %c0_49] : memref<8x8x384xf32, #tpu.memory_space<vmem>>, vector<1x8x384xf32>
    %188 = vector.shape_cast %187 : vector<1x8x384xf32> to vector<8x384xf32>
    %cst_50 = arith.constant dense<0.000000e+00> : vector<8x384xf32>
    %189 = tpu.matmul %181, %3, %cst_50 {dimension_numbers = #tpu.dot_dimension_numbers<[1], [0], [0], [1], [0, 0, 1, 1], [], []>, precision = #tpu.contract_precision<fp32>} : vector<8x128xf32>, vector<128x384xf32>, vector<8x384xf32> -> vector<8x384xf32>
    %190 = vector.broadcast %4 : vector<1x384xf32> to vector<8x384xf32>
    %191 = arith.addf %189, %190 : vector<8x384xf32>
    %192 = vector.extract_strided_slice %188 {offsets = [0, 0], sizes = [8, 256], strides = [1, 1]} : vector<8x384xf32> to vector<8x256xf32>
    %193 = vector.extract_strided_slice %191 {offsets = [0, 0], sizes = [8, 256], strides = [1, 1]} : vector<8x384xf32> to vector<8x256xf32>
    %194 = arith.addf %192, %193 : vector<8x256xf32>
    %195 = arith.negf %194 : vector<8x256xf32>
    %196 = math.exp %195 : vector<8x256xf32>
    %cst_51 = arith.constant 1.000000e+00 : f32
    %197 = vector.broadcast %cst_51 : f32 to vector<8x256xf32>
    %198 = arith.addf %197, %196 : vector<8x256xf32>
    %199 = arith.divf %197, %198 : vector<8x256xf32>
    %200 = vector.extract_strided_slice %199 {offsets = [0, 0], sizes = [8, 128], strides = [1, 1]} : vector<8x256xf32> to vector<8x128xf32>
    %201 = vector.extract_strided_slice %199 {offsets = [0, 128], sizes = [8, 128], strides = [1, 1]} : vector<8x256xf32> to vector<8x128xf32>
    %202 = vector.extract_strided_slice %188 {offsets = [0, 256], sizes = [8, 128], strides = [1, 1]} : vector<8x384xf32> to vector<8x128xf32>
    %203 = vector.extract_strided_slice %191 {offsets = [0, 256], sizes = [8, 128], strides = [1, 1]} : vector<8x384xf32> to vector<8x128xf32>
    %204 = arith.mulf %200, %203 : vector<8x128xf32>
    %205 = arith.addf %202, %204 : vector<8x128xf32>
    %206 = math.tanh %205 : vector<8x128xf32>
    %cst_52 = arith.constant 1.000000e+00 : f32
    %207 = vector.broadcast %cst_52 : f32 to vector<8x128xf32>
    %208 = arith.subf %207, %201 : vector<8x128xf32>
    %209 = arith.mulf %208, %206 : vector<8x128xf32>
    %210 = arith.mulf %201, %181 : vector<8x128xf32>
    %211 = arith.addf %209, %210 : vector<8x128xf32>
    %212 = arith.index_cast %c6_i32 : i32 to index
    %c0_53 = arith.constant 0 : index
    %c0_54 = arith.constant 0 : index
    %213 = vector.load %arg5[%212, %c0_53, %c0_54] : memref<8x8x128xf32, #tpu.memory_space<vmem>>, vector<1x8x128xf32>
    %214 = vector.shape_cast %213 : vector<1x8x128xf32> to vector<8x128xf32>
    %215 = vector.shape_cast %211 : vector<8x128xf32> to vector<1x8x128xf32>
    tpu.vector_store %arg5[%212, %c0_53, %c0_54], %215 {strides = array<i32>} : memref<8x8x128xf32, #tpu.memory_space<vmem>>, vector<1x8x128xf32>,
    %c7_i32 = arith.constant 7 : i32
    %216 = arith.index_cast %c7_i32 : i32 to index
    %c0_55 = arith.constant 0 : index
    %c0_56 = arith.constant 0 : index
    %217 = vector.load %arg1[%216, %c0_55, %c0_56] : memref<8x8x384xf32, #tpu.memory_space<vmem>>, vector<1x8x384xf32>
    %218 = vector.shape_cast %217 : vector<1x8x384xf32> to vector<8x384xf32>
    %cst_57 = arith.constant dense<0.000000e+00> : vector<8x384xf32>
    %219 = tpu.matmul %211, %3, %cst_57 {dimension_numbers = #tpu.dot_dimension_numbers<[1], [0], [0], [1], [0, 0, 1, 1], [], []>, precision = #tpu.contract_precision<fp32>} : vector<8x128xf32>, vector<128x384xf32>, vector<8x384xf32> -> vector<8x384xf32>
    %220 = vector.broadcast %4 : vector<1x384xf32> to vector<8x384xf32>
    %221 = arith.addf %219, %220 : vector<8x384xf32>
    %222 = vector.extract_strided_slice %218 {offsets = [0, 0], sizes = [8, 256], strides = [1, 1]} : vector<8x384xf32> to vector<8x256xf32>
    %223 = vector.extract_strided_slice %221 {offsets = [0, 0], sizes = [8, 256], strides = [1, 1]} : vector<8x384xf32> to vector<8x256xf32>
    %224 = arith.addf %222, %223 : vector<8x256xf32>
    %225 = arith.negf %224 : vector<8x256xf32>
    %226 = math.exp %225 : vector<8x256xf32>
    %cst_58 = arith.constant 1.000000e+00 : f32
    %227 = vector.broadcast %cst_58 : f32 to vector<8x256xf32>
    %228 = arith.addf %227, %226 : vector<8x256xf32>
    %229 = arith.divf %227, %228 : vector<8x256xf32>
    %230 = vector.extract_strided_slice %229 {offsets = [0, 0], sizes = [8, 128], strides = [1, 1]} : vector<8x256xf32> to vector<8x128xf32>
    %231 = vector.extract_strided_slice %229 {offsets = [0, 128], sizes = [8, 128], strides = [1, 1]} : vector<8x256xf32> to vector<8x128xf32>
    %232 = vector.extract_strided_slice %218 {offsets = [0, 256], sizes = [8, 128], strides = [1, 1]} : vector<8x384xf32> to vector<8x128xf32>
    %233 = vector.extract_strided_slice %221 {offsets = [0, 256], sizes = [8, 128], strides = [1, 1]} : vector<8x384xf32> to vector<8x128xf32>
    %234 = arith.mulf %230, %233 : vector<8x128xf32>
    %235 = arith.addf %232, %234 : vector<8x128xf32>
    %236 = math.tanh %235 : vector<8x128xf32>
    %cst_59 = arith.constant 1.000000e+00 : f32
    %237 = vector.broadcast %cst_59 : f32 to vector<8x128xf32>
    %238 = arith.subf %237, %231 : vector<8x128xf32>
    %239 = arith.mulf %238, %236 : vector<8x128xf32>
    %240 = arith.mulf %231, %211 : vector<8x128xf32>
    %241 = arith.addf %239, %240 : vector<8x128xf32>
    %242 = arith.index_cast %c7_i32 : i32 to index
    %c0_60 = arith.constant 0 : index
    %c0_61 = arith.constant 0 : index
    %243 = vector.load %arg5[%242, %c0_60, %c0_61] : memref<8x8x128xf32, #tpu.memory_space<vmem>>, vector<1x8x128xf32>
    %244 = vector.shape_cast %243 : vector<1x8x128xf32> to vector<8x128xf32>
    %245 = vector.shape_cast %241 : vector<8x128xf32> to vector<1x8x128xf32>
    tpu.vector_store %arg5[%242, %c0_60, %c0_61], %245 {strides = array<i32>} : memref<8x8x128xf32, #tpu.memory_space<vmem>>, vector<1x8x128xf32>,
    %c8_i32 = arith.constant 8 : i32
    %c0_62 = arith.constant 0 : index
    %c0_63 = arith.constant 0 : index
    %246 = vector.load %arg6[%c0_62, %c0_63] : memref<8x128xf32, #tpu.memory_space<vmem>>, vector<8x128xf32>
    tpu.vector_store %arg6[%c0_62, %c0_63], %241 {strides = array<i32>} : memref<8x128xf32, #tpu.memory_space<vmem>>, vector<8x128xf32>,
    return
  }
  func.func @transform_0(%arg0: i32) -> (i32, i32, i32) {
    %c0_i32 = arith.constant 0 : i32
    %c0_i32_0 = arith.constant 0 : i32
    %c0_i32_1 = arith.constant 0 : i32
    return %arg0, %c0_i32, %c0_i32_0 : i32, i32, i32
  }
  func.func @transform_1(%arg0: i32) -> (i32, i32) {
    %c0_i32 = arith.constant 0 : i32
    %c0_i32_0 = arith.constant 0 : i32
    %c0_i32_1 = arith.constant 0 : i32
    return %c0_i32, %c0_i32_0 : i32, i32
  }
  func.func @transform_2(%arg0: i32) -> (i32, i32) {
    %c0_i32 = arith.constant 0 : i32
    %c0_i32_0 = arith.constant 0 : i32
    %c0_i32_1 = arith.constant 0 : i32
    return %c0_i32, %c0_i32_0 : i32, i32
  }
  func.func @transform_3(%arg0: i32) -> (i32, i32) {
    %c0_i32 = arith.constant 0 : i32
    %c0_i32_0 = arith.constant 0 : i32
    %c0_i32_1 = arith.constant 0 : i32
    return %c0_i32, %c0_i32_0 : i32, i32
  }
  func.func @transform_4(%arg0: i32) -> (i32, i32, i32) {
    %c0_i32 = arith.constant 0 : i32
    %c0_i32_0 = arith.constant 0 : i32
    %c0_i32_1 = arith.constant 0 : i32
    return %arg0, %c0_i32, %c0_i32_0 : i32, i32, i32
  }
}

</mosaic_0001>

<llo_original>
// kernel: tpu_custom_call.1
$region0: #{tpu_custom_call.1}
  #allocation0 [shape = 'u32[]', space=smem, size = 0x4, offset = 0x4, fixed_abs, tag = 'smem constant byte address 0x4 - core index']
  #allocation1 [shape = 'u32[72,128]{1,0:T(1,128)}', space=vmem, size = 0x9000, scoped, tag = 'internal scratch']
  #allocation2 [shape = 'f32[8,128]{1,0:T(8,128)}', space=vmem, size = 0x1000, scoped, tag = 'scratch operand']
  %s0 = inlined_call_operand.hbm [shape: f32[8,8,384], index: 0, kind: input, shape index: {}]
  %s1 = inlined_call_operand.hbm [shape: f32[8,128], index: 1, kind: input, shape index: {}]
  %s2 = inlined_call_operand.hbm [shape: f32[128,384], index: 2, kind: input, shape index: {}]
  %s3 = inlined_call_operand.hbm [shape: f32[1,384], index: 3, kind: input, shape index: {}]
  %s4 = inlined_call_operand.hbm [shape: f32[8,8,128], index: 4, kind: output, shape index: {}]
  %s5 = sld [smem:[#allocation0]]
  $region46: #{tpu_custom_call.1} parent=0
    _
  %s7 = ssub.s32 1, %s5
  %s8 = scalar_select 0, %s7, %s5
  $region1: #{tpu_custom_call.1} parent=0
    #allocation3 [shape = 'u8[98304]{0}', space=vmem, size = 0x18000, scoped, tag = 'input window, operand 0, single buffered']
    #allocation4 [shape = 's32[1]{0}', space=sflag, size = 0x4, scoped, tag = 'scoped memory for tpu_custom_call.1']
    #allocation5 [shape = 's32[1]{0}', space=sflag, size = 0x4, scoped, tag = 'scoped memory for tpu_custom_call.1']
    #allocation6 [shape = 'u8[4096]{0}', space=vmem, size = 0x1000, scoped, tag = 'input window, operand 1, single buffered']
    #allocation7 [shape = 's32[1]{0}', space=sflag, size = 0x4, scoped, tag = 'scoped memory for tpu_custom_call.1']
    #allocation8 [shape = 'u8[196608]{0}', space=vmem, size = 0x30000, scoped, tag = 'input window, operand 2, single buffered']
    #allocation9 [shape = 'u8[1536]{0}', space=vmem, size = 0x800, scoped, tag = 'input window, operand 3, single buffered']
    #allocation10 [shape = 's32[1]{0}', space=sflag, size = 0x4, scoped, tag = 'scoped memory for tpu_custom_call.1']
    #allocation11 [shape = 'u8[32768]{0}', space=vmem, size = 0x8000, scoped, tag = 'output window, operand 0, single buffered']
    %9 = vsyncpa [#allocation4], 0
    %10 = vsyncpa [#allocation7], 0
    %11 = vsyncpa [#allocation10], 0
    %12 = vsyncpa [#allocation5], 0
    // Predicated region
    $region2: #{tpu_custom_call.1} parent=1 // pred_check
      _
    $region3: #{tpu_custom_call.1} parent=1 // pred_check_branch
      %14 = sbr.rel (0) target = $region5
    $region4: #{tpu_custom_call.1} parent=1 // pred_region
      %16 = vsyncadd [#allocation4], 0
      %s17 = sshll.u32 %s0, 4
      %s18 = int_to_ptr.hbm [resolvable:$true] %s17
      %s19 = sshll.u32 [#allocation3], 4
      %s20 = int_to_ptr.vmem [resolvable:$true] %s19
      %25 = dma.hbm_to_vmem [thread:$0]  %s18, 3072, %s20, [#allocation4], 384, 384, 24
    $region5: #{tpu_custom_call.1} parent=1 // pred_fallthru
      _
    // Predicated region
    $region6: #{tpu_custom_call.1} parent=1 // pred_check
      _
    $region7: #{tpu_custom_call.1} parent=1 // pred_check_branch
      %27 = sbr.rel (0) target = $region9
    $region8: #{tpu_custom_call.1} parent=1 // pred_region
      %29 = vsyncadd [#allocation7], 0
      %s31 = sshll.u32 %s1, 4
      %s32 = int_to_ptr.hbm [resolvable:$true] %s31
      %s33 = sshll.u32 [#allocation6], 4
      %s34 = int_to_ptr.vmem [resolvable:$true] %s33
      %36 = dma.hbm_to_vmem [thread:$0]  %s32, 128, %s34, [#allocation7]
    $region9: #{tpu_custom_call.1} parent=1 // pred_fallthru
      _
    // Predicated region
    $region10: #{tpu_custom_call.1} parent=1 // pred_check
      _
    $region11: #{tpu_custom_call.1} parent=1 // pred_check_branch
      %38 = sbr.rel (0) target = $region13
    $region12: #{tpu_custom_call.1} parent=1 // pred_region
      %40 = vsyncadd [#allocation7], 0
      %s41 = sshll.u32 %s2, 4
      %s42 = int_to_ptr.hbm [resolvable:$true] %s41
      %s43 = sshll.u32 [#allocation8], 4
      %s44 = int_to_ptr.vmem [resolvable:$true] %s43
      %49 = dma.hbm_to_vmem [thread:$0]  %s42, 6144, %s44, [#allocation7], 384, 384, 24
    $region13: #{tpu_custom_call.1} parent=1 // pred_fallthru
      _
    // Predicated region
    $region14: #{tpu_custom_call.1} parent=1 // pred_check
      _
    $region15: #{tpu_custom_call.1} parent=1 // pred_check_branch
      %51 = sbr.rel (0) target = $region17
    $region16: #{tpu_custom_call.1} parent=1 // pred_region
      %53 = vsyncadd [#allocation10], 0
      %s55 = sshll.u32 %s3, 4
      %s56 = int_to_ptr.hbm [resolvable:$true] %s55
      %s57 = sshll.u32 [#allocation9], 4
      %s58 = int_to_ptr.vmem [resolvable:$true] %s57
      %60 = dma.hbm_to_vmem [thread:$0]  %s56, 48, %s58, [#allocation10]
    $region17: #{tpu_custom_call.1} parent=1 // pred_fallthru
      _
    // Predicated region
    $region18: #{tpu_custom_call.1} parent=1 // pred_check
      _
    $region19: #{tpu_custom_call.1} parent=1 // pred_check_branch
      %62 = sbr.rel (0) target = $region21
    $region20: #{tpu_custom_call.1} parent=1 // pred_region
      %64 = dma.done [#allocation4], 3072
    $region21: #{tpu_custom_call.1} parent=1 // pred_fallthru
      _
    // Predicated region
    $region22: #{tpu_custom_call.1} parent=1 // pred_check
      _
    $region23: #{tpu_custom_call.1} parent=1 // pred_check_branch
      %66 = sbr.rel (0) target = $region25
    $region24: #{tpu_custom_call.1} parent=1 // pred_region
      %68 = dma.done [#allocation7], 128
    $region25: #{tpu_custom_call.1} parent=1 // pred_fallthru
      _
    // Predicated region
    $region26: #{tpu_custom_call.1} parent=1 // pred_check
      _
    $region27: #{tpu_custom_call.1} parent=1 // pred_check_branch
      %70 = sbr.rel (0) target = $region29
    $region28: #{tpu_custom_call.1} parent=1 // pred_region
      %72 = dma.done [#allocation7], 6144
    $region29: #{tpu_custom_call.1} parent=1 // pred_fallthru
      _
    // Predicated region
    $region30: #{tpu_custom_call.1} parent=1 // pred_check
      _
    $region31: #{tpu_custom_call.1} parent=1 // pred_check_branch
      %74 = sbr.rel (0) target = $region33
    $region32: #{tpu_custom_call.1} parent=1 // pred_region
      %76 = dma.done [#allocation10], 48
    $region33: #{tpu_custom_call.1} parent=1 // pred_fallthru
      _
    %p77 = scmp.eq.s32.totalorder 0, 0
    // Predicated region
    $region34: #{tpu_custom_call.1} parent=1 // pred_check
      %p78 = pneg %p77
    $region35: #{tpu_custom_call.1} parent=1 // pred_check_branch
      %80 = sbr.rel (%p78) target = $region37
    $region36: #{tpu_custom_call.1} parent=1 // pred_region
      %v81 = vld [vmem:[#allocation6] sm:$0xff]
      %82 = vst [vmem:[#allocation2] sm:$0xff] %v81
    $region37: #{tpu_custom_call.1} parent=1 // pred_fallthru
      _
    %v83 = vld [vmem:[#allocation8] sm:$0xff]
    %v84 = vld [vmem:[#allocation8 + $0x8] sm:$0xff]
    %v85 = vld [vmem:[#allocation8 + $0x10] sm:$0xff]
    %v86 = vld [vmem:[#allocation8 + $0x18] sm:$0xff]
    %v87 = vld [vmem:[#allocation8 + $0x20] sm:$0xff]
    %v88 = vld [vmem:[#allocation8 + $0x28] sm:$0xff]
    %v89 = vld [vmem:[#allocation8 + $0x30] sm:$0xff]
    %v90 = vld [vmem:[#allocation8 + $0x38] sm:$0xff]
    %v91 = vld [vmem:[#allocation8 + $0x40] sm:$0xff]
    %v92 = vld [vmem:[#allocation8 + $0x48] sm:$0xff]
    %v93 = vld [vmem:[#allocation8 + $0x50] sm:$0xff]
    %v94 = vld [vmem:[#allocation8 + $0x58] sm:$0xff]
    %v95 = vld [vmem:[#allocation8 + $0x60] sm:$0xff]
    %v96 = vld [vmem:[#allocation8 + $0x68] sm:$0xff]
    %v97 = vld [vmem:[#allocation8 + $0x70] sm:$0xff]
    %v98 = vld [vmem:[#allocation8 + $0x78] sm:$0xff]
    %v99 = vld [vmem:[#allocation8 + $0x80] sm:$0xff]
    %v100 = vld [vmem:[#allocation8 + $0x88] sm:$0xff]
    %v101 = vld [vmem:[#allocation8 + $0x90] sm:$0xff]
    %v102 = vld [vmem:[#allocation8 + $0x98] sm:$0xff]
    %v103 = vld [vmem:[#allocation8 + $0xa0] sm:$0xff]
    %v104 = vld [vmem:[#allocation8 + $0xa8] sm:$0xff]
    %v105 = vld [vmem:[#allocation8 + $0xb0] sm:$0xff]
    %v106 = vld [vmem:[#allocation8 + $0xb8] sm:$0xff]
    %v107 = vld [vmem:[#allocation8 + $0xc0] sm:$0xff]
    %v108 = vld [vmem:[#allocation8 + $0xc8] sm:$0xff]
    %v109 = vld [vmem:[#allocation8 + $0xd0] sm:$0xff]
    %v110 = vld [vmem:[#allocation8 + $0xd8] sm:$0xff]
    %v111 = vld [vmem:[#allocation8 + $0xe0] sm:$0xff]
    %v112 = vld [vmem:[#allocation8 + $0xe8] sm:$0xff]
    %v113 = vld [vmem:[#allocation8 + $0xf0] sm:$0xff]
    %v114 = vld [vmem:[#allocation8 + $0xf8] sm:$0xff]
    %v115 = vld [vmem:[#allocation8 + $0x100] sm:$0xff]
    %v116 = vld [vmem:[#allocation8 + $0x108] sm:$0xff]
    %v117 = vld [vmem:[#allocation8 + $0x110] sm:$0xff]
    %v118 = vld [vmem:[#allocation8 + $0x118] sm:$0xff]
    %v119 = vld [vmem:[#allocation8 + $0x120] sm:$0xff]
    %v120 = vld [vmem:[#allocation8 + $0x128] sm:$0xff]
    %v121 = vld [vmem:[#allocation8 + $0x130] sm:$0xff]
    %v122 = vld [vmem:[#allocation8 + $0x138] sm:$0xff]
    %v123 = vld [vmem:[#allocation8 + $0x140] sm:$0xff]
    %v124 = vld [vmem:[#allocation8 + $0x148] sm:$0xff]
    %v125 = vld [vmem:[#allocation8 + $0x150] sm:$0xff]
    %v126 = vld [vmem:[#allocation8 + $0x158] sm:$0xff]
    %v127 = vld [vmem:[#allocation8 + $0x160] sm:$0xff]
    %v128 = vld [vmem:[#allocation8 + $0x168] sm:$0xff]
    %v129 = vld [vmem:[#allocation8 + $0x170] sm:$0xff]
    %v130 = vld [vmem:[#allocation8 + $0x178] sm:$0xff]
    %v131 = vld [vmem:[#allocation9] sm:$0x7]
    %v132 = vld [vmem:[#allocation2] sm:$0xff]
    %v133 = vld [vmem:[#allocation3] sm:$0xff]
    %v134 = vld [vmem:[#allocation3 + $0x8] sm:$0xff]
    %v135 = vld [vmem:[#allocation3 + $0x10] sm:$0xff]
    %v137 = vperm.slane %v131, 0
    %v138 = vperm.slane %v131, 1
    %v139 = vperm.slane %v131, 2
    %v143 = vand.u32 %v128, 4294901760
    %144 = vmatpush.msra.mxu0 %v143
    %v145 = vand.u32 %v125, 4294901760
    %146 = vmatpush.msra.mxu0 %v145
    %v147 = vand.u32 %v122, 4294901760
    %148 = vmatpush.msra.mxu0 %v147
    %v149 = vand.u32 %v119, 4294901760
    %150 = vmatpush.msra.mxu0 %v149
    %v151 = vand.u32 %v116, 4294901760
    %152 = vmatpush.msra.mxu0 %v151
    %v153 = vand.u32 %v113, 4294901760
    %154 = vmatpush.msra.mxu0 %v153
    %v155 = vand.u32 %v110, 4294901760
    %156 = vmatpush.msra.mxu0 %v155
    %v157 = vand.u32 %v107, 4294901760
    %158 = vmatpush.msra.mxu0 %v157
    %v159 = vand.u32 %v104, 4294901760
    %160 = vmatpush.msra.mxu0 %v159
    %v161 = vand.u32 %v101, 4294901760
    %162 = vmatpush.msra.mxu0 %v161
    %v163 = vand.u32 %v98, 4294901760
    %164 = vmatpush.msra.mxu0 %v163
    %v165 = vand.u32 %v95, 4294901760
    %166 = vmatpush.msra.mxu0 %v165
    %v167 = vand.u32 %v92, 4294901760
    %168 = vmatpush.msra.mxu0 %v167
    %v169 = vand.u32 %v89, 4294901760
    %170 = vmatpush.msra.mxu0 %v169
    %v171 = vand.u32 %v86, 4294901760
    %172 = vmatpush.msra.mxu0 %v171
    %v173 = vand.u32 %v83, 4294901760
    %174 = vmatpush.msra.mxu0 %v173
    %v175 = vand.u32 %v132, 4294901760
    %v176 = vsub.f32 %v132, %v175
    %v177 = vand.u32 %v176, 4294901760
    %v178 = vsub.f32 %v176, %v177
    %v179 = vand.u32 %v178, 4294901760
    %180 = vmatmul.f32.gmra.mxu0 %v179
    %v181 = vpop.f32.mrf.mxu0
    %v182 = vadd.f32 %v137, %v181
    %183 = vdwg.mxu0
    %v184 = vand.u32 %v128, 4294901760
    %v185 = vsub.f32 %v128, %v184
    %v186 = vand.u32 %v185, 4294901760
    %v187 = vsub.f32 %v185, %v186
    %v188 = vand.u32 %v187, 4294901760
    %189 = vmatpush.msra.mxu0 %v188
    %v190 = vand.u32 %v125, 4294901760
    %v191 = vsub.f32 %v125, %v190
    %v192 = vand.u32 %v191, 4294901760
    %v193 = vsub.f32 %v191, %v192
    %v194 = vand.u32 %v193, 4294901760
    %195 = vmatpush.msra.mxu0 %v194
    %v196 = vand.u32 %v122, 4294901760
    %v197 = vsub.f32 %v122, %v196
    %v198 = vand.u32 %v197, 4294901760
    %v199 = vsub.f32 %v197, %v198
    %v200 = vand.u32 %v199, 4294901760
    %201 = vmatpush.msra.mxu0 %v200
    %v202 = vand.u32 %v119, 4294901760
    %v203 = vsub.f32 %v119, %v202
    %v204 = vand.u32 %v203, 4294901760
    %v205 = vsub.f32 %v203, %v204
    %v206 = vand.u32 %v205, 4294901760
    %207 = vmatpush.msra.mxu0 %v206
    %v208 = vand.u32 %v116, 4294901760
    %v209 = vsub.f32 %v116, %v208
    %v210 = vand.u32 %v209, 4294901760
    %v211 = vsub.f32 %v209, %v210
    %v212 = vand.u32 %v211, 4294901760
    %213 = vmatpush.msra.mxu0 %v212
    %v214 = vand.u32 %v113, 4294901760
    %v215 = vsub.f32 %v113, %v214
    %v216 = vand.u32 %v215, 4294901760
    %v217 = vsub.f32 %v215, %v216
    %v218 = vand.u32 %v217, 4294901760
    %219 = vmatpush.msra.mxu0 %v218
    %v220 = vand.u32 %v110, 4294901760
    %v221 = vsub.f32 %v110, %v220
    %v222 = vand.u32 %v221, 4294901760
    %v223 = vsub.f32 %v221, %v222
    %v224 = vand.u32 %v223, 4294901760
    %225 = vmatpush.msra.mxu0 %v224
    %v226 = vand.u32 %v107, 4294901760
    %v227 = vsub.f32 %v107, %v226
    %v228 = vand.u32 %v227, 4294901760
    %v229 = vsub.f32 %v227, %v228
    %v230 = vand.u32 %v229, 4294901760
    %231 = vmatpush.msra.mxu0 %v230
    %v232 = vand.u32 %v104, 4294901760
    %v233 = vsub.f32 %v104, %v232
    %v234 = vand.u32 %v233, 4294901760
    %v235 = vsub.f32 %v233, %v234
    %v236 = vand.u32 %v235, 4294901760
    %237 = vmatpush.msra.mxu0 %v236
    %v238 = vand.u32 %v101, 4294901760
    %v239 = vsub.f32 %v101, %v238
    %v240 = vand.u32 %v239, 4294901760
    %v241 = vsub.f32 %v239, %v240
    %v242 = vand.u32 %v241, 4294901760
    %243 = vmatpush.msra.mxu0 %v242
    %v244 = vand.u32 %v98, 4294901760
    %v245 = vsub.f32 %v98, %v244
    %v246 = vand.u32 %v245, 4294901760
    %v247 = vsub.f32 %v245, %v246
    %v248 = vand.u32 %v247, 4294901760
    %249 = vmatpush.msra.mxu0 %v248
    %v250 = vand.u32 %v95, 4294901760
    %v251 = vsub.f32 %v95, %v250
    %v252 = vand.u32 %v251, 4294901760
    %v253 = vsub.f32 %v251, %v252
    %v254 = vand.u32 %v253, 4294901760
    %255 = vmatpush.msra.mxu0 %v254
    %v256 = vand.u32 %v92, 4294901760
    %v257 = vsub.f32 %v92, %v256
    %v258 = vand.u32 %v257, 4294901760
    %v259 = vsub.f32 %v257, %v258
    %v260 = vand.u32 %v259, 4294901760
    %261 = vmatpush.msra.mxu0 %v260
    %v262 = vand.u32 %v89, 4294901760
    %v263 = vsub.f32 %v89, %v262
    %v264 = vand.u32 %v263, 4294901760
    %v265 = vsub.f32 %v263, %v264
    %v266 = vand.u32 %v265, 4294901760
    %267 = vmatpush.msra.mxu0 %v266
    %v268 = vand.u32 %v86, 4294901760
    %v269 = vsub.f32 %v86, %v268
    %v270 = vand.u32 %v269, 4294901760
    %v271 = vsub.f32 %v269, %v270
    %v272 = vand.u32 %v271, 4294901760
    %273 = vmatpush.msra.mxu0 %v272
    %v274 = vand.u32 %v83, 4294901760
    %v275 = vsub.f32 %v83, %v274
    %v276 = vand.u32 %v275, 4294901760
    %v277 = vsub.f32 %v275, %v276
    %v278 = vand.u32 %v277, 4294901760
    %279 = vmatpush.msra.mxu0 %v278
    %v280 = vand.u32 %v132, 4294901760
    %281 = vmatmul.f32.gmra.mxu0 %v280
    %v282 = vpop.f32.mrf.mxu0
    %v283 = vadd.f32 %v182, %v282
    %284 = vdwg.mxu0
    %v285 = vand.u32 %v128, 4294901760
    %v286 = vsub.f32 %v128, %v285
    %287 = vmatpush.msra.mxu0 %v286
    %v288 = vand.u32 %v125, 4294901760
    %v289 = vsub.f32 %v125, %v288
    %290 = vmatpush.msra.mxu0 %v289
    %v291 = vand.u32 %v122, 4294901760
    %v292 = vsub.f32 %v122, %v291
    %293 = vmatpush.msra.mxu0 %v292
    %v294 = vand.u32 %v119, 4294901760
    %v295 = vsub.f32 %v119, %v294
    %296 = vmatpush.msra.mxu0 %v295
    %v297 = vand.u32 %v116, 4294901760
    %v298 = vsub.f32 %v116, %v297
    %299 = vmatpush.msra.mxu0 %v298
    %v300 = vand.u32 %v113, 4294901760
    %v301 = vsub.f32 %v113, %v300
    %302 = vmatpush.msra.mxu0 %v301
    %v303 = vand.u32 %v110, 4294901760
    %v304 = vsub.f32 %v110, %v303
    %305 = vmatpush.msra.mxu0 %v304
    %v306 = vand.u32 %v107, 4294901760
    %v307 = vsub.f32 %v107, %v306
    %308 = vmatpush.msra.mxu0 %v307
    %v309 = vand.u32 %v104, 4294901760
    %v310 = vsub.f32 %v104, %v309
    %311 = vmatpush.msra.mxu0 %v310
    %v312 = vand.u32 %v101, 4294901760
    %v313 = vsub.f32 %v101, %v312
    %314 = vmatpush.msra.mxu0 %v313
    %v315 = vand.u32 %v98, 4294901760
    %v316 = vsub.f32 %v98, %v315
    %317 = vmatpush.msra.mxu0 %v316
    %v318 = vand.u32 %v95, 4294901760
    %v319 = vsub.f32 %v95, %v318
    %320 = vmatpush.msra.mxu0 %v319
    %v321 = vand.u32 %v92, 4294901760
    %v322 = vsub.f32 %v92, %v321
    %323 = vmatpush.msra.mxu0 %v322
    %v324 = vand.u32 %v89, 4294901760
    %v325 = vsub.f32 %v89, %v324
    %326 = vmatpush.msra.mxu0 %v325
    %v327 = vand.u32 %v86, 4294901760
    %v328 = vsub.f32 %v86, %v327
    %329 = vmatpush.msra.mxu0 %v328
    %v330 = vand.u32 %v83, 4294901760
    %v331 = vsub.f32 %v83, %v330
    %332 = vmatpush.msra.mxu0 %v331
    %v333 = vand.u32 %v132, 4294901760
    %v334 = vsub.f32 %v132, %v333
    %335 = vmatmul.f32.gmra.mxu0 %v334
    %v336 = vpop.f32.mrf.mxu0
    %v337 = vadd.f32 %v283, %v336
    %338 = vdwg.mxu0
    %v339 = vand.u32 %v128, 4294901760
    %340 = vmatpush.msra.mxu0 %v339
    %v341 = vand.u32 %v125, 4294901760
    %342 = vmatpush.msra.mxu0 %v341
    %v343 = vand.u32 %v122, 4294901760
    %344 = vmatpush.msra.mxu0 %v343
    %v345 = vand.u32 %v119, 4294901760
    %346 = vmatpush.msra.mxu0 %v345
    %v347 = vand.u32 %v116, 4294901760
    %348 = vmatpush.msra.mxu0 %v347
    %v349 = vand.u32 %v113, 4294901760
    %350 = vmatpush.msra.mxu0 %v349
    %v351 = vand.u32 %v110, 4294901760
    %352 = vmatpush.msra.mxu0 %v351
    %v353 = vand.u32 %v107, 4294901760
    %354 = vmatpush.msra.mxu0 %v353
    %v355 = vand.u32 %v104, 4294901760
    %356 = vmatpush.msra.mxu0 %v355
    %v357 = vand.u32 %v101, 4294901760
    %358 = vmatpush.msra.mxu0 %v357
    %v359 = vand.u32 %v98, 4294901760
    %360 = vmatpush.msra.mxu0 %v359
    %v361 = vand.u32 %v95, 4294901760
    %362 = vmatpush.msra.mxu0 %v361
    %v363 = vand.u32 %v92, 4294901760
    %364 = vmatpush.msra.mxu0 %v363
    %v365 = vand.u32 %v89, 4294901760
    %366 = vmatpush.msra.mxu0 %v365
    %v367 = vand.u32 %v86, 4294901760
    %368 = vmatpush.msra.mxu0 %v367
    %v369 = vand.u32 %v83, 4294901760
    %370 = vmatpush.msra.mxu0 %v369
    %v371 = vand.u32 %v132, 4294901760
    %v372 = vsub.f32 %v132, %v371
    %v373 = vand.u32 %v372, 4294901760
    %374 = vmatmul.f32.gmra.mxu0 %v373
    %v375 = vpop.f32.mrf.mxu0
    %v376 = vadd.f32 %v337, %v375
    %377 = vdwg.mxu0
    %v378 = vand.u32 %v128, 4294901760
    %v379 = vsub.f32 %v128, %v378
    %v380 = vand.u32 %v379, 4294901760
    %381 = vmatpush.msra.mxu0 %v380
    %v382 = vand.u32 %v125, 4294901760
    %v383 = vsub.f32 %v125, %v382
    %v384 = vand.u32 %v383, 4294901760
    %385 = vmatpush.msra.mxu0 %v384
    %v386 = vand.u32 %v122, 4294901760
    %v387 = vsub.f32 %v122, %v386
    %v388 = vand.u32 %v387, 4294901760
    %389 = vmatpush.msra.mxu0 %v388
    %v390 = vand.u32 %v119, 4294901760
    %v391 = vsub.f32 %v119, %v390
    %v392 = vand.u32 %v391, 4294901760
    %393 = vmatpush.msra.mxu0 %v392
    %v394 = vand.u32 %v116, 4294901760
    %v395 = vsub.f32 %v116, %v394
    %v396 = vand.u32 %v395, 4294901760
    %397 = vmatpush.msra.mxu0 %v396
    %v398 = vand.u32 %v113, 4294901760
    %v399 = vsub.f32 %v113, %v398
    %v400 = vand.u32 %v399, 4294901760
    %401 = vmatpush.msra.mxu0 %v400
    %v402 = vand.u32 %v110, 4294901760
    %v403 = vsub.f32 %v110, %v402
    %v404 = vand.u32 %v403, 4294901760
    %405 = vmatpush.msra.mxu0 %v404
    %v406 = vand.u32 %v107, 4294901760
    %v407 = vsub.f32 %v107, %v406
    %v408 = vand.u32 %v407, 4294901760
    %409 = vmatpush.msra.mxu0 %v408
    %v410 = vand.u32 %v104, 4294901760
    %v411 = vsub.f32 %v104, %v410
    %v412 = vand.u32 %v411, 4294901760
    %413 = vmatpush.msra.mxu0 %v412
    %v414 = vand.u32 %v101, 4294901760
    %v415 = vsub.f32 %v101, %v414
    %v416 = vand.u32 %v415, 4294901760
    %417 = vmatpush.msra.mxu0 %v416
    %v418 = vand.u32 %v98, 4294901760
    %v419 = vsub.f32 %v98, %v418
    %v420 = vand.u32 %v419, 4294901760
    %421 = vmatpush.msra.mxu0 %v420
    %v422 = vand.u32 %v95, 4294901760
    %v423 = vsub.f32 %v95, %v422
    %v424 = vand.u32 %v423, 4294901760
    %425 = vmatpush.msra.mxu0 %v424
    %v426 = vand.u32 %v92, 4294901760
    %v427 = vsub.f32 %v92, %v426
    %v428 = vand.u32 %v427, 4294901760
    %429 = vmatpush.msra.mxu0 %v428
    %v430 = vand.u32 %v89, 4294901760
    %v431 = vsub.f32 %v89, %v430
    %v432 = vand.u32 %v431, 4294901760
    %433 = vmatpush.msra.mxu0 %v432
    %v434 = vand.u32 %v86, 4294901760
    %v435 = vsub.f32 %v86, %v434
    %v436 = vand.u32 %v435, 4294901760
    %437 = vmatpush.msra.mxu0 %v436
    %v438 = vand.u32 %v83, 4294901760
    %v439 = vsub.f32 %v83, %v438
    %v440 = vand.u32 %v439, 4294901760
    %441 = vmatpush.msra.mxu0 %v440
    %v442 = vand.u32 %v132, 4294901760
    %443 = vmatmul.f32.gmra.mxu0 %v442
    %v444 = vpop.f32.mrf.mxu0
    %v445 = vadd.f32 %v376, %v444
    %446 = vdwg.mxu0
    %v447 = vand.u32 %v128, 4294901760
    %448 = vmatpush.msra.mxu0 %v447
    %v449 = vand.u32 %v125, 4294901760
    %450 = vmatpush.msra.mxu0 %v449
    %v451 = vand.u32 %v122, 4294901760
    %452 = vmatpush.msra.mxu0 %v451
    %v453 = vand.u32 %v119, 4294901760
    %454 = vmatpush.msra.mxu0 %v453
    %v455 = vand.u32 %v116, 4294901760
    %456 = vmatpush.msra.mxu0 %v455
    %v457 = vand.u32 %v113, 4294901760
    %458 = vmatpush.msra.mxu0 %v457
    %v459 = vand.u32 %v110, 4294901760
    %460 = vmatpush.msra.mxu0 %v459
    %v461 = vand.u32 %v107, 4294901760
    %462 = vmatpush.msra.mxu0 %v461
    %v463 = vand.u32 %v104, 4294901760
    %464 = vmatpush.msra.mxu0 %v463
    %v465 = vand.u32 %v101, 4294901760
    %466 = vmatpush.msra.mxu0 %v465
    %v467 = vand.u32 %v98, 4294901760
    %468 = vmatpush.msra.mxu0 %v467
    %v469 = vand.u32 %v95, 4294901760
    %470 = vmatpush.msra.mxu0 %v469
    %v471 = vand.u32 %v92, 4294901760
    %472 = vmatpush.msra.mxu0 %v471
    %v473 = vand.u32 %v89, 4294901760
    %474 = vmatpush.msra.mxu0 %v473
    %v475 = vand.u32 %v86, 4294901760
    %476 = vmatpush.msra.mxu0 %v475
    %v477 = vand.u32 %v83, 4294901760
    %478 = vmatpush.msra.mxu0 %v477
    %v479 = vand.u32 %v132, 4294901760
    %480 = vmatmul.f32.gmra.mxu0 %v479
    %v481 = vpop.f32.mrf.mxu0
    %v482 = vadd.f32 %v445, %v481
    %483 = vdwg.mxu0
    %v484 = vand.u32 %v129, 4294901760
    %485 = vmatpush.msra.mxu0 %v484
    %v486 = vand.u32 %v126, 4294901760
    %487 = vmatpush.msra.mxu0 %v486
    %v488 = vand.u32 %v123, 4294901760
    %489 = vmatpush.msra.mxu0 %v488
    %v490 = vand.u32 %v120, 4294901760
    %491 = vmatpush.msra.mxu0 %v490
    %v492 = vand.u32 %v117, 4294901760
    %493 = vmatpush.msra.mxu0 %v492
    %v494 = vand.u32 %v114, 4294901760
    %495 = vmatpush.msra.mxu0 %v494
    %v496 = vand.u32 %v111, 4294901760
    %497 = vmatpush.msra.mxu0 %v496
    %v498 = vand.u32 %v108, 4294901760
    %499 = vmatpush.msra.mxu0 %v498
    %v500 = vand.u32 %v105, 4294901760
    %501 = vmatpush.msra.mxu0 %v500
    %v502 = vand.u32 %v102, 4294901760
    %503 = vmatpush.msra.mxu0 %v502
    %v504 = vand.u32 %v99, 4294901760
    %505 = vmatpush.msra.mxu0 %v504
    %v506 = vand.u32 %v96, 4294901760
    %507 = vmatpush.msra.mxu0 %v506
    %v508 = vand.u32 %v93, 4294901760
    %509 = vmatpush.msra.mxu0 %v508
    %v510 = vand.u32 %v90, 4294901760
    %511 = vmatpush.msra.mxu0 %v510
    %v512 = vand.u32 %v87, 4294901760
    %513 = vmatpush.msra.mxu0 %v512
    %v514 = vand.u32 %v84, 4294901760
    %515 = vmatpush.msra.mxu0 %v514
    %v516 = vand.u32 %v132, 4294901760
    %v517 = vsub.f32 %v132, %v516
    %v518 = vand.u32 %v517, 4294901760
    %v519 = vsub.f32 %v517, %v518
    %v520 = vand.u32 %v519, 4294901760
    %521 = vmatmul.f32.gmra.mxu0 %v520
    %v522 = vpop.f32.mrf.mxu0
    %v523 = vadd.f32 %v138, %v522
    %524 = vdwg.mxu0
    %v525 = vand.u32 %v129, 4294901760
    %v526 = vsub.f32 %v129, %v525
    %v527 = vand.u32 %v526, 4294901760
    %v528 = vsub.f32 %v526, %v527
    %v529 = vand.u32 %v528, 4294901760
    %530 = vmatpush.msra.mxu0 %v529
    %v531 = vand.u32 %v126, 4294901760
    %v532 = vsub.f32 %v126, %v531
    %v533 = vand.u32 %v532, 4294901760
    %v534 = vsub.f32 %v532, %v533
    %v535 = vand.u32 %v534, 4294901760
    %536 = vmatpush.msra.mxu0 %v535
    %v537 = vand.u32 %v123, 4294901760
    %v538 = vsub.f32 %v123, %v537
    %v539 = vand.u32 %v538, 4294901760
    %v540 = vsub.f32 %v538, %v539
    %v541 = vand.u32 %v540, 4294901760
    %542 = vmatpush.msra.mxu0 %v541
    %v543 = vand.u32 %v120, 4294901760
    %v544 = vsub.f32 %v120, %v543
    %v545 = vand.u32 %v544, 4294901760
    %v546 = vsub.f32 %v544, %v545
    %v547 = vand.u32 %v546, 4294901760
    %548 = vmatpush.msra.mxu0 %v547
    %v549 = vand.u32 %v117, 4294901760
    %v550 = vsub.f32 %v117, %v549
    %v551 = vand.u32 %v550, 4294901760
    %v552 = vsub.f32 %v550, %v551
    %v553 = vand.u32 %v552, 4294901760
    %554 = vmatpush.msra.mxu0 %v553
    %v555 = vand.u32 %v114, 4294901760
    %v556 = vsub.f32 %v114, %v555
    %v557 = vand.u32 %v556, 4294901760
    %v558 = vsub.f32 %v556, %v557
    %v559 = vand.u32 %v558, 4294901760
    %560 = vmatpush.msra.mxu0 %v559
    %v561 = vand.u32 %v111, 4294901760
    %v562 = vsub.f32 %v111, %v561
    %v563 = vand.u32 %v562, 4294901760
    %v564 = vsub.f32 %v562, %v563
    %v565 = vand.u32 %v564, 4294901760
    %566 = vmatpush.msra.mxu0 %v565
    %v567 = vand.u32 %v108, 4294901760
    %v568 = vsub.f32 %v108, %v567
    %v569 = vand.u32 %v568, 4294901760
    %v570 = vsub.f32 %v568, %v569
    %v571 = vand.u32 %v570, 4294901760
    %572 = vmatpush.msra.mxu0 %v571
    %v573 = vand.u32 %v105, 4294901760
    %v574 = vsub.f32 %v105, %v573
    %v575 = vand.u32 %v574, 4294901760
    %v576 = vsub.f32 %v574, %v575
    %v577 = vand.u32 %v576, 4294901760
    %578 = vmatpush.msra.mxu0 %v577
    %v579 = vand.u32 %v102, 4294901760
    %v580 = vsub.f32 %v102, %v579
    %v581 = vand.u32 %v580, 4294901760
    %v582 = vsub.f32 %v580, %v581
    %v583 = vand.u32 %v582, 4294901760
    %584 = vmatpush.msra.mxu0 %v583
    %v585 = vand.u32 %v99, 4294901760
    %v586 = vsub.f32 %v99, %v585
    %v587 = vand.u32 %v586, 4294901760
    %v588 = vsub.f32 %v586, %v587
    %v589 = vand.u32 %v588, 4294901760
    %590 = vmatpush.msra.mxu0 %v589
    %v591 = vand.u32 %v96, 4294901760
    %v592 = vsub.f32 %v96, %v591
    %v593 = vand.u32 %v592, 4294901760
    %v594 = vsub.f32 %v592, %v593
    %v595 = vand.u32 %v594, 4294901760
    %596 = vmatpush.msra.mxu0 %v595
    %v597 = vand.u32 %v93, 4294901760
    %v598 = vsub.f32 %v93, %v597
    %v599 = vand.u32 %v598, 4294901760
    %v600 = vsub.f32 %v598, %v599
    %v601 = vand.u32 %v600, 4294901760
    %602 = vmatpush.msra.mxu0 %v601
    %v603 = vand.u32 %v90, 4294901760
    %v604 = vsub.f32 %v90, %v603
    %v605 = vand.u32 %v604, 4294901760
    %v606 = vsub.f32 %v604, %v605
    %v607 = vand.u32 %v606, 4294901760
    %608 = vmatpush.msra.mxu0 %v607
    %v609 = vand.u32 %v87, 4294901760
    %v610 = vsub.f32 %v87, %v609
    %v611 = vand.u32 %v610, 4294901760
    %v612 = vsub.f32 %v610, %v611
    %v613 = vand.u32 %v612, 4294901760
    %614 = vmatpush.msra.mxu0 %v613
    %v615 = vand.u32 %v84, 4294901760
    %v616 = vsub.f32 %v84, %v615
    %v617 = vand.u32 %v616, 4294901760
    %v618 = vsub.f32 %v616, %v617
    %v619 = vand.u32 %v618, 4294901760
    %620 = vmatpush.msra.mxu0 %v619
    %v621 = vand.u32 %v132, 4294901760
    %622 = vmatmul.f32.gmra.mxu0 %v621
    %v623 = vpop.f32.mrf.mxu0
    %v624 = vadd.f32 %v523, %v623
    %625 = vdwg.mxu0
    %v626 = vand.u32 %v129, 4294901760
    %v627 = vsub.f32 %v129, %v626
    %628 = vmatpush.msra.mxu0 %v627
    %v629 = vand.u32 %v126, 4294901760
    %v630 = vsub.f32 %v126, %v629
    %631 = vmatpush.msra.mxu0 %v630
    %v632 = vand.u32 %v123, 4294901760
    %v633 = vsub.f32 %v123, %v632
    %634 = vmatpush.msra.mxu0 %v633
    %v635 = vand.u32 %v120, 4294901760
    %v636 = vsub.f32 %v120, %v635
    %637 = vmatpush.msra.mxu0 %v636
    %v638 = vand.u32 %v117, 4294901760
    %v639 = vsub.f32 %v117, %v638
    %640 = vmatpush.msra.mxu0 %v639
    %v641 = vand.u32 %v114, 4294901760
    %v642 = vsub.f32 %v114, %v641
    %643 = vmatpush.msra.mxu0 %v642
    %v644 = vand.u32 %v111, 4294901760
    %v645 = vsub.f32 %v111, %v644
    %646 = vmatpush.msra.mxu0 %v645
    %v647 = vand.u32 %v108, 4294901760
    %v648 = vsub.f32 %v108, %v647
    %649 = vmatpush.msra.mxu0 %v648
    %v650 = vand.u32 %v105, 4294901760
    %v651 = vsub.f32 %v105, %v650
    %652 = vmatpush.msra.mxu0 %v651
    %v653 = vand.u32 %v102, 4294901760
    %v654 = vsub.f32 %v102, %v653
    %655 = vmatpush.msra.mxu0 %v654
    %v656 = vand.u32 %v99, 4294901760
    %v657 = vsub.f32 %v99, %v656
    %658 = vmatpush.msra.mxu0 %v657
    %v659 = vand.u32 %v96, 4294901760
    %v660 = vsub.f32 %v96, %v659
    %661 = vmatpush.msra.mxu0 %v660
    %v662 = vand.u32 %v93, 4294901760
    %v663 = vsub.f32 %v93, %v662
    %664 = vmatpush.msra.mxu0 %v663
    %v665 = vand.u32 %v90, 4294901760
    %v666 = vsub.f32 %v90, %v665
    %667 = vmatpush.msra.mxu0 %v666
    %v668 = vand.u32 %v87, 4294901760
    %v669 = vsub.f32 %v87, %v668
    %670 = vmatpush.msra.mxu0 %v669
    %v671 = vand.u32 %v84, 4294901760
    %v672 = vsub.f32 %v84, %v671
    %673 = vmatpush.msra.mxu0 %v672
    %v674 = vand.u32 %v132, 4294901760
    %v675 = vsub.f32 %v132, %v674
    %676 = vmatmul.f32.gmra.mxu0 %v675
    %v677 = vpop.f32.mrf.mxu0
    %v678 = vadd.f32 %v624, %v677
    %679 = vdwg.mxu0
    %v680 = vand.u32 %v129, 4294901760
    %681 = vmatpush.msra.mxu0 %v680
    %v682 = vand.u32 %v126, 4294901760
    %683 = vmatpush.msra.mxu0 %v682
    %v684 = vand.u32 %v123, 4294901760
    %685 = vmatpush.msra.mxu0 %v684
    %v686 = vand.u32 %v120, 4294901760
    %687 = vmatpush.msra.mxu0 %v686
    %v688 = vand.u32 %v117, 4294901760
    %689 = vmatpush.msra.mxu0 %v688
    %v690 = vand.u32 %v114, 4294901760
    %691 = vmatpush.msra.mxu0 %v690
    %v692 = vand.u32 %v111, 4294901760
    %693 = vmatpush.msra.mxu0 %v692
    %v694 = vand.u32 %v108, 4294901760
    %695 = vmatpush.msra.mxu0 %v694
    %v696 = vand.u32 %v105, 4294901760
    %697 = vmatpush.msra.mxu0 %v696
    %v698 = vand.u32 %v102, 4294901760
    %699 = vmatpush.msra.mxu0 %v698
    %v700 = vand.u32 %v99, 4294901760
    %701 = vmatpush.msra.mxu0 %v700
    %v702 = vand.u32 %v96, 4294901760
    %703 = vmatpush.msra.mxu0 %v702
    %v704 = vand.u32 %v93, 4294901760
    %705 = vmatpush.msra.mxu0 %v704
    %v706 = vand.u32 %v90, 4294901760
    %707 = vmatpush.msra.mxu0 %v706
    %v708 = vand.u32 %v87, 4294901760
    %709 = vmatpush.msra.mxu0 %v708
    %v710 = vand.u32 %v84, 4294901760
    %711 = vmatpush.msra.mxu0 %v710
    %v712 = vand.u32 %v132, 4294901760
    %v713 = vsub.f32 %v132, %v712
    %v714 = vand.u32 %v713, 4294901760
    %715 = vmatmul.f32.gmra.mxu0 %v714
    %v716 = vpop.f32.mrf.mxu0
    %v717 = vadd.f32 %v678, %v716
    %718 = vdwg.mxu0
    %v719 = vand.u32 %v129, 4294901760
    %v720 = vsub.f32 %v129, %v719
    %v721 = vand.u32 %v720, 4294901760
    %722 = vmatpush.msra.mxu0 %v721
    %v723 = vand.u32 %v126, 4294901760
    %v724 = vsub.f32 %v126, %v723
    %v725 = vand.u32 %v724, 4294901760
    %726 = vmatpush.msra.mxu0 %v725
    %v727 = vand.u32 %v123, 4294901760
    %v728 = vsub.f32 %v123, %v727
    %v729 = vand.u32 %v728, 4294901760
    %730 = vmatpush.msra.mxu0 %v729
    %v731 = vand.u32 %v120, 4294901760
    %v732 = vsub.f32 %v120, %v731
    %v733 = vand.u32 %v732, 4294901760
    %734 = vmatpush.msra.mxu0 %v733
    %v735 = vand.u32 %v117, 4294901760
    %v736 = vsub.f32 %v117, %v735
    %v737 = vand.u32 %v736, 4294901760
    %738 = vmatpush.msra.mxu0 %v737
    %v739 = vand.u32 %v114, 4294901760
    %v740 = vsub.f32 %v114, %v739
    %v741 = vand.u32 %v740, 4294901760
    %742 = vmatpush.msra.mxu0 %v741
    %v743 = vand.u32 %v111, 4294901760
    %v744 = vsub.f32 %v111, %v743
    %v745 = vand.u32 %v744, 4294901760
    %746 = vmatpush.msra.mxu0 %v745
    %v747 = vand.u32 %v108, 4294901760
    %v748 = vsub.f32 %v108, %v747
    %v749 = vand.u32 %v748, 4294901760
    %750 = vmatpush.msra.mxu0 %v749
    %v751 = vand.u32 %v105, 4294901760
    %v752 = vsub.f32 %v105, %v751
    %v753 = vand.u32 %v752, 4294901760
    %754 = vmatpush.msra.mxu0 %v753
    %v755 = vand.u32 %v102, 4294901760
    %v756 = vsub.f32 %v102, %v755
    %v757 = vand.u32 %v756, 4294901760
    %758 = vmatpush.msra.mxu0 %v757
    %v759 = vand.u32 %v99, 4294901760
    %v760 = vsub.f32 %v99, %v759
    %v761 = vand.u32 %v760, 4294901760
    %762 = vmatpush.msra.mxu0 %v761
    %v763 = vand.u32 %v96, 4294901760
    %v764 = vsub.f32 %v96, %v763
    %v765 = vand.u32 %v764, 4294901760
    %766 = vmatpush.msra.mxu0 %v765
    %v767 = vand.u32 %v93, 4294901760
    %v768 = vsub.f32 %v93, %v767
    %v769 = vand.u32 %v768, 4294901760
    %770 = vmatpush.msra.mxu0 %v769
    %v771 = vand.u32 %v90, 4294901760
    %v772 = vsub.f32 %v90, %v771
    %v773 = vand.u32 %v772, 4294901760
    %774 = vmatpush.msra.mxu0 %v773
    %v775 = vand.u32 %v87, 4294901760
    %v776 = vsub.f32 %v87, %v775
    %v777 = vand.u32 %v776, 4294901760
    %778 = vmatpush.msra.mxu0 %v777
    %v779 = vand.u32 %v84, 4294901760
    %v780 = vsub.f32 %v84, %v779
    %v781 = vand.u32 %v780, 4294901760
    %782 = vmatpush.msra.mxu0 %v781
    %v783 = vand.u32 %v132, 4294901760
    %784 = vmatmul.f32.gmra.mxu0 %v783
    %v785 = vpop.f32.mrf.mxu0
    %v786 = vadd.f32 %v717, %v785
    %787 = vdwg.mxu0
    %v788 = vand.u32 %v129, 4294901760
    %789 = vmatpush.msra.mxu0 %v788
    %v790 = vand.u32 %v126, 4294901760
    %791 = vmatpush.msra.mxu0 %v790
    %v792 = vand.u32 %v123, 4294901760
    %793 = vmatpush.msra.mxu0 %v792
    %v794 = vand.u32 %v120, 4294901760
    %795 = vmatpush.msra.mxu0 %v794
    %v796 = vand.u32 %v117, 4294901760
    %797 = vmatpush.msra.mxu0 %v796
    %v798 = vand.u32 %v114, 4294901760
    %799 = vmatpush.msra.mxu0 %v798
    %v800 = vand.u32 %v111, 4294901760
    %801 = vmatpush.msra.mxu0 %v800
    %v802 = vand.u32 %v108, 4294901760
    %803 = vmatpush.msra.mxu0 %v802
    %v804 = vand.u32 %v105, 4294901760
    %805 = vmatpush.msra.mxu0 %v804
    %v806 = vand.u32 %v102, 4294901760
    %807 = vmatpush.msra.mxu0 %v806
    %v808 = vand.u32 %v99, 4294901760
    %809 = vmatpush.msra.mxu0 %v808
    %v810 = vand.u32 %v96, 4294901760
    %811 = vmatpush.msra.mxu0 %v810
    %v812 = vand.u32 %v93, 4294901760
    %813 = vmatpush.msra.mxu0 %v812
    %v814 = vand.u32 %v90, 4294901760
    %815 = vmatpush.msra.mxu0 %v814
    %v816 = vand.u32 %v87, 4294901760
    %817 = vmatpush.msra.mxu0 %v816
    %v818 = vand.u32 %v84, 4294901760
    %819 = vmatpush.msra.mxu0 %v818
    %v820 = vand.u32 %v132, 4294901760
    %821 = vmatmul.f32.gmra.mxu0 %v820
    %v822 = vpop.f32.mrf.mxu0
    %v823 = vadd.f32 %v786, %v822
    %824 = vdwg.mxu0
    %v825 = vand.u32 %v130, 4294901760
    %826 = vmatpush.msra.mxu0 %v825
    %v827 = vand.u32 %v127, 4294901760
    %828 = vmatpush.msra.mxu0 %v827
    %v829 = vand.u32 %v124, 4294901760
    %830 = vmatpush.msra.mxu0 %v829
    %v831 = vand.u32 %v121, 4294901760
    %832 = vmatpush.msra.mxu0 %v831
    %v833 = vand.u32 %v118, 4294901760
    %834 = vmatpush.msra.mxu0 %v833
    %v835 = vand.u32 %v115, 4294901760
    %836 = vmatpush.msra.mxu0 %v835
    %v837 = vand.u32 %v112, 4294901760
    %838 = vmatpush.msra.mxu0 %v837
    %v839 = vand.u32 %v109, 4294901760
    %840 = vmatpush.msra.mxu0 %v839
    %v841 = vand.u32 %v106, 4294901760
    %842 = vmatpush.msra.mxu0 %v841
    %v843 = vand.u32 %v103, 4294901760
    %844 = vmatpush.msra.mxu0 %v843
    %v845 = vand.u32 %v100, 4294901760
    %846 = vmatpush.msra.mxu0 %v845
    %v847 = vand.u32 %v97, 4294901760
    %848 = vmatpush.msra.mxu0 %v847
    %v849 = vand.u32 %v94, 4294901760
    %850 = vmatpush.msra.mxu0 %v849
    %v851 = vand.u32 %v91, 4294901760
    %852 = vmatpush.msra.mxu0 %v851
    %v853 = vand.u32 %v88, 4294901760
    %854 = vmatpush.msra.mxu0 %v853
    %v855 = vand.u32 %v85, 4294901760
    %856 = vmatpush.msra.mxu0 %v855
    %v857 = vand.u32 %v132, 4294901760
    %v858 = vsub.f32 %v132, %v857
    %v859 = vand.u32 %v858, 4294901760
    %v860 = vsub.f32 %v858, %v859
    %v861 = vand.u32 %v860, 4294901760
    %862 = vmatmul.f32.gmra.mxu0 %v861
    %v863 = vpop.f32.mrf.mxu0
    %v864 = vadd.f32 %v139, %v863
    %865 = vdwg.mxu0
    %v866 = vand.u32 %v130, 4294901760
    %v867 = vsub.f32 %v130, %v866
    %v868 = vand.u32 %v867, 4294901760
    %v869 = vsub.f32 %v867, %v868
    %v870 = vand.u32 %v869, 4294901760
    %871 = vmatpush.msra.mxu0 %v870
    %v872 = vand.u32 %v127, 4294901760
    %v873 = vsub.f32 %v127, %v872
    %v874 = vand.u32 %v873, 4294901760
    %v875 = vsub.f32 %v873, %v874
    %v876 = vand.u32 %v875, 4294901760
    %877 = vmatpush.msra.mxu0 %v876
    %v878 = vand.u32 %v124, 4294901760
    %v879 = vsub.f32 %v124, %v878
    %v880 = vand.u32 %v879, 4294901760
    %v881 = vsub.f32 %v879, %v880
    %v882 = vand.u32 %v881, 4294901760
    %883 = vmatpush.msra.mxu0 %v882
    %v884 = vand.u32 %v121, 4294901760
    %v885 = vsub.f32 %v121, %v884
    %v886 = vand.u32 %v885, 4294901760
    %v887 = vsub.f32 %v885, %v886
    %v888 = vand.u32 %v887, 4294901760
    %889 = vmatpush.msra.mxu0 %v888
    %v890 = vand.u32 %v118, 4294901760
    %v891 = vsub.f32 %v118, %v890
    %v892 = vand.u32 %v891, 4294901760
    %v893 = vsub.f32 %v891, %v892
    %v894 = vand.u32 %v893, 4294901760
    %895 = vmatpush.msra.mxu0 %v894
    %v896 = vand.u32 %v115, 4294901760
    %v897 = vsub.f32 %v115, %v896
    %v898 = vand.u32 %v897, 4294901760
    %v899 = vsub.f32 %v897, %v898
    %v900 = vand.u32 %v899, 4294901760
    %901 = vmatpush.msra.mxu0 %v900
    %v902 = vand.u32 %v112, 4294901760
    %v903 = vsub.f32 %v112, %v902
    %v904 = vand.u32 %v903, 4294901760
    %v905 = vsub.f32 %v903, %v904
    %v906 = vand.u32 %v905, 4294901760
    %907 = vmatpush.msra.mxu0 %v906
    %v908 = vand.u32 %v109, 4294901760
    %v909 = vsub.f32 %v109, %v908
    %v910 = vand.u32 %v909, 4294901760
    %v911 = vsub.f32 %v909, %v910
    %v912 = vand.u32 %v911, 4294901760
    %913 = vmatpush.msra.mxu0 %v912
    %v914 = vand.u32 %v106, 4294901760
    %v915 = vsub.f32 %v106, %v914
    %v916 = vand.u32 %v915, 4294901760
    %v917 = vsub.f32 %v915, %v916
    %v918 = vand.u32 %v917, 4294901760
    %919 = vmatpush.msra.mxu0 %v918
    %v920 = vand.u32 %v103, 4294901760
    %v921 = vsub.f32 %v103, %v920
    %v922 = vand.u32 %v921, 4294901760
    %v923 = vsub.f32 %v921, %v922
    %v924 = vand.u32 %v923, 4294901760
    %925 = vmatpush.msra.mxu0 %v924
    %v926 = vand.u32 %v100, 4294901760
    %v927 = vsub.f32 %v100, %v926
    %v928 = vand.u32 %v927, 4294901760
    %v929 = vsub.f32 %v927, %v928
    %v930 = vand.u32 %v929, 4294901760
    %931 = vmatpush.msra.mxu0 %v930
    %v932 = vand.u32 %v97, 4294901760
    %v933 = vsub.f32 %v97, %v932
    %v934 = vand.u32 %v933, 4294901760
    %v935 = vsub.f32 %v933, %v934
    %v936 = vand.u32 %v935, 4294901760
    %937 = vmatpush.msra.mxu0 %v936
    %v938 = vand.u32 %v94, 4294901760
    %v939 = vsub.f32 %v94, %v938
    %v940 = vand.u32 %v939, 4294901760
    %v941 = vsub.f32 %v939, %v940
    %v942 = vand.u32 %v941, 4294901760
    %943 = vmatpush.msra.mxu0 %v942
    %v944 = vand.u32 %v91, 4294901760
    %v945 = vsub.f32 %v91, %v944
    %v946 = vand.u32 %v945, 4294901760
    %v947 = vsub.f32 %v945, %v946
    %v948 = vand.u32 %v947, 4294901760
    %949 = vmatpush.msra.mxu0 %v948
    %v950 = vand.u32 %v88, 4294901760
    %v951 = vsub.f32 %v88, %v950
    %v952 = vand.u32 %v951, 4294901760
    %v953 = vsub.f32 %v951, %v952
    %v954 = vand.u32 %v953, 4294901760
    %955 = vmatpush.msra.mxu0 %v954
    %v956 = vand.u32 %v85, 4294901760
    %v957 = vsub.f32 %v85, %v956
    %v958 = vand.u32 %v957, 4294901760
    %v959 = vsub.f32 %v957, %v958
    %v960 = vand.u32 %v959, 4294901760
    %961 = vmatpush.msra.mxu0 %v960
    %v962 = vand.u32 %v132, 4294901760
    %963 = vmatmul.f32.gmra.mxu0 %v962
    %v964 = vpop.f32.mrf.mxu0
    %v965 = vadd.f32 %v864, %v964
    %966 = vdwg.mxu0
    %v967 = vand.u32 %v130, 4294901760
    %v968 = vsub.f32 %v130, %v967
    %969 = vmatpush.msra.mxu0 %v968
    %v970 = vand.u32 %v127, 4294901760
    %v971 = vsub.f32 %v127, %v970
    %972 = vmatpush.msra.mxu0 %v971
    %v973 = vand.u32 %v124, 4294901760
    %v974 = vsub.f32 %v124, %v973
    %975 = vmatpush.msra.mxu0 %v974
    %v976 = vand.u32 %v121, 4294901760
    %v977 = vsub.f32 %v121, %v976
    %978 = vmatpush.msra.mxu0 %v977
    %v979 = vand.u32 %v118, 4294901760
    %v980 = vsub.f32 %v118, %v979
    %981 = vmatpush.msra.mxu0 %v980
    %v982 = vand.u32 %v115, 4294901760
    %v983 = vsub.f32 %v115, %v982
    %984 = vmatpush.msra.mxu0 %v983
    %v985 = vand.u32 %v112, 4294901760
    %v986 = vsub.f32 %v112, %v985
    %987 = vmatpush.msra.mxu0 %v986
    %v988 = vand.u32 %v109, 4294901760
    %v989 = vsub.f32 %v109, %v988
    %990 = vmatpush.msra.mxu0 %v989
    %v991 = vand.u32 %v106, 4294901760
    %v992 = vsub.f32 %v106, %v991
    %993 = vmatpush.msra.mxu0 %v992
    %v994 = vand.u32 %v103, 4294901760
    %v995 = vsub.f32 %v103, %v994
    %996 = vmatpush.msra.mxu0 %v995
    %v997 = vand.u32 %v100, 4294901760
    %v998 = vsub.f32 %v100, %v997
    %999 = vmatpush.msra.mxu0 %v998
    %v1000 = vand.u32 %v97, 4294901760
    %v1001 = vsub.f32 %v97, %v1000
    %1002 = vmatpush.msra.mxu0 %v1001
    %v1003 = vand.u32 %v94, 4294901760
    %v1004 = vsub.f32 %v94, %v1003
    %1005 = vmatpush.msra.mxu0 %v1004
    %v1006 = vand.u32 %v91, 4294901760
    %v1007 = vsub.f32 %v91, %v1006
    %1008 = vmatpush.msra.mxu0 %v1007
    %v1009 = vand.u32 %v88, 4294901760
    %v1010 = vsub.f32 %v88, %v1009
    %1011 = vmatpush.msra.mxu0 %v1010
    %v1012 = vand.u32 %v85, 4294901760
    %v1013 = vsub.f32 %v85, %v1012
    %1014 = vmatpush.msra.mxu0 %v1013
    %v1015 = vand.u32 %v132, 4294901760
    %v1016 = vsub.f32 %v132, %v1015
    %1017 = vmatmul.f32.gmra.mxu0 %v1016
    %v1018 = vpop.f32.mrf.mxu0
    %v1019 = vadd.f32 %v965, %v1018
    %1020 = vdwg.mxu0
    %v1021 = vand.u32 %v130, 4294901760
    %1022 = vmatpush.msra.mxu0 %v1021
    %v1023 = vand.u32 %v127, 4294901760
    %1024 = vmatpush.msra.mxu0 %v1023
    %v1025 = vand.u32 %v124, 4294901760
    %1026 = vmatpush.msra.mxu0 %v1025
    %v1027 = vand.u32 %v121, 4294901760
    %1028 = vmatpush.msra.mxu0 %v1027
    %v1029 = vand.u32 %v118, 4294901760
    %1030 = vmatpush.msra.mxu0 %v1029
    %v1031 = vand.u32 %v115, 4294901760
    %1032 = vmatpush.msra.mxu0 %v1031
    %v1033 = vand.u32 %v112, 4294901760
    %1034 = vmatpush.msra.mxu0 %v1033
    %v1035 = vand.u32 %v109, 4294901760
    %1036 = vmatpush.msra.mxu0 %v1035
    %v1037 = vand.u32 %v106, 4294901760
    %1038 = vmatpush.msra.mxu0 %v1037
    %v1039 = vand.u32 %v103, 4294901760
    %1040 = vmatpush.msra.mxu0 %v1039
    %v1041 = vand.u32 %v100, 4294901760
    %1042 = vmatpush.msra.mxu0 %v1041
    %v1043 = vand.u32 %v97, 4294901760
    %1044 = vmatpush.msra.mxu0 %v1043
    %v1045 = vand.u32 %v94, 4294901760
    %1046 = vmatpush.msra.mxu0 %v1045
    %v1047 = vand.u32 %v91, 4294901760
    %1048 = vmatpush.msra.mxu0 %v1047
    %v1049 = vand.u32 %v88, 4294901760
    %1050 = vmatpush.msra.mxu0 %v1049
    %v1051 = vand.u32 %v85, 4294901760
    %1052 = vmatpush.msra.mxu0 %v1051
    %v1053 = vand.u32 %v132, 4294901760
    %v1054 = vsub.f32 %v132, %v1053
    %v1055 = vand.u32 %v1054, 4294901760
    %1056 = vmatmul.f32.gmra.mxu0 %v1055
    %v1057 = vpop.f32.mrf.mxu0
    %v1058 = vadd.f32 %v1019, %v1057
    %1059 = vdwg.mxu0
    %v1060 = vand.u32 %v130, 4294901760
    %v1061 = vsub.f32 %v130, %v1060
    %v1062 = vand.u32 %v1061, 4294901760
    %1063 = vmatpush.msra.mxu0 %v1062
    %v1064 = vand.u32 %v127, 4294901760
    %v1065 = vsub.f32 %v127, %v1064
    %v1066 = vand.u32 %v1065, 4294901760
    %1067 = vmatpush.msra.mxu0 %v1066
    %v1068 = vand.u32 %v124, 4294901760
    %v1069 = vsub.f32 %v124, %v1068
    %v1070 = vand.u32 %v1069, 4294901760
    %1071 = vmatpush.msra.mxu0 %v1070
    %v1072 = vand.u32 %v121, 4294901760
    %v1073 = vsub.f32 %v121, %v1072
    %v1074 = vand.u32 %v1073, 4294901760
    %1075 = vmatpush.msra.mxu0 %v1074
    %v1076 = vand.u32 %v118, 4294901760
    %v1077 = vsub.f32 %v118, %v1076
    %v1078 = vand.u32 %v1077, 4294901760
    %1079 = vmatpush.msra.mxu0 %v1078
    %v1080 = vand.u32 %v115, 4294901760
    %v1081 = vsub.f32 %v115, %v1080
    %v1082 = vand.u32 %v1081, 4294901760
    %1083 = vmatpush.msra.mxu0 %v1082
    %v1084 = vand.u32 %v112, 4294901760
    %v1085 = vsub.f32 %v112, %v1084
    %v1086 = vand.u32 %v1085, 4294901760
    %1087 = vmatpush.msra.mxu0 %v1086
    %v1088 = vand.u32 %v109, 4294901760
    %v1089 = vsub.f32 %v109, %v1088
    %v1090 = vand.u32 %v1089, 4294901760
    %1091 = vmatpush.msra.mxu0 %v1090
    %v1092 = vand.u32 %v106, 4294901760
    %v1093 = vsub.f32 %v106, %v1092
    %v1094 = vand.u32 %v1093, 4294901760
    %1095 = vmatpush.msra.mxu0 %v1094
    %v1096 = vand.u32 %v103, 4294901760
    %v1097 = vsub.f32 %v103, %v1096
    %v1098 = vand.u32 %v1097, 4294901760
    %1099 = vmatpush.msra.mxu0 %v1098
    %v1100 = vand.u32 %v100, 4294901760
    %v1101 = vsub.f32 %v100, %v1100
    %v1102 = vand.u32 %v1101, 4294901760
    %1103 = vmatpush.msra.mxu0 %v1102
    %v1104 = vand.u32 %v97, 4294901760
    %v1105 = vsub.f32 %v97, %v1104
    %v1106 = vand.u32 %v1105, 4294901760
    %1107 = vmatpush.msra.mxu0 %v1106
    %v1108 = vand.u32 %v94, 4294901760
    %v1109 = vsub.f32 %v94, %v1108
    %v1110 = vand.u32 %v1109, 4294901760
    %1111 = vmatpush.msra.mxu0 %v1110
    %v1112 = vand.u32 %v91, 4294901760
    %v1113 = vsub.f32 %v91, %v1112
    %v1114 = vand.u32 %v1113, 4294901760
    %1115 = vmatpush.msra.mxu0 %v1114
    %v1116 = vand.u32 %v88, 4294901760
    %v1117 = vsub.f32 %v88, %v1116
    %v1118 = vand.u32 %v1117, 4294901760
    %1119 = vmatpush.msra.mxu0 %v1118
    %v1120 = vand.u32 %v85, 4294901760
    %v1121 = vsub.f32 %v85, %v1120
    %v1122 = vand.u32 %v1121, 4294901760
    %1123 = vmatpush.msra.mxu0 %v1122
    %v1124 = vand.u32 %v132, 4294901760
    %1125 = vmatmul.f32.gmra.mxu0 %v1124
    %v1126 = vpop.f32.mrf.mxu0
    %v1127 = vadd.f32 %v1058, %v1126
    %1128 = vdwg.mxu0
    %v1129 = vand.u32 %v130, 4294901760
    %1130 = vmatpush.msra.mxu0 %v1129
    %v1131 = vand.u32 %v127, 4294901760
    %1132 = vmatpush.msra.mxu0 %v1131
    %v1133 = vand.u32 %v124, 4294901760
    %1134 = vmatpush.msra.mxu0 %v1133
    %v1135 = vand.u32 %v121, 4294901760
    %1136 = vmatpush.msra.mxu0 %v1135
    %v1137 = vand.u32 %v118, 4294901760
    %1138 = vmatpush.msra.mxu0 %v1137
    %v1139 = vand.u32 %v115, 4294901760
    %1140 = vmatpush.msra.mxu0 %v1139
    %v1141 = vand.u32 %v112, 4294901760
    %1142 = vmatpush.msra.mxu0 %v1141
    %v1143 = vand.u32 %v109, 4294901760
    %1144 = vmatpush.msra.mxu0 %v1143
    %v1145 = vand.u32 %v106, 4294901760
    %1146 = vmatpush.msra.mxu0 %v1145
    %v1147 = vand.u32 %v103, 4294901760
    %1148 = vmatpush.msra.mxu0 %v1147
    %v1149 = vand.u32 %v100, 4294901760
    %1150 = vmatpush.msra.mxu0 %v1149
    %v1151 = vand.u32 %v97, 4294901760
    %1152 = vmatpush.msra.mxu0 %v1151
    %v1153 = vand.u32 %v94, 4294901760
    %1154 = vmatpush.msra.mxu0 %v1153
    %v1155 = vand.u32 %v91, 4294901760
    %1156 = vmatpush.msra.mxu0 %v1155
    %v1157 = vand.u32 %v88, 4294901760
    %1158 = vmatpush.msra.mxu0 %v1157
    %v1159 = vand.u32 %v85, 4294901760
    %1160 = vmatpush.msra.mxu0 %v1159
    %v1161 = vand.u32 %v132, 4294901760
    %1162 = vmatmul.f32.gmra.mxu0 %v1161
    %v1163 = vpop.f32.mrf.mxu0
    %v1164 = vadd.f32 %v1127, %v1163
    %1165 = vdwg.mxu0
    %v1166 = vadd.f32 %v133, %v482
    %v1167 = vadd.f32 %v134, %v823
    %v1168 = vxor.u32 %v1166, 2147483648
    %v1169 = vxor.u32 %v1167, 2147483648
    %v1170 = vmul.f32 %v1168, 1.442695
    %v1171 = vpow.pop %v1170
    %v1172 = vmul.f32 %v1169, 1.442695
    %v1173 = vpow.pop %v1172
    %v1174 = vadd.f32 %v1171, 1.0
    %v1175 = vadd.f32 %v1173, 1.0
    %v1176 = vrcp.pop %v1174
    %v1177 = vmul.f32 %v1174, %v1176
    %v1178 = vsub.f32 1.0, %v1177
    %v1179 = vmul.f32 %v1176, %v1178
    %v1180 = vadd.f32 %v1176, %v1179
    %vm1181 = vweird.f32 %v1174
    %vm1182 = vweird.f32 %v1176
    %vm1183 = vmor %vm1181, %vm1182
    %v1184 = vsel %vm1183, %v1176, %v1180
    %v1185 = vand.u32 2147483647, %v1174
    %vm1186 = vcmp.eq.f32.partialorder %v1185, 8.507059e+37
    %v1187 = vand.u32 %v1174, 2147483648
    %v1188 = vor.u32 1.1754944e-38, %v1187
    %v1189 = vsel %vm1186, %v1188, %v1184
    %v1190 = vmul.f32 1.0, %v1189
    %v1191 = vrcp.pop %v1175
    %v1192 = vmul.f32 %v1175, %v1191
    %v1193 = vsub.f32 1.0, %v1192
    %v1194 = vmul.f32 %v1191, %v1193
    %v1195 = vadd.f32 %v1191, %v1194
    %vm1196 = vweird.f32 %v1175
    %vm1197 = vweird.f32 %v1191
    %vm1198 = vmor %vm1196, %vm1197
    %v1199 = vsel %vm1198, %v1191, %v1195
    %v1200 = vand.u32 2147483647, %v1175
    %vm1201 = vcmp.eq.f32.partialorder %v1200, 8.507059e+37
    %v1202 = vand.u32 %v1175, 2147483648
    %v1203 = vor.u32 1.1754944e-38, %v1202
    %v1204 = vsel %vm1201, %v1203, %v1199
    %v1205 = vmul.f32 1.0, %v1204
    %v1206 = vmul.f32 %v1190, %v1164
    %v1207 = vadd.f32 %v135, %v1206
    %v1208 = vtanh.pop %v1207
    %v1209 = vsub.f32 1.0, %v1205
    %v1210 = vmul.f32 %v1209, %v1208
    %v1211 = vmul.f32 %v1205, %v132
    %v1212 = vadd.f32 %v1210, %v1211
    %1213 = vst [vmem:[#allocation11] sm:$0xff] %v1212
    %s1214 = scalar_lea.vmem [#allocation3], 24
    %v1215 = vld [vmem:[%s1214] sm:$0xff]
    %v1216 = vld [vmem:[%s1214 + $0x8] sm:$0xff]
    %v1217 = vld [vmem:[%s1214 + $0x10] sm:$0xff]
    %v1218 = vand.u32 %v128, 4294901760
    %1219 = vmatpush.msra.mxu0 %v1218
    %v1220 = vand.u32 %v125, 4294901760
    %1221 = vmatpush.msra.mxu0 %v1220
    %v1222 = vand.u32 %v122, 4294901760
    %1223 = vmatpush.msra.mxu0 %v1222
    %v1224 = vand.u32 %v119, 4294901760
    %1225 = vmatpush.msra.mxu0 %v1224
    %v1226 = vand.u32 %v116, 4294901760
    %1227 = vmatpush.msra.mxu0 %v1226
    %v1228 = vand.u32 %v113, 4294901760
    %1229 = vmatpush.msra.mxu0 %v1228
    %v1230 = vand.u32 %v110, 4294901760
    %1231 = vmatpush.msra.mxu0 %v1230
    %v1232 = vand.u32 %v107, 4294901760
    %1233 = vmatpush.msra.mxu0 %v1232
    %v1234 = vand.u32 %v104, 4294901760
    %1235 = vmatpush.msra.mxu0 %v1234
    %v1236 = vand.u32 %v101, 4294901760
    %1237 = vmatpush.msra.mxu0 %v1236
    %v1238 = vand.u32 %v98, 4294901760
    %1239 = vmatpush.msra.mxu0 %v1238
    %v1240 = vand.u32 %v95, 4294901760
    %1241 = vmatpush.msra.mxu0 %v1240
    %v1242 = vand.u32 %v92, 4294901760
    %1243 = vmatpush.msra.mxu0 %v1242
    %v1244 = vand.u32 %v89, 4294901760
    %1245 = vmatpush.msra.mxu0 %v1244
    %v1246 = vand.u32 %v86, 4294901760
    %1247 = vmatpush.msra.mxu0 %v1246
    %v1248 = vand.u32 %v83, 4294901760
    %1249 = vmatpush.msra.mxu0 %v1248
    %v1250 = vand.u32 %v1212, 4294901760
    %v1251 = vsub.f32 %v1212, %v1250
    %v1252 = vand.u32 %v1251, 4294901760
    %v1253 = vsub.f32 %v1251, %v1252
    %v1254 = vand.u32 %v1253, 4294901760
    %1255 = vmatmul.f32.gmra.mxu0 %v1254
    %v1256 = vpop.f32.mrf.mxu0
    %v1257 = vadd.f32 %v137, %v1256
    %1258 = vdwg.mxu0
    %v1259 = vand.u32 %v128, 4294901760
    %v1260 = vsub.f32 %v128, %v1259
    %v1261 = vand.u32 %v1260, 4294901760
    %v1262 = vsub.f32 %v1260, %v1261
    %v1263 = vand.u32 %v1262, 4294901760
    %1264 = vmatpush.msra.mxu0 %v1263
    %v1265 = vand.u32 %v125, 4294901760
    %v1266 = vsub.f32 %v125, %v1265
    %v1267 = vand.u32 %v1266, 4294901760
    %v1268 = vsub.f32 %v1266, %v1267
    %v1269 = vand.u32 %v1268, 4294901760
    %1270 = vmatpush.msra.mxu0 %v1269
    %v1271 = vand.u32 %v122, 4294901760
    %v1272 = vsub.f32 %v122, %v1271
    %v1273 = vand.u32 %v1272, 4294901760
    %v1274 = vsub.f32 %v1272, %v1273
    %v1275 = vand.u32 %v1274, 4294901760
    %1276 = vmatpush.msra.mxu0 %v1275
    %v1277 = vand.u32 %v119, 4294901760
    %v1278 = vsub.f32 %v119, %v1277
    %v1279 = vand.u32 %v1278, 4294901760
    %v1280 = vsub.f32 %v1278, %v1279
    %v1281 = vand.u32 %v1280, 4294901760
    %1282 = vmatpush.msra.mxu0 %v1281
    %v1283 = vand.u32 %v116, 4294901760
    %v1284 = vsub.f32 %v116, %v1283
    %v1285 = vand.u32 %v1284, 4294901760
    %v1286 = vsub.f32 %v1284, %v1285
    %v1287 = vand.u32 %v1286, 4294901760
    %1288 = vmatpush.msra.mxu0 %v1287
    %v1289 = vand.u32 %v113, 4294901760
    %v1290 = vsub.f32 %v113, %v1289
    %v1291 = vand.u32 %v1290, 4294901760
    %v1292 = vsub.f32 %v1290, %v1291
    %v1293 = vand.u32 %v1292, 4294901760
    %1294 = vmatpush.msra.mxu0 %v1293
    %v1295 = vand.u32 %v110, 4294901760
    %v1296 = vsub.f32 %v110, %v1295
    %v1297 = vand.u32 %v1296, 4294901760
    %v1298 = vsub.f32 %v1296, %v1297
    %v1299 = vand.u32 %v1298, 4294901760
    %1300 = vmatpush.msra.mxu0 %v1299
    %v1301 = vand.u32 %v107, 4294901760
    %v1302 = vsub.f32 %v107, %v1301
    %v1303 = vand.u32 %v1302, 4294901760
    %v1304 = vsub.f32 %v1302, %v1303
    %v1305 = vand.u32 %v1304, 4294901760
    %1306 = vmatpush.msra.mxu0 %v1305
    %v1307 = vand.u32 %v104, 4294901760
    %v1308 = vsub.f32 %v104, %v1307
    %v1309 = vand.u32 %v1308, 4294901760
    %v1310 = vsub.f32 %v1308, %v1309
    %v1311 = vand.u32 %v1310, 4294901760
    %1312 = vmatpush.msra.mxu0 %v1311
    %v1313 = vand.u32 %v101, 4294901760
    %v1314 = vsub.f32 %v101, %v1313
    %v1315 = vand.u32 %v1314, 4294901760
    %v1316 = vsub.f32 %v1314, %v1315
    %v1317 = vand.u32 %v1316, 4294901760
    %1318 = vmatpush.msra.mxu0 %v1317
    %v1319 = vand.u32 %v98, 4294901760
    %v1320 = vsub.f32 %v98, %v1319
    %v1321 = vand.u32 %v1320, 4294901760
    %v1322 = vsub.f32 %v1320, %v1321
    %v1323 = vand.u32 %v1322, 4294901760
    %1324 = vmatpush.msra.mxu0 %v1323
    %v1325 = vand.u32 %v95, 4294901760
    %v1326 = vsub.f32 %v95, %v1325
    %v1327 = vand.u32 %v1326, 4294901760
    %v1328 = vsub.f32 %v1326, %v1327
    %v1329 = vand.u32 %v1328, 4294901760
    %1330 = vmatpush.msra.mxu0 %v1329
    %v1331 = vand.u32 %v92, 4294901760
    %v1332 = vsub.f32 %v92, %v1331
    %v1333 = vand.u32 %v1332, 4294901760
    %v1334 = vsub.f32 %v1332, %v1333
    %v1335 = vand.u32 %v1334, 4294901760
    %1336 = vmatpush.msra.mxu0 %v1335
    %v1337 = vand.u32 %v89, 4294901760
    %v1338 = vsub.f32 %v89, %v1337
    %v1339 = vand.u32 %v1338, 4294901760
    %v1340 = vsub.f32 %v1338, %v1339
    %v1341 = vand.u32 %v1340, 4294901760
    %1342 = vmatpush.msra.mxu0 %v1341
    %v1343 = vand.u32 %v86, 4294901760
    %v1344 = vsub.f32 %v86, %v1343
    %v1345 = vand.u32 %v1344, 4294901760
    %v1346 = vsub.f32 %v1344, %v1345
    %v1347 = vand.u32 %v1346, 4294901760
    %1348 = vmatpush.msra.mxu0 %v1347
    %v1349 = vand.u32 %v83, 4294901760
    %v1350 = vsub.f32 %v83, %v1349
    %v1351 = vand.u32 %v1350, 4294901760
    %v1352 = vsub.f32 %v1350, %v1351
    %v1353 = vand.u32 %v1352, 4294901760
    %1354 = vmatpush.msra.mxu0 %v1353
    %v1355 = vand.u32 %v1212, 4294901760
    %1356 = vmatmul.f32.gmra.mxu0 %v1355
    %v1357 = vpop.f32.mrf.mxu0
    %v1358 = vadd.f32 %v1257, %v1357
    %1359 = vdwg.mxu0
    %v1360 = vand.u32 %v128, 4294901760
    %v1361 = vsub.f32 %v128, %v1360
    %1362 = vmatpush.msra.mxu0 %v1361
    %v1363 = vand.u32 %v125, 4294901760
    %v1364 = vsub.f32 %v125, %v1363
    %1365 = vmatpush.msra.mxu0 %v1364
    %v1366 = vand.u32 %v122, 4294901760
    %v1367 = vsub.f32 %v122, %v1366
    %1368 = vmatpush.msra.mxu0 %v1367
    %v1369 = vand.u32 %v119, 4294901760
    %v1370 = vsub.f32 %v119, %v1369
    %1371 = vmatpush.msra.mxu0 %v1370
    %v1372 = vand.u32 %v116, 4294901760
    %v1373 = vsub.f32 %v116, %v1372
    %1374 = vmatpush.msra.mxu0 %v1373
    %v1375 = vand.u32 %v113, 4294901760
    %v1376 = vsub.f32 %v113, %v1375
    %1377 = vmatpush.msra.mxu0 %v1376
    %v1378 = vand.u32 %v110, 4294901760
    %v1379 = vsub.f32 %v110, %v1378
    %1380 = vmatpush.msra.mxu0 %v1379
    %v1381 = vand.u32 %v107, 4294901760
    %v1382 = vsub.f32 %v107, %v1381
    %1383 = vmatpush.msra.mxu0 %v1382
    %v1384 = vand.u32 %v104, 4294901760
    %v1385 = vsub.f32 %v104, %v1384
    %1386 = vmatpush.msra.mxu0 %v1385
    %v1387 = vand.u32 %v101, 4294901760
    %v1388 = vsub.f32 %v101, %v1387
    %1389 = vmatpush.msra.mxu0 %v1388
    %v1390 = vand.u32 %v98, 4294901760
    %v1391 = vsub.f32 %v98, %v1390
    %1392 = vmatpush.msra.mxu0 %v1391
    %v1393 = vand.u32 %v95, 4294901760
    %v1394 = vsub.f32 %v95, %v1393
    %1395 = vmatpush.msra.mxu0 %v1394
    %v1396 = vand.u32 %v92, 4294901760
    %v1397 = vsub.f32 %v92, %v1396
    %1398 = vmatpush.msra.mxu0 %v1397
    %v1399 = vand.u32 %v89, 4294901760
    %v1400 = vsub.f32 %v89, %v1399
    %1401 = vmatpush.msra.mxu0 %v1400
    %v1402 = vand.u32 %v86, 4294901760
    %v1403 = vsub.f32 %v86, %v1402
    %1404 = vmatpush.msra.mxu0 %v1403
    %v1405 = vand.u32 %v83, 4294901760
    %v1406 = vsub.f32 %v83, %v1405
    %1407 = vmatpush.msra.mxu0 %v1406
    %v1408 = vand.u32 %v1212, 4294901760
    %v1409 = vsub.f32 %v1212, %v1408
    %1410 = vmatmul.f32.gmra.mxu0 %v1409
    %v1411 = vpop.f32.mrf.mxu0
    %v1412 = vadd.f32 %v1358, %v1411
    %1413 = vdwg.mxu0
    %v1414 = vand.u32 %v128, 4294901760
    %1415 = vmatpush.msra.mxu0 %v1414
    %v1416 = vand.u32 %v125, 4294901760
    %1417 = vmatpush.msra.mxu0 %v1416
    %v1418 = vand.u32 %v122, 4294901760
    %1419 = vmatpush.msra.mxu0 %v1418
    %v1420 = vand.u32 %v119, 4294901760
    %1421 = vmatpush.msra.mxu0 %v1420
    %v1422 = vand.u32 %v116, 4294901760
    %1423 = vmatpush.msra.mxu0 %v1422
    %v1424 = vand.u32 %v113, 4294901760
    %1425 = vmatpush.msra.mxu0 %v1424
    %v1426 = vand.u32 %v110, 4294901760
    %1427 = vmatpush.msra.mxu0 %v1426
    %v1428 = vand.u32 %v107, 4294901760
    %1429 = vmatpush.msra.mxu0 %v1428
    %v1430 = vand.u32 %v104, 4294901760
    %1431 = vmatpush.msra.mxu0 %v1430
    %v1432 = vand.u32 %v101, 4294901760
    %1433 = vmatpush.msra.mxu0 %v1432
    %v1434 = vand.u32 %v98, 4294901760
    %1435 = vmatpush.msra.mxu0 %v1434
    %v1436 = vand.u32 %v95, 4294901760
    %1437 = vmatpush.msra.mxu0 %v1436
    %v1438 = vand.u32 %v92, 4294901760
    %1439 = vmatpush.msra.mxu0 %v1438
    %v1440 = vand.u32 %v89, 4294901760
    %1441 = vmatpush.msra.mxu0 %v1440
    %v1442 = vand.u32 %v86, 4294901760
    %1443 = vmatpush.msra.mxu0 %v1442
    %v1444 = vand.u32 %v83, 4294901760
    %1445 = vmatpush.msra.mxu0 %v1444
    %v1446 = vand.u32 %v1212, 4294901760
    %v1447 = vsub.f32 %v1212, %v1446
    %v1448 = vand.u32 %v1447, 4294901760
    %1449 = vmatmul.f32.gmra.mxu0 %v1448
    %v1450 = vpop.f32.mrf.mxu0
    %v1451 = vadd.f32 %v1412, %v1450
    %1452 = vdwg.mxu0
    %v1453 = vand.u32 %v128, 4294901760
    %v1454 = vsub.f32 %v128, %v1453
    %v1455 = vand.u32 %v1454, 4294901760
    %1456 = vmatpush.msra.mxu0 %v1455
    %v1457 = vand.u32 %v125, 4294901760
    %v1458 = vsub.f32 %v125, %v1457
    %v1459 = vand.u32 %v1458, 4294901760
    %1460 = vmatpush.msra.mxu0 %v1459
    %v1461 = vand.u32 %v122, 4294901760
    %v1462 = vsub.f32 %v122, %v1461
    %v1463 = vand.u32 %v1462, 4294901760
    %1464 = vmatpush.msra.mxu0 %v1463
    %v1465 = vand.u32 %v119, 4294901760
    %v1466 = vsub.f32 %v119, %v1465
    %v1467 = vand.u32 %v1466, 4294901760
    %1468 = vmatpush.msra.mxu0 %v1467
    %v1469 = vand.u32 %v116, 4294901760
    %v1470 = vsub.f32 %v116, %v1469
    %v1471 = vand.u32 %v1470, 4294901760
    %1472 = vmatpush.msra.mxu0 %v1471
    %v1473 = vand.u32 %v113, 4294901760
    %v1474 = vsub.f32 %v113, %v1473
    %v1475 = vand.u32 %v1474, 4294901760
    %1476 = vmatpush.msra.mxu0 %v1475
    %v1477 = vand.u32 %v110, 4294901760
    %v1478 = vsub.f32 %v110, %v1477
    %v1479 = vand.u32 %v1478, 4294901760
    %1480 = vmatpush.msra.mxu0 %v1479
    %v1481 = vand.u32 %v107, 4294901760
    %v1482 = vsub.f32 %v107, %v1481
    %v1483 = vand.u32 %v1482, 4294901760
    %1484 = vmatpush.msra.mxu0 %v1483
    %v1485 = vand.u32 %v104, 4294901760
    %v1486 = vsub.f32 %v104, %v1485
    %v1487 = vand.u32 %v1486, 4294901760
    %1488 = vmatpush.msra.mxu0 %v1487
    %v1489 = vand.u32 %v101, 4294901760
    %v1490 = vsub.f32 %v101, %v1489
    %v1491 = vand.u32 %v1490, 4294901760
    %1492 = vmatpush.msra.mxu0 %v1491
    %v1493 = vand.u32 %v98, 4294901760
    %v1494 = vsub.f32 %v98, %v1493
    %v1495 = vand.u32 %v1494, 4294901760
    %1496 = vmatpush.msra.mxu0 %v1495
    %v1497 = vand.u32 %v95, 4294901760
    %v1498 = vsub.f32 %v95, %v1497
    %v1499 = vand.u32 %v1498, 4294901760
    %1500 = vmatpush.msra.mxu0 %v1499
    %v1501 = vand.u32 %v92, 4294901760
    %v1502 = vsub.f32 %v92, %v1501
    %v1503 = vand.u32 %v1502, 4294901760
    %1504 = vmatpush.msra.mxu0 %v1503
    %v1505 = vand.u32 %v89, 4294901760
    %v1506 = vsub.f32 %v89, %v1505
    %v1507 = vand.u32 %v1506, 4294901760
    %1508 = vmatpush.msra.mxu0 %v1507
    %v1509 = vand.u32 %v86, 4294901760
    %v1510 = vsub.f32 %v86, %v1509
    %v1511 = vand.u32 %v1510, 4294901760
    %1512 = vmatpush.msra.mxu0 %v1511
    %v1513 = vand.u32 %v83, 4294901760
    %v1514 = vsub.f32 %v83, %v1513
    %v1515 = vand.u32 %v1514, 4294901760
    %1516 = vmatpush.msra.mxu0 %v1515
    %v1517 = vand.u32 %v1212, 4294901760
    %1518 = vmatmul.f32.gmra.mxu0 %v1517
    %v1519 = vpop.f32.mrf.mxu0
    %v1520 = vadd.f32 %v1451, %v1519
    %1521 = vdwg.mxu0
    %v1522 = vand.u32 %v128, 4294901760
    %1523 = vmatpush.msra.mxu0 %v1522
    %v1524 = vand.u32 %v125, 4294901760
    %1525 = vmatpush.msra.mxu0 %v1524
    %v1526 = vand.u32 %v122, 4294901760
    %1527 = vmatpush.msra.mxu0 %v1526
    %v1528 = vand.u32 %v119, 4294901760
    %1529 = vmatpush.msra.mxu0 %v1528
    %v1530 = vand.u32 %v116, 4294901760
    %1531 = vmatpush.msra.mxu0 %v1530
    %v1532 = vand.u32 %v113, 4294901760
    %1533 = vmatpush.msra.mxu0 %v1532
    %v1534 = vand.u32 %v110, 4294901760
    %1535 = vmatpush.msra.mxu0 %v1534
    %v1536 = vand.u32 %v107, 4294901760
    %1537 = vmatpush.msra.mxu0 %v1536
    %v1538 = vand.u32 %v104, 4294901760
    %1539 = vmatpush.msra.mxu0 %v1538
    %v1540 = vand.u32 %v101, 4294901760
    %1541 = vmatpush.msra.mxu0 %v1540
    %v1542 = vand.u32 %v98, 4294901760
    %1543 = vmatpush.msra.mxu0 %v1542
    %v1544 = vand.u32 %v95, 4294901760
    %1545 = vmatpush.msra.mxu0 %v1544
    %v1546 = vand.u32 %v92, 4294901760
    %1547 = vmatpush.msra.mxu0 %v1546
    %v1548 = vand.u32 %v89, 4294901760
    %1549 = vmatpush.msra.mxu0 %v1548
    %v1550 = vand.u32 %v86, 4294901760
    %1551 = vmatpush.msra.mxu0 %v1550
    %v1552 = vand.u32 %v83, 4294901760
    %1553 = vmatpush.msra.mxu0 %v1552
    %v1554 = vand.u32 %v1212, 4294901760
    %1555 = vmatmul.f32.gmra.mxu0 %v1554
    %v1556 = vpop.f32.mrf.mxu0
    %v1557 = vadd.f32 %v1520, %v1556
    %1558 = vdwg.mxu0
    %v1559 = vand.u32 %v129, 4294901760
    %1560 = vmatpush.msra.mxu0 %v1559
    %v1561 = vand.u32 %v126, 4294901760
    %1562 = vmatpush.msra.mxu0 %v1561
    %v1563 = vand.u32 %v123, 4294901760
    %1564 = vmatpush.msra.mxu0 %v1563
    %v1565 = vand.u32 %v120, 4294901760
    %1566 = vmatpush.msra.mxu0 %v1565
    %v1567 = vand.u32 %v117, 4294901760
    %1568 = vmatpush.msra.mxu0 %v1567
    %v1569 = vand.u32 %v114, 4294901760
    %1570 = vmatpush.msra.mxu0 %v1569
    %v1571 = vand.u32 %v111, 4294901760
    %1572 = vmatpush.msra.mxu0 %v1571
    %v1573 = vand.u32 %v108, 4294901760
    %1574 = vmatpush.msra.mxu0 %v1573
    %v1575 = vand.u32 %v105, 4294901760
    %1576 = vmatpush.msra.mxu0 %v1575
    %v1577 = vand.u32 %v102, 4294901760
    %1578 = vmatpush.msra.mxu0 %v1577
    %v1579 = vand.u32 %v99, 4294901760
    %1580 = vmatpush.msra.mxu0 %v1579
    %v1581 = vand.u32 %v96, 4294901760
    %1582 = vmatpush.msra.mxu0 %v1581
    %v1583 = vand.u32 %v93, 4294901760
    %1584 = vmatpush.msra.mxu0 %v1583
    %v1585 = vand.u32 %v90, 4294901760
    %1586 = vmatpush.msra.mxu0 %v1585
    %v1587 = vand.u32 %v87, 4294901760
    %1588 = vmatpush.msra.mxu0 %v1587
    %v1589 = vand.u32 %v84, 4294901760
    %1590 = vmatpush.msra.mxu0 %v1589
    %v1591 = vand.u32 %v1212, 4294901760
    %v1592 = vsub.f32 %v1212, %v1591
    %v1593 = vand.u32 %v1592, 4294901760
    %v1594 = vsub.f32 %v1592, %v1593
    %v1595 = vand.u32 %v1594, 4294901760
    %1596 = vmatmul.f32.gmra.mxu0 %v1595
    %v1597 = vpop.f32.mrf.mxu0
    %v1598 = vadd.f32 %v138, %v1597
    %1599 = vdwg.mxu0
    %v1600 = vand.u32 %v129, 4294901760
    %v1601 = vsub.f32 %v129, %v1600
    %v1602 = vand.u32 %v1601, 4294901760
    %v1603 = vsub.f32 %v1601, %v1602
    %v1604 = vand.u32 %v1603, 4294901760
    %1605 = vmatpush.msra.mxu0 %v1604
    %v1606 = vand.u32 %v126, 4294901760
    %v1607 = vsub.f32 %v126, %v1606
    %v1608 = vand.u32 %v1607, 4294901760
    %v1609 = vsub.f32 %v1607, %v1608
    %v1610 = vand.u32 %v1609, 4294901760
    %1611 = vmatpush.msra.mxu0 %v1610
    %v1612 = vand.u32 %v123, 4294901760
    %v1613 = vsub.f32 %v123, %v1612
    %v1614 = vand.u32 %v1613, 4294901760
    %v1615 = vsub.f32 %v1613, %v1614
    %v1616 = vand.u32 %v1615, 4294901760
    %1617 = vmatpush.msra.mxu0 %v1616
    %v1618 = vand.u32 %v120, 4294901760
    %v1619 = vsub.f32 %v120, %v1618
    %v1620 = vand.u32 %v1619, 4294901760
    %v1621 = vsub.f32 %v1619, %v1620
    %v1622 = vand.u32 %v1621, 4294901760
    %1623 = vmatpush.msra.mxu0 %v1622
    %v1624 = vand.u32 %v117, 4294901760
    %v1625 = vsub.f32 %v117, %v1624
    %v1626 = vand.u32 %v1625, 4294901760
    %v1627 = vsub.f32 %v1625, %v1626
    %v1628 = vand.u32 %v1627, 4294901760
    %1629 = vmatpush.msra.mxu0 %v1628
    %v1630 = vand.u32 %v114, 4294901760
    %v1631 = vsub.f32 %v114, %v1630
    %v1632 = vand.u32 %v1631, 4294901760
    %v1633 = vsub.f32 %v1631, %v1632
    %v1634 = vand.u32 %v1633, 4294901760
    %1635 = vmatpush.msra.mxu0 %v1634
    %v1636 = vand.u32 %v111, 4294901760
    %v1637 = vsub.f32 %v111, %v1636
    %v1638 = vand.u32 %v1637, 4294901760
    %v1639 = vsub.f32 %v1637, %v1638
    %v1640 = vand.u32 %v1639, 4294901760
    %1641 = vmatpush.msra.mxu0 %v1640
    %v1642 = vand.u32 %v108, 4294901760
    %v1643 = vsub.f32 %v108, %v1642
    %v1644 = vand.u32 %v1643, 4294901760
    %v1645 = vsub.f32 %v1643, %v1644
    %v1646 = vand.u32 %v1645, 4294901760
    %1647 = vmatpush.msra.mxu0 %v1646
    %v1648 = vand.u32 %v105, 4294901760
    %v1649 = vsub.f32 %v105, %v1648
    %v1650 = vand.u32 %v1649, 4294901760
    %v1651 = vsub.f32 %v1649, %v1650
    %v1652 = vand.u32 %v1651, 4294901760
    %1653 = vmatpush.msra.mxu0 %v1652
    %v1654 = vand.u32 %v102, 4294901760
    %v1655 = vsub.f32 %v102, %v1654
    %v1656 = vand.u32 %v1655, 4294901760
    %v1657 = vsub.f32 %v1655, %v1656
    %v1658 = vand.u32 %v1657, 4294901760
    %1659 = vmatpush.msra.mxu0 %v1658
    %v1660 = vand.u32 %v99, 4294901760
    %v1661 = vsub.f32 %v99, %v1660
    %v1662 = vand.u32 %v1661, 4294901760
    %v1663 = vsub.f32 %v1661, %v1662
    %v1664 = vand.u32 %v1663, 4294901760
    %1665 = vmatpush.msra.mxu0 %v1664
    %v1666 = vand.u32 %v96, 4294901760
    %v1667 = vsub.f32 %v96, %v1666
    %v1668 = vand.u32 %v1667, 4294901760
    %v1669 = vsub.f32 %v1667, %v1668
    %v1670 = vand.u32 %v1669, 4294901760
    %1671 = vmatpush.msra.mxu0 %v1670
    %v1672 = vand.u32 %v93, 4294901760
    %v1673 = vsub.f32 %v93, %v1672
    %v1674 = vand.u32 %v1673, 4294901760
    %v1675 = vsub.f32 %v1673, %v1674
    %v1676 = vand.u32 %v1675, 4294901760
    %1677 = vmatpush.msra.mxu0 %v1676
    %v1678 = vand.u32 %v90, 4294901760
    %v1679 = vsub.f32 %v90, %v1678
    %v1680 = vand.u32 %v1679, 4294901760
    %v1681 = vsub.f32 %v1679, %v1680
    %v1682 = vand.u32 %v1681, 4294901760
    %1683 = vmatpush.msra.mxu0 %v1682
    %v1684 = vand.u32 %v87, 4294901760
    %v1685 = vsub.f32 %v87, %v1684
    %v1686 = vand.u32 %v1685, 4294901760
    %v1687 = vsub.f32 %v1685, %v1686
    %v1688 = vand.u32 %v1687, 4294901760
    %1689 = vmatpush.msra.mxu0 %v1688
    %v1690 = vand.u32 %v84, 4294901760
    %v1691 = vsub.f32 %v84, %v1690
    %v1692 = vand.u32 %v1691, 4294901760
    %v1693 = vsub.f32 %v1691, %v1692
    %v1694 = vand.u32 %v1693, 4294901760
    %1695 = vmatpush.msra.mxu0 %v1694
    %v1696 = vand.u32 %v1212, 4294901760
    %1697 = vmatmul.f32.gmra.mxu0 %v1696
    %v1698 = vpop.f32.mrf.mxu0
    %v1699 = vadd.f32 %v1598, %v1698
    %1700 = vdwg.mxu0
    %v1701 = vand.u32 %v129, 4294901760
    %v1702 = vsub.f32 %v129, %v1701
    %1703 = vmatpush.msra.mxu0 %v1702
    %v1704 = vand.u32 %v126, 4294901760
    %v1705 = vsub.f32 %v126, %v1704
    %1706 = vmatpush.msra.mxu0 %v1705
    %v1707 = vand.u32 %v123, 4294901760
    %v1708 = vsub.f32 %v123, %v1707
    %1709 = vmatpush.msra.mxu0 %v1708
    %v1710 = vand.u32 %v120, 4294901760
    %v1711 = vsub.f32 %v120, %v1710
    %1712 = vmatpush.msra.mxu0 %v1711
    %v1713 = vand.u32 %v117, 4294901760
    %v1714 = vsub.f32 %v117, %v1713
    %1715 = vmatpush.msra.mxu0 %v1714
    %v1716 = vand.u32 %v114, 4294901760
    %v1717 = vsub.f32 %v114, %v1716
    %1718 = vmatpush.msra.mxu0 %v1717
    %v1719 = vand.u32 %v111, 4294901760
    %v1720 = vsub.f32 %v111, %v1719
    %1721 = vmatpush.msra.mxu0 %v1720
    %v1722 = vand.u32 %v108, 4294901760
    %v1723 = vsub.f32 %v108, %v1722
    %1724 = vmatpush.msra.mxu0 %v1723
    %v1725 = vand.u32 %v105, 4294901760
    %v1726 = vsub.f32 %v105, %v1725
    %1727 = vmatpush.msra.mxu0 %v1726
    %v1728 = vand.u32 %v102, 4294901760
    %v1729 = vsub.f32 %v102, %v1728
    %1730 = vmatpush.msra.mxu0 %v1729
    %v1731 = vand.u32 %v99, 4294901760
    %v1732 = vsub.f32 %v99, %v1731
    %1733 = vmatpush.msra.mxu0 %v1732
    %v1734 = vand.u32 %v96, 4294901760
    %v1735 = vsub.f32 %v96, %v1734
    %1736 = vmatpush.msra.mxu0 %v1735
    %v1737 = vand.u32 %v93, 4294901760
    %v1738 = vsub.f32 %v93, %v1737
    %1739 = vmatpush.msra.mxu0 %v1738
    %v1740 = vand.u32 %v90, 4294901760
    %v1741 = vsub.f32 %v90, %v1740
    %1742 = vmatpush.msra.mxu0 %v1741
    %v1743 = vand.u32 %v87, 4294901760
    %v1744 = vsub.f32 %v87, %v1743
    %1745 = vmatpush.msra.mxu0 %v1744
    %v1746 = vand.u32 %v84, 4294901760
    %v1747 = vsub.f32 %v84, %v1746
    %1748 = vmatpush.msra.mxu0 %v1747
    %v1749 = vand.u32 %v1212, 4294901760
    %v1750 = vsub.f32 %v1212, %v1749
    %1751 = vmatmul.f32.gmra.mxu0 %v1750
    %v1752 = vpop.f32.mrf.mxu0
    %v1753 = vadd.f32 %v1699, %v1752
    %1754 = vdwg.mxu0
    %v1755 = vand.u32 %v129, 4294901760
    %1756 = vmatpush.msra.mxu0 %v1755
    %v1757 = vand.u32 %v126, 4294901760
    %1758 = vmatpush.msra.mxu0 %v1757
    %v1759 = vand.u32 %v123, 4294901760
    %1760 = vmatpush.msra.mxu0 %v1759
    %v1761 = vand.u32 %v120, 4294901760
    %1762 = vmatpush.msra.mxu0 %v1761
    %v1763 = vand.u32 %v117, 4294901760
    %1764 = vmatpush.msra.mxu0 %v1763
    %v1765 = vand.u32 %v114, 4294901760
    %1766 = vmatpush.msra.mxu0 %v1765
    %v1767 = vand.u32 %v111, 4294901760
    %1768 = vmatpush.msra.mxu0 %v1767
    %v1769 = vand.u32 %v108, 4294901760
    %1770 = vmatpush.msra.mxu0 %v1769
    %v1771 = vand.u32 %v105, 4294901760
    %1772 = vmatpush.msra.mxu0 %v1771
    %v1773 = vand.u32 %v102, 4294901760
    %1774 = vmatpush.msra.mxu0 %v1773
    %v1775 = vand.u32 %v99, 4294901760
    %1776 = vmatpush.msra.mxu0 %v1775
    %v1777 = vand.u32 %v96, 4294901760
    %1778 = vmatpush.msra.mxu0 %v1777
    %v1779 = vand.u32 %v93, 4294901760
    %1780 = vmatpush.msra.mxu0 %v1779
    %v1781 = vand.u32 %v90, 4294901760
    %1782 = vmatpush.msra.mxu0 %v1781
    %v1783 = vand.u32 %v87, 4294901760
    %1784 = vmatpush.msra.mxu0 %v1783
    %v1785 = vand.u32 %v84, 4294901760
    %1786 = vmatpush.msra.mxu0 %v1785
    %v1787 = vand.u32 %v1212, 4294901760
    %v1788 = vsub.f32 %v1212, %v1787
    %v1789 = vand.u32 %v1788, 4294901760
    %1790 = vmatmul.f32.gmra.mxu0 %v1789
    %v1791 = vpop.f32.mrf.mxu0
    %v1792 = vadd.f32 %v1753, %v1791
    %1793 = vdwg.mxu0
    %v1794 = vand.u32 %v129, 4294901760
    %v1795 = vsub.f32 %v129, %v1794
    %v1796 = vand.u32 %v1795, 4294901760
    %1797 = vmatpush.msra.mxu0 %v1796
    %v1798 = vand.u32 %v126, 4294901760
    %v1799 = vsub.f32 %v126, %v1798
    %v1800 = vand.u32 %v1799, 4294901760
    %1801 = vmatpush.msra.mxu0 %v1800
    %v1802 = vand.u32 %v123, 4294901760
    %v1803 = vsub.f32 %v123, %v1802
    %v1804 = vand.u32 %v1803, 4294901760
    %1805 = vmatpush.msra.mxu0 %v1804
    %v1806 = vand.u32 %v120, 4294901760
    %v1807 = vsub.f32 %v120, %v1806
    %v1808 = vand.u32 %v1807, 4294901760
    %1809 = vmatpush.msra.mxu0 %v1808
    %v1810 = vand.u32 %v117, 4294901760
    %v1811 = vsub.f32 %v117, %v1810
    %v1812 = vand.u32 %v1811, 4294901760
    %1813 = vmatpush.msra.mxu0 %v1812
    %v1814 = vand.u32 %v114, 4294901760
    %v1815 = vsub.f32 %v114, %v1814
    %v1816 = vand.u32 %v1815, 4294901760
    %1817 = vmatpush.msra.mxu0 %v1816
    %v1818 = vand.u32 %v111, 4294901760
    %v1819 = vsub.f32 %v111, %v1818
    %v1820 = vand.u32 %v1819, 4294901760
    %1821 = vmatpush.msra.mxu0 %v1820
    %v1822 = vand.u32 %v108, 4294901760
    %v1823 = vsub.f32 %v108, %v1822
    %v1824 = vand.u32 %v1823, 4294901760
    %1825 = vmatpush.msra.mxu0 %v1824
    %v1826 = vand.u32 %v105, 4294901760
    %v1827 = vsub.f32 %v105, %v1826
    %v1828 = vand.u32 %v1827, 4294901760
    %1829 = vmatpush.msra.mxu0 %v1828
    %v1830 = vand.u32 %v102, 4294901760
    %v1831 = vsub.f32 %v102, %v1830
    %v1832 = vand.u32 %v1831, 4294901760
    %1833 = vmatpush.msra.mxu0 %v1832
    %v1834 = vand.u32 %v99, 4294901760
    %v1835 = vsub.f32 %v99, %v1834
    %v1836 = vand.u32 %v1835, 4294901760
    %1837 = vmatpush.msra.mxu0 %v1836
    %v1838 = vand.u32 %v96, 4294901760
    %v1839 = vsub.f32 %v96, %v1838
    %v1840 = vand.u32 %v1839, 4294901760
    %1841 = vmatpush.msra.mxu0 %v1840
    %v1842 = vand.u32 %v93, 4294901760
    %v1843 = vsub.f32 %v93, %v1842
    %v1844 = vand.u32 %v1843, 4294901760
    %1845 = vmatpush.msra.mxu0 %v1844
    %v1846 = vand.u32 %v90, 4294901760
    %v1847 = vsub.f32 %v90, %v1846
    %v1848 = vand.u32 %v1847, 4294901760
    %1849 = vmatpush.msra.mxu0 %v1848
    %v1850 = vand.u32 %v87, 4294901760
    %v1851 = vsub.f32 %v87, %v1850
    %v1852 = vand.u32 %v1851, 4294901760
    %1853 = vmatpush.msra.mxu0 %v1852
    %v1854 = vand.u32 %v84, 4294901760
    %v1855 = vsub.f32 %v84, %v1854
    %v1856 = vand.u32 %v1855, 4294901760
    %1857 = vmatpush.msra.mxu0 %v1856
    %v1858 = vand.u32 %v1212, 4294901760
    %1859 = vmatmul.f32.gmra.mxu0 %v1858
    %v1860 = vpop.f32.mrf.mxu0
    %v1861 = vadd.f32 %v1792, %v1860
    %1862 = vdwg.mxu0
    %v1863 = vand.u32 %v129, 4294901760
    %1864 = vmatpush.msra.mxu0 %v1863
    %v1865 = vand.u32 %v126, 4294901760
    %1866 = vmatpush.msra.mxu0 %v1865
    %v1867 = vand.u32 %v123, 4294901760
    %1868 = vmatpush.msra.mxu0 %v1867
    %v1869 = vand.u32 %v120, 4294901760
    %1870 = vmatpush.msra.mxu0 %v1869
    %v1871 = vand.u32 %v117, 4294901760
    %1872 = vmatpush.msra.mxu0 %v1871
    %v1873 = vand.u32 %v114, 4294901760
    %1874 = vmatpush.msra.mxu0 %v1873
    %v1875 = vand.u32 %v111, 4294901760
    %1876 = vmatpush.msra.mxu0 %v1875
    %v1877 = vand.u32 %v108, 4294901760
    %1878 = vmatpush.msra.mxu0 %v1877
    %v1879 = vand.u32 %v105, 4294901760
    %1880 = vmatpush.msra.mxu0 %v1879
    %v1881 = vand.u32 %v102, 4294901760
    %1882 = vmatpush.msra.mxu0 %v1881
    %v1883 = vand.u32 %v99, 4294901760
    %1884 = vmatpush.msra.mxu0 %v1883
    %v1885 = vand.u32 %v96, 4294901760
    %1886 = vmatpush.msra.mxu0 %v1885
    %v1887 = vand.u32 %v93, 4294901760
    %1888 = vmatpush.msra.mxu0 %v1887
    %v1889 = vand.u32 %v90, 4294901760
    %1890 = vmatpush.msra.mxu0 %v1889
    %v1891 = vand.u32 %v87, 4294901760
    %1892 = vmatpush.msra.mxu0 %v1891
    %v1893 = vand.u32 %v84, 4294901760
    %1894 = vmatpush.msra.mxu0 %v1893
    %v1895 = vand.u32 %v1212, 4294901760
    %1896 = vmatmul.f32.gmra.mxu0 %v1895
    %v1897 = vpop.f32.mrf.mxu0
    %v1898 = vadd.f32 %v1861, %v1897
    %1899 = vdwg.mxu0
    %v1900 = vand.u32 %v130, 4294901760
    %1901 = vmatpush.msra.mxu0 %v1900
    %v1902 = vand.u32 %v127, 4294901760
    %1903 = vmatpush.msra.mxu0 %v1902
    %v1904 = vand.u32 %v124, 4294901760
    %1905 = vmatpush.msra.mxu0 %v1904
    %v1906 = vand.u32 %v121, 4294901760
    %1907 = vmatpush.msra.mxu0 %v1906
    %v1908 = vand.u32 %v118, 4294901760
    %1909 = vmatpush.msra.mxu0 %v1908
    %v1910 = vand.u32 %v115, 4294901760
    %1911 = vmatpush.msra.mxu0 %v1910
    %v1912 = vand.u32 %v112, 4294901760
    %1913 = vmatpush.msra.mxu0 %v1912
    %v1914 = vand.u32 %v109, 4294901760
    %1915 = vmatpush.msra.mxu0 %v1914
    %v1916 = vand.u32 %v106, 4294901760
    %1917 = vmatpush.msra.mxu0 %v1916
    %v1918 = vand.u32 %v103, 4294901760
    %1919 = vmatpush.msra.mxu0 %v1918
    %v1920 = vand.u32 %v100, 4294901760
    %1921 = vmatpush.msra.mxu0 %v1920
    %v1922 = vand.u32 %v97, 4294901760
    %1923 = vmatpush.msra.mxu0 %v1922
    %v1924 = vand.u32 %v94, 4294901760
    %1925 = vmatpush.msra.mxu0 %v1924
    %v1926 = vand.u32 %v91, 4294901760
    %1927 = vmatpush.msra.mxu0 %v1926
    %v1928 = vand.u32 %v88, 4294901760
    %1929 = vmatpush.msra.mxu0 %v1928
    %v1930 = vand.u32 %v85, 4294901760
    %1931 = vmatpush.msra.mxu0 %v1930
    %v1932 = vand.u32 %v1212, 4294901760
    %v1933 = vsub.f32 %v1212, %v1932
    %v1934 = vand.u32 %v1933, 4294901760
    %v1935 = vsub.f32 %v1933, %v1934
    %v1936 = vand.u32 %v1935, 4294901760
    %1937 = vmatmul.f32.gmra.mxu0 %v1936
    %v1938 = vpop.f32.mrf.mxu0
    %v1939 = vadd.f32 %v139, %v1938
    %1940 = vdwg.mxu0
    %v1941 = vand.u32 %v130, 4294901760
    %v1942 = vsub.f32 %v130, %v1941
    %v1943 = vand.u32 %v1942, 4294901760
    %v1944 = vsub.f32 %v1942, %v1943
    %v1945 = vand.u32 %v1944, 4294901760
    %1946 = vmatpush.msra.mxu0 %v1945
    %v1947 = vand.u32 %v127, 4294901760
    %v1948 = vsub.f32 %v127, %v1947
    %v1949 = vand.u32 %v1948, 4294901760
    %v1950 = vsub.f32 %v1948, %v1949
    %v1951 = vand.u32 %v1950, 4294901760
    %1952 = vmatpush.msra.mxu0 %v1951
    %v1953 = vand.u32 %v124, 4294901760
    %v1954 = vsub.f32 %v124, %v1953
    %v1955 = vand.u32 %v1954, 4294901760
    %v1956 = vsub.f32 %v1954, %v1955
    %v1957 = vand.u32 %v1956, 4294901760
    %1958 = vmatpush.msra.mxu0 %v1957
    %v1959 = vand.u32 %v121, 4294901760
    %v1960 = vsub.f32 %v121, %v1959
    %v1961 = vand.u32 %v1960, 4294901760
    %v1962 = vsub.f32 %v1960, %v1961
    %v1963 = vand.u32 %v1962, 4294901760
    %1964 = vmatpush.msra.mxu0 %v1963
    %v1965 = vand.u32 %v118, 4294901760
    %v1966 = vsub.f32 %v118, %v1965
    %v1967 = vand.u32 %v1966, 4294901760
    %v1968 = vsub.f32 %v1966, %v1967
    %v1969 = vand.u32 %v1968, 4294901760
    %1970 = vmatpush.msra.mxu0 %v1969
    %v1971 = vand.u32 %v115, 4294901760
    %v1972 = vsub.f32 %v115, %v1971
    %v1973 = vand.u32 %v1972, 4294901760
    %v1974 = vsub.f32 %v1972, %v1973
    %v1975 = vand.u32 %v1974, 4294901760
    %1976 = vmatpush.msra.mxu0 %v1975
    %v1977 = vand.u32 %v112, 4294901760
    %v1978 = vsub.f32 %v112, %v1977
    %v1979 = vand.u32 %v1978, 4294901760
    %v1980 = vsub.f32 %v1978, %v1979
    %v1981 = vand.u32 %v1980, 4294901760
    %1982 = vmatpush.msra.mxu0 %v1981
    %v1983 = vand.u32 %v109, 4294901760
    %v1984 = vsub.f32 %v109, %v1983
    %v1985 = vand.u32 %v1984, 4294901760
    %v1986 = vsub.f32 %v1984, %v1985
    %v1987 = vand.u32 %v1986, 4294901760
    %1988 = vmatpush.msra.mxu0 %v1987
    %v1989 = vand.u32 %v106, 4294901760
    %v1990 = vsub.f32 %v106, %v1989
    %v1991 = vand.u32 %v1990, 4294901760
    %v1992 = vsub.f32 %v1990, %v1991
    %v1993 = vand.u32 %v1992, 4294901760
    %1994 = vmatpush.msra.mxu0 %v1993
    %v1995 = vand.u32 %v103, 4294901760
    %v1996 = vsub.f32 %v103, %v1995
    %v1997 = vand.u32 %v1996, 4294901760
    %v1998 = vsub.f32 %v1996, %v1997
    %v1999 = vand.u32 %v1998, 4294901760
    %2000 = vmatpush.msra.mxu0 %v1999
    %v2001 = vand.u32 %v100, 4294901760
    %v2002 = vsub.f32 %v100, %v2001
    %v2003 = vand.u32 %v2002, 4294901760
    %v2004 = vsub.f32 %v2002, %v2003
    %v2005 = vand.u32 %v2004, 4294901760
    %2006 = vmatpush.msra.mxu0 %v2005
    %v2007 = vand.u32 %v97, 4294901760
    %v2008 = vsub.f32 %v97, %v2007
    %v2009 = vand.u32 %v2008, 4294901760
    %v2010 = vsub.f32 %v2008, %v2009
    %v2011 = vand.u32 %v2010, 4294901760
    %2012 = vmatpush.msra.mxu0 %v2011
    %v2013 = vand.u32 %v94, 4294901760
    %v2014 = vsub.f32 %v94, %v2013
    %v2015 = vand.u32 %v2014, 4294901760
    %v2016 = vsub.f32 %v2014, %v2015
    %v2017 = vand.u32 %v2016, 4294901760
    %2018 = vmatpush.msra.mxu0 %v2017
    %v2019 = vand.u32 %v91, 4294901760
    %v2020 = vsub.f32 %v91, %v2019
    %v2021 = vand.u32 %v2020, 4294901760
    %v2022 = vsub.f32 %v2020, %v2021
    %v2023 = vand.u32 %v2022, 4294901760
    %2024 = vmatpush.msra.mxu0 %v2023
    %v2025 = vand.u32 %v88, 4294901760
    %v2026 = vsub.f32 %v88, %v2025
    %v2027 = vand.u32 %v2026, 4294901760
    %v2028 = vsub.f32 %v2026, %v2027
    %v2029 = vand.u32 %v2028, 4294901760
    %2030 = vmatpush.msra.mxu0 %v2029
    %v2031 = vand.u32 %v85, 4294901760
    %v2032 = vsub.f32 %v85, %v2031
    %v2033 = vand.u32 %v2032, 4294901760
    %v2034 = vsub.f32 %v2032, %v2033
    %v2035 = vand.u32 %v2034, 4294901760
    %2036 = vmatpush.msra.mxu0 %v2035
    %v2037 = vand.u32 %v1212, 4294901760
    %2038 = vmatmul.f32.gmra.mxu0 %v2037
    %v2039 = vpop.f32.mrf.mxu0
    %v2040 = vadd.f32 %v1939, %v2039
    %2041 = vdwg.mxu0
    %v2042 = vand.u32 %v130, 4294901760
    %v2043 = vsub.f32 %v130, %v2042
    %2044 = vmatpush.msra.mxu0 %v2043
    %v2045 = vand.u32 %v127, 4294901760
    %v2046 = vsub.f32 %v127, %v2045
    %2047 = vmatpush.msra.mxu0 %v2046
    %v2048 = vand.u32 %v124, 4294901760
    %v2049 = vsub.f32 %v124, %v2048
    %2050 = vmatpush.msra.mxu0 %v2049
    %v2051 = vand.u32 %v121, 4294901760
    %v2052 = vsub.f32 %v121, %v2051
    %2053 = vmatpush.msra.mxu0 %v2052
    %v2054 = vand.u32 %v118, 4294901760
    %v2055 = vsub.f32 %v118, %v2054
    %2056 = vmatpush.msra.mxu0 %v2055
    %v2057 = vand.u32 %v115, 4294901760
    %v2058 = vsub.f32 %v115, %v2057
    %2059 = vmatpush.msra.mxu0 %v2058
    %v2060 = vand.u32 %v112, 4294901760
    %v2061 = vsub.f32 %v112, %v2060
    %2062 = vmatpush.msra.mxu0 %v2061
    %v2063 = vand.u32 %v109, 4294901760
    %v2064 = vsub.f32 %v109, %v2063
    %2065 = vmatpush.msra.mxu0 %v2064
    %v2066 = vand.u32 %v106, 4294901760
    %v2067 = vsub.f32 %v106, %v2066
    %2068 = vmatpush.msra.mxu0 %v2067
    %v2069 = vand.u32 %v103, 4294901760
    %v2070 = vsub.f32 %v103, %v2069
    %2071 = vmatpush.msra.mxu0 %v2070
    %v2072 = vand.u32 %v100, 4294901760
    %v2073 = vsub.f32 %v100, %v2072
    %2074 = vmatpush.msra.mxu0 %v2073
    %v2075 = vand.u32 %v97, 4294901760
    %v2076 = vsub.f32 %v97, %v2075
    %2077 = vmatpush.msra.mxu0 %v2076
    %v2078 = vand.u32 %v94, 4294901760
    %v2079 = vsub.f32 %v94, %v2078
    %2080 = vmatpush.msra.mxu0 %v2079
    %v2081 = vand.u32 %v91, 4294901760
    %v2082 = vsub.f32 %v91, %v2081
    %2083 = vmatpush.msra.mxu0 %v2082
    %v2084 = vand.u32 %v88, 4294901760
    %v2085 = vsub.f32 %v88, %v2084
    %2086 = vmatpush.msra.mxu0 %v2085
    %v2087 = vand.u32 %v85, 4294901760
    %v2088 = vsub.f32 %v85, %v2087
    %2089 = vmatpush.msra.mxu0 %v2088
    %v2090 = vand.u32 %v1212, 4294901760
    %v2091 = vsub.f32 %v1212, %v2090
    %2092 = vmatmul.f32.gmra.mxu0 %v2091
    %v2093 = vpop.f32.mrf.mxu0
    %v2094 = vadd.f32 %v2040, %v2093
    %2095 = vdwg.mxu0
    %v2096 = vand.u32 %v130, 4294901760
    %2097 = vmatpush.msra.mxu0 %v2096
    %v2098 = vand.u32 %v127, 4294901760
    %2099 = vmatpush.msra.mxu0 %v2098
    %v2100 = vand.u32 %v124, 4294901760
    %2101 = vmatpush.msra.mxu0 %v2100
    %v2102 = vand.u32 %v121, 4294901760
    %2103 = vmatpush.msra.mxu0 %v2102
    %v2104 = vand.u32 %v118, 4294901760
    %2105 = vmatpush.msra.mxu0 %v2104
    %v2106 = vand.u32 %v115, 4294901760
    %2107 = vmatpush.msra.mxu0 %v2106
    %v2108 = vand.u32 %v112, 4294901760
    %2109 = vmatpush.msra.mxu0 %v2108
    %v2110 = vand.u32 %v109, 4294901760
    %2111 = vmatpush.msra.mxu0 %v2110
    %v2112 = vand.u32 %v106, 4294901760
    %2113 = vmatpush.msra.mxu0 %v2112
    %v2114 = vand.u32 %v103, 4294901760
    %2115 = vmatpush.msra.mxu0 %v2114
    %v2116 = vand.u32 %v100, 4294901760
    %2117 = vmatpush.msra.mxu0 %v2116
    %v2118 = vand.u32 %v97, 4294901760
    %2119 = vmatpush.msra.mxu0 %v2118
    %v2120 = vand.u32 %v94, 4294901760
    %2121 = vmatpush.msra.mxu0 %v2120
    %v2122 = vand.u32 %v91, 4294901760
    %2123 = vmatpush.msra.mxu0 %v2122
    %v2124 = vand.u32 %v88, 4294901760
    %2125 = vmatpush.msra.mxu0 %v2124
    %v2126 = vand.u32 %v85, 4294901760
    %2127 = vmatpush.msra.mxu0 %v2126
    %v2128 = vand.u32 %v1212, 4294901760
    %v2129 = vsub.f32 %v1212, %v2128
    %v2130 = vand.u32 %v2129, 4294901760
    %2131 = vmatmul.f32.gmra.mxu0 %v2130
    %v2132 = vpop.f32.mrf.mxu0
    %v2133 = vadd.f32 %v2094, %v2132
    %2134 = vdwg.mxu0
    %v2135 = vand.u32 %v130, 4294901760
    %v2136 = vsub.f32 %v130, %v2135
    %v2137 = vand.u32 %v2136, 4294901760
    %2138 = vmatpush.msra.mxu0 %v2137
    %v2139 = vand.u32 %v127, 4294901760
    %v2140 = vsub.f32 %v127, %v2139
    %v2141 = vand.u32 %v2140, 4294901760
    %2142 = vmatpush.msra.mxu0 %v2141
    %v2143 = vand.u32 %v124, 4294901760
    %v2144 = vsub.f32 %v124, %v2143
    %v2145 = vand.u32 %v2144, 4294901760
    %2146 = vmatpush.msra.mxu0 %v2145
    %v2147 = vand.u32 %v121, 4294901760
    %v2148 = vsub.f32 %v121, %v2147
    %v2149 = vand.u32 %v2148, 4294901760
    %2150 = vmatpush.msra.mxu0 %v2149
    %v2151 = vand.u32 %v118, 4294901760
    %v2152 = vsub.f32 %v118, %v2151
    %v2153 = vand.u32 %v2152, 4294901760
    %2154 = vmatpush.msra.mxu0 %v2153
    %v2155 = vand.u32 %v115, 4294901760
    %v2156 = vsub.f32 %v115, %v2155
    %v2157 = vand.u32 %v2156, 4294901760
    %2158 = vmatpush.msra.mxu0 %v2157
    %v2159 = vand.u32 %v112, 4294901760
    %v2160 = vsub.f32 %v112, %v2159
    %v2161 = vand.u32 %v2160, 4294901760
    %2162 = vmatpush.msra.mxu0 %v2161
    %v2163 = vand.u32 %v109, 4294901760
    %v2164 = vsub.f32 %v109, %v2163
    %v2165 = vand.u32 %v2164, 4294901760
    %2166 = vmatpush.msra.mxu0 %v2165
    %v2167 = vand.u32 %v106, 4294901760
    %v2168 = vsub.f32 %v106, %v2167
    %v2169 = vand.u32 %v2168, 4294901760
    %2170 = vmatpush.msra.mxu0 %v2169
    %v2171 = vand.u32 %v103, 4294901760
    %v2172 = vsub.f32 %v103, %v2171
    %v2173 = vand.u32 %v2172, 4294901760
    %2174 = vmatpush.msra.mxu0 %v2173
    %v2175 = vand.u32 %v100, 4294901760
    %v2176 = vsub.f32 %v100, %v2175
    %v2177 = vand.u32 %v2176, 4294901760
    %2178 = vmatpush.msra.mxu0 %v2177
    %v2179 = vand.u32 %v97, 4294901760
    %v2180 = vsub.f32 %v97, %v2179
    %v2181 = vand.u32 %v2180, 4294901760
    %2182 = vmatpush.msra.mxu0 %v2181
    %v2183 = vand.u32 %v94, 4294901760
    %v2184 = vsub.f32 %v94, %v2183
    %v2185 = vand.u32 %v2184, 4294901760
    %2186 = vmatpush.msra.mxu0 %v2185
    %v2187 = vand.u32 %v91, 4294901760
    %v2188 = vsub.f32 %v91, %v2187
    %v2189 = vand.u32 %v2188, 4294901760
    %2190 = vmatpush.msra.mxu0 %v2189
    %v2191 = vand.u32 %v88, 4294901760
    %v2192 = vsub.f32 %v88, %v2191
    %v2193 = vand.u32 %v2192, 4294901760
    %2194 = vmatpush.msra.mxu0 %v2193
    %v2195 = vand.u32 %v85, 4294901760
    %v2196 = vsub.f32 %v85, %v2195
    %v2197 = vand.u32 %v2196, 4294901760
    %2198 = vmatpush.msra.mxu0 %v2197
    %v2199 = vand.u32 %v1212, 4294901760
    %2200 = vmatmul.f32.gmra.mxu0 %v2199
    %v2201 = vpop.f32.mrf.mxu0
    %v2202 = vadd.f32 %v2133, %v2201
    %2203 = vdwg.mxu0
    %v2204 = vand.u32 %v130, 4294901760
    %2205 = vmatpush.msra.mxu0 %v2204
    %v2206 = vand.u32 %v127, 4294901760
    %2207 = vmatpush.msra.mxu0 %v2206
    %v2208 = vand.u32 %v124, 4294901760
    %2209 = vmatpush.msra.mxu0 %v2208
    %v2210 = vand.u32 %v121, 4294901760
    %2211 = vmatpush.msra.mxu0 %v2210
    %v2212 = vand.u32 %v118, 4294901760
    %2213 = vmatpush.msra.mxu0 %v2212
    %v2214 = vand.u32 %v115, 4294901760
    %2215 = vmatpush.msra.mxu0 %v2214
    %v2216 = vand.u32 %v112, 4294901760
    %2217 = vmatpush.msra.mxu0 %v2216
    %v2218 = vand.u32 %v109, 4294901760
    %2219 = vmatpush.msra.mxu0 %v2218
    %v2220 = vand.u32 %v106, 4294901760
    %2221 = vmatpush.msra.mxu0 %v2220
    %v2222 = vand.u32 %v103, 4294901760
    %2223 = vmatpush.msra.mxu0 %v2222
    %v2224 = vand.u32 %v100, 4294901760
    %2225 = vmatpush.msra.mxu0 %v2224
    %v2226 = vand.u32 %v97, 4294901760
    %2227 = vmatpush.msra.mxu0 %v2226
    %v2228 = vand.u32 %v94, 4294901760
    %2229 = vmatpush.msra.mxu0 %v2228
    %v2230 = vand.u32 %v91, 4294901760
    %2231 = vmatpush.msra.mxu0 %v2230
    %v2232 = vand.u32 %v88, 4294901760
    %2233 = vmatpush.msra.mxu0 %v2232
    %v2234 = vand.u32 %v85, 4294901760
    %2235 = vmatpush.msra.mxu0 %v2234
    %v2236 = vand.u32 %v1212, 4294901760
    %2237 = vmatmul.f32.gmra.mxu0 %v2236
    %v2238 = vpop.f32.mrf.mxu0
    %v2239 = vadd.f32 %v2202, %v2238
    %2240 = vdwg.mxu0
    %v2241 = vadd.f32 %v1215, %v1557
    %v2242 = vadd.f32 %v1216, %v1898
    %v2243 = vxor.u32 %v2241, 2147483648
    %v2244 = vxor.u32 %v2242, 2147483648
    %v2245 = vmul.f32 %v2243, 1.442695
    %v2246 = vpow.pop %v2245
    %v2247 = vmul.f32 %v2244, 1.442695
    %v2248 = vpow.pop %v2247
    %v2249 = vadd.f32 %v2246, 1.0
    %v2250 = vadd.f32 %v2248, 1.0
    %v2251 = vrcp.pop %v2249
    %v2252 = vmul.f32 %v2249, %v2251
    %v2253 = vsub.f32 1.0, %v2252
    %v2254 = vmul.f32 %v2251, %v2253
    %v2255 = vadd.f32 %v2251, %v2254
    %vm2256 = vweird.f32 %v2249
    %vm2257 = vweird.f32 %v2251
    %vm2258 = vmor %vm2256, %vm2257
    %v2259 = vsel %vm2258, %v2251, %v2255
    %v2260 = vand.u32 2147483647, %v2249
    %vm2261 = vcmp.eq.f32.partialorder %v2260, 8.507059e+37
    %v2262 = vand.u32 %v2249, 2147483648
    %v2263 = vor.u32 1.1754944e-38, %v2262
    %v2264 = vsel %vm2261, %v2263, %v2259
    %v2265 = vmul.f32 1.0, %v2264
    %v2266 = vrcp.pop %v2250
    %v2267 = vmul.f32 %v2250, %v2266
    %v2268 = vsub.f32 1.0, %v2267
    %v2269 = vmul.f32 %v2266, %v2268
    %v2270 = vadd.f32 %v2266, %v2269
    %vm2271 = vweird.f32 %v2250
    %vm2272 = vweird.f32 %v2266
    %vm2273 = vmor %vm2271, %vm2272
    %v2274 = vsel %vm2273, %v2266, %v2270
    %v2275 = vand.u32 2147483647, %v2250
    %vm2276 = vcmp.eq.f32.partialorder %v2275, 8.507059e+37
    %v2277 = vand.u32 %v2250, 2147483648
    %v2278 = vor.u32 1.1754944e-38, %v2277
    %v2279 = vsel %vm2276, %v2278, %v2274
    %v2280 = vmul.f32 1.0, %v2279
    %v2281 = vmul.f32 %v2265, %v2239
    %v2282 = vadd.f32 %v1217, %v2281
    %v2283 = vtanh.pop %v2282
    %v2284 = vsub.f32 1.0, %v2280
    %v2285 = vmul.f32 %v2284, %v2283
    %v2286 = vmul.f32 %v2280, %v1212
    %v2287 = vadd.f32 %v2285, %v2286
    %s2288 = scalar_lea.vmem [#allocation11], 8
    %2289 = vst [vmem:[%s2288] sm:$0xff] %v2287
    %s2290 = scalar_lea.vmem [#allocation3], 48
    %v2291 = vld [vmem:[%s2290] sm:$0xff]
    %v2292 = vld [vmem:[%s2290 + $0x8] sm:$0xff]
    %v2293 = vld [vmem:[%s2290 + $0x10] sm:$0xff]
    %v2294 = vand.u32 %v128, 4294901760
    %2295 = vmatpush.msra.mxu0 %v2294
    %v2296 = vand.u32 %v125, 4294901760
    %2297 = vmatpush.msra.mxu0 %v2296
    %v2298 = vand.u32 %v122, 4294901760
    %2299 = vmatpush.msra.mxu0 %v2298
    %v2300 = vand.u32 %v119, 4294901760
    %2301 = vmatpush.msra.mxu0 %v2300
    %v2302 = vand.u32 %v116, 4294901760
    %2303 = vmatpush.msra.mxu0 %v2302
    %v2304 = vand.u32 %v113, 4294901760
    %2305 = vmatpush.msra.mxu0 %v2304
    %v2306 = vand.u32 %v110, 4294901760
    %2307 = vmatpush.msra.mxu0 %v2306
    %v2308 = vand.u32 %v107, 4294901760
    %2309 = vmatpush.msra.mxu0 %v2308
    %v2310 = vand.u32 %v104, 4294901760
    %2311 = vmatpush.msra.mxu0 %v2310
    %v2312 = vand.u32 %v101, 4294901760
    %2313 = vmatpush.msra.mxu0 %v2312
    %v2314 = vand.u32 %v98, 4294901760
    %2315 = vmatpush.msra.mxu0 %v2314
    %v2316 = vand.u32 %v95, 4294901760
    %2317 = vmatpush.msra.mxu0 %v2316
    %v2318 = vand.u32 %v92, 4294901760
    %2319 = vmatpush.msra.mxu0 %v2318
    %v2320 = vand.u32 %v89, 4294901760
    %2321 = vmatpush.msra.mxu0 %v2320
    %v2322 = vand.u32 %v86, 4294901760
    %2323 = vmatpush.msra.mxu0 %v2322
    %v2324 = vand.u32 %v83, 4294901760
    %2325 = vmatpush.msra.mxu0 %v2324
    %v2326 = vand.u32 %v2287, 4294901760
    %v2327 = vsub.f32 %v2287, %v2326
    %v2328 = vand.u32 %v2327, 4294901760
    %v2329 = vsub.f32 %v2327, %v2328
    %v2330 = vand.u32 %v2329, 4294901760
    %2331 = vmatmul.f32.gmra.mxu0 %v2330
    %v2332 = vpop.f32.mrf.mxu0
    %v2333 = vadd.f32 %v137, %v2332
    %2334 = vdwg.mxu0
    %v2335 = vand.u32 %v128, 4294901760
    %v2336 = vsub.f32 %v128, %v2335
    %v2337 = vand.u32 %v2336, 4294901760
    %v2338 = vsub.f32 %v2336, %v2337
    %v2339 = vand.u32 %v2338, 4294901760
    %2340 = vmatpush.msra.mxu0 %v2339
    %v2341 = vand.u32 %v125, 4294901760
    %v2342 = vsub.f32 %v125, %v2341
    %v2343 = vand.u32 %v2342, 4294901760
    %v2344 = vsub.f32 %v2342, %v2343
    %v2345 = vand.u32 %v2344, 4294901760
    %2346 = vmatpush.msra.mxu0 %v2345
    %v2347 = vand.u32 %v122, 4294901760
    %v2348 = vsub.f32 %v122, %v2347
    %v2349 = vand.u32 %v2348, 4294901760
    %v2350 = vsub.f32 %v2348, %v2349
    %v2351 = vand.u32 %v2350, 4294901760
    %2352 = vmatpush.msra.mxu0 %v2351
    %v2353 = vand.u32 %v119, 4294901760
    %v2354 = vsub.f32 %v119, %v2353
    %v2355 = vand.u32 %v2354, 4294901760
    %v2356 = vsub.f32 %v2354, %v2355
    %v2357 = vand.u32 %v2356, 4294901760
    %2358 = vmatpush.msra.mxu0 %v2357
    %v2359 = vand.u32 %v116, 4294901760
    %v2360 = vsub.f32 %v116, %v2359
    %v2361 = vand.u32 %v2360, 4294901760
    %v2362 = vsub.f32 %v2360, %v2361
    %v2363 = vand.u32 %v2362, 4294901760
    %2364 = vmatpush.msra.mxu0 %v2363
    %v2365 = vand.u32 %v113, 4294901760
    %v2366 = vsub.f32 %v113, %v2365
    %v2367 = vand.u32 %v2366, 4294901760
    %v2368 = vsub.f32 %v2366, %v2367
    %v2369 = vand.u32 %v2368, 4294901760
    %2370 = vmatpush.msra.mxu0 %v2369
    %v2371 = vand.u32 %v110, 4294901760
    %v2372 = vsub.f32 %v110, %v2371
    %v2373 = vand.u32 %v2372, 4294901760
    %v2374 = vsub.f32 %v2372, %v2373
    %v2375 = vand.u32 %v2374, 4294901760
    %2376 = vmatpush.msra.mxu0 %v2375
    %v2377 = vand.u32 %v107, 4294901760
    %v2378 = vsub.f32 %v107, %v2377
    %v2379 = vand.u32 %v2378, 4294901760
    %v2380 = vsub.f32 %v2378, %v2379
    %v2381 = vand.u32 %v2380, 4294901760
    %2382 = vmatpush.msra.mxu0 %v2381
    %v2383 = vand.u32 %v104, 4294901760
    %v2384 = vsub.f32 %v104, %v2383
    %v2385 = vand.u32 %v2384, 4294901760
    %v2386 = vsub.f32 %v2384, %v2385
    %v2387 = vand.u32 %v2386, 4294901760
    %2388 = vmatpush.msra.mxu0 %v2387
    %v2389 = vand.u32 %v101, 4294901760
    %v2390 = vsub.f32 %v101, %v2389
    %v2391 = vand.u32 %v2390, 4294901760
    %v2392 = vsub.f32 %v2390, %v2391
    %v2393 = vand.u32 %v2392, 4294901760
    %2394 = vmatpush.msra.mxu0 %v2393
    %v2395 = vand.u32 %v98, 4294901760
    %v2396 = vsub.f32 %v98, %v2395
    %v2397 = vand.u32 %v2396, 4294901760
    %v2398 = vsub.f32 %v2396, %v2397
    %v2399 = vand.u32 %v2398, 4294901760
    %2400 = vmatpush.msra.mxu0 %v2399
    %v2401 = vand.u32 %v95, 4294901760
    %v2402 = vsub.f32 %v95, %v2401
    %v2403 = vand.u32 %v2402, 4294901760
    %v2404 = vsub.f32 %v2402, %v2403
    %v2405 = vand.u32 %v2404, 4294901760
    %2406 = vmatpush.msra.mxu0 %v2405
    %v2407 = vand.u32 %v92, 4294901760
    %v2408 = vsub.f32 %v92, %v2407
    %v2409 = vand.u32 %v2408, 4294901760
    %v2410 = vsub.f32 %v2408, %v2409
    %v2411 = vand.u32 %v2410, 4294901760
    %2412 = vmatpush.msra.mxu0 %v2411
    %v2413 = vand.u32 %v89, 4294901760
    %v2414 = vsub.f32 %v89, %v2413
    %v2415 = vand.u32 %v2414, 4294901760
    %v2416 = vsub.f32 %v2414, %v2415
    %v2417 = vand.u32 %v2416, 4294901760
    %2418 = vmatpush.msra.mxu0 %v2417
    %v2419 = vand.u32 %v86, 4294901760
    %v2420 = vsub.f32 %v86, %v2419
    %v2421 = vand.u32 %v2420, 4294901760
    %v2422 = vsub.f32 %v2420, %v2421
    %v2423 = vand.u32 %v2422, 4294901760
    %2424 = vmatpush.msra.mxu0 %v2423
    %v2425 = vand.u32 %v83, 4294901760
    %v2426 = vsub.f32 %v83, %v2425
    %v2427 = vand.u32 %v2426, 4294901760
    %v2428 = vsub.f32 %v2426, %v2427
    %v2429 = vand.u32 %v2428, 4294901760
    %2430 = vmatpush.msra.mxu0 %v2429
    %v2431 = vand.u32 %v2287, 4294901760
    %2432 = vmatmul.f32.gmra.mxu0 %v2431
    %v2433 = vpop.f32.mrf.mxu0
    %v2434 = vadd.f32 %v2333, %v2433
    %2435 = vdwg.mxu0
    %v2436 = vand.u32 %v128, 4294901760
    %v2437 = vsub.f32 %v128, %v2436
    %2438 = vmatpush.msra.mxu0 %v2437
    %v2439 = vand.u32 %v125, 4294901760
    %v2440 = vsub.f32 %v125, %v2439
    %2441 = vmatpush.msra.mxu0 %v2440
    %v2442 = vand.u32 %v122, 4294901760
    %v2443 = vsub.f32 %v122, %v2442
    %2444 = vmatpush.msra.mxu0 %v2443
    %v2445 = vand.u32 %v119, 4294901760
    %v2446 = vsub.f32 %v119, %v2445
    %2447 = vmatpush.msra.mxu0 %v2446
    %v2448 = vand.u32 %v116, 4294901760
    %v2449 = vsub.f32 %v116, %v2448
    %2450 = vmatpush.msra.mxu0 %v2449
    %v2451 = vand.u32 %v113, 4294901760
    %v2452 = vsub.f32 %v113, %v2451
    %2453 = vmatpush.msra.mxu0 %v2452
    %v2454 = vand.u32 %v110, 4294901760
    %v2455 = vsub.f32 %v110, %v2454
    %2456 = vmatpush.msra.mxu0 %v2455
    %v2457 = vand.u32 %v107, 4294901760
    %v2458 = vsub.f32 %v107, %v2457
    %2459 = vmatpush.msra.mxu0 %v2458
    %v2460 = vand.u32 %v104, 4294901760
    %v2461 = vsub.f32 %v104, %v2460
    %2462 = vmatpush.msra.mxu0 %v2461
    %v2463 = vand.u32 %v101, 4294901760
    %v2464 = vsub.f32 %v101, %v2463
    %2465 = vmatpush.msra.mxu0 %v2464
    %v2466 = vand.u32 %v98, 4294901760
    %v2467 = vsub.f32 %v98, %v2466
    %2468 = vmatpush.msra.mxu0 %v2467
    %v2469 = vand.u32 %v95, 4294901760
    %v2470 = vsub.f32 %v95, %v2469
    %2471 = vmatpush.msra.mxu0 %v2470
    %v2472 = vand.u32 %v92, 4294901760
    %v2473 = vsub.f32 %v92, %v2472
    %2474 = vmatpush.msra.mxu0 %v2473
    %v2475 = vand.u32 %v89, 4294901760
    %v2476 = vsub.f32 %v89, %v2475
    %2477 = vmatpush.msra.mxu0 %v2476
    %v2478 = vand.u32 %v86, 4294901760
    %v2479 = vsub.f32 %v86, %v2478
    %2480 = vmatpush.msra.mxu0 %v2479
    %v2481 = vand.u32 %v83, 4294901760
    %v2482 = vsub.f32 %v83, %v2481
    %2483 = vmatpush.msra.mxu0 %v2482
    %v2484 = vand.u32 %v2287, 4294901760
    %v2485 = vsub.f32 %v2287, %v2484
    %2486 = vmatmul.f32.gmra.mxu0 %v2485
    %v2487 = vpop.f32.mrf.mxu0
    %v2488 = vadd.f32 %v2434, %v2487
    %2489 = vdwg.mxu0
    %v2490 = vand.u32 %v128, 4294901760
    %2491 = vmatpush.msra.mxu0 %v2490
    %v2492 = vand.u32 %v125, 4294901760
    %2493 = vmatpush.msra.mxu0 %v2492
    %v2494 = vand.u32 %v122, 4294901760
    %2495 = vmatpush.msra.mxu0 %v2494
    %v2496 = vand.u32 %v119, 4294901760
    %2497 = vmatpush.msra.mxu0 %v2496
    %v2498 = vand.u32 %v116, 4294901760
    %2499 = vmatpush.msra.mxu0 %v2498
    %v2500 = vand.u32 %v113, 4294901760
    %2501 = vmatpush.msra.mxu0 %v2500
    %v2502 = vand.u32 %v110, 4294901760
    %2503 = vmatpush.msra.mxu0 %v2502
    %v2504 = vand.u32 %v107, 4294901760
    %2505 = vmatpush.msra.mxu0 %v2504
    %v2506 = vand.u32 %v104, 4294901760
    %2507 = vmatpush.msra.mxu0 %v2506
    %v2508 = vand.u32 %v101, 4294901760
    %2509 = vmatpush.msra.mxu0 %v2508
    %v2510 = vand.u32 %v98, 4294901760
    %2511 = vmatpush.msra.mxu0 %v2510
    %v2512 = vand.u32 %v95, 4294901760
    %2513 = vmatpush.msra.mxu0 %v2512
    %v2514 = vand.u32 %v92, 4294901760
    %2515 = vmatpush.msra.mxu0 %v2514
    %v2516 = vand.u32 %v89, 4294901760
    %2517 = vmatpush.msra.mxu0 %v2516
    %v2518 = vand.u32 %v86, 4294901760
    %2519 = vmatpush.msra.mxu0 %v2518
    %v2520 = vand.u32 %v83, 4294901760
    %2521 = vmatpush.msra.mxu0 %v2520
    %v2522 = vand.u32 %v2287, 4294901760
    %v2523 = vsub.f32 %v2287, %v2522
    %v2524 = vand.u32 %v2523, 4294901760
    %2525 = vmatmul.f32.gmra.mxu0 %v2524
    %v2526 = vpop.f32.mrf.mxu0
    %v2527 = vadd.f32 %v2488, %v2526
    %2528 = vdwg.mxu0
    %v2529 = vand.u32 %v128, 4294901760
    %v2530 = vsub.f32 %v128, %v2529
    %v2531 = vand.u32 %v2530, 4294901760
    %2532 = vmatpush.msra.mxu0 %v2531
    %v2533 = vand.u32 %v125, 4294901760
    %v2534 = vsub.f32 %v125, %v2533
    %v2535 = vand.u32 %v2534, 4294901760
    %2536 = vmatpush.msra.mxu0 %v2535
    %v2537 = vand.u32 %v122, 4294901760
    %v2538 = vsub.f32 %v122, %v2537
    %v2539 = vand.u32 %v2538, 4294901760
    %2540 = vmatpush.msra.mxu0 %v2539
    %v2541 = vand.u32 %v119, 4294901760
    %v2542 = vsub.f32 %v119, %v2541
    %v2543 = vand.u32 %v2542, 4294901760
    %2544 = vmatpush.msra.mxu0 %v2543
    %v2545 = vand.u32 %v116, 4294901760
    %v2546 = vsub.f32 %v116, %v2545
    %v2547 = vand.u32 %v2546, 4294901760
    %2548 = vmatpush.msra.mxu0 %v2547
    %v2549 = vand.u32 %v113, 4294901760
    %v2550 = vsub.f32 %v113, %v2549
    %v2551 = vand.u32 %v2550, 4294901760
    %2552 = vmatpush.msra.mxu0 %v2551
    %v2553 = vand.u32 %v110, 4294901760
    %v2554 = vsub.f32 %v110, %v2553
    %v2555 = vand.u32 %v2554, 4294901760
    %2556 = vmatpush.msra.mxu0 %v2555
    %v2557 = vand.u32 %v107, 4294901760
    %v2558 = vsub.f32 %v107, %v2557
    %v2559 = vand.u32 %v2558, 4294901760
    %2560 = vmatpush.msra.mxu0 %v2559
    %v2561 = vand.u32 %v104, 4294901760
    %v2562 = vsub.f32 %v104, %v2561
    %v2563 = vand.u32 %v2562, 4294901760
    %2564 = vmatpush.msra.mxu0 %v2563
    %v2565 = vand.u32 %v101, 4294901760
    %v2566 = vsub.f32 %v101, %v2565
    %v2567 = vand.u32 %v2566, 4294901760
    %2568 = vmatpush.msra.mxu0 %v2567
    %v2569 = vand.u32 %v98, 4294901760
    %v2570 = vsub.f32 %v98, %v2569
    %v2571 = vand.u32 %v2570, 4294901760
    %2572 = vmatpush.msra.mxu0 %v2571
    %v2573 = vand.u32 %v95, 4294901760
    %v2574 = vsub.f32 %v95, %v2573
    %v2575 = vand.u32 %v2574, 4294901760
    %2576 = vmatpush.msra.mxu0 %v2575
    %v2577 = vand.u32 %v92, 4294901760
    %v2578 = vsub.f32 %v92, %v2577
    %v2579 = vand.u32 %v2578, 4294901760
    %2580 = vmatpush.msra.mxu0 %v2579
    %v2581 = vand.u32 %v89, 4294901760
    %v2582 = vsub.f32 %v89, %v2581
    %v2583 = vand.u32 %v2582, 4294901760
    %2584 = vmatpush.msra.mxu0 %v2583
    %v2585 = vand.u32 %v86, 4294901760
    %v2586 = vsub.f32 %v86, %v2585
    %v2587 = vand.u32 %v2586, 4294901760
    %2588 = vmatpush.msra.mxu0 %v2587
    %v2589 = vand.u32 %v83, 4294901760
    %v2590 = vsub.f32 %v83, %v2589
    %v2591 = vand.u32 %v2590, 4294901760
    %2592 = vmatpush.msra.mxu0 %v2591
    %v2593 = vand.u32 %v2287, 4294901760
    %2594 = vmatmul.f32.gmra.mxu0 %v2593
    %v2595 = vpop.f32.mrf.mxu0
    %v2596 = vadd.f32 %v2527, %v2595
    %2597 = vdwg.mxu0
    %v2598 = vand.u32 %v128, 4294901760
    %2599 = vmatpush.msra.mxu0 %v2598
    %v2600 = vand.u32 %v125, 4294901760
    %2601 = vmatpush.msra.mxu0 %v2600
    %v2602 = vand.u32 %v122, 4294901760
    %2603 = vmatpush.msra.mxu0 %v2602
    %v2604 = vand.u32 %v119, 4294901760
    %2605 = vmatpush.msra.mxu0 %v2604
    %v2606 = vand.u32 %v116, 4294901760
    %2607 = vmatpush.msra.mxu0 %v2606
    %v2608 = vand.u32 %v113, 4294901760
    %2609 = vmatpush.msra.mxu0 %v2608
    %v2610 = vand.u32 %v110, 4294901760
    %2611 = vmatpush.msra.mxu0 %v2610
    %v2612 = vand.u32 %v107, 4294901760
    %2613 = vmatpush.msra.mxu0 %v2612
    %v2614 = vand.u32 %v104, 4294901760
    %2615 = vmatpush.msra.mxu0 %v2614
    %v2616 = vand.u32 %v101, 4294901760
    %2617 = vmatpush.msra.mxu0 %v2616
    %v2618 = vand.u32 %v98, 4294901760
    %2619 = vmatpush.msra.mxu0 %v2618
    %v2620 = vand.u32 %v95, 4294901760
    %2621 = vmatpush.msra.mxu0 %v2620
    %v2622 = vand.u32 %v92, 4294901760
    %2623 = vmatpush.msra.mxu0 %v2622
    %v2624 = vand.u32 %v89, 4294901760
    %2625 = vmatpush.msra.mxu0 %v2624
    %v2626 = vand.u32 %v86, 4294901760
    %2627 = vmatpush.msra.mxu0 %v2626
    %v2628 = vand.u32 %v83, 4294901760
    %2629 = vmatpush.msra.mxu0 %v2628
    %v2630 = vand.u32 %v2287, 4294901760
    %2631 = vmatmul.f32.gmra.mxu0 %v2630
    %v2632 = vpop.f32.mrf.mxu0
    %v2633 = vadd.f32 %v2596, %v2632
    %2634 = vdwg.mxu0
    %v2635 = vand.u32 %v129, 4294901760
    %2636 = vmatpush.msra.mxu0 %v2635
    %v2637 = vand.u32 %v126, 4294901760
    %2638 = vmatpush.msra.mxu0 %v2637
    %v2639 = vand.u32 %v123, 4294901760
    %2640 = vmatpush.msra.mxu0 %v2639
    %v2641 = vand.u32 %v120, 4294901760
    %2642 = vmatpush.msra.mxu0 %v2641
    %v2643 = vand.u32 %v117, 4294901760
    %2644 = vmatpush.msra.mxu0 %v2643
    %v2645 = vand.u32 %v114, 4294901760
    %2646 = vmatpush.msra.mxu0 %v2645
    %v2647 = vand.u32 %v111, 4294901760
    %2648 = vmatpush.msra.mxu0 %v2647
    %v2649 = vand.u32 %v108, 4294901760
    %2650 = vmatpush.msra.mxu0 %v2649
    %v2651 = vand.u32 %v105, 4294901760
    %2652 = vmatpush.msra.mxu0 %v2651
    %v2653 = vand.u32 %v102, 4294901760
    %2654 = vmatpush.msra.mxu0 %v2653
    %v2655 = vand.u32 %v99, 4294901760
    %2656 = vmatpush.msra.mxu0 %v2655
    %v2657 = vand.u32 %v96, 4294901760
    %2658 = vmatpush.msra.mxu0 %v2657
    %v2659 = vand.u32 %v93, 4294901760
    %2660 = vmatpush.msra.mxu0 %v2659
    %v2661 = vand.u32 %v90, 4294901760
    %2662 = vmatpush.msra.mxu0 %v2661
    %v2663 = vand.u32 %v87, 4294901760
    %2664 = vmatpush.msra.mxu0 %v2663
    %v2665 = vand.u32 %v84, 4294901760
    %2666 = vmatpush.msra.mxu0 %v2665
    %v2667 = vand.u32 %v2287, 4294901760
    %v2668 = vsub.f32 %v2287, %v2667
    %v2669 = vand.u32 %v2668, 4294901760
    %v2670 = vsub.f32 %v2668, %v2669
    %v2671 = vand.u32 %v2670, 4294901760
    %2672 = vmatmul.f32.gmra.mxu0 %v2671
    %v2673 = vpop.f32.mrf.mxu0
    %v2674 = vadd.f32 %v138, %v2673
    %2675 = vdwg.mxu0
    %v2676 = vand.u32 %v129, 4294901760
    %v2677 = vsub.f32 %v129, %v2676
    %v2678 = vand.u32 %v2677, 4294901760
    %v2679 = vsub.f32 %v2677, %v2678
    %v2680 = vand.u32 %v2679, 4294901760
    %2681 = vmatpush.msra.mxu0 %v2680
    %v2682 = vand.u32 %v126, 4294901760
    %v2683 = vsub.f32 %v126, %v2682
    %v2684 = vand.u32 %v2683, 4294901760
    %v2685 = vsub.f32 %v2683, %v2684
    %v2686 = vand.u32 %v2685, 4294901760
    %2687 = vmatpush.msra.mxu0 %v2686
    %v2688 = vand.u32 %v123, 4294901760
    %v2689 = vsub.f32 %v123, %v2688
    %v2690 = vand.u32 %v2689, 4294901760
    %v2691 = vsub.f32 %v2689, %v2690
    %v2692 = vand.u32 %v2691, 4294901760
    %2693 = vmatpush.msra.mxu0 %v2692
    %v2694 = vand.u32 %v120, 4294901760
    %v2695 = vsub.f32 %v120, %v2694
    %v2696 = vand.u32 %v2695, 4294901760
    %v2697 = vsub.f32 %v2695, %v2696
    %v2698 = vand.u32 %v2697, 4294901760
    %2699 = vmatpush.msra.mxu0 %v2698
    %v2700 = vand.u32 %v117, 4294901760
    %v2701 = vsub.f32 %v117, %v2700
    %v2702 = vand.u32 %v2701, 4294901760
    %v2703 = vsub.f32 %v2701, %v2702
    %v2704 = vand.u32 %v2703, 4294901760
    %2705 = vmatpush.msra.mxu0 %v2704
    %v2706 = vand.u32 %v114, 4294901760
    %v2707 = vsub.f32 %v114, %v2706
    %v2708 = vand.u32 %v2707, 4294901760
    %v2709 = vsub.f32 %v2707, %v2708
    %v2710 = vand.u32 %v2709, 4294901760
    %2711 = vmatpush.msra.mxu0 %v2710
    %v2712 = vand.u32 %v111, 4294901760
    %v2713 = vsub.f32 %v111, %v2712
    %v2714 = vand.u32 %v2713, 4294901760
    %v2715 = vsub.f32 %v2713, %v2714
    %v2716 = vand.u32 %v2715, 4294901760
    %2717 = vmatpush.msra.mxu0 %v2716
    %v2718 = vand.u32 %v108, 4294901760
    %v2719 = vsub.f32 %v108, %v2718
    %v2720 = vand.u32 %v2719, 4294901760
    %v2721 = vsub.f32 %v2719, %v2720
    %v2722 = vand.u32 %v2721, 4294901760
    %2723 = vmatpush.msra.mxu0 %v2722
    %v2724 = vand.u32 %v105, 4294901760
    %v2725 = vsub.f32 %v105, %v2724
    %v2726 = vand.u32 %v2725, 4294901760
    %v2727 = vsub.f32 %v2725, %v2726
    %v2728 = vand.u32 %v2727, 4294901760
    %2729 = vmatpush.msra.mxu0 %v2728
    %v2730 = vand.u32 %v102, 4294901760
    %v2731 = vsub.f32 %v102, %v2730
    %v2732 = vand.u32 %v2731, 4294901760
    %v2733 = vsub.f32 %v2731, %v2732
    %v2734 = vand.u32 %v2733, 4294901760
    %2735 = vmatpush.msra.mxu0 %v2734
    %v2736 = vand.u32 %v99, 4294901760
    %v2737 = vsub.f32 %v99, %v2736
    %v2738 = vand.u32 %v2737, 4294901760
    %v2739 = vsub.f32 %v2737, %v2738
    %v2740 = vand.u32 %v2739, 4294901760
    %2741 = vmatpush.msra.mxu0 %v2740
    %v2742 = vand.u32 %v96, 4294901760
    %v2743 = vsub.f32 %v96, %v2742
    %v2744 = vand.u32 %v2743, 4294901760
    %v2745 = vsub.f32 %v2743, %v2744
    %v2746 = vand.u32 %v2745, 4294901760
    %2747 = vmatpush.msra.mxu0 %v2746
    %v2748 = vand.u32 %v93, 4294901760
    %v2749 = vsub.f32 %v93, %v2748
    %v2750 = vand.u32 %v2749, 4294901760
    %v2751 = vsub.f32 %v2749, %v2750
    %v2752 = vand.u32 %v2751, 4294901760
    %2753 = vmatpush.msra.mxu0 %v2752
    %v2754 = vand.u32 %v90, 4294901760
    %v2755 = vsub.f32 %v90, %v2754
    %v2756 = vand.u32 %v2755, 4294901760
    %v2757 = vsub.f32 %v2755, %v2756
    %v2758 = vand.u32 %v2757, 4294901760
    %2759 = vmatpush.msra.mxu0 %v2758
    %v2760 = vand.u32 %v87, 4294901760
    %v2761 = vsub.f32 %v87, %v2760
    %v2762 = vand.u32 %v2761, 4294901760
    %v2763 = vsub.f32 %v2761, %v2762
    %v2764 = vand.u32 %v2763, 4294901760
    %2765 = vmatpush.msra.mxu0 %v2764
    %v2766 = vand.u32 %v84, 4294901760
    %v2767 = vsub.f32 %v84, %v2766
    %v2768 = vand.u32 %v2767, 4294901760
    %v2769 = vsub.f32 %v2767, %v2768
    %v2770 = vand.u32 %v2769, 4294901760
    %2771 = vmatpush.msra.mxu0 %v2770
    %v2772 = vand.u32 %v2287, 4294901760
    %2773 = vmatmul.f32.gmra.mxu0 %v2772
    %v2774 = vpop.f32.mrf.mxu0
    %v2775 = vadd.f32 %v2674, %v2774
    %2776 = vdwg.mxu0
    %v2777 = vand.u32 %v129, 4294901760
    %v2778 = vsub.f32 %v129, %v2777
    %2779 = vmatpush.msra.mxu0 %v2778
    %v2780 = vand.u32 %v126, 4294901760
    %v2781 = vsub.f32 %v126, %v2780
    %2782 = vmatpush.msra.mxu0 %v2781
    %v2783 = vand.u32 %v123, 4294901760
    %v2784 = vsub.f32 %v123, %v2783
    %2785 = vmatpush.msra.mxu0 %v2784
    %v2786 = vand.u32 %v120, 4294901760
    %v2787 = vsub.f32 %v120, %v2786
    %2788 = vmatpush.msra.mxu0 %v2787
    %v2789 = vand.u32 %v117, 4294901760
    %v2790 = vsub.f32 %v117, %v2789
    %2791 = vmatpush.msra.mxu0 %v2790
    %v2792 = vand.u32 %v114, 4294901760
    %v2793 = vsub.f32 %v114, %v2792
    %2794 = vmatpush.msra.mxu0 %v2793
    %v2795 = vand.u32 %v111, 4294901760
    %v2796 = vsub.f32 %v111, %v2795
    %2797 = vmatpush.msra.mxu0 %v2796
    %v2798 = vand.u32 %v108, 4294901760
    %v2799 = vsub.f32 %v108, %v2798
    %2800 = vmatpush.msra.mxu0 %v2799
    %v2801 = vand.u32 %v105, 4294901760
    %v2802 = vsub.f32 %v105, %v2801
    %2803 = vmatpush.msra.mxu0 %v2802
    %v2804 = vand.u32 %v102, 4294901760
    %v2805 = vsub.f32 %v102, %v2804
    %2806 = vmatpush.msra.mxu0 %v2805
    %v2807 = vand.u32 %v99, 4294901760
    %v2808 = vsub.f32 %v99, %v2807
    %2809 = vmatpush.msra.mxu0 %v2808
    %v2810 = vand.u32 %v96, 4294901760
    %v2811 = vsub.f32 %v96, %v2810
    %2812 = vmatpush.msra.mxu0 %v2811
    %v2813 = vand.u32 %v93, 4294901760
    %v2814 = vsub.f32 %v93, %v2813
    %2815 = vmatpush.msra.mxu0 %v2814
    %v2816 = vand.u32 %v90, 4294901760
    %v2817 = vsub.f32 %v90, %v2816
    %2818 = vmatpush.msra.mxu0 %v2817
    %v2819 = vand.u32 %v87, 4294901760
    %v2820 = vsub.f32 %v87, %v2819
    %2821 = vmatpush.msra.mxu0 %v2820
    %v2822 = vand.u32 %v84, 4294901760
    %v2823 = vsub.f32 %v84, %v2822
    %2824 = vmatpush.msra.mxu0 %v2823
    %v2825 = vand.u32 %v2287, 4294901760
    %v2826 = vsub.f32 %v2287, %v2825
    %2827 = vmatmul.f32.gmra.mxu0 %v2826
    %v2828 = vpop.f32.mrf.mxu0
    %v2829 = vadd.f32 %v2775, %v2828
    %2830 = vdwg.mxu0
    %v2831 = vand.u32 %v129, 4294901760
    %2832 = vmatpush.msra.mxu0 %v2831
    %v2833 = vand.u32 %v126, 4294901760
    %2834 = vmatpush.msra.mxu0 %v2833
    %v2835 = vand.u32 %v123, 4294901760
    %2836 = vmatpush.msra.mxu0 %v2835
    %v2837 = vand.u32 %v120, 4294901760
    %2838 = vmatpush.msra.mxu0 %v2837
    %v2839 = vand.u32 %v117, 4294901760
    %2840 = vmatpush.msra.mxu0 %v2839
    %v2841 = vand.u32 %v114, 4294901760
    %2842 = vmatpush.msra.mxu0 %v2841
    %v2843 = vand.u32 %v111, 4294901760
    %2844 = vmatpush.msra.mxu0 %v2843
    %v2845 = vand.u32 %v108, 4294901760
    %2846 = vmatpush.msra.mxu0 %v2845
    %v2847 = vand.u32 %v105, 4294901760
    %2848 = vmatpush.msra.mxu0 %v2847
    %v2849 = vand.u32 %v102, 4294901760
    %2850 = vmatpush.msra.mxu0 %v2849
    %v2851 = vand.u32 %v99, 4294901760
    %2852 = vmatpush.msra.mxu0 %v2851
    %v2853 = vand.u32 %v96, 4294901760
    %2854 = vmatpush.msra.mxu0 %v2853
    %v2855 = vand.u32 %v93, 4294901760
    %2856 = vmatpush.msra.mxu0 %v2855
    %v2857 = vand.u32 %v90, 4294901760
    %2858 = vmatpush.msra.mxu0 %v2857
    %v2859 = vand.u32 %v87, 4294901760
    %2860 = vmatpush.msra.mxu0 %v2859
    %v2861 = vand.u32 %v84, 4294901760
    %2862 = vmatpush.msra.mxu0 %v2861
    %v2863 = vand.u32 %v2287, 4294901760
    %v2864 = vsub.f32 %v2287, %v2863
    %v2865 = vand.u32 %v2864, 4294901760
    %2866 = vmatmul.f32.gmra.mxu0 %v2865
    %v2867 = vpop.f32.mrf.mxu0
    %v2868 = vadd.f32 %v2829, %v2867
    %2869 = vdwg.mxu0
    %v2870 = vand.u32 %v129, 4294901760
    %v2871 = vsub.f32 %v129, %v2870
    %v2872 = vand.u32 %v2871, 4294901760
    %2873 = vmatpush.msra.mxu0 %v2872
    %v2874 = vand.u32 %v126, 4294901760
    %v2875 = vsub.f32 %v126, %v2874
    %v2876 = vand.u32 %v2875, 4294901760
    %2877 = vmatpush.msra.mxu0 %v2876
    %v2878 = vand.u32 %v123, 4294901760
    %v2879 = vsub.f32 %v123, %v2878
    %v2880 = vand.u32 %v2879, 4294901760
    %2881 = vmatpush.msra.mxu0 %v2880
    %v2882 = vand.u32 %v120, 4294901760
    %v2883 = vsub.f32 %v120, %v2882
    %v2884 = vand.u32 %v2883, 4294901760
    %2885 = vmatpush.msra.mxu0 %v2884
    %v2886 = vand.u32 %v117, 4294901760
    %v2887 = vsub.f32 %v117, %v2886
    %v2888 = vand.u32 %v2887, 4294901760
    %2889 = vmatpush.msra.mxu0 %v2888
    %v2890 = vand.u32 %v114, 4294901760
    %v2891 = vsub.f32 %v114, %v2890
    %v2892 = vand.u32 %v2891, 4294901760
    %2893 = vmatpush.msra.mxu0 %v2892
    %v2894 = vand.u32 %v111, 4294901760
    %v2895 = vsub.f32 %v111, %v2894
    %v2896 = vand.u32 %v2895, 4294901760
    %2897 = vmatpush.msra.mxu0 %v2896
    %v2898 = vand.u32 %v108, 4294901760
    %v2899 = vsub.f32 %v108, %v2898
    %v2900 = vand.u32 %v2899, 4294901760
    %2901 = vmatpush.msra.mxu0 %v2900
    %v2902 = vand.u32 %v105, 4294901760
    %v2903 = vsub.f32 %v105, %v2902
    %v2904 = vand.u32 %v2903, 4294901760
    %2905 = vmatpush.msra.mxu0 %v2904
    %v2906 = vand.u32 %v102, 4294901760
    %v2907 = vsub.f32 %v102, %v2906
    %v2908 = vand.u32 %v2907, 4294901760
    %2909 = vmatpush.msra.mxu0 %v2908
    %v2910 = vand.u32 %v99, 4294901760
    %v2911 = vsub.f32 %v99, %v2910
    %v2912 = vand.u32 %v2911, 4294901760
    %2913 = vmatpush.msra.mxu0 %v2912
    %v2914 = vand.u32 %v96, 4294901760
    %v2915 = vsub.f32 %v96, %v2914
    %v2916 = vand.u32 %v2915, 4294901760
    %2917 = vmatpush.msra.mxu0 %v2916
    %v2918 = vand.u32 %v93, 4294901760
    %v2919 = vsub.f32 %v93, %v2918
    %v2920 = vand.u32 %v2919, 4294901760
    %2921 = vmatpush.msra.mxu0 %v2920
    %v2922 = vand.u32 %v90, 4294901760
    %v2923 = vsub.f32 %v90, %v2922
    %v2924 = vand.u32 %v2923, 4294901760
    %2925 = vmatpush.msra.mxu0 %v2924
    %v2926 = vand.u32 %v87, 4294901760
    %v2927 = vsub.f32 %v87, %v2926
    %v2928 = vand.u32 %v2927, 4294901760
    %2929 = vmatpush.msra.mxu0 %v2928
    %v2930 = vand.u32 %v84, 4294901760
    %v2931 = vsub.f32 %v84, %v2930
    %v2932 = vand.u32 %v2931, 4294901760
    %2933 = vmatpush.msra.mxu0 %v2932
    %v2934 = vand.u32 %v2287, 4294901760
    %2935 = vmatmul.f32.gmra.mxu0 %v2934
    %v2936 = vpop.f32.mrf.mxu0
    %v2937 = vadd.f32 %v2868, %v2936
    %2938 = vdwg.mxu0
    %v2939 = vand.u32 %v129, 4294901760
    %2940 = vmatpush.msra.mxu0 %v2939
    %v2941 = vand.u32 %v126, 4294901760
    %2942 = vmatpush.msra.mxu0 %v2941
    %v2943 = vand.u32 %v123, 4294901760
    %2944 = vmatpush.msra.mxu0 %v2943
    %v2945 = vand.u32 %v120, 4294901760
    %2946 = vmatpush.msra.mxu0 %v2945
    %v2947 = vand.u32 %v117, 4294901760
    %2948 = vmatpush.msra.mxu0 %v2947
    %v2949 = vand.u32 %v114, 4294901760
    %2950 = vmatpush.msra.mxu0 %v2949
    %v2951 = vand.u32 %v111, 4294901760
    %2952 = vmatpush.msra.mxu0 %v2951
    %v2953 = vand.u32 %v108, 4294901760
    %2954 = vmatpush.msra.mxu0 %v2953
    %v2955 = vand.u32 %v105, 4294901760
    %2956 = vmatpush.msra.mxu0 %v2955
    %v2957 = vand.u32 %v102, 4294901760
    %2958 = vmatpush.msra.mxu0 %v2957
    %v2959 = vand.u32 %v99, 4294901760
    %2960 = vmatpush.msra.mxu0 %v2959
    %v2961 = vand.u32 %v96, 4294901760
    %2962 = vmatpush.msra.mxu0 %v2961
    %v2963 = vand.u32 %v93, 4294901760
    %2964 = vmatpush.msra.mxu0 %v2963
    %v2965 = vand.u32 %v90, 4294901760
    %2966 = vmatpush.msra.mxu0 %v2965
    %v2967 = vand.u32 %v87, 4294901760
    %2968 = vmatpush.msra.mxu0 %v2967
    %v2969 = vand.u32 %v84, 4294901760
    %2970 = vmatpush.msra.mxu0 %v2969
    %v2971 = vand.u32 %v2287, 4294901760
    %2972 = vmatmul.f32.gmra.mxu0 %v2971
    %v2973 = vpop.f32.mrf.mxu0
    %v2974 = vadd.f32 %v2937, %v2973
    %2975 = vdwg.mxu0
    %v2976 = vand.u32 %v130, 4294901760
    %2977 = vmatpush.msra.mxu0 %v2976
    %v2978 = vand.u32 %v127, 4294901760
    %2979 = vmatpush.msra.mxu0 %v2978
    %v2980 = vand.u32 %v124, 4294901760
    %2981 = vmatpush.msra.mxu0 %v2980
    %v2982 = vand.u32 %v121, 4294901760
    %2983 = vmatpush.msra.mxu0 %v2982
    %v2984 = vand.u32 %v118, 4294901760
    %2985 = vmatpush.msra.mxu0 %v2984
    %v2986 = vand.u32 %v115, 4294901760
    %2987 = vmatpush.msra.mxu0 %v2986
    %v2988 = vand.u32 %v112, 4294901760
    %2989 = vmatpush.msra.mxu0 %v2988
    %v2990 = vand.u32 %v109, 4294901760
    %2991 = vmatpush.msra.mxu0 %v2990
    %v2992 = vand.u32 %v106, 4294901760
    %2993 = vmatpush.msra.mxu0 %v2992
    %v2994 = vand.u32 %v103, 4294901760
    %2995 = vmatpush.msra.mxu0 %v2994
    %v2996 = vand.u32 %v100, 4294901760
    %2997 = vmatpush.msra.mxu0 %v2996
    %v2998 = vand.u32 %v97, 4294901760
    %2999 = vmatpush.msra.mxu0 %v2998
    %v3000 = vand.u32 %v94, 4294901760
    %3001 = vmatpush.msra.mxu0 %v3000
    %v3002 = vand.u32 %v91, 4294901760
    %3003 = vmatpush.msra.mxu0 %v3002
    %v3004 = vand.u32 %v88, 4294901760
    %3005 = vmatpush.msra.mxu0 %v3004
    %v3006 = vand.u32 %v85, 4294901760
    %3007 = vmatpush.msra.mxu0 %v3006
    %v3008 = vand.u32 %v2287, 4294901760
    %v3009 = vsub.f32 %v2287, %v3008
    %v3010 = vand.u32 %v3009, 4294901760
    %v3011 = vsub.f32 %v3009, %v3010
    %v3012 = vand.u32 %v3011, 4294901760
    %3013 = vmatmul.f32.gmra.mxu0 %v3012
    %v3014 = vpop.f32.mrf.mxu0
    %v3015 = vadd.f32 %v139, %v3014
    %3016 = vdwg.mxu0
    %v3017 = vand.u32 %v130, 4294901760
    %v3018 = vsub.f32 %v130, %v3017
    %v3019 = vand.u32 %v3018, 4294901760
    %v3020 = vsub.f32 %v3018, %v3019
    %v3021 = vand.u32 %v3020, 4294901760
    %3022 = vmatpush.msra.mxu0 %v3021
    %v3023 = vand.u32 %v127, 4294901760
    %v3024 = vsub.f32 %v127, %v3023
    %v3025 = vand.u32 %v3024, 4294901760
    %v3026 = vsub.f32 %v3024, %v3025
    %v3027 = vand.u32 %v3026, 4294901760
    %3028 = vmatpush.msra.mxu0 %v3027
    %v3029 = vand.u32 %v124, 4294901760
    %v3030 = vsub.f32 %v124, %v3029
    %v3031 = vand.u32 %v3030, 4294901760
    %v3032 = vsub.f32 %v3030, %v3031
    %v3033 = vand.u32 %v3032, 4294901760
    %3034 = vmatpush.msra.mxu0 %v3033
    %v3035 = vand.u32 %v121, 4294901760
    %v3036 = vsub.f32 %v121, %v3035
    %v3037 = vand.u32 %v3036, 4294901760
    %v3038 = vsub.f32 %v3036, %v3037
    %v3039 = vand.u32 %v3038, 4294901760
    %3040 = vmatpush.msra.mxu0 %v3039
    %v3041 = vand.u32 %v118, 4294901760
    %v3042 = vsub.f32 %v118, %v3041
    %v3043 = vand.u32 %v3042, 4294901760
    %v3044 = vsub.f32 %v3042, %v3043
    %v3045 = vand.u32 %v3044, 4294901760
    %3046 = vmatpush.msra.mxu0 %v3045
    %v3047 = vand.u32 %v115, 4294901760
    %v3048 = vsub.f32 %v115, %v3047
    %v3049 = vand.u32 %v3048, 4294901760
    %v3050 = vsub.f32 %v3048, %v3049
    %v3051 = vand.u32 %v3050, 4294901760
    %3052 = vmatpush.msra.mxu0 %v3051
    %v3053 = vand.u32 %v112, 4294901760
    %v3054 = vsub.f32 %v112, %v3053
    %v3055 = vand.u32 %v3054, 4294901760
    %v3056 = vsub.f32 %v3054, %v3055
    %v3057 = vand.u32 %v3056, 4294901760
    %3058 = vmatpush.msra.mxu0 %v3057
    %v3059 = vand.u32 %v109, 4294901760
    %v3060 = vsub.f32 %v109, %v3059
    %v3061 = vand.u32 %v3060, 4294901760
    %v3062 = vsub.f32 %v3060, %v3061
    %v3063 = vand.u32 %v3062, 4294901760
    %3064 = vmatpush.msra.mxu0 %v3063
    %v3065 = vand.u32 %v106, 4294901760
    %v3066 = vsub.f32 %v106, %v3065
    %v3067 = vand.u32 %v3066, 4294901760
    %v3068 = vsub.f32 %v3066, %v3067
    %v3069 = vand.u32 %v3068, 4294901760
    %3070 = vmatpush.msra.mxu0 %v3069
    %v3071 = vand.u32 %v103, 4294901760
    %v3072 = vsub.f32 %v103, %v3071
    %v3073 = vand.u32 %v3072, 4294901760
    %v3074 = vsub.f32 %v3072, %v3073
    %v3075 = vand.u32 %v3074, 4294901760
    %3076 = vmatpush.msra.mxu0 %v3075
    %v3077 = vand.u32 %v100, 4294901760
    %v3078 = vsub.f32 %v100, %v3077
    %v3079 = vand.u32 %v3078, 4294901760
    %v3080 = vsub.f32 %v3078, %v3079
    %v3081 = vand.u32 %v3080, 4294901760
    %3082 = vmatpush.msra.mxu0 %v3081
    %v3083 = vand.u32 %v97, 4294901760
    %v3084 = vsub.f32 %v97, %v3083
    %v3085 = vand.u32 %v3084, 4294901760
    %v3086 = vsub.f32 %v3084, %v3085
    %v3087 = vand.u32 %v3086, 4294901760
    %3088 = vmatpush.msra.mxu0 %v3087
    %v3089 = vand.u32 %v94, 4294901760
    %v3090 = vsub.f32 %v94, %v3089
    %v3091 = vand.u32 %v3090, 4294901760
    %v3092 = vsub.f32 %v3090, %v3091
    %v3093 = vand.u32 %v3092, 4294901760
    %3094 = vmatpush.msra.mxu0 %v3093
    %v3095 = vand.u32 %v91, 4294901760
    %v3096 = vsub.f32 %v91, %v3095
    %v3097 = vand.u32 %v3096, 4294901760
    %v3098 = vsub.f32 %v3096, %v3097
    %v3099 = vand.u32 %v3098, 4294901760
    %3100 = vmatpush.msra.mxu0 %v3099
    %v3101 = vand.u32 %v88, 4294901760
    %v3102 = vsub.f32 %v88, %v3101
    %v3103 = vand.u32 %v3102, 4294901760
    %v3104 = vsub.f32 %v3102, %v3103
    %v3105 = vand.u32 %v3104, 4294901760
    %3106 = vmatpush.msra.mxu0 %v3105
    %v3107 = vand.u32 %v85, 4294901760
    %v3108 = vsub.f32 %v85, %v3107
    %v3109 = vand.u32 %v3108, 4294901760
    %v3110 = vsub.f32 %v3108, %v3109
    %v3111 = vand.u32 %v3110, 4294901760
    %3112 = vmatpush.msra.mxu0 %v3111
    %v3113 = vand.u32 %v2287, 4294901760
    %3114 = vmatmul.f32.gmra.mxu0 %v3113
    %v3115 = vpop.f32.mrf.mxu0
    %v3116 = vadd.f32 %v3015, %v3115
    %3117 = vdwg.mxu0
    %v3118 = vand.u32 %v130, 4294901760
    %v3119 = vsub.f32 %v130, %v3118
    %3120 = vmatpush.msra.mxu0 %v3119
    %v3121 = vand.u32 %v127, 4294901760
    %v3122 = vsub.f32 %v127, %v3121
    %3123 = vmatpush.msra.mxu0 %v3122
    %v3124 = vand.u32 %v124, 4294901760
    %v3125 = vsub.f32 %v124, %v3124
    %3126 = vmatpush.msra.mxu0 %v3125
    %v3127 = vand.u32 %v121, 4294901760
    %v3128 = vsub.f32 %v121, %v3127
    %3129 = vmatpush.msra.mxu0 %v3128
    %v3130 = vand.u32 %v118, 4294901760
    %v3131 = vsub.f32 %v118, %v3130
    %3132 = vmatpush.msra.mxu0 %v3131
    %v3133 = vand.u32 %v115, 4294901760
    %v3134 = vsub.f32 %v115, %v3133
    %3135 = vmatpush.msra.mxu0 %v3134
    %v3136 = vand.u32 %v112, 4294901760
    %v3137 = vsub.f32 %v112, %v3136
    %3138 = vmatpush.msra.mxu0 %v3137
    %v3139 = vand.u32 %v109, 4294901760
    %v3140 = vsub.f32 %v109, %v3139
    %3141 = vmatpush.msra.mxu0 %v3140
    %v3142 = vand.u32 %v106, 4294901760
    %v3143 = vsub.f32 %v106, %v3142
    %3144 = vmatpush.msra.mxu0 %v3143
    %v3145 = vand.u32 %v103, 4294901760
    %v3146 = vsub.f32 %v103, %v3145
    %3147 = vmatpush.msra.mxu0 %v3146
    %v3148 = vand.u32 %v100, 4294901760
    %v3149 = vsub.f32 %v100, %v3148
    %3150 = vmatpush.msra.mxu0 %v3149
    %v3151 = vand.u32 %v97, 4294901760
    %v3152 = vsub.f32 %v97, %v3151
    %3153 = vmatpush.msra.mxu0 %v3152
    %v3154 = vand.u32 %v94, 4294901760
    %v3155 = vsub.f32 %v94, %v3154
    %3156 = vmatpush.msra.mxu0 %v3155
    %v3157 = vand.u32 %v91, 4294901760
    %v3158 = vsub.f32 %v91, %v3157
    %3159 = vmatpush.msra.mxu0 %v3158
    %v3160 = vand.u32 %v88, 4294901760
    %v3161 = vsub.f32 %v88, %v3160
    %3162 = vmatpush.msra.mxu0 %v3161
    %v3163 = vand.u32 %v85, 4294901760
    %v3164 = vsub.f32 %v85, %v3163
    %3165 = vmatpush.msra.mxu0 %v3164
    %v3166 = vand.u32 %v2287, 4294901760
    %v3167 = vsub.f32 %v2287, %v3166
    %3168 = vmatmul.f32.gmra.mxu0 %v3167
    %v3169 = vpop.f32.mrf.mxu0
    %v3170 = vadd.f32 %v3116, %v3169
    %3171 = vdwg.mxu0
    %v3172 = vand.u32 %v130, 4294901760
    %3173 = vmatpush.msra.mxu0 %v3172
    %v3174 = vand.u32 %v127, 4294901760
    %3175 = vmatpush.msra.mxu0 %v3174
    %v3176 = vand.u32 %v124, 4294901760
    %3177 = vmatpush.msra.mxu0 %v3176
    %v3178 = vand.u32 %v121, 4294901760
    %3179 = vmatpush.msra.mxu0 %v3178
    %v3180 = vand.u32 %v118, 4294901760
    %3181 = vmatpush.msra.mxu0 %v3180
    %v3182 = vand.u32 %v115, 4294901760
    %3183 = vmatpush.msra.mxu0 %v3182
    %v3184 = vand.u32 %v112, 4294901760
    %3185 = vmatpush.msra.mxu0 %v3184
    %v3186 = vand.u32 %v109, 4294901760
    %3187 = vmatpush.msra.mxu0 %v3186
    %v3188 = vand.u32 %v106, 4294901760
    %3189 = vmatpush.msra.mxu0 %v3188
    %v3190 = vand.u32 %v103, 4294901760
    %3191 = vmatpush.msra.mxu0 %v3190
    %v3192 = vand.u32 %v100, 4294901760
    %3193 = vmatpush.msra.mxu0 %v3192
    %v3194 = vand.u32 %v97, 4294901760
    %3195 = vmatpush.msra.mxu0 %v3194
    %v3196 = vand.u32 %v94, 4294901760
    %3197 = vmatpush.msra.mxu0 %v3196
    %v3198 = vand.u32 %v91, 4294901760
    %3199 = vmatpush.msra.mxu0 %v3198
    %v3200 = vand.u32 %v88, 4294901760
    %3201 = vmatpush.msra.mxu0 %v3200
    %v3202 = vand.u32 %v85, 4294901760
    %3203 = vmatpush.msra.mxu0 %v3202
    %v3204 = vand.u32 %v2287, 4294901760
    %v3205 = vsub.f32 %v2287, %v3204
    %v3206 = vand.u32 %v3205, 4294901760
    %3207 = vmatmul.f32.gmra.mxu0 %v3206
    %v3208 = vpop.f32.mrf.mxu0
    %v3209 = vadd.f32 %v3170, %v3208
    %3210 = vdwg.mxu0
    %v3211 = vand.u32 %v130, 4294901760
    %v3212 = vsub.f32 %v130, %v3211
    %v3213 = vand.u32 %v3212, 4294901760
    %3214 = vmatpush.msra.mxu0 %v3213
    %v3215 = vand.u32 %v127, 4294901760
    %v3216 = vsub.f32 %v127, %v3215
    %v3217 = vand.u32 %v3216, 4294901760
    %3218 = vmatpush.msra.mxu0 %v3217
    %v3219 = vand.u32 %v124, 4294901760
    %v3220 = vsub.f32 %v124, %v3219
    %v3221 = vand.u32 %v3220, 4294901760
    %3222 = vmatpush.msra.mxu0 %v3221
    %v3223 = vand.u32 %v121, 4294901760
    %v3224 = vsub.f32 %v121, %v3223
    %v3225 = vand.u32 %v3224, 4294901760
    %3226 = vmatpush.msra.mxu0 %v3225
    %v3227 = vand.u32 %v118, 4294901760
    %v3228 = vsub.f32 %v118, %v3227
    %v3229 = vand.u32 %v3228, 4294901760
    %3230 = vmatpush.msra.mxu0 %v3229
    %v3231 = vand.u32 %v115, 4294901760
    %v3232 = vsub.f32 %v115, %v3231
    %v3233 = vand.u32 %v3232, 4294901760
    %3234 = vmatpush.msra.mxu0 %v3233
    %v3235 = vand.u32 %v112, 4294901760
    %v3236 = vsub.f32 %v112, %v3235
    %v3237 = vand.u32 %v3236, 4294901760
    %3238 = vmatpush.msra.mxu0 %v3237
    %v3239 = vand.u32 %v109, 4294901760
    %v3240 = vsub.f32 %v109, %v3239
    %v3241 = vand.u32 %v3240, 4294901760
    %3242 = vmatpush.msra.mxu0 %v3241
    %v3243 = vand.u32 %v106, 4294901760
    %v3244 = vsub.f32 %v106, %v3243
    %v3245 = vand.u32 %v3244, 4294901760
    %3246 = vmatpush.msra.mxu0 %v3245
    %v3247 = vand.u32 %v103, 4294901760
    %v3248 = vsub.f32 %v103, %v3247
    %v3249 = vand.u32 %v3248, 4294901760
    %3250 = vmatpush.msra.mxu0 %v3249
    %v3251 = vand.u32 %v100, 4294901760
    %v3252 = vsub.f32 %v100, %v3251
    %v3253 = vand.u32 %v3252, 4294901760
    %3254 = vmatpush.msra.mxu0 %v3253
    %v3255 = vand.u32 %v97, 4294901760
    %v3256 = vsub.f32 %v97, %v3255
    %v3257 = vand.u32 %v3256, 4294901760
    %3258 = vmatpush.msra.mxu0 %v3257
    %v3259 = vand.u32 %v94, 4294901760
    %v3260 = vsub.f32 %v94, %v3259
    %v3261 = vand.u32 %v3260, 4294901760
    %3262 = vmatpush.msra.mxu0 %v3261
    %v3263 = vand.u32 %v91, 4294901760
    %v3264 = vsub.f32 %v91, %v3263
    %v3265 = vand.u32 %v3264, 4294901760
    %3266 = vmatpush.msra.mxu0 %v3265
    %v3267 = vand.u32 %v88, 4294901760
    %v3268 = vsub.f32 %v88, %v3267
    %v3269 = vand.u32 %v3268, 4294901760
    %3270 = vmatpush.msra.mxu0 %v3269
    %v3271 = vand.u32 %v85, 4294901760
    %v3272 = vsub.f32 %v85, %v3271
    %v3273 = vand.u32 %v3272, 4294901760
    %3274 = vmatpush.msra.mxu0 %v3273
    %v3275 = vand.u32 %v2287, 4294901760
    %3276 = vmatmul.f32.gmra.mxu0 %v3275
    %v3277 = vpop.f32.mrf.mxu0
    %v3278 = vadd.f32 %v3209, %v3277
    %3279 = vdwg.mxu0
    %v3280 = vand.u32 %v130, 4294901760
    %3281 = vmatpush.msra.mxu0 %v3280
    %v3282 = vand.u32 %v127, 4294901760
    %3283 = vmatpush.msra.mxu0 %v3282
    %v3284 = vand.u32 %v124, 4294901760
    %3285 = vmatpush.msra.mxu0 %v3284
    %v3286 = vand.u32 %v121, 4294901760
    %3287 = vmatpush.msra.mxu0 %v3286
    %v3288 = vand.u32 %v118, 4294901760
    %3289 = vmatpush.msra.mxu0 %v3288
    %v3290 = vand.u32 %v115, 4294901760
    %3291 = vmatpush.msra.mxu0 %v3290
    %v3292 = vand.u32 %v112, 4294901760
    %3293 = vmatpush.msra.mxu0 %v3292
    %v3294 = vand.u32 %v109, 4294901760
    %3295 = vmatpush.msra.mxu0 %v3294
    %v3296 = vand.u32 %v106, 4294901760
    %3297 = vmatpush.msra.mxu0 %v3296
    %v3298 = vand.u32 %v103, 4294901760
    %3299 = vmatpush.msra.mxu0 %v3298
    %v3300 = vand.u32 %v100, 4294901760
    %3301 = vmatpush.msra.mxu0 %v3300
    %v3302 = vand.u32 %v97, 4294901760
    %3303 = vmatpush.msra.mxu0 %v3302
    %v3304 = vand.u32 %v94, 4294901760
    %3305 = vmatpush.msra.mxu0 %v3304
    %v3306 = vand.u32 %v91, 4294901760
    %3307 = vmatpush.msra.mxu0 %v3306
    %v3308 = vand.u32 %v88, 4294901760
    %3309 = vmatpush.msra.mxu0 %v3308
    %v3310 = vand.u32 %v85, 4294901760
    %3311 = vmatpush.msra.mxu0 %v3310
    %v3312 = vand.u32 %v2287, 4294901760
    %3313 = vmatmul.f32.gmra.mxu0 %v3312
    %v3314 = vpop.f32.mrf.mxu0
    %v3315 = vadd.f32 %v3278, %v3314
    %3316 = vdwg.mxu0
    %v3317 = vadd.f32 %v2291, %v2633
    %v3318 = vadd.f32 %v2292, %v2974
    %v3319 = vxor.u32 %v3317, 2147483648
    %v3320 = vxor.u32 %v3318, 2147483648
    %v3321 = vmul.f32 %v3319, 1.442695
    %v3322 = vpow.pop %v3321
    %v3323 = vmul.f32 %v3320, 1.442695
    %v3324 = vpow.pop %v3323
    %v3325 = vadd.f32 %v3322, 1.0
    %v3326 = vadd.f32 %v3324, 1.0
    %v3327 = vrcp.pop %v3325
    %v3328 = vmul.f32 %v3325, %v3327
    %v3329 = vsub.f32 1.0, %v3328
    %v3330 = vmul.f32 %v3327, %v3329
    %v3331 = vadd.f32 %v3327, %v3330
    %vm3332 = vweird.f32 %v3325
    %vm3333 = vweird.f32 %v3327
    %vm3334 = vmor %vm3332, %vm3333
    %v3335 = vsel %vm3334, %v3327, %v3331
    %v3336 = vand.u32 2147483647, %v3325
    %vm3337 = vcmp.eq.f32.partialorder %v3336, 8.507059e+37
    %v3338 = vand.u32 %v3325, 2147483648
    %v3339 = vor.u32 1.1754944e-38, %v3338
    %v3340 = vsel %vm3337, %v3339, %v3335
    %v3341 = vmul.f32 1.0, %v3340
    %v3342 = vrcp.pop %v3326
    %v3343 = vmul.f32 %v3326, %v3342
    %v3344 = vsub.f32 1.0, %v3343
    %v3345 = vmul.f32 %v3342, %v3344
    %v3346 = vadd.f32 %v3342, %v3345
    %vm3347 = vweird.f32 %v3326
    %vm3348 = vweird.f32 %v3342
    %vm3349 = vmor %vm3347, %vm3348
    %v3350 = vsel %vm3349, %v3342, %v3346
    %v3351 = vand.u32 2147483647, %v3326
    %vm3352 = vcmp.eq.f32.partialorder %v3351, 8.507059e+37
    %v3353 = vand.u32 %v3326, 2147483648
    %v3354 = vor.u32 1.1754944e-38, %v3353
    %v3355 = vsel %vm3352, %v3354, %v3350
    %v3356 = vmul.f32 1.0, %v3355
    %v3357 = vmul.f32 %v3341, %v3315
    %v3358 = vadd.f32 %v2293, %v3357
    %v3359 = vtanh.pop %v3358
    %v3360 = vsub.f32 1.0, %v3356
    %v3361 = vmul.f32 %v3360, %v3359
    %v3362 = vmul.f32 %v3356, %v2287
    %v3363 = vadd.f32 %v3361, %v3362
    %s3364 = scalar_lea.vmem [#allocation11], 16
    %3365 = vst [vmem:[%s3364] sm:$0xff] %v3363
    %s3366 = scalar_lea.vmem [#allocation3], 72
    %v3367 = vld [vmem:[%s3366] sm:$0xff]
    %v3368 = vld [vmem:[%s3366 + $0x8] sm:$0xff]
    %v3369 = vld [vmem:[%s3366 + $0x10] sm:$0xff]
    %v3370 = vand.u32 %v128, 4294901760
    %3371 = vmatpush.msra.mxu0 %v3370
    %v3372 = vand.u32 %v125, 4294901760
    %3373 = vmatpush.msra.mxu0 %v3372
    %v3374 = vand.u32 %v122, 4294901760
    %3375 = vmatpush.msra.mxu0 %v3374
    %v3376 = vand.u32 %v119, 4294901760
    %3377 = vmatpush.msra.mxu0 %v3376
    %v3378 = vand.u32 %v116, 4294901760
    %3379 = vmatpush.msra.mxu0 %v3378
    %v3380 = vand.u32 %v113, 4294901760
    %3381 = vmatpush.msra.mxu0 %v3380
    %v3382 = vand.u32 %v110, 4294901760
    %3383 = vmatpush.msra.mxu0 %v3382
    %v3384 = vand.u32 %v107, 4294901760
    %3385 = vmatpush.msra.mxu0 %v3384
    %v3386 = vand.u32 %v104, 4294901760
    %3387 = vmatpush.msra.mxu0 %v3386
    %v3388 = vand.u32 %v101, 4294901760
    %3389 = vmatpush.msra.mxu0 %v3388
    %v3390 = vand.u32 %v98, 4294901760
    %3391 = vmatpush.msra.mxu0 %v3390
    %v3392 = vand.u32 %v95, 4294901760
    %3393 = vmatpush.msra.mxu0 %v3392
    %v3394 = vand.u32 %v92, 4294901760
    %3395 = vmatpush.msra.mxu0 %v3394
    %v3396 = vand.u32 %v89, 4294901760
    %3397 = vmatpush.msra.mxu0 %v3396
    %v3398 = vand.u32 %v86, 4294901760
    %3399 = vmatpush.msra.mxu0 %v3398
    %v3400 = vand.u32 %v83, 4294901760
    %3401 = vmatpush.msra.mxu0 %v3400
    %v3402 = vand.u32 %v3363, 4294901760
    %v3403 = vsub.f32 %v3363, %v3402
    %v3404 = vand.u32 %v3403, 4294901760
    %v3405 = vsub.f32 %v3403, %v3404
    %v3406 = vand.u32 %v3405, 4294901760
    %3407 = vmatmul.f32.gmra.mxu0 %v3406
    %v3408 = vpop.f32.mrf.mxu0
    %v3409 = vadd.f32 %v137, %v3408
    %3410 = vdwg.mxu0
    %v3411 = vand.u32 %v128, 4294901760
    %v3412 = vsub.f32 %v128, %v3411
    %v3413 = vand.u32 %v3412, 4294901760
    %v3414 = vsub.f32 %v3412, %v3413
    %v3415 = vand.u32 %v3414, 4294901760
    %3416 = vmatpush.msra.mxu0 %v3415
    %v3417 = vand.u32 %v125, 4294901760
    %v3418 = vsub.f32 %v125, %v3417
    %v3419 = vand.u32 %v3418, 4294901760
    %v3420 = vsub.f32 %v3418, %v3419
    %v3421 = vand.u32 %v3420, 4294901760
    %3422 = vmatpush.msra.mxu0 %v3421
    %v3423 = vand.u32 %v122, 4294901760
    %v3424 = vsub.f32 %v122, %v3423
    %v3425 = vand.u32 %v3424, 4294901760
    %v3426 = vsub.f32 %v3424, %v3425
    %v3427 = vand.u32 %v3426, 4294901760
    %3428 = vmatpush.msra.mxu0 %v3427
    %v3429 = vand.u32 %v119, 4294901760
    %v3430 = vsub.f32 %v119, %v3429
    %v3431 = vand.u32 %v3430, 4294901760
    %v3432 = vsub.f32 %v3430, %v3431
    %v3433 = vand.u32 %v3432, 4294901760
    %3434 = vmatpush.msra.mxu0 %v3433
    %v3435 = vand.u32 %v116, 4294901760
    %v3436 = vsub.f32 %v116, %v3435
    %v3437 = vand.u32 %v3436, 4294901760
    %v3438 = vsub.f32 %v3436, %v3437
    %v3439 = vand.u32 %v3438, 4294901760
    %3440 = vmatpush.msra.mxu0 %v3439
    %v3441 = vand.u32 %v113, 4294901760
    %v3442 = vsub.f32 %v113, %v3441
    %v3443 = vand.u32 %v3442, 4294901760
    %v3444 = vsub.f32 %v3442, %v3443
    %v3445 = vand.u32 %v3444, 4294901760
    %3446 = vmatpush.msra.mxu0 %v3445
    %v3447 = vand.u32 %v110, 4294901760
    %v3448 = vsub.f32 %v110, %v3447
    %v3449 = vand.u32 %v3448, 4294901760
    %v3450 = vsub.f32 %v3448, %v3449
    %v3451 = vand.u32 %v3450, 4294901760
    %3452 = vmatpush.msra.mxu0 %v3451
    %v3453 = vand.u32 %v107, 4294901760
    %v3454 = vsub.f32 %v107, %v3453
    %v3455 = vand.u32 %v3454, 4294901760
    %v3456 = vsub.f32 %v3454, %v3455
    %v3457 = vand.u32 %v3456, 4294901760
    %3458 = vmatpush.msra.mxu0 %v3457
    %v3459 = vand.u32 %v104, 4294901760
    %v3460 = vsub.f32 %v104, %v3459
    %v3461 = vand.u32 %v3460, 4294901760
    %v3462 = vsub.f32 %v3460, %v3461
    %v3463 = vand.u32 %v3462, 4294901760
    %3464 = vmatpush.msra.mxu0 %v3463
    %v3465 = vand.u32 %v101, 4294901760
    %v3466 = vsub.f32 %v101, %v3465
    %v3467 = vand.u32 %v3466, 4294901760
    %v3468 = vsub.f32 %v3466, %v3467
    %v3469 = vand.u32 %v3468, 4294901760
    %3470 = vmatpush.msra.mxu0 %v3469
    %v3471 = vand.u32 %v98, 4294901760
    %v3472 = vsub.f32 %v98, %v3471
    %v3473 = vand.u32 %v3472, 4294901760
    %v3474 = vsub.f32 %v3472, %v3473
    %v3475 = vand.u32 %v3474, 4294901760
    %3476 = vmatpush.msra.mxu0 %v3475
    %v3477 = vand.u32 %v95, 4294901760
    %v3478 = vsub.f32 %v95, %v3477
    %v3479 = vand.u32 %v3478, 4294901760
    %v3480 = vsub.f32 %v3478, %v3479
    %v3481 = vand.u32 %v3480, 4294901760
    %3482 = vmatpush.msra.mxu0 %v3481
    %v3483 = vand.u32 %v92, 4294901760
    %v3484 = vsub.f32 %v92, %v3483
    %v3485 = vand.u32 %v3484, 4294901760
    %v3486 = vsub.f32 %v3484, %v3485
    %v3487 = vand.u32 %v3486, 4294901760
    %3488 = vmatpush.msra.mxu0 %v3487
    %v3489 = vand.u32 %v89, 4294901760
    %v3490 = vsub.f32 %v89, %v3489
    %v3491 = vand.u32 %v3490, 4294901760
    %v3492 = vsub.f32 %v3490, %v3491
    %v3493 = vand.u32 %v3492, 4294901760
    %3494 = vmatpush.msra.mxu0 %v3493
    %v3495 = vand.u32 %v86, 4294901760
    %v3496 = vsub.f32 %v86, %v3495
    %v3497 = vand.u32 %v3496, 4294901760
    %v3498 = vsub.f32 %v3496, %v3497
    %v3499 = vand.u32 %v3498, 4294901760
    %3500 = vmatpush.msra.mxu0 %v3499
    %v3501 = vand.u32 %v83, 4294901760
    %v3502 = vsub.f32 %v83, %v3501
    %v3503 = vand.u32 %v3502, 4294901760
    %v3504 = vsub.f32 %v3502, %v3503
    %v3505 = vand.u32 %v3504, 4294901760
    %3506 = vmatpush.msra.mxu0 %v3505
    %v3507 = vand.u32 %v3363, 4294901760
    %3508 = vmatmul.f32.gmra.mxu0 %v3507
    %v3509 = vpop.f32.mrf.mxu0
    %v3510 = vadd.f32 %v3409, %v3509
    %3511 = vdwg.mxu0
    %v3512 = vand.u32 %v128, 4294901760
    %v3513 = vsub.f32 %v128, %v3512
    %3514 = vmatpush.msra.mxu0 %v3513
    %v3515 = vand.u32 %v125, 4294901760
    %v3516 = vsub.f32 %v125, %v3515
    %3517 = vmatpush.msra.mxu0 %v3516
    %v3518 = vand.u32 %v122, 4294901760
    %v3519 = vsub.f32 %v122, %v3518
    %3520 = vmatpush.msra.mxu0 %v3519
    %v3521 = vand.u32 %v119, 4294901760
    %v3522 = vsub.f32 %v119, %v3521
    %3523 = vmatpush.msra.mxu0 %v3522
    %v3524 = vand.u32 %v116, 4294901760
    %v3525 = vsub.f32 %v116, %v3524
    %3526 = vmatpush.msra.mxu0 %v3525
    %v3527 = vand.u32 %v113, 4294901760
    %v3528 = vsub.f32 %v113, %v3527
    %3529 = vmatpush.msra.mxu0 %v3528
    %v3530 = vand.u32 %v110, 4294901760
    %v3531 = vsub.f32 %v110, %v3530
    %3532 = vmatpush.msra.mxu0 %v3531
    %v3533 = vand.u32 %v107, 4294901760
    %v3534 = vsub.f32 %v107, %v3533
    %3535 = vmatpush.msra.mxu0 %v3534
    %v3536 = vand.u32 %v104, 4294901760
    %v3537 = vsub.f32 %v104, %v3536
    %3538 = vmatpush.msra.mxu0 %v3537
    %v3539 = vand.u32 %v101, 4294901760
    %v3540 = vsub.f32 %v101, %v3539
    %3541 = vmatpush.msra.mxu0 %v3540
    %v3542 = vand.u32 %v98, 4294901760
    %v3543 = vsub.f32 %v98, %v3542
    %3544 = vmatpush.msra.mxu0 %v3543
    %v3545 = vand.u32 %v95, 4294901760
    %v3546 = vsub.f32 %v95, %v3545
    %3547 = vmatpush.msra.mxu0 %v3546
    %v3548 = vand.u32 %v92, 4294901760
    %v3549 = vsub.f32 %v92, %v3548
    %3550 = vmatpush.msra.mxu0 %v3549
    %v3551 = vand.u32 %v89, 4294901760
    %v3552 = vsub.f32 %v89, %v3551
    %3553 = vmatpush.msra.mxu0 %v3552
    %v3554 = vand.u32 %v86, 4294901760
    %v3555 = vsub.f32 %v86, %v3554
    %3556 = vmatpush.msra.mxu0 %v3555
    %v3557 = vand.u32 %v83, 4294901760
    %v3558 = vsub.f32 %v83, %v3557
    %3559 = vmatpush.msra.mxu0 %v3558
    %v3560 = vand.u32 %v3363, 4294901760
    %v3561 = vsub.f32 %v3363, %v3560
    %3562 = vmatmul.f32.gmra.mxu0 %v3561
    %v3563 = vpop.f32.mrf.mxu0
    %v3564 = vadd.f32 %v3510, %v3563
    %3565 = vdwg.mxu0
    %v3566 = vand.u32 %v128, 4294901760
    %3567 = vmatpush.msra.mxu0 %v3566
    %v3568 = vand.u32 %v125, 4294901760
    %3569 = vmatpush.msra.mxu0 %v3568
    %v3570 = vand.u32 %v122, 4294901760
    %3571 = vmatpush.msra.mxu0 %v3570
    %v3572 = vand.u32 %v119, 4294901760
    %3573 = vmatpush.msra.mxu0 %v3572
    %v3574 = vand.u32 %v116, 4294901760
    %3575 = vmatpush.msra.mxu0 %v3574
    %v3576 = vand.u32 %v113, 4294901760
    %3577 = vmatpush.msra.mxu0 %v3576
    %v3578 = vand.u32 %v110, 4294901760
    %3579 = vmatpush.msra.mxu0 %v3578
    %v3580 = vand.u32 %v107, 4294901760
    %3581 = vmatpush.msra.mxu0 %v3580
    %v3582 = vand.u32 %v104, 4294901760
    %3583 = vmatpush.msra.mxu0 %v3582
    %v3584 = vand.u32 %v101, 4294901760
    %3585 = vmatpush.msra.mxu0 %v3584
    %v3586 = vand.u32 %v98, 4294901760
    %3587 = vmatpush.msra.mxu0 %v3586
    %v3588 = vand.u32 %v95, 4294901760
    %3589 = vmatpush.msra.mxu0 %v3588
    %v3590 = vand.u32 %v92, 4294901760
    %3591 = vmatpush.msra.mxu0 %v3590
    %v3592 = vand.u32 %v89, 4294901760
    %3593 = vmatpush.msra.mxu0 %v3592
    %v3594 = vand.u32 %v86, 4294901760
    %3595 = vmatpush.msra.mxu0 %v3594
    %v3596 = vand.u32 %v83, 4294901760
    %3597 = vmatpush.msra.mxu0 %v3596
    %v3598 = vand.u32 %v3363, 4294901760
    %v3599 = vsub.f32 %v3363, %v3598
    %v3600 = vand.u32 %v3599, 4294901760
    %3601 = vmatmul.f32.gmra.mxu0 %v3600
    %v3602 = vpop.f32.mrf.mxu0
    %v3603 = vadd.f32 %v3564, %v3602
    %3604 = vdwg.mxu0
    %v3605 = vand.u32 %v128, 4294901760
    %v3606 = vsub.f32 %v128, %v3605
    %v3607 = vand.u32 %v3606, 4294901760
    %3608 = vmatpush.msra.mxu0 %v3607
    %v3609 = vand.u32 %v125, 4294901760
    %v3610 = vsub.f32 %v125, %v3609
    %v3611 = vand.u32 %v3610, 4294901760
    %3612 = vmatpush.msra.mxu0 %v3611
    %v3613 = vand.u32 %v122, 4294901760
    %v3614 = vsub.f32 %v122, %v3613
    %v3615 = vand.u32 %v3614, 4294901760
    %3616 = vmatpush.msra.mxu0 %v3615
    %v3617 = vand.u32 %v119, 4294901760
    %v3618 = vsub.f32 %v119, %v3617
    %v3619 = vand.u32 %v3618, 4294901760
    %3620 = vmatpush.msra.mxu0 %v3619
    %v3621 = vand.u32 %v116, 4294901760
    %v3622 = vsub.f32 %v116, %v3621
    %v3623 = vand.u32 %v3622, 4294901760
    %3624 = vmatpush.msra.mxu0 %v3623
    %v3625 = vand.u32 %v113, 4294901760
    %v3626 = vsub.f32 %v113, %v3625
    %v3627 = vand.u32 %v3626, 4294901760
    %3628 = vmatpush.msra.mxu0 %v3627
    %v3629 = vand.u32 %v110, 4294901760
    %v3630 = vsub.f32 %v110, %v3629
    %v3631 = vand.u32 %v3630, 4294901760
    %3632 = vmatpush.msra.mxu0 %v3631
    %v3633 = vand.u32 %v107, 4294901760
    %v3634 = vsub.f32 %v107, %v3633
    %v3635 = vand.u32 %v3634, 4294901760
    %3636 = vmatpush.msra.mxu0 %v3635
    %v3637 = vand.u32 %v104, 4294901760
    %v3638 = vsub.f32 %v104, %v3637
    %v3639 = vand.u32 %v3638, 4294901760
    %3640 = vmatpush.msra.mxu0 %v3639
    %v3641 = vand.u32 %v101, 4294901760
    %v3642 = vsub.f32 %v101, %v3641
    %v3643 = vand.u32 %v3642, 4294901760
    %3644 = vmatpush.msra.mxu0 %v3643
    %v3645 = vand.u32 %v98, 4294901760
    %v3646 = vsub.f32 %v98, %v3645
    %v3647 = vand.u32 %v3646, 4294901760
    %3648 = vmatpush.msra.mxu0 %v3647
    %v3649 = vand.u32 %v95, 4294901760
    %v3650 = vsub.f32 %v95, %v3649
    %v3651 = vand.u32 %v3650, 4294901760
    %3652 = vmatpush.msra.mxu0 %v3651
    %v3653 = vand.u32 %v92, 4294901760
    %v3654 = vsub.f32 %v92, %v3653
    %v3655 = vand.u32 %v3654, 4294901760
    %3656 = vmatpush.msra.mxu0 %v3655
    %v3657 = vand.u32 %v89, 4294901760
    %v3658 = vsub.f32 %v89, %v3657
    %v3659 = vand.u32 %v3658, 4294901760
    %3660 = vmatpush.msra.mxu0 %v3659
    %v3661 = vand.u32 %v86, 4294901760
    %v3662 = vsub.f32 %v86, %v3661
    %v3663 = vand.u32 %v3662, 4294901760
    %3664 = vmatpush.msra.mxu0 %v3663
    %v3665 = vand.u32 %v83, 4294901760
    %v3666 = vsub.f32 %v83, %v3665
    %v3667 = vand.u32 %v3666, 4294901760
    %3668 = vmatpush.msra.mxu0 %v3667
    %v3669 = vand.u32 %v3363, 4294901760
    %3670 = vmatmul.f32.gmra.mxu0 %v3669
    %v3671 = vpop.f32.mrf.mxu0
    %v3672 = vadd.f32 %v3603, %v3671
    %3673 = vdwg.mxu0
    %v3674 = vand.u32 %v128, 4294901760
    %3675 = vmatpush.msra.mxu0 %v3674
    %v3676 = vand.u32 %v125, 4294901760
    %3677 = vmatpush.msra.mxu0 %v3676
    %v3678 = vand.u32 %v122, 4294901760
    %3679 = vmatpush.msra.mxu0 %v3678
    %v3680 = vand.u32 %v119, 4294901760
    %3681 = vmatpush.msra.mxu0 %v3680
    %v3682 = vand.u32 %v116, 4294901760
    %3683 = vmatpush.msra.mxu0 %v3682
    %v3684 = vand.u32 %v113, 4294901760
    %3685 = vmatpush.msra.mxu0 %v3684
    %v3686 = vand.u32 %v110, 4294901760
    %3687 = vmatpush.msra.mxu0 %v3686
    %v3688 = vand.u32 %v107, 4294901760
    %3689 = vmatpush.msra.mxu0 %v3688
    %v3690 = vand.u32 %v104, 4294901760
    %3691 = vmatpush.msra.mxu0 %v3690
    %v3692 = vand.u32 %v101, 4294901760
    %3693 = vmatpush.msra.mxu0 %v3692
    %v3694 = vand.u32 %v98, 4294901760
    %3695 = vmatpush.msra.mxu0 %v3694
    %v3696 = vand.u32 %v95, 4294901760
    %3697 = vmatpush.msra.mxu0 %v3696
    %v3698 = vand.u32 %v92, 4294901760
    %3699 = vmatpush.msra.mxu0 %v3698
    %v3700 = vand.u32 %v89, 4294901760
    %3701 = vmatpush.msra.mxu0 %v3700
    %v3702 = vand.u32 %v86, 4294901760
    %3703 = vmatpush.msra.mxu0 %v3702
    %v3704 = vand.u32 %v83, 4294901760
    %3705 = vmatpush.msra.mxu0 %v3704
    %v3706 = vand.u32 %v3363, 4294901760
    %3707 = vmatmul.f32.gmra.mxu0 %v3706
    %v3708 = vpop.f32.mrf.mxu0
    %v3709 = vadd.f32 %v3672, %v3708
    %3710 = vdwg.mxu0
    %v3711 = vand.u32 %v129, 4294901760
    %3712 = vmatpush.msra.mxu0 %v3711
    %v3713 = vand.u32 %v126, 4294901760
    %3714 = vmatpush.msra.mxu0 %v3713
    %v3715 = vand.u32 %v123, 4294901760
    %3716 = vmatpush.msra.mxu0 %v3715
    %v3717 = vand.u32 %v120, 4294901760
    %3718 = vmatpush.msra.mxu0 %v3717
    %v3719 = vand.u32 %v117, 4294901760
    %3720 = vmatpush.msra.mxu0 %v3719
    %v3721 = vand.u32 %v114, 4294901760
    %3722 = vmatpush.msra.mxu0 %v3721
    %v3723 = vand.u32 %v111, 4294901760
    %3724 = vmatpush.msra.mxu0 %v3723
    %v3725 = vand.u32 %v108, 4294901760
    %3726 = vmatpush.msra.mxu0 %v3725
    %v3727 = vand.u32 %v105, 4294901760
    %3728 = vmatpush.msra.mxu0 %v3727
    %v3729 = vand.u32 %v102, 4294901760
    %3730 = vmatpush.msra.mxu0 %v3729
    %v3731 = vand.u32 %v99, 4294901760
    %3732 = vmatpush.msra.mxu0 %v3731
    %v3733 = vand.u32 %v96, 4294901760
    %3734 = vmatpush.msra.mxu0 %v3733
    %v3735 = vand.u32 %v93, 4294901760
    %3736 = vmatpush.msra.mxu0 %v3735
    %v3737 = vand.u32 %v90, 4294901760
    %3738 = vmatpush.msra.mxu0 %v3737
    %v3739 = vand.u32 %v87, 4294901760
    %3740 = vmatpush.msra.mxu0 %v3739
    %v3741 = vand.u32 %v84, 4294901760
    %3742 = vmatpush.msra.mxu0 %v3741
    %v3743 = vand.u32 %v3363, 4294901760
    %v3744 = vsub.f32 %v3363, %v3743
    %v3745 = vand.u32 %v3744, 4294901760
    %v3746 = vsub.f32 %v3744, %v3745
    %v3747 = vand.u32 %v3746, 4294901760
    %3748 = vmatmul.f32.gmra.mxu0 %v3747
    %v3749 = vpop.f32.mrf.mxu0
    %v3750 = vadd.f32 %v138, %v3749
    %3751 = vdwg.mxu0
    %v3752 = vand.u32 %v129, 4294901760
    %v3753 = vsub.f32 %v129, %v3752
    %v3754 = vand.u32 %v3753, 4294901760
    %v3755 = vsub.f32 %v3753, %v3754
    %v3756 = vand.u32 %v3755, 4294901760
    %3757 = vmatpush.msra.mxu0 %v3756
    %v3758 = vand.u32 %v126, 4294901760
    %v3759 = vsub.f32 %v126, %v3758
    %v3760 = vand.u32 %v3759, 4294901760
    %v3761 = vsub.f32 %v3759, %v3760
    %v3762 = vand.u32 %v3761, 4294901760
    %3763 = vmatpush.msra.mxu0 %v3762
    %v3764 = vand.u32 %v123, 4294901760
    %v3765 = vsub.f32 %v123, %v3764
    %v3766 = vand.u32 %v3765, 4294901760
    %v3767 = vsub.f32 %v3765, %v3766
    %v3768 = vand.u32 %v3767, 4294901760
    %3769 = vmatpush.msra.mxu0 %v3768
    %v3770 = vand.u32 %v120, 4294901760
    %v3771 = vsub.f32 %v120, %v3770
    %v3772 = vand.u32 %v3771, 4294901760
    %v3773 = vsub.f32 %v3771, %v3772
    %v3774 = vand.u32 %v3773, 4294901760
    %3775 = vmatpush.msra.mxu0 %v3774
    %v3776 = vand.u32 %v117, 4294901760
    %v3777 = vsub.f32 %v117, %v3776
    %v3778 = vand.u32 %v3777, 4294901760
    %v3779 = vsub.f32 %v3777, %v3778
    %v3780 = vand.u32 %v3779, 4294901760
    %3781 = vmatpush.msra.mxu0 %v3780
    %v3782 = vand.u32 %v114, 4294901760
    %v3783 = vsub.f32 %v114, %v3782
    %v3784 = vand.u32 %v3783, 4294901760
    %v3785 = vsub.f32 %v3783, %v3784
    %v3786 = vand.u32 %v3785, 4294901760
    %3787 = vmatpush.msra.mxu0 %v3786
    %v3788 = vand.u32 %v111, 4294901760
    %v3789 = vsub.f32 %v111, %v3788
    %v3790 = vand.u32 %v3789, 4294901760
    %v3791 = vsub.f32 %v3789, %v3790
    %v3792 = vand.u32 %v3791, 4294901760
    %3793 = vmatpush.msra.mxu0 %v3792
    %v3794 = vand.u32 %v108, 4294901760
    %v3795 = vsub.f32 %v108, %v3794
    %v3796 = vand.u32 %v3795, 4294901760
    %v3797 = vsub.f32 %v3795, %v3796
    %v3798 = vand.u32 %v3797, 4294901760
    %3799 = vmatpush.msra.mxu0 %v3798
    %v3800 = vand.u32 %v105, 4294901760
    %v3801 = vsub.f32 %v105, %v3800
    %v3802 = vand.u32 %v3801, 4294901760
    %v3803 = vsub.f32 %v3801, %v3802
    %v3804 = vand.u32 %v3803, 4294901760
    %3805 = vmatpush.msra.mxu0 %v3804
    %v3806 = vand.u32 %v102, 4294901760
    %v3807 = vsub.f32 %v102, %v3806
    %v3808 = vand.u32 %v3807, 4294901760
    %v3809 = vsub.f32 %v3807, %v3808
    %v3810 = vand.u32 %v3809, 4294901760
    %3811 = vmatpush.msra.mxu0 %v3810
    %v3812 = vand.u32 %v99, 4294901760
    %v3813 = vsub.f32 %v99, %v3812
    %v3814 = vand.u32 %v3813, 4294901760
    %v3815 = vsub.f32 %v3813, %v3814
    %v3816 = vand.u32 %v3815, 4294901760
    %3817 = vmatpush.msra.mxu0 %v3816
    %v3818 = vand.u32 %v96, 4294901760
    %v3819 = vsub.f32 %v96, %v3818
    %v3820 = vand.u32 %v3819, 4294901760
    %v3821 = vsub.f32 %v3819, %v3820
    %v3822 = vand.u32 %v3821, 4294901760
    %3823 = vmatpush.msra.mxu0 %v3822
    %v3824 = vand.u32 %v93, 4294901760
    %v3825 = vsub.f32 %v93, %v3824
    %v3826 = vand.u32 %v3825, 4294901760
    %v3827 = vsub.f32 %v3825, %v3826
    %v3828 = vand.u32 %v3827, 4294901760
    %3829 = vmatpush.msra.mxu0 %v3828
    %v3830 = vand.u32 %v90, 4294901760
    %v3831 = vsub.f32 %v90, %v3830
    %v3832 = vand.u32 %v3831, 4294901760
    %v3833 = vsub.f32 %v3831, %v3832
    %v3834 = vand.u32 %v3833, 4294901760
    %3835 = vmatpush.msra.mxu0 %v3834
    %v3836 = vand.u32 %v87, 4294901760
    %v3837 = vsub.f32 %v87, %v3836
    %v3838 = vand.u32 %v3837, 4294901760
    %v3839 = vsub.f32 %v3837, %v3838
    %v3840 = vand.u32 %v3839, 4294901760
    %3841 = vmatpush.msra.mxu0 %v3840
    %v3842 = vand.u32 %v84, 4294901760
    %v3843 = vsub.f32 %v84, %v3842
    %v3844 = vand.u32 %v3843, 4294901760
    %v3845 = vsub.f32 %v3843, %v3844
    %v3846 = vand.u32 %v3845, 4294901760
    %3847 = vmatpush.msra.mxu0 %v3846
    %v3848 = vand.u32 %v3363, 4294901760
    %3849 = vmatmul.f32.gmra.mxu0 %v3848
    %v3850 = vpop.f32.mrf.mxu0
    %v3851 = vadd.f32 %v3750, %v3850
    %3852 = vdwg.mxu0
    %v3853 = vand.u32 %v129, 4294901760
    %v3854 = vsub.f32 %v129, %v3853
    %3855 = vmatpush.msra.mxu0 %v3854
    %v3856 = vand.u32 %v126, 4294901760
    %v3857 = vsub.f32 %v126, %v3856
    %3858 = vmatpush.msra.mxu0 %v3857
    %v3859 = vand.u32 %v123, 4294901760
    %v3860 = vsub.f32 %v123, %v3859
    %3861 = vmatpush.msra.mxu0 %v3860
    %v3862 = vand.u32 %v120, 4294901760
    %v3863 = vsub.f32 %v120, %v3862
    %3864 = vmatpush.msra.mxu0 %v3863
    %v3865 = vand.u32 %v117, 4294901760
    %v3866 = vsub.f32 %v117, %v3865
    %3867 = vmatpush.msra.mxu0 %v3866
    %v3868 = vand.u32 %v114, 4294901760
    %v3869 = vsub.f32 %v114, %v3868
    %3870 = vmatpush.msra.mxu0 %v3869
    %v3871 = vand.u32 %v111, 4294901760
    %v3872 = vsub.f32 %v111, %v3871
    %3873 = vmatpush.msra.mxu0 %v3872
    %v3874 = vand.u32 %v108, 4294901760
    %v3875 = vsub.f32 %v108, %v3874
    %3876 = vmatpush.msra.mxu0 %v3875
    %v3877 = vand.u32 %v105, 4294901760
    %v3878 = vsub.f32 %v105, %v3877
    %3879 = vmatpush.msra.mxu0 %v3878
    %v3880 = vand.u32 %v102, 4294901760
    %v3881 = vsub.f32 %v102, %v3880
    %3882 = vmatpush.msra.mxu0 %v3881
    %v3883 = vand.u32 %v99, 4294901760
    %v3884 = vsub.f32 %v99, %v3883
    %3885 = vmatpush.msra.mxu0 %v3884
    %v3886 = vand.u32 %v96, 4294901760
    %v3887 = vsub.f32 %v96, %v3886
    %3888 = vmatpush.msra.mxu0 %v3887
    %v3889 = vand.u32 %v93, 4294901760
    %v3890 = vsub.f32 %v93, %v3889
    %3891 = vmatpush.msra.mxu0 %v3890
    %v3892 = vand.u32 %v90, 4294901760
    %v3893 = vsub.f32 %v90, %v3892
    %3894 = vmatpush.msra.mxu0 %v3893
    %v3895 = vand.u32 %v87, 4294901760
    %v3896 = vsub.f32 %v87, %v3895
    %3897 = vmatpush.msra.mxu0 %v3896
    %v3898 = vand.u32 %v84, 4294901760
    %v3899 = vsub.f32 %v84, %v3898
    %3900 = vmatpush.msra.mxu0 %v3899
    %v3901 = vand.u32 %v3363, 4294901760
    %v3902 = vsub.f32 %v3363, %v3901
    %3903 = vmatmul.f32.gmra.mxu0 %v3902
    %v3904 = vpop.f32.mrf.mxu0
    %v3905 = vadd.f32 %v3851, %v3904
    %3906 = vdwg.mxu0
    %v3907 = vand.u32 %v129, 4294901760
    %3908 = vmatpush.msra.mxu0 %v3907
    %v3909 = vand.u32 %v126, 4294901760
    %3910 = vmatpush.msra.mxu0 %v3909
    %v3911 = vand.u32 %v123, 4294901760
    %3912 = vmatpush.msra.mxu0 %v3911
    %v3913 = vand.u32 %v120, 4294901760
    %3914 = vmatpush.msra.mxu0 %v3913
    %v3915 = vand.u32 %v117, 4294901760
    %3916 = vmatpush.msra.mxu0 %v3915
    %v3917 = vand.u32 %v114, 4294901760
    %3918 = vmatpush.msra.mxu0 %v3917
    %v3919 = vand.u32 %v111, 4294901760
    %3920 = vmatpush.msra.mxu0 %v3919
    %v3921 = vand.u32 %v108, 4294901760
    %3922 = vmatpush.msra.mxu0 %v3921
    %v3923 = vand.u32 %v105, 4294901760
    %3924 = vmatpush.msra.mxu0 %v3923
    %v3925 = vand.u32 %v102, 4294901760
    %3926 = vmatpush.msra.mxu0 %v3925
    %v3927 = vand.u32 %v99, 4294901760
    %3928 = vmatpush.msra.mxu0 %v3927
    %v3929 = vand.u32 %v96, 4294901760
    %3930 = vmatpush.msra.mxu0 %v3929
    %v3931 = vand.u32 %v93, 4294901760
    %3932 = vmatpush.msra.mxu0 %v3931
    %v3933 = vand.u32 %v90, 4294901760
    %3934 = vmatpush.msra.mxu0 %v3933
    %v3935 = vand.u32 %v87, 4294901760
    %3936 = vmatpush.msra.mxu0 %v3935
    %v3937 = vand.u32 %v84, 4294901760
    %3938 = vmatpush.msra.mxu0 %v3937
    %v3939 = vand.u32 %v3363, 4294901760
    %v3940 = vsub.f32 %v3363, %v3939
    %v3941 = vand.u32 %v3940, 4294901760
    %3942 = vmatmul.f32.gmra.mxu0 %v3941
    %v3943 = vpop.f32.mrf.mxu0
    %v3944 = vadd.f32 %v3905, %v3943
    %3945 = vdwg.mxu0
    %v3946 = vand.u32 %v129, 4294901760
    %v3947 = vsub.f32 %v129, %v3946
    %v3948 = vand.u32 %v3947, 4294901760
    %3949 = vmatpush.msra.mxu0 %v3948
    %v3950 = vand.u32 %v126, 4294901760
    %v3951 = vsub.f32 %v126, %v3950
    %v3952 = vand.u32 %v3951, 4294901760
    %3953 = vmatpush.msra.mxu0 %v3952
    %v3954 = vand.u32 %v123, 4294901760
    %v3955 = vsub.f32 %v123, %v3954
    %v3956 = vand.u32 %v3955, 4294901760
    %3957 = vmatpush.msra.mxu0 %v3956
    %v3958 = vand.u32 %v120, 4294901760
    %v3959 = vsub.f32 %v120, %v3958
    %v3960 = vand.u32 %v3959, 4294901760
    %3961 = vmatpush.msra.mxu0 %v3960
    %v3962 = vand.u32 %v117, 4294901760
    %v3963 = vsub.f32 %v117, %v3962
    %v3964 = vand.u32 %v3963, 4294901760
    %3965 = vmatpush.msra.mxu0 %v3964
    %v3966 = vand.u32 %v114, 4294901760
    %v3967 = vsub.f32 %v114, %v3966
    %v3968 = vand.u32 %v3967, 4294901760
    %3969 = vmatpush.msra.mxu0 %v3968
    %v3970 = vand.u32 %v111, 4294901760
    %v3971 = vsub.f32 %v111, %v3970
    %v3972 = vand.u32 %v3971, 4294901760
    %3973 = vmatpush.msra.mxu0 %v3972
    %v3974 = vand.u32 %v108, 4294901760
    %v3975 = vsub.f32 %v108, %v3974
    %v3976 = vand.u32 %v3975, 4294901760
    %3977 = vmatpush.msra.mxu0 %v3976
    %v3978 = vand.u32 %v105, 4294901760
    %v3979 = vsub.f32 %v105, %v3978
    %v3980 = vand.u32 %v3979, 4294901760
    %3981 = vmatpush.msra.mxu0 %v3980
    %v3982 = vand.u32 %v102, 4294901760
    %v3983 = vsub.f32 %v102, %v3982
    %v3984 = vand.u32 %v3983, 4294901760
    %3985 = vmatpush.msra.mxu0 %v3984
    %v3986 = vand.u32 %v99, 4294901760
    %v3987 = vsub.f32 %v99, %v3986
    %v3988 = vand.u32 %v3987, 4294901760
    %3989 = vmatpush.msra.mxu0 %v3988
    %v3990 = vand.u32 %v96, 4294901760
    %v3991 = vsub.f32 %v96, %v3990
    %v3992 = vand.u32 %v3991, 4294901760
    %3993 = vmatpush.msra.mxu0 %v3992
    %v3994 = vand.u32 %v93, 4294901760
    %v3995 = vsub.f32 %v93, %v3994
    %v3996 = vand.u32 %v3995, 4294901760
    %3997 = vmatpush.msra.mxu0 %v3996
    %v3998 = vand.u32 %v90, 4294901760
    %v3999 = vsub.f32 %v90, %v3998
    %v4000 = vand.u32 %v3999, 4294901760
    %4001 = vmatpush.msra.mxu0 %v4000
    %v4002 = vand.u32 %v87, 4294901760
    %v4003 = vsub.f32 %v87, %v4002
    %v4004 = vand.u32 %v4003, 4294901760
    %4005 = vmatpush.msra.mxu0 %v4004
    %v4006 = vand.u32 %v84, 4294901760
    %v4007 = vsub.f32 %v84, %v4006
    %v4008 = vand.u32 %v4007, 4294901760
    %4009 = vmatpush.msra.mxu0 %v4008
    %v4010 = vand.u32 %v3363, 4294901760
    %4011 = vmatmul.f32.gmra.mxu0 %v4010
    %v4012 = vpop.f32.mrf.mxu0
    %v4013 = vadd.f32 %v3944, %v4012
    %4014 = vdwg.mxu0
    %v4015 = vand.u32 %v129, 4294901760
    %4016 = vmatpush.msra.mxu0 %v4015
    %v4017 = vand.u32 %v126, 4294901760
    %4018 = vmatpush.msra.mxu0 %v4017
    %v4019 = vand.u32 %v123, 4294901760
    %4020 = vmatpush.msra.mxu0 %v4019
    %v4021 = vand.u32 %v120, 4294901760
    %4022 = vmatpush.msra.mxu0 %v4021
    %v4023 = vand.u32 %v117, 4294901760
    %4024 = vmatpush.msra.mxu0 %v4023
    %v4025 = vand.u32 %v114, 4294901760
    %4026 = vmatpush.msra.mxu0 %v4025
    %v4027 = vand.u32 %v111, 4294901760
    %4028 = vmatpush.msra.mxu0 %v4027
    %v4029 = vand.u32 %v108, 4294901760
    %4030 = vmatpush.msra.mxu0 %v4029
    %v4031 = vand.u32 %v105, 4294901760
    %4032 = vmatpush.msra.mxu0 %v4031
    %v4033 = vand.u32 %v102, 4294901760
    %4034 = vmatpush.msra.mxu0 %v4033
    %v4035 = vand.u32 %v99, 4294901760
    %4036 = vmatpush.msra.mxu0 %v4035
    %v4037 = vand.u32 %v96, 4294901760
    %4038 = vmatpush.msra.mxu0 %v4037
    %v4039 = vand.u32 %v93, 4294901760
    %4040 = vmatpush.msra.mxu0 %v4039
    %v4041 = vand.u32 %v90, 4294901760
    %4042 = vmatpush.msra.mxu0 %v4041
    %v4043 = vand.u32 %v87, 4294901760
    %4044 = vmatpush.msra.mxu0 %v4043
    %v4045 = vand.u32 %v84, 4294901760
    %4046 = vmatpush.msra.mxu0 %v4045
    %v4047 = vand.u32 %v3363, 4294901760
    %4048 = vmatmul.f32.gmra.mxu0 %v4047
    %v4049 = vpop.f32.mrf.mxu0
    %v4050 = vadd.f32 %v4013, %v4049
    %4051 = vdwg.mxu0
    %v4052 = vand.u32 %v130, 4294901760
    %4053 = vmatpush.msra.mxu0 %v4052
    %v4054 = vand.u32 %v127, 4294901760
    %4055 = vmatpush.msra.mxu0 %v4054
    %v4056 = vand.u32 %v124, 4294901760
    %4057 = vmatpush.msra.mxu0 %v4056
    %v4058 = vand.u32 %v121, 4294901760
    %4059 = vmatpush.msra.mxu0 %v4058
    %v4060 = vand.u32 %v118, 4294901760
    %4061 = vmatpush.msra.mxu0 %v4060
    %v4062 = vand.u32 %v115, 4294901760
    %4063 = vmatpush.msra.mxu0 %v4062
    %v4064 = vand.u32 %v112, 4294901760
    %4065 = vmatpush.msra.mxu0 %v4064
    %v4066 = vand.u32 %v109, 4294901760
    %4067 = vmatpush.msra.mxu0 %v4066
    %v4068 = vand.u32 %v106, 4294901760
    %4069 = vmatpush.msra.mxu0 %v4068
    %v4070 = vand.u32 %v103, 4294901760
    %4071 = vmatpush.msra.mxu0 %v4070
    %v4072 = vand.u32 %v100, 4294901760
    %4073 = vmatpush.msra.mxu0 %v4072
    %v4074 = vand.u32 %v97, 4294901760
    %4075 = vmatpush.msra.mxu0 %v4074
    %v4076 = vand.u32 %v94, 4294901760
    %4077 = vmatpush.msra.mxu0 %v4076
    %v4078 = vand.u32 %v91, 4294901760
    %4079 = vmatpush.msra.mxu0 %v4078
    %v4080 = vand.u32 %v88, 4294901760
    %4081 = vmatpush.msra.mxu0 %v4080
    %v4082 = vand.u32 %v85, 4294901760
    %4083 = vmatpush.msra.mxu0 %v4082
    %v4084 = vand.u32 %v3363, 4294901760
    %v4085 = vsub.f32 %v3363, %v4084
    %v4086 = vand.u32 %v4085, 4294901760
    %v4087 = vsub.f32 %v4085, %v4086
    %v4088 = vand.u32 %v4087, 4294901760
    %4089 = vmatmul.f32.gmra.mxu0 %v4088
    %v4090 = vpop.f32.mrf.mxu0
    %v4091 = vadd.f32 %v139, %v4090
    %4092 = vdwg.mxu0
    %v4093 = vand.u32 %v130, 4294901760
    %v4094 = vsub.f32 %v130, %v4093
    %v4095 = vand.u32 %v4094, 4294901760
    %v4096 = vsub.f32 %v4094, %v4095
    %v4097 = vand.u32 %v4096, 4294901760
    %4098 = vmatpush.msra.mxu0 %v4097
    %v4099 = vand.u32 %v127, 4294901760
    %v4100 = vsub.f32 %v127, %v4099
    %v4101 = vand.u32 %v4100, 4294901760
    %v4102 = vsub.f32 %v4100, %v4101
    %v4103 = vand.u32 %v4102, 4294901760
    %4104 = vmatpush.msra.mxu0 %v4103
    %v4105 = vand.u32 %v124, 4294901760
    %v4106 = vsub.f32 %v124, %v4105
    %v4107 = vand.u32 %v4106, 4294901760
    %v4108 = vsub.f32 %v4106, %v4107
    %v4109 = vand.u32 %v4108, 4294901760
    %4110 = vmatpush.msra.mxu0 %v4109
    %v4111 = vand.u32 %v121, 4294901760
    %v4112 = vsub.f32 %v121, %v4111
    %v4113 = vand.u32 %v4112, 4294901760
    %v4114 = vsub.f32 %v4112, %v4113
    %v4115 = vand.u32 %v4114, 4294901760
    %4116 = vmatpush.msra.mxu0 %v4115
    %v4117 = vand.u32 %v118, 4294901760
    %v4118 = vsub.f32 %v118, %v4117
    %v4119 = vand.u32 %v4118, 4294901760
    %v4120 = vsub.f32 %v4118, %v4119
    %v4121 = vand.u32 %v4120, 4294901760
    %4122 = vmatpush.msra.mxu0 %v4121
    %v4123 = vand.u32 %v115, 4294901760
    %v4124 = vsub.f32 %v115, %v4123
    %v4125 = vand.u32 %v4124, 4294901760
    %v4126 = vsub.f32 %v4124, %v4125
    %v4127 = vand.u32 %v4126, 4294901760
    %4128 = vmatpush.msra.mxu0 %v4127
    %v4129 = vand.u32 %v112, 4294901760
    %v4130 = vsub.f32 %v112, %v4129
    %v4131 = vand.u32 %v4130, 4294901760
    %v4132 = vsub.f32 %v4130, %v4131
    %v4133 = vand.u32 %v4132, 4294901760
    %4134 = vmatpush.msra.mxu0 %v4133
    %v4135 = vand.u32 %v109, 4294901760
    %v4136 = vsub.f32 %v109, %v4135
    %v4137 = vand.u32 %v4136, 4294901760
    %v4138 = vsub.f32 %v4136, %v4137
    %v4139 = vand.u32 %v4138, 4294901760
    %4140 = vmatpush.msra.mxu0 %v4139
    %v4141 = vand.u32 %v106, 4294901760
    %v4142 = vsub.f32 %v106, %v4141
    %v4143 = vand.u32 %v4142, 4294901760
    %v4144 = vsub.f32 %v4142, %v4143
    %v4145 = vand.u32 %v4144, 4294901760
    %4146 = vmatpush.msra.mxu0 %v4145
    %v4147 = vand.u32 %v103, 4294901760
    %v4148 = vsub.f32 %v103, %v4147
    %v4149 = vand.u32 %v4148, 4294901760
    %v4150 = vsub.f32 %v4148, %v4149
    %v4151 = vand.u32 %v4150, 4294901760
    %4152 = vmatpush.msra.mxu0 %v4151
    %v4153 = vand.u32 %v100, 4294901760
    %v4154 = vsub.f32 %v100, %v4153
    %v4155 = vand.u32 %v4154, 4294901760
    %v4156 = vsub.f32 %v4154, %v4155
    %v4157 = vand.u32 %v4156, 4294901760
    %4158 = vmatpush.msra.mxu0 %v4157
    %v4159 = vand.u32 %v97, 4294901760
    %v4160 = vsub.f32 %v97, %v4159
    %v4161 = vand.u32 %v4160, 4294901760
    %v4162 = vsub.f32 %v4160, %v4161
    %v4163 = vand.u32 %v4162, 4294901760
    %4164 = vmatpush.msra.mxu0 %v4163
    %v4165 = vand.u32 %v94, 4294901760
    %v4166 = vsub.f32 %v94, %v4165
    %v4167 = vand.u32 %v4166, 4294901760
    %v4168 = vsub.f32 %v4166, %v4167
    %v4169 = vand.u32 %v4168, 4294901760
    %4170 = vmatpush.msra.mxu0 %v4169
    %v4171 = vand.u32 %v91, 4294901760
    %v4172 = vsub.f32 %v91, %v4171
    %v4173 = vand.u32 %v4172, 4294901760
    %v4174 = vsub.f32 %v4172, %v4173
    %v4175 = vand.u32 %v4174, 4294901760
    %4176 = vmatpush.msra.mxu0 %v4175
    %v4177 = vand.u32 %v88, 4294901760
    %v4178 = vsub.f32 %v88, %v4177
    %v4179 = vand.u32 %v4178, 4294901760
    %v4180 = vsub.f32 %v4178, %v4179
    %v4181 = vand.u32 %v4180, 4294901760
    %4182 = vmatpush.msra.mxu0 %v4181
    %v4183 = vand.u32 %v85, 4294901760
    %v4184 = vsub.f32 %v85, %v4183
    %v4185 = vand.u32 %v4184, 4294901760
    %v4186 = vsub.f32 %v4184, %v4185
    %v4187 = vand.u32 %v4186, 4294901760
    %4188 = vmatpush.msra.mxu0 %v4187
    %v4189 = vand.u32 %v3363, 4294901760
    %4190 = vmatmul.f32.gmra.mxu0 %v4189
    %v4191 = vpop.f32.mrf.mxu0
    %v4192 = vadd.f32 %v4091, %v4191
    %4193 = vdwg.mxu0
    %v4194 = vand.u32 %v130, 4294901760
    %v4195 = vsub.f32 %v130, %v4194
    %4196 = vmatpush.msra.mxu0 %v4195
    %v4197 = vand.u32 %v127, 4294901760
    %v4198 = vsub.f32 %v127, %v4197
    %4199 = vmatpush.msra.mxu0 %v4198
    %v4200 = vand.u32 %v124, 4294901760
    %v4201 = vsub.f32 %v124, %v4200
    %4202 = vmatpush.msra.mxu0 %v4201
    %v4203 = vand.u32 %v121, 4294901760
    %v4204 = vsub.f32 %v121, %v4203
    %4205 = vmatpush.msra.mxu0 %v4204
    %v4206 = vand.u32 %v118, 4294901760
    %v4207 = vsub.f32 %v118, %v4206
    %4208 = vmatpush.msra.mxu0 %v4207
    %v4209 = vand.u32 %v115, 4294901760
    %v4210 = vsub.f32 %v115, %v4209
    %4211 = vmatpush.msra.mxu0 %v4210
    %v4212 = vand.u32 %v112, 4294901760
    %v4213 = vsub.f32 %v112, %v4212
    %4214 = vmatpush.msra.mxu0 %v4213
    %v4215 = vand.u32 %v109, 4294901760
    %v4216 = vsub.f32 %v109, %v4215
    %4217 = vmatpush.msra.mxu0 %v4216
    %v4218 = vand.u32 %v106, 4294901760
    %v4219 = vsub.f32 %v106, %v4218
    %4220 = vmatpush.msra.mxu0 %v4219
    %v4221 = vand.u32 %v103, 4294901760
    %v4222 = vsub.f32 %v103, %v4221
    %4223 = vmatpush.msra.mxu0 %v4222
    %v4224 = vand.u32 %v100, 4294901760
    %v4225 = vsub.f32 %v100, %v4224
    %4226 = vmatpush.msra.mxu0 %v4225
    %v4227 = vand.u32 %v97, 4294901760
    %v4228 = vsub.f32 %v97, %v4227
    %4229 = vmatpush.msra.mxu0 %v4228
    %v4230 = vand.u32 %v94, 4294901760
    %v4231 = vsub.f32 %v94, %v4230
    %4232 = vmatpush.msra.mxu0 %v4231
    %v4233 = vand.u32 %v91, 4294901760
    %v4234 = vsub.f32 %v91, %v4233
    %4235 = vmatpush.msra.mxu0 %v4234
    %v4236 = vand.u32 %v88, 4294901760
    %v4237 = vsub.f32 %v88, %v4236
    %4238 = vmatpush.msra.mxu0 %v4237
    %v4239 = vand.u32 %v85, 4294901760
    %v4240 = vsub.f32 %v85, %v4239
    %4241 = vmatpush.msra.mxu0 %v4240
    %v4242 = vand.u32 %v3363, 4294901760
    %v4243 = vsub.f32 %v3363, %v4242
    %4244 = vmatmul.f32.gmra.mxu0 %v4243
    %v4245 = vpop.f32.mrf.mxu0
    %v4246 = vadd.f32 %v4192, %v4245
    %4247 = vdwg.mxu0
    %v4248 = vand.u32 %v130, 4294901760
    %4249 = vmatpush.msra.mxu0 %v4248
    %v4250 = vand.u32 %v127, 4294901760
    %4251 = vmatpush.msra.mxu0 %v4250
    %v4252 = vand.u32 %v124, 4294901760
    %4253 = vmatpush.msra.mxu0 %v4252
    %v4254 = vand.u32 %v121, 4294901760
    %4255 = vmatpush.msra.mxu0 %v4254
    %v4256 = vand.u32 %v118, 4294901760
    %4257 = vmatpush.msra.mxu0 %v4256
    %v4258 = vand.u32 %v115, 4294901760
    %4259 = vmatpush.msra.mxu0 %v4258
    %v4260 = vand.u32 %v112, 4294901760
    %4261 = vmatpush.msra.mxu0 %v4260
    %v4262 = vand.u32 %v109, 4294901760
    %4263 = vmatpush.msra.mxu0 %v4262
    %v4264 = vand.u32 %v106, 4294901760
    %4265 = vmatpush.msra.mxu0 %v4264
    %v4266 = vand.u32 %v103, 4294901760
    %4267 = vmatpush.msra.mxu0 %v4266
    %v4268 = vand.u32 %v100, 4294901760
    %4269 = vmatpush.msra.mxu0 %v4268
    %v4270 = vand.u32 %v97, 4294901760
    %4271 = vmatpush.msra.mxu0 %v4270
    %v4272 = vand.u32 %v94, 4294901760
    %4273 = vmatpush.msra.mxu0 %v4272
    %v4274 = vand.u32 %v91, 4294901760
    %4275 = vmatpush.msra.mxu0 %v4274
    %v4276 = vand.u32 %v88, 4294901760
    %4277 = vmatpush.msra.mxu0 %v4276
    %v4278 = vand.u32 %v85, 4294901760
    %4279 = vmatpush.msra.mxu0 %v4278
    %v4280 = vand.u32 %v3363, 4294901760
    %v4281 = vsub.f32 %v3363, %v4280
    %v4282 = vand.u32 %v4281, 4294901760
    %4283 = vmatmul.f32.gmra.mxu0 %v4282
    %v4284 = vpop.f32.mrf.mxu0
    %v4285 = vadd.f32 %v4246, %v4284
    %4286 = vdwg.mxu0
    %v4287 = vand.u32 %v130, 4294901760
    %v4288 = vsub.f32 %v130, %v4287
    %v4289 = vand.u32 %v4288, 4294901760
    %4290 = vmatpush.msra.mxu0 %v4289
    %v4291 = vand.u32 %v127, 4294901760
    %v4292 = vsub.f32 %v127, %v4291
    %v4293 = vand.u32 %v4292, 4294901760
    %4294 = vmatpush.msra.mxu0 %v4293
    %v4295 = vand.u32 %v124, 4294901760
    %v4296 = vsub.f32 %v124, %v4295
    %v4297 = vand.u32 %v4296, 4294901760
    %4298 = vmatpush.msra.mxu0 %v4297
    %v4299 = vand.u32 %v121, 4294901760
    %v4300 = vsub.f32 %v121, %v4299
    %v4301 = vand.u32 %v4300, 4294901760
    %4302 = vmatpush.msra.mxu0 %v4301
    %v4303 = vand.u32 %v118, 4294901760
    %v4304 = vsub.f32 %v118, %v4303
    %v4305 = vand.u32 %v4304, 4294901760
    %4306 = vmatpush.msra.mxu0 %v4305
    %v4307 = vand.u32 %v115, 4294901760
    %v4308 = vsub.f32 %v115, %v4307
    %v4309 = vand.u32 %v4308, 4294901760
    %4310 = vmatpush.msra.mxu0 %v4309
    %v4311 = vand.u32 %v112, 4294901760
    %v4312 = vsub.f32 %v112, %v4311
    %v4313 = vand.u32 %v4312, 4294901760
    %4314 = vmatpush.msra.mxu0 %v4313
    %v4315 = vand.u32 %v109, 4294901760
    %v4316 = vsub.f32 %v109, %v4315
    %v4317 = vand.u32 %v4316, 4294901760
    %4318 = vmatpush.msra.mxu0 %v4317
    %v4319 = vand.u32 %v106, 4294901760
    %v4320 = vsub.f32 %v106, %v4319
    %v4321 = vand.u32 %v4320, 4294901760
    %4322 = vmatpush.msra.mxu0 %v4321
    %v4323 = vand.u32 %v103, 4294901760
    %v4324 = vsub.f32 %v103, %v4323
    %v4325 = vand.u32 %v4324, 4294901760
    %4326 = vmatpush.msra.mxu0 %v4325
    %v4327 = vand.u32 %v100, 4294901760
    %v4328 = vsub.f32 %v100, %v4327
    %v4329 = vand.u32 %v4328, 4294901760
    %4330 = vmatpush.msra.mxu0 %v4329
    %v4331 = vand.u32 %v97, 4294901760
    %v4332 = vsub.f32 %v97, %v4331
    %v4333 = vand.u32 %v4332, 4294901760
    %4334 = vmatpush.msra.mxu0 %v4333
    %v4335 = vand.u32 %v94, 4294901760
    %v4336 = vsub.f32 %v94, %v4335
    %v4337 = vand.u32 %v4336, 4294901760
    %4338 = vmatpush.msra.mxu0 %v4337
    %v4339 = vand.u32 %v91, 4294901760
    %v4340 = vsub.f32 %v91, %v4339
    %v4341 = vand.u32 %v4340, 4294901760
    %4342 = vmatpush.msra.mxu0 %v4341
    %v4343 = vand.u32 %v88, 4294901760
    %v4344 = vsub.f32 %v88, %v4343
    %v4345 = vand.u32 %v4344, 4294901760
    %4346 = vmatpush.msra.mxu0 %v4345
    %v4347 = vand.u32 %v85, 4294901760
    %v4348 = vsub.f32 %v85, %v4347
    %v4349 = vand.u32 %v4348, 4294901760
    %4350 = vmatpush.msra.mxu0 %v4349
    %v4351 = vand.u32 %v3363, 4294901760
    %4352 = vmatmul.f32.gmra.mxu0 %v4351
    %v4353 = vpop.f32.mrf.mxu0
    %v4354 = vadd.f32 %v4285, %v4353
    %4355 = vdwg.mxu0
    %v4356 = vand.u32 %v130, 4294901760
    %4357 = vmatpush.msra.mxu0 %v4356
    %v4358 = vand.u32 %v127, 4294901760
    %4359 = vmatpush.msra.mxu0 %v4358
    %v4360 = vand.u32 %v124, 4294901760
    %4361 = vmatpush.msra.mxu0 %v4360
    %v4362 = vand.u32 %v121, 4294901760
    %4363 = vmatpush.msra.mxu0 %v4362
    %v4364 = vand.u32 %v118, 4294901760
    %4365 = vmatpush.msra.mxu0 %v4364
    %v4366 = vand.u32 %v115, 4294901760
    %4367 = vmatpush.msra.mxu0 %v4366
    %v4368 = vand.u32 %v112, 4294901760
    %4369 = vmatpush.msra.mxu0 %v4368
    %v4370 = vand.u32 %v109, 4294901760
    %4371 = vmatpush.msra.mxu0 %v4370
    %v4372 = vand.u32 %v106, 4294901760
    %4373 = vmatpush.msra.mxu0 %v4372
    %v4374 = vand.u32 %v103, 4294901760
    %4375 = vmatpush.msra.mxu0 %v4374
    %v4376 = vand.u32 %v100, 4294901760
    %4377 = vmatpush.msra.mxu0 %v4376
    %v4378 = vand.u32 %v97, 4294901760
    %4379 = vmatpush.msra.mxu0 %v4378
    %v4380 = vand.u32 %v94, 4294901760
    %4381 = vmatpush.msra.mxu0 %v4380
    %v4382 = vand.u32 %v91, 4294901760
    %4383 = vmatpush.msra.mxu0 %v4382
    %v4384 = vand.u32 %v88, 4294901760
    %4385 = vmatpush.msra.mxu0 %v4384
    %v4386 = vand.u32 %v85, 4294901760
    %4387 = vmatpush.msra.mxu0 %v4386
    %v4388 = vand.u32 %v3363, 4294901760
    %4389 = vmatmul.f32.gmra.mxu0 %v4388
    %v4390 = vpop.f32.mrf.mxu0
    %v4391 = vadd.f32 %v4354, %v4390
    %4392 = vdwg.mxu0
    %v4393 = vadd.f32 %v3367, %v3709
    %v4394 = vadd.f32 %v3368, %v4050
    %v4395 = vxor.u32 %v4393, 2147483648
    %v4396 = vxor.u32 %v4394, 2147483648
    %v4397 = vmul.f32 %v4395, 1.442695
    %v4398 = vpow.pop %v4397
    %v4399 = vmul.f32 %v4396, 1.442695
    %v4400 = vpow.pop %v4399
    %v4401 = vadd.f32 %v4398, 1.0
    %v4402 = vadd.f32 %v4400, 1.0
    %v4403 = vrcp.pop %v4401
    %v4404 = vmul.f32 %v4401, %v4403
    %v4405 = vsub.f32 1.0, %v4404
    %v4406 = vmul.f32 %v4403, %v4405
    %v4407 = vadd.f32 %v4403, %v4406
    %vm4408 = vweird.f32 %v4401
    %vm4409 = vweird.f32 %v4403
    %vm4410 = vmor %vm4408, %vm4409
    %v4411 = vsel %vm4410, %v4403, %v4407
    %v4412 = vand.u32 2147483647, %v4401
    %vm4413 = vcmp.eq.f32.partialorder %v4412, 8.507059e+37
    %v4414 = vand.u32 %v4401, 2147483648
    %v4415 = vor.u32 1.1754944e-38, %v4414
    %v4416 = vsel %vm4413, %v4415, %v4411
    %v4417 = vmul.f32 1.0, %v4416
    %v4418 = vrcp.pop %v4402
    %v4419 = vmul.f32 %v4402, %v4418
    %v4420 = vsub.f32 1.0, %v4419
    %v4421 = vmul.f32 %v4418, %v4420
    %v4422 = vadd.f32 %v4418, %v4421
    %vm4423 = vweird.f32 %v4402
    %vm4424 = vweird.f32 %v4418
    %vm4425 = vmor %vm4423, %vm4424
    %v4426 = vsel %vm4425, %v4418, %v4422
    %v4427 = vand.u32 2147483647, %v4402
    %vm4428 = vcmp.eq.f32.partialorder %v4427, 8.507059e+37
    %v4429 = vand.u32 %v4402, 2147483648
    %v4430 = vor.u32 1.1754944e-38, %v4429
    %v4431 = vsel %vm4428, %v4430, %v4426
    %v4432 = vmul.f32 1.0, %v4431
    %v4433 = vmul.f32 %v4417, %v4391
    %v4434 = vadd.f32 %v3369, %v4433
    %v4435 = vtanh.pop %v4434
    %v4436 = vsub.f32 1.0, %v4432
    %v4437 = vmul.f32 %v4436, %v4435
    %v4438 = vmul.f32 %v4432, %v3363
    %v4439 = vadd.f32 %v4437, %v4438
    %s4440 = scalar_lea.vmem [#allocation11], 24
    %4441 = vst [vmem:[%s4440] sm:$0xff] %v4439
    %s4442 = scalar_lea.vmem [#allocation3], 96
    %v4443 = vld [vmem:[%s4442] sm:$0xff]
    %v4444 = vld [vmem:[%s4442 + $0x8] sm:$0xff]
    %v4445 = vld [vmem:[%s4442 + $0x10] sm:$0xff]
    %v4446 = vand.u32 %v128, 4294901760
    %4447 = vmatpush.msra.mxu0 %v4446
    %v4448 = vand.u32 %v125, 4294901760
    %4449 = vmatpush.msra.mxu0 %v4448
    %v4450 = vand.u32 %v122, 4294901760
    %4451 = vmatpush.msra.mxu0 %v4450
    %v4452 = vand.u32 %v119, 4294901760
    %4453 = vmatpush.msra.mxu0 %v4452
    %v4454 = vand.u32 %v116, 4294901760
    %4455 = vmatpush.msra.mxu0 %v4454
    %v4456 = vand.u32 %v113, 4294901760
    %4457 = vmatpush.msra.mxu0 %v4456
    %v4458 = vand.u32 %v110, 4294901760
    %4459 = vmatpush.msra.mxu0 %v4458
    %v4460 = vand.u32 %v107, 4294901760
    %4461 = vmatpush.msra.mxu0 %v4460
    %v4462 = vand.u32 %v104, 4294901760
    %4463 = vmatpush.msra.mxu0 %v4462
    %v4464 = vand.u32 %v101, 4294901760
    %4465 = vmatpush.msra.mxu0 %v4464
    %v4466 = vand.u32 %v98, 4294901760
    %4467 = vmatpush.msra.mxu0 %v4466
    %v4468 = vand.u32 %v95, 4294901760
    %4469 = vmatpush.msra.mxu0 %v4468
    %v4470 = vand.u32 %v92, 4294901760
    %4471 = vmatpush.msra.mxu0 %v4470
    %v4472 = vand.u32 %v89, 4294901760
    %4473 = vmatpush.msra.mxu0 %v4472
    %v4474 = vand.u32 %v86, 4294901760
    %4475 = vmatpush.msra.mxu0 %v4474
    %v4476 = vand.u32 %v83, 4294901760
    %4477 = vmatpush.msra.mxu0 %v4476
    %v4478 = vand.u32 %v4439, 4294901760
    %v4479 = vsub.f32 %v4439, %v4478
    %v4480 = vand.u32 %v4479, 4294901760
    %v4481 = vsub.f32 %v4479, %v4480
    %v4482 = vand.u32 %v4481, 4294901760
    %4483 = vmatmul.f32.gmra.mxu0 %v4482
    %v4484 = vpop.f32.mrf.mxu0
    %v4485 = vadd.f32 %v137, %v4484
    %4486 = vdwg.mxu0
    %v4487 = vand.u32 %v128, 4294901760
    %v4488 = vsub.f32 %v128, %v4487
    %v4489 = vand.u32 %v4488, 4294901760
    %v4490 = vsub.f32 %v4488, %v4489
    %v4491 = vand.u32 %v4490, 4294901760
    %4492 = vmatpush.msra.mxu0 %v4491
    %v4493 = vand.u32 %v125, 4294901760
    %v4494 = vsub.f32 %v125, %v4493
    %v4495 = vand.u32 %v4494, 4294901760
    %v4496 = vsub.f32 %v4494, %v4495
    %v4497 = vand.u32 %v4496, 4294901760
    %4498 = vmatpush.msra.mxu0 %v4497
    %v4499 = vand.u32 %v122, 4294901760
    %v4500 = vsub.f32 %v122, %v4499
    %v4501 = vand.u32 %v4500, 4294901760
    %v4502 = vsub.f32 %v4500, %v4501
    %v4503 = vand.u32 %v4502, 4294901760
    %4504 = vmatpush.msra.mxu0 %v4503
    %v4505 = vand.u32 %v119, 4294901760
    %v4506 = vsub.f32 %v119, %v4505
    %v4507 = vand.u32 %v4506, 4294901760
    %v4508 = vsub.f32 %v4506, %v4507
    %v4509 = vand.u32 %v4508, 4294901760
    %4510 = vmatpush.msra.mxu0 %v4509
    %v4511 = vand.u32 %v116, 4294901760
    %v4512 = vsub.f32 %v116, %v4511
    %v4513 = vand.u32 %v4512, 4294901760
    %v4514 = vsub.f32 %v4512, %v4513
    %v4515 = vand.u32 %v4514, 4294901760
    %4516 = vmatpush.msra.mxu0 %v4515
    %v4517 = vand.u32 %v113, 4294901760
    %v4518 = vsub.f32 %v113, %v4517
    %v4519 = vand.u32 %v4518, 4294901760
    %v4520 = vsub.f32 %v4518, %v4519
    %v4521 = vand.u32 %v4520, 4294901760
    %4522 = vmatpush.msra.mxu0 %v4521
    %v4523 = vand.u32 %v110, 4294901760
    %v4524 = vsub.f32 %v110, %v4523
    %v4525 = vand.u32 %v4524, 4294901760
    %v4526 = vsub.f32 %v4524, %v4525
    %v4527 = vand.u32 %v4526, 4294901760
    %4528 = vmatpush.msra.mxu0 %v4527
    %v4529 = vand.u32 %v107, 4294901760
    %v4530 = vsub.f32 %v107, %v4529
    %v4531 = vand.u32 %v4530, 4294901760
    %v4532 = vsub.f32 %v4530, %v4531
    %v4533 = vand.u32 %v4532, 4294901760
    %4534 = vmatpush.msra.mxu0 %v4533
    %v4535 = vand.u32 %v104, 4294901760
    %v4536 = vsub.f32 %v104, %v4535
    %v4537 = vand.u32 %v4536, 4294901760
    %v4538 = vsub.f32 %v4536, %v4537
    %v4539 = vand.u32 %v4538, 4294901760
    %4540 = vmatpush.msra.mxu0 %v4539
    %v4541 = vand.u32 %v101, 4294901760
    %v4542 = vsub.f32 %v101, %v4541
    %v4543 = vand.u32 %v4542, 4294901760
    %v4544 = vsub.f32 %v4542, %v4543
    %v4545 = vand.u32 %v4544, 4294901760
    %4546 = vmatpush.msra.mxu0 %v4545
    %v4547 = vand.u32 %v98, 4294901760
    %v4548 = vsub.f32 %v98, %v4547
    %v4549 = vand.u32 %v4548, 4294901760
    %v4550 = vsub.f32 %v4548, %v4549
    %v4551 = vand.u32 %v4550, 4294901760
    %4552 = vmatpush.msra.mxu0 %v4551
    %v4553 = vand.u32 %v95, 4294901760
    %v4554 = vsub.f32 %v95, %v4553
    %v4555 = vand.u32 %v4554, 4294901760
    %v4556 = vsub.f32 %v4554, %v4555
    %v4557 = vand.u32 %v4556, 4294901760
    %4558 = vmatpush.msra.mxu0 %v4557
    %v4559 = vand.u32 %v92, 4294901760
    %v4560 = vsub.f32 %v92, %v4559
    %v4561 = vand.u32 %v4560, 4294901760
    %v4562 = vsub.f32 %v4560, %v4561
    %v4563 = vand.u32 %v4562, 4294901760
    %4564 = vmatpush.msra.mxu0 %v4563
    %v4565 = vand.u32 %v89, 4294901760
    %v4566 = vsub.f32 %v89, %v4565
    %v4567 = vand.u32 %v4566, 4294901760
    %v4568 = vsub.f32 %v4566, %v4567
    %v4569 = vand.u32 %v4568, 4294901760
    %4570 = vmatpush.msra.mxu0 %v4569
    %v4571 = vand.u32 %v86, 4294901760
    %v4572 = vsub.f32 %v86, %v4571
    %v4573 = vand.u32 %v4572, 4294901760
    %v4574 = vsub.f32 %v4572, %v4573
    %v4575 = vand.u32 %v4574, 4294901760
    %4576 = vmatpush.msra.mxu0 %v4575
    %v4577 = vand.u32 %v83, 4294901760
    %v4578 = vsub.f32 %v83, %v4577
    %v4579 = vand.u32 %v4578, 4294901760
    %v4580 = vsub.f32 %v4578, %v4579
    %v4581 = vand.u32 %v4580, 4294901760
    %4582 = vmatpush.msra.mxu0 %v4581
    %v4583 = vand.u32 %v4439, 4294901760
    %4584 = vmatmul.f32.gmra.mxu0 %v4583
    %v4585 = vpop.f32.mrf.mxu0
    %v4586 = vadd.f32 %v4485, %v4585
    %4587 = vdwg.mxu0
    %v4588 = vand.u32 %v128, 4294901760
    %v4589 = vsub.f32 %v128, %v4588
    %4590 = vmatpush.msra.mxu0 %v4589
    %v4591 = vand.u32 %v125, 4294901760
    %v4592 = vsub.f32 %v125, %v4591
    %4593 = vmatpush.msra.mxu0 %v4592
    %v4594 = vand.u32 %v122, 4294901760
    %v4595 = vsub.f32 %v122, %v4594
    %4596 = vmatpush.msra.mxu0 %v4595
    %v4597 = vand.u32 %v119, 4294901760
    %v4598 = vsub.f32 %v119, %v4597
    %4599 = vmatpush.msra.mxu0 %v4598
    %v4600 = vand.u32 %v116, 4294901760
    %v4601 = vsub.f32 %v116, %v4600
    %4602 = vmatpush.msra.mxu0 %v4601
    %v4603 = vand.u32 %v113, 4294901760
    %v4604 = vsub.f32 %v113, %v4603
    %4605 = vmatpush.msra.mxu0 %v4604
    %v4606 = vand.u32 %v110, 4294901760
    %v4607 = vsub.f32 %v110, %v4606
    %4608 = vmatpush.msra.mxu0 %v4607
    %v4609 = vand.u32 %v107, 4294901760
    %v4610 = vsub.f32 %v107, %v4609
    %4611 = vmatpush.msra.mxu0 %v4610
    %v4612 = vand.u32 %v104, 4294901760
    %v4613 = vsub.f32 %v104, %v4612
    %4614 = vmatpush.msra.mxu0 %v4613
    %v4615 = vand.u32 %v101, 4294901760
    %v4616 = vsub.f32 %v101, %v4615
    %4617 = vmatpush.msra.mxu0 %v4616
    %v4618 = vand.u32 %v98, 4294901760
    %v4619 = vsub.f32 %v98, %v4618
    %4620 = vmatpush.msra.mxu0 %v4619
    %v4621 = vand.u32 %v95, 4294901760
    %v4622 = vsub.f32 %v95, %v4621
    %4623 = vmatpush.msra.mxu0 %v4622
    %v4624 = vand.u32 %v92, 4294901760
    %v4625 = vsub.f32 %v92, %v4624
    %4626 = vmatpush.msra.mxu0 %v4625
    %v4627 = vand.u32 %v89, 4294901760
    %v4628 = vsub.f32 %v89, %v4627
    %4629 = vmatpush.msra.mxu0 %v4628
    %v4630 = vand.u32 %v86, 4294901760
    %v4631 = vsub.f32 %v86, %v4630
    %4632 = vmatpush.msra.mxu0 %v4631
    %v4633 = vand.u32 %v83, 4294901760
    %v4634 = vsub.f32 %v83, %v4633
    %4635 = vmatpush.msra.mxu0 %v4634
    %v4636 = vand.u32 %v4439, 4294901760
    %v4637 = vsub.f32 %v4439, %v4636
    %4638 = vmatmul.f32.gmra.mxu0 %v4637
    %v4639 = vpop.f32.mrf.mxu0
    %v4640 = vadd.f32 %v4586, %v4639
    %4641 = vdwg.mxu0
    %v4642 = vand.u32 %v128, 4294901760
    %4643 = vmatpush.msra.mxu0 %v4642
    %v4644 = vand.u32 %v125, 4294901760
    %4645 = vmatpush.msra.mxu0 %v4644
    %v4646 = vand.u32 %v122, 4294901760
    %4647 = vmatpush.msra.mxu0 %v4646
    %v4648 = vand.u32 %v119, 4294901760
    %4649 = vmatpush.msra.mxu0 %v4648
    %v4650 = vand.u32 %v116, 4294901760
    %4651 = vmatpush.msra.mxu0 %v4650
    %v4652 = vand.u32 %v113, 4294901760
    %4653 = vmatpush.msra.mxu0 %v4652
    %v4654 = vand.u32 %v110, 4294901760
    %4655 = vmatpush.msra.mxu0 %v4654
    %v4656 = vand.u32 %v107, 4294901760
    %4657 = vmatpush.msra.mxu0 %v4656
    %v4658 = vand.u32 %v104, 4294901760
    %4659 = vmatpush.msra.mxu0 %v4658
    %v4660 = vand.u32 %v101, 4294901760
    %4661 = vmatpush.msra.mxu0 %v4660
    %v4662 = vand.u32 %v98, 4294901760
    %4663 = vmatpush.msra.mxu0 %v4662
    %v4664 = vand.u32 %v95, 4294901760
    %4665 = vmatpush.msra.mxu0 %v4664
    %v4666 = vand.u32 %v92, 4294901760
    %4667 = vmatpush.msra.mxu0 %v4666
    %v4668 = vand.u32 %v89, 4294901760
    %4669 = vmatpush.msra.mxu0 %v4668
    %v4670 = vand.u32 %v86, 4294901760
    %4671 = vmatpush.msra.mxu0 %v4670
    %v4672 = vand.u32 %v83, 4294901760
    %4673 = vmatpush.msra.mxu0 %v4672
    %v4674 = vand.u32 %v4439, 4294901760
    %v4675 = vsub.f32 %v4439, %v4674
    %v4676 = vand.u32 %v4675, 4294901760
    %4677 = vmatmul.f32.gmra.mxu0 %v4676
    %v4678 = vpop.f32.mrf.mxu0
    %v4679 = vadd.f32 %v4640, %v4678
    %4680 = vdwg.mxu0
    %v4681 = vand.u32 %v128, 4294901760
    %v4682 = vsub.f32 %v128, %v4681
    %v4683 = vand.u32 %v4682, 4294901760
    %4684 = vmatpush.msra.mxu0 %v4683
    %v4685 = vand.u32 %v125, 4294901760
    %v4686 = vsub.f32 %v125, %v4685
    %v4687 = vand.u32 %v4686, 4294901760
    %4688 = vmatpush.msra.mxu0 %v4687
    %v4689 = vand.u32 %v122, 4294901760
    %v4690 = vsub.f32 %v122, %v4689
    %v4691 = vand.u32 %v4690, 4294901760
    %4692 = vmatpush.msra.mxu0 %v4691
    %v4693 = vand.u32 %v119, 4294901760
    %v4694 = vsub.f32 %v119, %v4693
    %v4695 = vand.u32 %v4694, 4294901760
    %4696 = vmatpush.msra.mxu0 %v4695
    %v4697 = vand.u32 %v116, 4294901760
    %v4698 = vsub.f32 %v116, %v4697
    %v4699 = vand.u32 %v4698, 4294901760
    %4700 = vmatpush.msra.mxu0 %v4699
    %v4701 = vand.u32 %v113, 4294901760
    %v4702 = vsub.f32 %v113, %v4701
    %v4703 = vand.u32 %v4702, 4294901760
    %4704 = vmatpush.msra.mxu0 %v4703
    %v4705 = vand.u32 %v110, 4294901760
    %v4706 = vsub.f32 %v110, %v4705
    %v4707 = vand.u32 %v4706, 4294901760
    %4708 = vmatpush.msra.mxu0 %v4707
    %v4709 = vand.u32 %v107, 4294901760
    %v4710 = vsub.f32 %v107, %v4709
    %v4711 = vand.u32 %v4710, 4294901760
    %4712 = vmatpush.msra.mxu0 %v4711
    %v4713 = vand.u32 %v104, 4294901760
    %v4714 = vsub.f32 %v104, %v4713
    %v4715 = vand.u32 %v4714, 4294901760
    %4716 = vmatpush.msra.mxu0 %v4715
    %v4717 = vand.u32 %v101, 4294901760
    %v4718 = vsub.f32 %v101, %v4717
    %v4719 = vand.u32 %v4718, 4294901760
    %4720 = vmatpush.msra.mxu0 %v4719
    %v4721 = vand.u32 %v98, 4294901760
    %v4722 = vsub.f32 %v98, %v4721
    %v4723 = vand.u32 %v4722, 4294901760
    %4724 = vmatpush.msra.mxu0 %v4723
    %v4725 = vand.u32 %v95, 4294901760
    %v4726 = vsub.f32 %v95, %v4725
    %v4727 = vand.u32 %v4726, 4294901760
    %4728 = vmatpush.msra.mxu0 %v4727
    %v4729 = vand.u32 %v92, 4294901760
    %v4730 = vsub.f32 %v92, %v4729
    %v4731 = vand.u32 %v4730, 4294901760
    %4732 = vmatpush.msra.mxu0 %v4731
    %v4733 = vand.u32 %v89, 4294901760
    %v4734 = vsub.f32 %v89, %v4733
    %v4735 = vand.u32 %v4734, 4294901760
    %4736 = vmatpush.msra.mxu0 %v4735
    %v4737 = vand.u32 %v86, 4294901760
    %v4738 = vsub.f32 %v86, %v4737
    %v4739 = vand.u32 %v4738, 4294901760
    %4740 = vmatpush.msra.mxu0 %v4739
    %v4741 = vand.u32 %v83, 4294901760
    %v4742 = vsub.f32 %v83, %v4741
    %v4743 = vand.u32 %v4742, 4294901760
    %4744 = vmatpush.msra.mxu0 %v4743
    %v4745 = vand.u32 %v4439, 4294901760
    %4746 = vmatmul.f32.gmra.mxu0 %v4745
    %v4747 = vpop.f32.mrf.mxu0
    %v4748 = vadd.f32 %v4679, %v4747
    %4749 = vdwg.mxu0
    %v4750 = vand.u32 %v128, 4294901760
    %4751 = vmatpush.msra.mxu0 %v4750
    %v4752 = vand.u32 %v125, 4294901760
    %4753 = vmatpush.msra.mxu0 %v4752
    %v4754 = vand.u32 %v122, 4294901760
    %4755 = vmatpush.msra.mxu0 %v4754
    %v4756 = vand.u32 %v119, 4294901760
    %4757 = vmatpush.msra.mxu0 %v4756
    %v4758 = vand.u32 %v116, 4294901760
    %4759 = vmatpush.msra.mxu0 %v4758
    %v4760 = vand.u32 %v113, 4294901760
    %4761 = vmatpush.msra.mxu0 %v4760
    %v4762 = vand.u32 %v110, 4294901760
    %4763 = vmatpush.msra.mxu0 %v4762
    %v4764 = vand.u32 %v107, 4294901760
    %4765 = vmatpush.msra.mxu0 %v4764
    %v4766 = vand.u32 %v104, 4294901760
    %4767 = vmatpush.msra.mxu0 %v4766
    %v4768 = vand.u32 %v101, 4294901760
    %4769 = vmatpush.msra.mxu0 %v4768
    %v4770 = vand.u32 %v98, 4294901760
    %4771 = vmatpush.msra.mxu0 %v4770
    %v4772 = vand.u32 %v95, 4294901760
    %4773 = vmatpush.msra.mxu0 %v4772
    %v4774 = vand.u32 %v92, 4294901760
    %4775 = vmatpush.msra.mxu0 %v4774
    %v4776 = vand.u32 %v89, 4294901760
    %4777 = vmatpush.msra.mxu0 %v4776
    %v4778 = vand.u32 %v86, 4294901760
    %4779 = vmatpush.msra.mxu0 %v4778
    %v4780 = vand.u32 %v83, 4294901760
    %4781 = vmatpush.msra.mxu0 %v4780
    %v4782 = vand.u32 %v4439, 4294901760
    %4783 = vmatmul.f32.gmra.mxu0 %v4782
    %v4784 = vpop.f32.mrf.mxu0
    %v4785 = vadd.f32 %v4748, %v4784
    %4786 = vdwg.mxu0
    %v4787 = vand.u32 %v129, 4294901760
    %4788 = vmatpush.msra.mxu0 %v4787
    %v4789 = vand.u32 %v126, 4294901760
    %4790 = vmatpush.msra.mxu0 %v4789
    %v4791 = vand.u32 %v123, 4294901760
    %4792 = vmatpush.msra.mxu0 %v4791
    %v4793 = vand.u32 %v120, 4294901760
    %4794 = vmatpush.msra.mxu0 %v4793
    %v4795 = vand.u32 %v117, 4294901760
    %4796 = vmatpush.msra.mxu0 %v4795
    %v4797 = vand.u32 %v114, 4294901760
    %4798 = vmatpush.msra.mxu0 %v4797
    %v4799 = vand.u32 %v111, 4294901760
    %4800 = vmatpush.msra.mxu0 %v4799
    %v4801 = vand.u32 %v108, 4294901760
    %4802 = vmatpush.msra.mxu0 %v4801
    %v4803 = vand.u32 %v105, 4294901760
    %4804 = vmatpush.msra.mxu0 %v4803
    %v4805 = vand.u32 %v102, 4294901760
    %4806 = vmatpush.msra.mxu0 %v4805
    %v4807 = vand.u32 %v99, 4294901760
    %4808 = vmatpush.msra.mxu0 %v4807
    %v4809 = vand.u32 %v96, 4294901760
    %4810 = vmatpush.msra.mxu0 %v4809
    %v4811 = vand.u32 %v93, 4294901760
    %4812 = vmatpush.msra.mxu0 %v4811
    %v4813 = vand.u32 %v90, 4294901760
    %4814 = vmatpush.msra.mxu0 %v4813
    %v4815 = vand.u32 %v87, 4294901760
    %4816 = vmatpush.msra.mxu0 %v4815
    %v4817 = vand.u32 %v84, 4294901760
    %4818 = vmatpush.msra.mxu0 %v4817
    %v4819 = vand.u32 %v4439, 4294901760
    %v4820 = vsub.f32 %v4439, %v4819
    %v4821 = vand.u32 %v4820, 4294901760
    %v4822 = vsub.f32 %v4820, %v4821
    %v4823 = vand.u32 %v4822, 4294901760
    %4824 = vmatmul.f32.gmra.mxu0 %v4823
    %v4825 = vpop.f32.mrf.mxu0
    %v4826 = vadd.f32 %v138, %v4825
    %4827 = vdwg.mxu0
    %v4828 = vand.u32 %v129, 4294901760
    %v4829 = vsub.f32 %v129, %v4828
    %v4830 = vand.u32 %v4829, 4294901760
    %v4831 = vsub.f32 %v4829, %v4830
    %v4832 = vand.u32 %v4831, 4294901760
    %4833 = vmatpush.msra.mxu0 %v4832
    %v4834 = vand.u32 %v126, 4294901760
    %v4835 = vsub.f32 %v126, %v4834
    %v4836 = vand.u32 %v4835, 4294901760
    %v4837 = vsub.f32 %v4835, %v4836
    %v4838 = vand.u32 %v4837, 4294901760
    %4839 = vmatpush.msra.mxu0 %v4838
    %v4840 = vand.u32 %v123, 4294901760
    %v4841 = vsub.f32 %v123, %v4840
    %v4842 = vand.u32 %v4841, 4294901760
    %v4843 = vsub.f32 %v4841, %v4842
    %v4844 = vand.u32 %v4843, 4294901760
    %4845 = vmatpush.msra.mxu0 %v4844
    %v4846 = vand.u32 %v120, 4294901760
    %v4847 = vsub.f32 %v120, %v4846
    %v4848 = vand.u32 %v4847, 4294901760
    %v4849 = vsub.f32 %v4847, %v4848
    %v4850 = vand.u32 %v4849, 4294901760
    %4851 = vmatpush.msra.mxu0 %v4850
    %v4852 = vand.u32 %v117, 4294901760
    %v4853 = vsub.f32 %v117, %v4852
    %v4854 = vand.u32 %v4853, 4294901760
    %v4855 = vsub.f32 %v4853, %v4854
    %v4856 = vand.u32 %v4855, 4294901760
    %4857 = vmatpush.msra.mxu0 %v4856
    %v4858 = vand.u32 %v114, 4294901760
    %v4859 = vsub.f32 %v114, %v4858
    %v4860 = vand.u32 %v4859, 4294901760
    %v4861 = vsub.f32 %v4859, %v4860
    %v4862 = vand.u32 %v4861, 4294901760
    %4863 = vmatpush.msra.mxu0 %v4862
    %v4864 = vand.u32 %v111, 4294901760
    %v4865 = vsub.f32 %v111, %v4864
    %v4866 = vand.u32 %v4865, 4294901760
    %v4867 = vsub.f32 %v4865, %v4866
    %v4868 = vand.u32 %v4867, 4294901760
    %4869 = vmatpush.msra.mxu0 %v4868
    %v4870 = vand.u32 %v108, 4294901760
    %v4871 = vsub.f32 %v108, %v4870
    %v4872 = vand.u32 %v4871, 4294901760
    %v4873 = vsub.f32 %v4871, %v4872
    %v4874 = vand.u32 %v4873, 4294901760
    %4875 = vmatpush.msra.mxu0 %v4874
    %v4876 = vand.u32 %v105, 4294901760
    %v4877 = vsub.f32 %v105, %v4876
    %v4878 = vand.u32 %v4877, 4294901760
    %v4879 = vsub.f32 %v4877, %v4878
    %v4880 = vand.u32 %v4879, 4294901760
    %4881 = vmatpush.msra.mxu0 %v4880
    %v4882 = vand.u32 %v102, 4294901760
    %v4883 = vsub.f32 %v102, %v4882
    %v4884 = vand.u32 %v4883, 4294901760
    %v4885 = vsub.f32 %v4883, %v4884
    %v4886 = vand.u32 %v4885, 4294901760
    %4887 = vmatpush.msra.mxu0 %v4886
    %v4888 = vand.u32 %v99, 4294901760
    %v4889 = vsub.f32 %v99, %v4888
    %v4890 = vand.u32 %v4889, 4294901760
    %v4891 = vsub.f32 %v4889, %v4890
    %v4892 = vand.u32 %v4891, 4294901760
    %4893 = vmatpush.msra.mxu0 %v4892
    %v4894 = vand.u32 %v96, 4294901760
    %v4895 = vsub.f32 %v96, %v4894
    %v4896 = vand.u32 %v4895, 4294901760
    %v4897 = vsub.f32 %v4895, %v4896
    %v4898 = vand.u32 %v4897, 4294901760
    %4899 = vmatpush.msra.mxu0 %v4898
    %v4900 = vand.u32 %v93, 4294901760
    %v4901 = vsub.f32 %v93, %v4900
    %v4902 = vand.u32 %v4901, 4294901760
    %v4903 = vsub.f32 %v4901, %v4902
    %v4904 = vand.u32 %v4903, 4294901760
    %4905 = vmatpush.msra.mxu0 %v4904
    %v4906 = vand.u32 %v90, 4294901760
    %v4907 = vsub.f32 %v90, %v4906
    %v4908 = vand.u32 %v4907, 4294901760
    %v4909 = vsub.f32 %v4907, %v4908
    %v4910 = vand.u32 %v4909, 4294901760
    %4911 = vmatpush.msra.mxu0 %v4910
    %v4912 = vand.u32 %v87, 4294901760
    %v4913 = vsub.f32 %v87, %v4912
    %v4914 = vand.u32 %v4913, 4294901760
    %v4915 = vsub.f32 %v4913, %v4914
    %v4916 = vand.u32 %v4915, 4294901760
    %4917 = vmatpush.msra.mxu0 %v4916
    %v4918 = vand.u32 %v84, 4294901760
    %v4919 = vsub.f32 %v84, %v4918
    %v4920 = vand.u32 %v4919, 4294901760
    %v4921 = vsub.f32 %v4919, %v4920
    %v4922 = vand.u32 %v4921, 4294901760
    %4923 = vmatpush.msra.mxu0 %v4922
    %v4924 = vand.u32 %v4439, 4294901760
    %4925 = vmatmul.f32.gmra.mxu0 %v4924
    %v4926 = vpop.f32.mrf.mxu0
    %v4927 = vadd.f32 %v4826, %v4926
    %4928 = vdwg.mxu0
    %v4929 = vand.u32 %v129, 4294901760
    %v4930 = vsub.f32 %v129, %v4929
    %4931 = vmatpush.msra.mxu0 %v4930
    %v4932 = vand.u32 %v126, 4294901760
    %v4933 = vsub.f32 %v126, %v4932
    %4934 = vmatpush.msra.mxu0 %v4933
    %v4935 = vand.u32 %v123, 4294901760
    %v4936 = vsub.f32 %v123, %v4935
    %4937 = vmatpush.msra.mxu0 %v4936
    %v4938 = vand.u32 %v120, 4294901760
    %v4939 = vsub.f32 %v120, %v4938
    %4940 = vmatpush.msra.mxu0 %v4939
    %v4941 = vand.u32 %v117, 4294901760
    %v4942 = vsub.f32 %v117, %v4941
    %4943 = vmatpush.msra.mxu0 %v4942
    %v4944 = vand.u32 %v114, 4294901760
    %v4945 = vsub.f32 %v114, %v4944
    %4946 = vmatpush.msra.mxu0 %v4945
    %v4947 = vand.u32 %v111, 4294901760
    %v4948 = vsub.f32 %v111, %v4947
    %4949 = vmatpush.msra.mxu0 %v4948
    %v4950 = vand.u32 %v108, 4294901760
    %v4951 = vsub.f32 %v108, %v4950
    %4952 = vmatpush.msra.mxu0 %v4951
    %v4953 = vand.u32 %v105, 4294901760
    %v4954 = vsub.f32 %v105, %v4953
    %4955 = vmatpush.msra.mxu0 %v4954
    %v4956 = vand.u32 %v102, 4294901760
    %v4957 = vsub.f32 %v102, %v4956
    %4958 = vmatpush.msra.mxu0 %v4957
    %v4959 = vand.u32 %v99, 4294901760
    %v4960 = vsub.f32 %v99, %v4959
    %4961 = vmatpush.msra.mxu0 %v4960
    %v4962 = vand.u32 %v96, 4294901760
    %v4963 = vsub.f32 %v96, %v4962
    %4964 = vmatpush.msra.mxu0 %v4963
    %v4965 = vand.u32 %v93, 4294901760
    %v4966 = vsub.f32 %v93, %v4965
    %4967 = vmatpush.msra.mxu0 %v4966
    %v4968 = vand.u32 %v90, 4294901760
    %v4969 = vsub.f32 %v90, %v4968
    %4970 = vmatpush.msra.mxu0 %v4969
    %v4971 = vand.u32 %v87, 4294901760
    %v4972 = vsub.f32 %v87, %v4971
    %4973 = vmatpush.msra.mxu0 %v4972
    %v4974 = vand.u32 %v84, 4294901760
    %v4975 = vsub.f32 %v84, %v4974
    %4976 = vmatpush.msra.mxu0 %v4975
    %v4977 = vand.u32 %v4439, 4294901760
    %v4978 = vsub.f32 %v4439, %v4977
    %4979 = vmatmul.f32.gmra.mxu0 %v4978
    %v4980 = vpop.f32.mrf.mxu0
    %v4981 = vadd.f32 %v4927, %v4980
    %4982 = vdwg.mxu0
    %v4983 = vand.u32 %v129, 4294901760
    %4984 = vmatpush.msra.mxu0 %v4983
    %v4985 = vand.u32 %v126, 4294901760
    %4986 = vmatpush.msra.mxu0 %v4985
    %v4987 = vand.u32 %v123, 4294901760
    %4988 = vmatpush.msra.mxu0 %v4987
    %v4989 = vand.u32 %v120, 4294901760
    %4990 = vmatpush.msra.mxu0 %v4989
    %v4991 = vand.u32 %v117, 4294901760
    %4992 = vmatpush.msra.mxu0 %v4991
    %v4993 = vand.u32 %v114, 4294901760
    %4994 = vmatpush.msra.mxu0 %v4993
    %v4995 = vand.u32 %v111, 4294901760
    %4996 = vmatpush.msra.mxu0 %v4995
    %v4997 = vand.u32 %v108, 4294901760
    %4998 = vmatpush.msra.mxu0 %v4997
    %v4999 = vand.u32 %v105, 4294901760
    %5000 = vmatpush.msra.mxu0 %v4999
    %v5001 = vand.u32 %v102, 4294901760
    %5002 = vmatpush.msra.mxu0 %v5001
    %v5003 = vand.u32 %v99, 4294901760
    %5004 = vmatpush.msra.mxu0 %v5003
    %v5005 = vand.u32 %v96, 4294901760
    %5006 = vmatpush.msra.mxu0 %v5005
    %v5007 = vand.u32 %v93, 4294901760
    %5008 = vmatpush.msra.mxu0 %v5007
    %v5009 = vand.u32 %v90, 4294901760
    %5010 = vmatpush.msra.mxu0 %v5009
    %v5011 = vand.u32 %v87, 4294901760
    %5012 = vmatpush.msra.mxu0 %v5011
    %v5013 = vand.u32 %v84, 4294901760
    %5014 = vmatpush.msra.mxu0 %v5013
    %v5015 = vand.u32 %v4439, 4294901760
    %v5016 = vsub.f32 %v4439, %v5015
    %v5017 = vand.u32 %v5016, 4294901760
    %5018 = vmatmul.f32.gmra.mxu0 %v5017
    %v5019 = vpop.f32.mrf.mxu0
    %v5020 = vadd.f32 %v4981, %v5019
    %5021 = vdwg.mxu0
    %v5022 = vand.u32 %v129, 4294901760
    %v5023 = vsub.f32 %v129, %v5022
    %v5024 = vand.u32 %v5023, 4294901760
    %5025 = vmatpush.msra.mxu0 %v5024
    %v5026 = vand.u32 %v126, 4294901760
    %v5027 = vsub.f32 %v126, %v5026
    %v5028 = vand.u32 %v5027, 4294901760
    %5029 = vmatpush.msra.mxu0 %v5028
    %v5030 = vand.u32 %v123, 4294901760
    %v5031 = vsub.f32 %v123, %v5030
    %v5032 = vand.u32 %v5031, 4294901760
    %5033 = vmatpush.msra.mxu0 %v5032
    %v5034 = vand.u32 %v120, 4294901760
    %v5035 = vsub.f32 %v120, %v5034
    %v5036 = vand.u32 %v5035, 4294901760
    %5037 = vmatpush.msra.mxu0 %v5036
    %v5038 = vand.u32 %v117, 4294901760
    %v5039 = vsub.f32 %v117, %v5038
    %v5040 = vand.u32 %v5039, 4294901760
    %5041 = vmatpush.msra.mxu0 %v5040
    %v5042 = vand.u32 %v114, 4294901760
    %v5043 = vsub.f32 %v114, %v5042
    %v5044 = vand.u32 %v5043, 4294901760
    %5045 = vmatpush.msra.mxu0 %v5044
    %v5046 = vand.u32 %v111, 4294901760
    %v5047 = vsub.f32 %v111, %v5046
    %v5048 = vand.u32 %v5047, 4294901760
    %5049 = vmatpush.msra.mxu0 %v5048
    %v5050 = vand.u32 %v108, 4294901760
    %v5051 = vsub.f32 %v108, %v5050
    %v5052 = vand.u32 %v5051, 4294901760
    %5053 = vmatpush.msra.mxu0 %v5052
    %v5054 = vand.u32 %v105, 4294901760
    %v5055 = vsub.f32 %v105, %v5054
    %v5056 = vand.u32 %v5055, 4294901760
    %5057 = vmatpush.msra.mxu0 %v5056
    %v5058 = vand.u32 %v102, 4294901760
    %v5059 = vsub.f32 %v102, %v5058
    %v5060 = vand.u32 %v5059, 4294901760
    %5061 = vmatpush.msra.mxu0 %v5060
    %v5062 = vand.u32 %v99, 4294901760
    %v5063 = vsub.f32 %v99, %v5062
    %v5064 = vand.u32 %v5063, 4294901760
    %5065 = vmatpush.msra.mxu0 %v5064
    %v5066 = vand.u32 %v96, 4294901760
    %v5067 = vsub.f32 %v96, %v5066
    %v5068 = vand.u32 %v5067, 4294901760
    %5069 = vmatpush.msra.mxu0 %v5068
    %v5070 = vand.u32 %v93, 4294901760
    %v5071 = vsub.f32 %v93, %v5070
    %v5072 = vand.u32 %v5071, 4294901760
    %5073 = vmatpush.msra.mxu0 %v5072
    %v5074 = vand.u32 %v90, 4294901760
    %v5075 = vsub.f32 %v90, %v5074
    %v5076 = vand.u32 %v5075, 4294901760
    %5077 = vmatpush.msra.mxu0 %v5076
    %v5078 = vand.u32 %v87, 4294901760
    %v5079 = vsub.f32 %v87, %v5078
    %v5080 = vand.u32 %v5079, 4294901760
    %5081 = vmatpush.msra.mxu0 %v5080
    %v5082 = vand.u32 %v84, 4294901760
    %v5083 = vsub.f32 %v84, %v5082
    %v5084 = vand.u32 %v5083, 4294901760
    %5085 = vmatpush.msra.mxu0 %v5084
    %v5086 = vand.u32 %v4439, 4294901760
    %5087 = vmatmul.f32.gmra.mxu0 %v5086
    %v5088 = vpop.f32.mrf.mxu0
    %v5089 = vadd.f32 %v5020, %v5088
    %5090 = vdwg.mxu0
    %v5091 = vand.u32 %v129, 4294901760
    %5092 = vmatpush.msra.mxu0 %v5091
    %v5093 = vand.u32 %v126, 4294901760
    %5094 = vmatpush.msra.mxu0 %v5093
    %v5095 = vand.u32 %v123, 4294901760
    %5096 = vmatpush.msra.mxu0 %v5095
    %v5097 = vand.u32 %v120, 4294901760
    %5098 = vmatpush.msra.mxu0 %v5097
    %v5099 = vand.u32 %v117, 4294901760
    %5100 = vmatpush.msra.mxu0 %v5099
    %v5101 = vand.u32 %v114, 4294901760
    %5102 = vmatpush.msra.mxu0 %v5101
    %v5103 = vand.u32 %v111, 4294901760
    %5104 = vmatpush.msra.mxu0 %v5103
    %v5105 = vand.u32 %v108, 4294901760
    %5106 = vmatpush.msra.mxu0 %v5105
    %v5107 = vand.u32 %v105, 4294901760
    %5108 = vmatpush.msra.mxu0 %v5107
    %v5109 = vand.u32 %v102, 4294901760
    %5110 = vmatpush.msra.mxu0 %v5109
    %v5111 = vand.u32 %v99, 4294901760
    %5112 = vmatpush.msra.mxu0 %v5111
    %v5113 = vand.u32 %v96, 4294901760
    %5114 = vmatpush.msra.mxu0 %v5113
    %v5115 = vand.u32 %v93, 4294901760
    %5116 = vmatpush.msra.mxu0 %v5115
    %v5117 = vand.u32 %v90, 4294901760
    %5118 = vmatpush.msra.mxu0 %v5117
    %v5119 = vand.u32 %v87, 4294901760
    %5120 = vmatpush.msra.mxu0 %v5119
    %v5121 = vand.u32 %v84, 4294901760
    %5122 = vmatpush.msra.mxu0 %v5121
    %v5123 = vand.u32 %v4439, 4294901760
    %5124 = vmatmul.f32.gmra.mxu0 %v5123
    %v5125 = vpop.f32.mrf.mxu0
    %v5126 = vadd.f32 %v5089, %v5125
    %5127 = vdwg.mxu0
    %v5128 = vand.u32 %v130, 4294901760
    %5129 = vmatpush.msra.mxu0 %v5128
    %v5130 = vand.u32 %v127, 4294901760
    %5131 = vmatpush.msra.mxu0 %v5130
    %v5132 = vand.u32 %v124, 4294901760
    %5133 = vmatpush.msra.mxu0 %v5132
    %v5134 = vand.u32 %v121, 4294901760
    %5135 = vmatpush.msra.mxu0 %v5134
    %v5136 = vand.u32 %v118, 4294901760
    %5137 = vmatpush.msra.mxu0 %v5136
    %v5138 = vand.u32 %v115, 4294901760
    %5139 = vmatpush.msra.mxu0 %v5138
    %v5140 = vand.u32 %v112, 4294901760
    %5141 = vmatpush.msra.mxu0 %v5140
    %v5142 = vand.u32 %v109, 4294901760
    %5143 = vmatpush.msra.mxu0 %v5142
    %v5144 = vand.u32 %v106, 4294901760
    %5145 = vmatpush.msra.mxu0 %v5144
    %v5146 = vand.u32 %v103, 4294901760
    %5147 = vmatpush.msra.mxu0 %v5146
    %v5148 = vand.u32 %v100, 4294901760
    %5149 = vmatpush.msra.mxu0 %v5148
    %v5150 = vand.u32 %v97, 4294901760
    %5151 = vmatpush.msra.mxu0 %v5150
    %v5152 = vand.u32 %v94, 4294901760
    %5153 = vmatpush.msra.mxu0 %v5152
    %v5154 = vand.u32 %v91, 4294901760
    %5155 = vmatpush.msra.mxu0 %v5154
    %v5156 = vand.u32 %v88, 4294901760
    %5157 = vmatpush.msra.mxu0 %v5156
    %v5158 = vand.u32 %v85, 4294901760
    %5159 = vmatpush.msra.mxu0 %v5158
    %v5160 = vand.u32 %v4439, 4294901760
    %v5161 = vsub.f32 %v4439, %v5160
    %v5162 = vand.u32 %v5161, 4294901760
    %v5163 = vsub.f32 %v5161, %v5162
    %v5164 = vand.u32 %v5163, 4294901760
    %5165 = vmatmul.f32.gmra.mxu0 %v5164
    %v5166 = vpop.f32.mrf.mxu0
    %v5167 = vadd.f32 %v139, %v5166
    %5168 = vdwg.mxu0
    %v5169 = vand.u32 %v130, 4294901760
    %v5170 = vsub.f32 %v130, %v5169
    %v5171 = vand.u32 %v5170, 4294901760
    %v5172 = vsub.f32 %v5170, %v5171
    %v5173 = vand.u32 %v5172, 4294901760
    %5174 = vmatpush.msra.mxu0 %v5173
    %v5175 = vand.u32 %v127, 4294901760
    %v5176 = vsub.f32 %v127, %v5175
    %v5177 = vand.u32 %v5176, 4294901760
    %v5178 = vsub.f32 %v5176, %v5177
    %v5179 = vand.u32 %v5178, 4294901760
    %5180 = vmatpush.msra.mxu0 %v5179
    %v5181 = vand.u32 %v124, 4294901760
    %v5182 = vsub.f32 %v124, %v5181
    %v5183 = vand.u32 %v5182, 4294901760
    %v5184 = vsub.f32 %v5182, %v5183
    %v5185 = vand.u32 %v5184, 4294901760
    %5186 = vmatpush.msra.mxu0 %v5185
    %v5187 = vand.u32 %v121, 4294901760
    %v5188 = vsub.f32 %v121, %v5187
    %v5189 = vand.u32 %v5188, 4294901760
    %v5190 = vsub.f32 %v5188, %v5189
    %v5191 = vand.u32 %v5190, 4294901760
    %5192 = vmatpush.msra.mxu0 %v5191
    %v5193 = vand.u32 %v118, 4294901760
    %v5194 = vsub.f32 %v118, %v5193
    %v5195 = vand.u32 %v5194, 4294901760
    %v5196 = vsub.f32 %v5194, %v5195
    %v5197 = vand.u32 %v5196, 4294901760
    %5198 = vmatpush.msra.mxu0 %v5197
    %v5199 = vand.u32 %v115, 4294901760
    %v5200 = vsub.f32 %v115, %v5199
    %v5201 = vand.u32 %v5200, 4294901760
    %v5202 = vsub.f32 %v5200, %v5201
    %v5203 = vand.u32 %v5202, 4294901760
    %5204 = vmatpush.msra.mxu0 %v5203
    %v5205 = vand.u32 %v112, 4294901760
    %v5206 = vsub.f32 %v112, %v5205
    %v5207 = vand.u32 %v5206, 4294901760
    %v5208 = vsub.f32 %v5206, %v5207
    %v5209 = vand.u32 %v5208, 4294901760
    %5210 = vmatpush.msra.mxu0 %v5209
    %v5211 = vand.u32 %v109, 4294901760
    %v5212 = vsub.f32 %v109, %v5211
    %v5213 = vand.u32 %v5212, 4294901760
    %v5214 = vsub.f32 %v5212, %v5213
    %v5215 = vand.u32 %v5214, 4294901760
    %5216 = vmatpush.msra.mxu0 %v5215
    %v5217 = vand.u32 %v106, 4294901760
    %v5218 = vsub.f32 %v106, %v5217
    %v5219 = vand.u32 %v5218, 4294901760
    %v5220 = vsub.f32 %v5218, %v5219
    %v5221 = vand.u32 %v5220, 4294901760
    %5222 = vmatpush.msra.mxu0 %v5221
    %v5223 = vand.u32 %v103, 4294901760
    %v5224 = vsub.f32 %v103, %v5223
    %v5225 = vand.u32 %v5224, 4294901760
    %v5226 = vsub.f32 %v5224, %v5225
    %v5227 = vand.u32 %v5226, 4294901760
    %5228 = vmatpush.msra.mxu0 %v5227
    %v5229 = vand.u32 %v100, 4294901760
    %v5230 = vsub.f32 %v100, %v5229
    %v5231 = vand.u32 %v5230, 4294901760
    %v5232 = vsub.f32 %v5230, %v5231
    %v5233 = vand.u32 %v5232, 4294901760
    %5234 = vmatpush.msra.mxu0 %v5233
    %v5235 = vand.u32 %v97, 4294901760
    %v5236 = vsub.f32 %v97, %v5235
    %v5237 = vand.u32 %v5236, 4294901760
    %v5238 = vsub.f32 %v5236, %v5237
    %v5239 = vand.u32 %v5238, 4294901760
    %5240 = vmatpush.msra.mxu0 %v5239
    %v5241 = vand.u32 %v94, 4294901760
    %v5242 = vsub.f32 %v94, %v5241
    %v5243 = vand.u32 %v5242, 4294901760
    %v5244 = vsub.f32 %v5242, %v5243
    %v5245 = vand.u32 %v5244, 4294901760
    %5246 = vmatpush.msra.mxu0 %v5245
    %v5247 = vand.u32 %v91, 4294901760
    %v5248 = vsub.f32 %v91, %v5247
    %v5249 = vand.u32 %v5248, 4294901760
    %v5250 = vsub.f32 %v5248, %v5249
    %v5251 = vand.u32 %v5250, 4294901760
    %5252 = vmatpush.msra.mxu0 %v5251
    %v5253 = vand.u32 %v88, 4294901760
    %v5254 = vsub.f32 %v88, %v5253
    %v5255 = vand.u32 %v5254, 4294901760
    %v5256 = vsub.f32 %v5254, %v5255
    %v5257 = vand.u32 %v5256, 4294901760
    %5258 = vmatpush.msra.mxu0 %v5257
    %v5259 = vand.u32 %v85, 4294901760
    %v5260 = vsub.f32 %v85, %v5259
    %v5261 = vand.u32 %v5260, 4294901760
    %v5262 = vsub.f32 %v5260, %v5261
    %v5263 = vand.u32 %v5262, 4294901760
    %5264 = vmatpush.msra.mxu0 %v5263
    %v5265 = vand.u32 %v4439, 4294901760
    %5266 = vmatmul.f32.gmra.mxu0 %v5265
    %v5267 = vpop.f32.mrf.mxu0
    %v5268 = vadd.f32 %v5167, %v5267
    %5269 = vdwg.mxu0
    %v5270 = vand.u32 %v130, 4294901760
    %v5271 = vsub.f32 %v130, %v5270
    %5272 = vmatpush.msra.mxu0 %v5271
    %v5273 = vand.u32 %v127, 4294901760
    %v5274 = vsub.f32 %v127, %v5273
    %5275 = vmatpush.msra.mxu0 %v5274
    %v5276 = vand.u32 %v124, 4294901760
    %v5277 = vsub.f32 %v124, %v5276
    %5278 = vmatpush.msra.mxu0 %v5277
    %v5279 = vand.u32 %v121, 4294901760
    %v5280 = vsub.f32 %v121, %v5279
    %5281 = vmatpush.msra.mxu0 %v5280
    %v5282 = vand.u32 %v118, 4294901760
    %v5283 = vsub.f32 %v118, %v5282
    %5284 = vmatpush.msra.mxu0 %v5283
    %v5285 = vand.u32 %v115, 4294901760
    %v5286 = vsub.f32 %v115, %v5285
    %5287 = vmatpush.msra.mxu0 %v5286
    %v5288 = vand.u32 %v112, 4294901760
    %v5289 = vsub.f32 %v112, %v5288
    %5290 = vmatpush.msra.mxu0 %v5289
    %v5291 = vand.u32 %v109, 4294901760
    %v5292 = vsub.f32 %v109, %v5291
    %5293 = vmatpush.msra.mxu0 %v5292
    %v5294 = vand.u32 %v106, 4294901760
    %v5295 = vsub.f32 %v106, %v5294
    %5296 = vmatpush.msra.mxu0 %v5295
    %v5297 = vand.u32 %v103, 4294901760
    %v5298 = vsub.f32 %v103, %v5297
    %5299 = vmatpush.msra.mxu0 %v5298
    %v5300 = vand.u32 %v100, 4294901760
    %v5301 = vsub.f32 %v100, %v5300
    %5302 = vmatpush.msra.mxu0 %v5301
    %v5303 = vand.u32 %v97, 4294901760
    %v5304 = vsub.f32 %v97, %v5303
    %5305 = vmatpush.msra.mxu0 %v5304
    %v5306 = vand.u32 %v94, 4294901760
    %v5307 = vsub.f32 %v94, %v5306
    %5308 = vmatpush.msra.mxu0 %v5307
    %v5309 = vand.u32 %v91, 4294901760
    %v5310 = vsub.f32 %v91, %v5309
    %5311 = vmatpush.msra.mxu0 %v5310
    %v5312 = vand.u32 %v88, 4294901760
    %v5313 = vsub.f32 %v88, %v5312
    %5314 = vmatpush.msra.mxu0 %v5313
    %v5315 = vand.u32 %v85, 4294901760
    %v5316 = vsub.f32 %v85, %v5315
    %5317 = vmatpush.msra.mxu0 %v5316
    %v5318 = vand.u32 %v4439, 4294901760
    %v5319 = vsub.f32 %v4439, %v5318
    %5320 = vmatmul.f32.gmra.mxu0 %v5319
    %v5321 = vpop.f32.mrf.mxu0
    %v5322 = vadd.f32 %v5268, %v5321
    %5323 = vdwg.mxu0
    %v5324 = vand.u32 %v130, 4294901760
    %5325 = vmatpush.msra.mxu0 %v5324
    %v5326 = vand.u32 %v127, 4294901760
    %5327 = vmatpush.msra.mxu0 %v5326
    %v5328 = vand.u32 %v124, 4294901760
    %5329 = vmatpush.msra.mxu0 %v5328
    %v5330 = vand.u32 %v121, 4294901760
    %5331 = vmatpush.msra.mxu0 %v5330
    %v5332 = vand.u32 %v118, 4294901760
    %5333 = vmatpush.msra.mxu0 %v5332
    %v5334 = vand.u32 %v115, 4294901760
    %5335 = vmatpush.msra.mxu0 %v5334
    %v5336 = vand.u32 %v112, 4294901760
    %5337 = vmatpush.msra.mxu0 %v5336
    %v5338 = vand.u32 %v109, 4294901760
    %5339 = vmatpush.msra.mxu0 %v5338
    %v5340 = vand.u32 %v106, 4294901760
    %5341 = vmatpush.msra.mxu0 %v5340
    %v5342 = vand.u32 %v103, 4294901760
    %5343 = vmatpush.msra.mxu0 %v5342
    %v5344 = vand.u32 %v100, 4294901760
    %5345 = vmatpush.msra.mxu0 %v5344
    %v5346 = vand.u32 %v97, 4294901760
    %5347 = vmatpush.msra.mxu0 %v5346
    %v5348 = vand.u32 %v94, 4294901760
    %5349 = vmatpush.msra.mxu0 %v5348
    %v5350 = vand.u32 %v91, 4294901760
    %5351 = vmatpush.msra.mxu0 %v5350
    %v5352 = vand.u32 %v88, 4294901760
    %5353 = vmatpush.msra.mxu0 %v5352
    %v5354 = vand.u32 %v85, 4294901760
    %5355 = vmatpush.msra.mxu0 %v5354
    %v5356 = vand.u32 %v4439, 4294901760
    %v5357 = vsub.f32 %v4439, %v5356
    %v5358 = vand.u32 %v5357, 4294901760
    %5359 = vmatmul.f32.gmra.mxu0 %v5358
    %v5360 = vpop.f32.mrf.mxu0
    %v5361 = vadd.f32 %v5322, %v5360
    %5362 = vdwg.mxu0
    %v5363 = vand.u32 %v130, 4294901760
    %v5364 = vsub.f32 %v130, %v5363
    %v5365 = vand.u32 %v5364, 4294901760
    %5366 = vmatpush.msra.mxu0 %v5365
    %v5367 = vand.u32 %v127, 4294901760
    %v5368 = vsub.f32 %v127, %v5367
    %v5369 = vand.u32 %v5368, 4294901760
    %5370 = vmatpush.msra.mxu0 %v5369
    %v5371 = vand.u32 %v124, 4294901760
    %v5372 = vsub.f32 %v124, %v5371
    %v5373 = vand.u32 %v5372, 4294901760
    %5374 = vmatpush.msra.mxu0 %v5373
    %v5375 = vand.u32 %v121, 4294901760
    %v5376 = vsub.f32 %v121, %v5375
    %v5377 = vand.u32 %v5376, 4294901760
    %5378 = vmatpush.msra.mxu0 %v5377
    %v5379 = vand.u32 %v118, 4294901760
    %v5380 = vsub.f32 %v118, %v5379
    %v5381 = vand.u32 %v5380, 4294901760
    %5382 = vmatpush.msra.mxu0 %v5381
    %v5383 = vand.u32 %v115, 4294901760
    %v5384 = vsub.f32 %v115, %v5383
    %v5385 = vand.u32 %v5384, 4294901760
    %5386 = vmatpush.msra.mxu0 %v5385
    %v5387 = vand.u32 %v112, 4294901760
    %v5388 = vsub.f32 %v112, %v5387
    %v5389 = vand.u32 %v5388, 4294901760
    %5390 = vmatpush.msra.mxu0 %v5389
    %v5391 = vand.u32 %v109, 4294901760
    %v5392 = vsub.f32 %v109, %v5391
    %v5393 = vand.u32 %v5392, 4294901760
    %5394 = vmatpush.msra.mxu0 %v5393
    %v5395 = vand.u32 %v106, 4294901760
    %v5396 = vsub.f32 %v106, %v5395
    %v5397 = vand.u32 %v5396, 4294901760
    %5398 = vmatpush.msra.mxu0 %v5397
    %v5399 = vand.u32 %v103, 4294901760
    %v5400 = vsub.f32 %v103, %v5399
    %v5401 = vand.u32 %v5400, 4294901760
    %5402 = vmatpush.msra.mxu0 %v5401
    %v5403 = vand.u32 %v100, 4294901760
    %v5404 = vsub.f32 %v100, %v5403
    %v5405 = vand.u32 %v5404, 4294901760
    %5406 = vmatpush.msra.mxu0 %v5405
    %v5407 = vand.u32 %v97, 4294901760
    %v5408 = vsub.f32 %v97, %v5407
    %v5409 = vand.u32 %v5408, 4294901760
    %5410 = vmatpush.msra.mxu0 %v5409
    %v5411 = vand.u32 %v94, 4294901760
    %v5412 = vsub.f32 %v94, %v5411
    %v5413 = vand.u32 %v5412, 4294901760
    %5414 = vmatpush.msra.mxu0 %v5413
    %v5415 = vand.u32 %v91, 4294901760
    %v5416 = vsub.f32 %v91, %v5415
    %v5417 = vand.u32 %v5416, 4294901760
    %5418 = vmatpush.msra.mxu0 %v5417
    %v5419 = vand.u32 %v88, 4294901760
    %v5420 = vsub.f32 %v88, %v5419
    %v5421 = vand.u32 %v5420, 4294901760
    %5422 = vmatpush.msra.mxu0 %v5421
    %v5423 = vand.u32 %v85, 4294901760
    %v5424 = vsub.f32 %v85, %v5423
    %v5425 = vand.u32 %v5424, 4294901760
    %5426 = vmatpush.msra.mxu0 %v5425
    %v5427 = vand.u32 %v4439, 4294901760
    %5428 = vmatmul.f32.gmra.mxu0 %v5427
    %v5429 = vpop.f32.mrf.mxu0
    %v5430 = vadd.f32 %v5361, %v5429
    %5431 = vdwg.mxu0
    %v5432 = vand.u32 %v130, 4294901760
    %5433 = vmatpush.msra.mxu0 %v5432
    %v5434 = vand.u32 %v127, 4294901760
    %5435 = vmatpush.msra.mxu0 %v5434
    %v5436 = vand.u32 %v124, 4294901760
    %5437 = vmatpush.msra.mxu0 %v5436
    %v5438 = vand.u32 %v121, 4294901760
    %5439 = vmatpush.msra.mxu0 %v5438
    %v5440 = vand.u32 %v118, 4294901760
    %5441 = vmatpush.msra.mxu0 %v5440
    %v5442 = vand.u32 %v115, 4294901760
    %5443 = vmatpush.msra.mxu0 %v5442
    %v5444 = vand.u32 %v112, 4294901760
    %5445 = vmatpush.msra.mxu0 %v5444
    %v5446 = vand.u32 %v109, 4294901760
    %5447 = vmatpush.msra.mxu0 %v5446
    %v5448 = vand.u32 %v106, 4294901760
    %5449 = vmatpush.msra.mxu0 %v5448
    %v5450 = vand.u32 %v103, 4294901760
    %5451 = vmatpush.msra.mxu0 %v5450
    %v5452 = vand.u32 %v100, 4294901760
    %5453 = vmatpush.msra.mxu0 %v5452
    %v5454 = vand.u32 %v97, 4294901760
    %5455 = vmatpush.msra.mxu0 %v5454
    %v5456 = vand.u32 %v94, 4294901760
    %5457 = vmatpush.msra.mxu0 %v5456
    %v5458 = vand.u32 %v91, 4294901760
    %5459 = vmatpush.msra.mxu0 %v5458
    %v5460 = vand.u32 %v88, 4294901760
    %5461 = vmatpush.msra.mxu0 %v5460
    %v5462 = vand.u32 %v85, 4294901760
    %5463 = vmatpush.msra.mxu0 %v5462
    %v5464 = vand.u32 %v4439, 4294901760
    %5465 = vmatmul.f32.gmra.mxu0 %v5464
    %v5466 = vpop.f32.mrf.mxu0
    %v5467 = vadd.f32 %v5430, %v5466
    %5468 = vdwg.mxu0
    %v5469 = vadd.f32 %v4443, %v4785
    %v5470 = vadd.f32 %v4444, %v5126
    %v5471 = vxor.u32 %v5469, 2147483648
    %v5472 = vxor.u32 %v5470, 2147483648
    %v5473 = vmul.f32 %v5471, 1.442695
    %v5474 = vpow.pop %v5473
    %v5475 = vmul.f32 %v5472, 1.442695
    %v5476 = vpow.pop %v5475
    %v5477 = vadd.f32 %v5474, 1.0
    %v5478 = vadd.f32 %v5476, 1.0
    %v5479 = vrcp.pop %v5477
    %v5480 = vmul.f32 %v5477, %v5479
    %v5481 = vsub.f32 1.0, %v5480
    %v5482 = vmul.f32 %v5479, %v5481
    %v5483 = vadd.f32 %v5479, %v5482
    %vm5484 = vweird.f32 %v5477
    %vm5485 = vweird.f32 %v5479
    %vm5486 = vmor %vm5484, %vm5485
    %v5487 = vsel %vm5486, %v5479, %v5483
    %v5488 = vand.u32 2147483647, %v5477
    %vm5489 = vcmp.eq.f32.partialorder %v5488, 8.507059e+37
    %v5490 = vand.u32 %v5477, 2147483648
    %v5491 = vor.u32 1.1754944e-38, %v5490
    %v5492 = vsel %vm5489, %v5491, %v5487
    %v5493 = vmul.f32 1.0, %v5492
    %v5494 = vrcp.pop %v5478
    %v5495 = vmul.f32 %v5478, %v5494
    %v5496 = vsub.f32 1.0, %v5495
    %v5497 = vmul.f32 %v5494, %v5496
    %v5498 = vadd.f32 %v5494, %v5497
    %vm5499 = vweird.f32 %v5478
    %vm5500 = vweird.f32 %v5494
    %vm5501 = vmor %vm5499, %vm5500
    %v5502 = vsel %vm5501, %v5494, %v5498
    %v5503 = vand.u32 2147483647, %v5478
    %vm5504 = vcmp.eq.f32.partialorder %v5503, 8.507059e+37
    %v5505 = vand.u32 %v5478, 2147483648
    %v5506 = vor.u32 1.1754944e-38, %v5505
    %v5507 = vsel %vm5504, %v5506, %v5502
    %v5508 = vmul.f32 1.0, %v5507
    %v5509 = vmul.f32 %v5493, %v5467
    %v5510 = vadd.f32 %v4445, %v5509
    %v5511 = vtanh.pop %v5510
    %v5512 = vsub.f32 1.0, %v5508
    %v5513 = vmul.f32 %v5512, %v5511
    %v5514 = vmul.f32 %v5508, %v4439
    %v5515 = vadd.f32 %v5513, %v5514
    %s5516 = scalar_lea.vmem [#allocation11], 32
    %5517 = vst [vmem:[%s5516] sm:$0xff] %v5515
    %s5518 = scalar_lea.vmem [#allocation3], 120
    %v5519 = vld [vmem:[%s5518] sm:$0xff]
    %v5520 = vld [vmem:[%s5518 + $0x8] sm:$0xff]
    %v5521 = vld [vmem:[%s5518 + $0x10] sm:$0xff]
    %v5522 = vand.u32 %v128, 4294901760
    %5523 = vmatpush.msra.mxu0 %v5522
    %v5524 = vand.u32 %v125, 4294901760
    %5525 = vmatpush.msra.mxu0 %v5524
    %v5526 = vand.u32 %v122, 4294901760
    %5527 = vmatpush.msra.mxu0 %v5526
    %v5528 = vand.u32 %v119, 4294901760
    %5529 = vmatpush.msra.mxu0 %v5528
    %v5530 = vand.u32 %v116, 4294901760
    %5531 = vmatpush.msra.mxu0 %v5530
    %v5532 = vand.u32 %v113, 4294901760
    %5533 = vmatpush.msra.mxu0 %v5532
    %v5534 = vand.u32 %v110, 4294901760
    %5535 = vmatpush.msra.mxu0 %v5534
    %v5536 = vand.u32 %v107, 4294901760
    %5537 = vmatpush.msra.mxu0 %v5536
    %v5538 = vand.u32 %v104, 4294901760
    %5539 = vmatpush.msra.mxu0 %v5538
    %v5540 = vand.u32 %v101, 4294901760
    %5541 = vmatpush.msra.mxu0 %v5540
    %v5542 = vand.u32 %v98, 4294901760
    %5543 = vmatpush.msra.mxu0 %v5542
    %v5544 = vand.u32 %v95, 4294901760
    %5545 = vmatpush.msra.mxu0 %v5544
    %v5546 = vand.u32 %v92, 4294901760
    %5547 = vmatpush.msra.mxu0 %v5546
    %v5548 = vand.u32 %v89, 4294901760
    %5549 = vmatpush.msra.mxu0 %v5548
    %v5550 = vand.u32 %v86, 4294901760
    %5551 = vmatpush.msra.mxu0 %v5550
    %v5552 = vand.u32 %v83, 4294901760
    %5553 = vmatpush.msra.mxu0 %v5552
    %v5554 = vand.u32 %v5515, 4294901760
    %v5555 = vsub.f32 %v5515, %v5554
    %v5556 = vand.u32 %v5555, 4294901760
    %v5557 = vsub.f32 %v5555, %v5556
    %v5558 = vand.u32 %v5557, 4294901760
    %5559 = vmatmul.f32.gmra.mxu0 %v5558
    %v5560 = vpop.f32.mrf.mxu0
    %v5561 = vadd.f32 %v137, %v5560
    %5562 = vdwg.mxu0
    %v5563 = vand.u32 %v128, 4294901760
    %v5564 = vsub.f32 %v128, %v5563
    %v5565 = vand.u32 %v5564, 4294901760
    %v5566 = vsub.f32 %v5564, %v5565
    %v5567 = vand.u32 %v5566, 4294901760
    %5568 = vmatpush.msra.mxu0 %v5567
    %v5569 = vand.u32 %v125, 4294901760
    %v5570 = vsub.f32 %v125, %v5569
    %v5571 = vand.u32 %v5570, 4294901760
    %v5572 = vsub.f32 %v5570, %v5571
    %v5573 = vand.u32 %v5572, 4294901760
    %5574 = vmatpush.msra.mxu0 %v5573
    %v5575 = vand.u32 %v122, 4294901760
    %v5576 = vsub.f32 %v122, %v5575
    %v5577 = vand.u32 %v5576, 4294901760
    %v5578 = vsub.f32 %v5576, %v5577
    %v5579 = vand.u32 %v5578, 4294901760
    %5580 = vmatpush.msra.mxu0 %v5579
    %v5581 = vand.u32 %v119, 4294901760
    %v5582 = vsub.f32 %v119, %v5581
    %v5583 = vand.u32 %v5582, 4294901760
    %v5584 = vsub.f32 %v5582, %v5583
    %v5585 = vand.u32 %v5584, 4294901760
    %5586 = vmatpush.msra.mxu0 %v5585
    %v5587 = vand.u32 %v116, 4294901760
    %v5588 = vsub.f32 %v116, %v5587
    %v5589 = vand.u32 %v5588, 4294901760
    %v5590 = vsub.f32 %v5588, %v5589
    %v5591 = vand.u32 %v5590, 4294901760
    %5592 = vmatpush.msra.mxu0 %v5591
    %v5593 = vand.u32 %v113, 4294901760
    %v5594 = vsub.f32 %v113, %v5593
    %v5595 = vand.u32 %v5594, 4294901760
    %v5596 = vsub.f32 %v5594, %v5595
    %v5597 = vand.u32 %v5596, 4294901760
    %5598 = vmatpush.msra.mxu0 %v5597
    %v5599 = vand.u32 %v110, 4294901760
    %v5600 = vsub.f32 %v110, %v5599
    %v5601 = vand.u32 %v5600, 4294901760
    %v5602 = vsub.f32 %v5600, %v5601
    %v5603 = vand.u32 %v5602, 4294901760
    %5604 = vmatpush.msra.mxu0 %v5603
    %v5605 = vand.u32 %v107, 4294901760
    %v5606 = vsub.f32 %v107, %v5605
    %v5607 = vand.u32 %v5606, 4294901760
    %v5608 = vsub.f32 %v5606, %v5607
    %v5609 = vand.u32 %v5608, 4294901760
    %5610 = vmatpush.msra.mxu0 %v5609
    %v5611 = vand.u32 %v104, 4294901760
    %v5612 = vsub.f32 %v104, %v5611
    %v5613 = vand.u32 %v5612, 4294901760
    %v5614 = vsub.f32 %v5612, %v5613
    %v5615 = vand.u32 %v5614, 4294901760
    %5616 = vmatpush.msra.mxu0 %v5615
    %v5617 = vand.u32 %v101, 4294901760
    %v5618 = vsub.f32 %v101, %v5617
    %v5619 = vand.u32 %v5618, 4294901760
    %v5620 = vsub.f32 %v5618, %v5619
    %v5621 = vand.u32 %v5620, 4294901760
    %5622 = vmatpush.msra.mxu0 %v5621
    %v5623 = vand.u32 %v98, 4294901760
    %v5624 = vsub.f32 %v98, %v5623
    %v5625 = vand.u32 %v5624, 4294901760
    %v5626 = vsub.f32 %v5624, %v5625
    %v5627 = vand.u32 %v5626, 4294901760
    %5628 = vmatpush.msra.mxu0 %v5627
    %v5629 = vand.u32 %v95, 4294901760
    %v5630 = vsub.f32 %v95, %v5629
    %v5631 = vand.u32 %v5630, 4294901760
    %v5632 = vsub.f32 %v5630, %v5631
    %v5633 = vand.u32 %v5632, 4294901760
    %5634 = vmatpush.msra.mxu0 %v5633
    %v5635 = vand.u32 %v92, 4294901760
    %v5636 = vsub.f32 %v92, %v5635
    %v5637 = vand.u32 %v5636, 4294901760
    %v5638 = vsub.f32 %v5636, %v5637
    %v5639 = vand.u32 %v5638, 4294901760
    %5640 = vmatpush.msra.mxu0 %v5639
    %v5641 = vand.u32 %v89, 4294901760
    %v5642 = vsub.f32 %v89, %v5641
    %v5643 = vand.u32 %v5642, 4294901760
    %v5644 = vsub.f32 %v5642, %v5643
    %v5645 = vand.u32 %v5644, 4294901760
    %5646 = vmatpush.msra.mxu0 %v5645
    %v5647 = vand.u32 %v86, 4294901760
    %v5648 = vsub.f32 %v86, %v5647
    %v5649 = vand.u32 %v5648, 4294901760
    %v5650 = vsub.f32 %v5648, %v5649
    %v5651 = vand.u32 %v5650, 4294901760
    %5652 = vmatpush.msra.mxu0 %v5651
    %v5653 = vand.u32 %v83, 4294901760
    %v5654 = vsub.f32 %v83, %v5653
    %v5655 = vand.u32 %v5654, 4294901760
    %v5656 = vsub.f32 %v5654, %v5655
    %v5657 = vand.u32 %v5656, 4294901760
    %5658 = vmatpush.msra.mxu0 %v5657
    %v5659 = vand.u32 %v5515, 4294901760
    %5660 = vmatmul.f32.gmra.mxu0 %v5659
    %v5661 = vpop.f32.mrf.mxu0
    %v5662 = vadd.f32 %v5561, %v5661
    %5663 = vdwg.mxu0
    %v5664 = vand.u32 %v128, 4294901760
    %v5665 = vsub.f32 %v128, %v5664
    %5666 = vmatpush.msra.mxu0 %v5665
    %v5667 = vand.u32 %v125, 4294901760
    %v5668 = vsub.f32 %v125, %v5667
    %5669 = vmatpush.msra.mxu0 %v5668
    %v5670 = vand.u32 %v122, 4294901760
    %v5671 = vsub.f32 %v122, %v5670
    %5672 = vmatpush.msra.mxu0 %v5671
    %v5673 = vand.u32 %v119, 4294901760
    %v5674 = vsub.f32 %v119, %v5673
    %5675 = vmatpush.msra.mxu0 %v5674
    %v5676 = vand.u32 %v116, 4294901760
    %v5677 = vsub.f32 %v116, %v5676
    %5678 = vmatpush.msra.mxu0 %v5677
    %v5679 = vand.u32 %v113, 4294901760
    %v5680 = vsub.f32 %v113, %v5679
    %5681 = vmatpush.msra.mxu0 %v5680
    %v5682 = vand.u32 %v110, 4294901760
    %v5683 = vsub.f32 %v110, %v5682
    %5684 = vmatpush.msra.mxu0 %v5683
    %v5685 = vand.u32 %v107, 4294901760
    %v5686 = vsub.f32 %v107, %v5685
    %5687 = vmatpush.msra.mxu0 %v5686
    %v5688 = vand.u32 %v104, 4294901760
    %v5689 = vsub.f32 %v104, %v5688
    %5690 = vmatpush.msra.mxu0 %v5689
    %v5691 = vand.u32 %v101, 4294901760
    %v5692 = vsub.f32 %v101, %v5691
    %5693 = vmatpush.msra.mxu0 %v5692
    %v5694 = vand.u32 %v98, 4294901760
    %v5695 = vsub.f32 %v98, %v5694
    %5696 = vmatpush.msra.mxu0 %v5695
    %v5697 = vand.u32 %v95, 4294901760
    %v5698 = vsub.f32 %v95, %v5697
    %5699 = vmatpush.msra.mxu0 %v5698
    %v5700 = vand.u32 %v92, 4294901760
    %v5701 = vsub.f32 %v92, %v5700
    %5702 = vmatpush.msra.mxu0 %v5701
    %v5703 = vand.u32 %v89, 4294901760
    %v5704 = vsub.f32 %v89, %v5703
    %5705 = vmatpush.msra.mxu0 %v5704
    %v5706 = vand.u32 %v86, 4294901760
    %v5707 = vsub.f32 %v86, %v5706
    %5708 = vmatpush.msra.mxu0 %v5707
    %v5709 = vand.u32 %v83, 4294901760
    %v5710 = vsub.f32 %v83, %v5709
    %5711 = vmatpush.msra.mxu0 %v5710
    %v5712 = vand.u32 %v5515, 4294901760
    %v5713 = vsub.f32 %v5515, %v5712
    %5714 = vmatmul.f32.gmra.mxu0 %v5713
    %v5715 = vpop.f32.mrf.mxu0
    %v5716 = vadd.f32 %v5662, %v5715
    %5717 = vdwg.mxu0
    %v5718 = vand.u32 %v128, 4294901760
    %5719 = vmatpush.msra.mxu0 %v5718
    %v5720 = vand.u32 %v125, 4294901760
    %5721 = vmatpush.msra.mxu0 %v5720
    %v5722 = vand.u32 %v122, 4294901760
    %5723 = vmatpush.msra.mxu0 %v5722
    %v5724 = vand.u32 %v119, 4294901760
    %5725 = vmatpush.msra.mxu0 %v5724
    %v5726 = vand.u32 %v116, 4294901760
    %5727 = vmatpush.msra.mxu0 %v5726
    %v5728 = vand.u32 %v113, 4294901760
    %5729 = vmatpush.msra.mxu0 %v5728
    %v5730 = vand.u32 %v110, 4294901760
    %5731 = vmatpush.msra.mxu0 %v5730
    %v5732 = vand.u32 %v107, 4294901760
    %5733 = vmatpush.msra.mxu0 %v5732
    %v5734 = vand.u32 %v104, 4294901760
    %5735 = vmatpush.msra.mxu0 %v5734
    %v5736 = vand.u32 %v101, 4294901760
    %5737 = vmatpush.msra.mxu0 %v5736
    %v5738 = vand.u32 %v98, 4294901760
    %5739 = vmatpush.msra.mxu0 %v5738
    %v5740 = vand.u32 %v95, 4294901760
    %5741 = vmatpush.msra.mxu0 %v5740
    %v5742 = vand.u32 %v92, 4294901760
    %5743 = vmatpush.msra.mxu0 %v5742
    %v5744 = vand.u32 %v89, 4294901760
    %5745 = vmatpush.msra.mxu0 %v5744
    %v5746 = vand.u32 %v86, 4294901760
    %5747 = vmatpush.msra.mxu0 %v5746
    %v5748 = vand.u32 %v83, 4294901760
    %5749 = vmatpush.msra.mxu0 %v5748
    %v5750 = vand.u32 %v5515, 4294901760
    %v5751 = vsub.f32 %v5515, %v5750
    %v5752 = vand.u32 %v5751, 4294901760
    %5753 = vmatmul.f32.gmra.mxu0 %v5752
    %v5754 = vpop.f32.mrf.mxu0
    %v5755 = vadd.f32 %v5716, %v5754
    %5756 = vdwg.mxu0
    %v5757 = vand.u32 %v128, 4294901760
    %v5758 = vsub.f32 %v128, %v5757
    %v5759 = vand.u32 %v5758, 4294901760
    %5760 = vmatpush.msra.mxu0 %v5759
    %v5761 = vand.u32 %v125, 4294901760
    %v5762 = vsub.f32 %v125, %v5761
    %v5763 = vand.u32 %v5762, 4294901760
    %5764 = vmatpush.msra.mxu0 %v5763
    %v5765 = vand.u32 %v122, 4294901760
    %v5766 = vsub.f32 %v122, %v5765
    %v5767 = vand.u32 %v5766, 4294901760
    %5768 = vmatpush.msra.mxu0 %v5767
    %v5769 = vand.u32 %v119, 4294901760
    %v5770 = vsub.f32 %v119, %v5769
    %v5771 = vand.u32 %v5770, 4294901760
    %5772 = vmatpush.msra.mxu0 %v5771
    %v5773 = vand.u32 %v116, 4294901760
    %v5774 = vsub.f32 %v116, %v5773
    %v5775 = vand.u32 %v5774, 4294901760
    %5776 = vmatpush.msra.mxu0 %v5775
    %v5777 = vand.u32 %v113, 4294901760
    %v5778 = vsub.f32 %v113, %v5777
    %v5779 = vand.u32 %v5778, 4294901760
    %5780 = vmatpush.msra.mxu0 %v5779
    %v5781 = vand.u32 %v110, 4294901760
    %v5782 = vsub.f32 %v110, %v5781
    %v5783 = vand.u32 %v5782, 4294901760
    %5784 = vmatpush.msra.mxu0 %v5783
    %v5785 = vand.u32 %v107, 4294901760
    %v5786 = vsub.f32 %v107, %v5785
    %v5787 = vand.u32 %v5786, 4294901760
    %5788 = vmatpush.msra.mxu0 %v5787
    %v5789 = vand.u32 %v104, 4294901760
    %v5790 = vsub.f32 %v104, %v5789
    %v5791 = vand.u32 %v5790, 4294901760
    %5792 = vmatpush.msra.mxu0 %v5791
    %v5793 = vand.u32 %v101, 4294901760
    %v5794 = vsub.f32 %v101, %v5793
    %v5795 = vand.u32 %v5794, 4294901760
    %5796 = vmatpush.msra.mxu0 %v5795
    %v5797 = vand.u32 %v98, 4294901760
    %v5798 = vsub.f32 %v98, %v5797
    %v5799 = vand.u32 %v5798, 4294901760
    %5800 = vmatpush.msra.mxu0 %v5799
    %v5801 = vand.u32 %v95, 4294901760
    %v5802 = vsub.f32 %v95, %v5801
    %v5803 = vand.u32 %v5802, 4294901760
    %5804 = vmatpush.msra.mxu0 %v5803
    %v5805 = vand.u32 %v92, 4294901760
    %v5806 = vsub.f32 %v92, %v5805
    %v5807 = vand.u32 %v5806, 4294901760
    %5808 = vmatpush.msra.mxu0 %v5807
    %v5809 = vand.u32 %v89, 4294901760
    %v5810 = vsub.f32 %v89, %v5809
    %v5811 = vand.u32 %v5810, 4294901760
    %5812 = vmatpush.msra.mxu0 %v5811
    %v5813 = vand.u32 %v86, 4294901760
    %v5814 = vsub.f32 %v86, %v5813
    %v5815 = vand.u32 %v5814, 4294901760
    %5816 = vmatpush.msra.mxu0 %v5815
    %v5817 = vand.u32 %v83, 4294901760
    %v5818 = vsub.f32 %v83, %v5817
    %v5819 = vand.u32 %v5818, 4294901760
    %5820 = vmatpush.msra.mxu0 %v5819
    %v5821 = vand.u32 %v5515, 4294901760
    %5822 = vmatmul.f32.gmra.mxu0 %v5821
    %v5823 = vpop.f32.mrf.mxu0
    %v5824 = vadd.f32 %v5755, %v5823
    %5825 = vdwg.mxu0
    %v5826 = vand.u32 %v128, 4294901760
    %5827 = vmatpush.msra.mxu0 %v5826
    %v5828 = vand.u32 %v125, 4294901760
    %5829 = vmatpush.msra.mxu0 %v5828
    %v5830 = vand.u32 %v122, 4294901760
    %5831 = vmatpush.msra.mxu0 %v5830
    %v5832 = vand.u32 %v119, 4294901760
    %5833 = vmatpush.msra.mxu0 %v5832
    %v5834 = vand.u32 %v116, 4294901760
    %5835 = vmatpush.msra.mxu0 %v5834
    %v5836 = vand.u32 %v113, 4294901760
    %5837 = vmatpush.msra.mxu0 %v5836
    %v5838 = vand.u32 %v110, 4294901760
    %5839 = vmatpush.msra.mxu0 %v5838
    %v5840 = vand.u32 %v107, 4294901760
    %5841 = vmatpush.msra.mxu0 %v5840
    %v5842 = vand.u32 %v104, 4294901760
    %5843 = vmatpush.msra.mxu0 %v5842
    %v5844 = vand.u32 %v101, 4294901760
    %5845 = vmatpush.msra.mxu0 %v5844
    %v5846 = vand.u32 %v98, 4294901760
    %5847 = vmatpush.msra.mxu0 %v5846
    %v5848 = vand.u32 %v95, 4294901760
    %5849 = vmatpush.msra.mxu0 %v5848
    %v5850 = vand.u32 %v92, 4294901760
    %5851 = vmatpush.msra.mxu0 %v5850
    %v5852 = vand.u32 %v89, 4294901760
    %5853 = vmatpush.msra.mxu0 %v5852
    %v5854 = vand.u32 %v86, 4294901760
    %5855 = vmatpush.msra.mxu0 %v5854
    %v5856 = vand.u32 %v83, 4294901760
    %5857 = vmatpush.msra.mxu0 %v5856
    %v5858 = vand.u32 %v5515, 4294901760
    %5859 = vmatmul.f32.gmra.mxu0 %v5858
    %v5860 = vpop.f32.mrf.mxu0
    %v5861 = vadd.f32 %v5824, %v5860
    %5862 = vdwg.mxu0
    %v5863 = vand.u32 %v129, 4294901760
    %5864 = vmatpush.msra.mxu0 %v5863
    %v5865 = vand.u32 %v126, 4294901760
    %5866 = vmatpush.msra.mxu0 %v5865
    %v5867 = vand.u32 %v123, 4294901760
    %5868 = vmatpush.msra.mxu0 %v5867
    %v5869 = vand.u32 %v120, 4294901760
    %5870 = vmatpush.msra.mxu0 %v5869
    %v5871 = vand.u32 %v117, 4294901760
    %5872 = vmatpush.msra.mxu0 %v5871
    %v5873 = vand.u32 %v114, 4294901760
    %5874 = vmatpush.msra.mxu0 %v5873
    %v5875 = vand.u32 %v111, 4294901760
    %5876 = vmatpush.msra.mxu0 %v5875
    %v5877 = vand.u32 %v108, 4294901760
    %5878 = vmatpush.msra.mxu0 %v5877
    %v5879 = vand.u32 %v105, 4294901760
    %5880 = vmatpush.msra.mxu0 %v5879
    %v5881 = vand.u32 %v102, 4294901760
    %5882 = vmatpush.msra.mxu0 %v5881
    %v5883 = vand.u32 %v99, 4294901760
    %5884 = vmatpush.msra.mxu0 %v5883
    %v5885 = vand.u32 %v96, 4294901760
    %5886 = vmatpush.msra.mxu0 %v5885
    %v5887 = vand.u32 %v93, 4294901760
    %5888 = vmatpush.msra.mxu0 %v5887
    %v5889 = vand.u32 %v90, 4294901760
    %5890 = vmatpush.msra.mxu0 %v5889
    %v5891 = vand.u32 %v87, 4294901760
    %5892 = vmatpush.msra.mxu0 %v5891
    %v5893 = vand.u32 %v84, 4294901760
    %5894 = vmatpush.msra.mxu0 %v5893
    %v5895 = vand.u32 %v5515, 4294901760
    %v5896 = vsub.f32 %v5515, %v5895
    %v5897 = vand.u32 %v5896, 4294901760
    %v5898 = vsub.f32 %v5896, %v5897
    %v5899 = vand.u32 %v5898, 4294901760
    %5900 = vmatmul.f32.gmra.mxu0 %v5899
    %v5901 = vpop.f32.mrf.mxu0
    %v5902 = vadd.f32 %v138, %v5901
    %5903 = vdwg.mxu0
    %v5904 = vand.u32 %v129, 4294901760
    %v5905 = vsub.f32 %v129, %v5904
    %v5906 = vand.u32 %v5905, 4294901760
    %v5907 = vsub.f32 %v5905, %v5906
    %v5908 = vand.u32 %v5907, 4294901760
    %5909 = vmatpush.msra.mxu0 %v5908
    %v5910 = vand.u32 %v126, 4294901760
    %v5911 = vsub.f32 %v126, %v5910
    %v5912 = vand.u32 %v5911, 4294901760
    %v5913 = vsub.f32 %v5911, %v5912
    %v5914 = vand.u32 %v5913, 4294901760
    %5915 = vmatpush.msra.mxu0 %v5914
    %v5916 = vand.u32 %v123, 4294901760
    %v5917 = vsub.f32 %v123, %v5916
    %v5918 = vand.u32 %v5917, 4294901760
    %v5919 = vsub.f32 %v5917, %v5918
    %v5920 = vand.u32 %v5919, 4294901760
    %5921 = vmatpush.msra.mxu0 %v5920
    %v5922 = vand.u32 %v120, 4294901760
    %v5923 = vsub.f32 %v120, %v5922
    %v5924 = vand.u32 %v5923, 4294901760
    %v5925 = vsub.f32 %v5923, %v5924
    %v5926 = vand.u32 %v5925, 4294901760
    %5927 = vmatpush.msra.mxu0 %v5926
    %v5928 = vand.u32 %v117, 4294901760
    %v5929 = vsub.f32 %v117, %v5928
    %v5930 = vand.u32 %v5929, 4294901760
    %v5931 = vsub.f32 %v5929, %v5930
    %v5932 = vand.u32 %v5931, 4294901760
    %5933 = vmatpush.msra.mxu0 %v5932
    %v5934 = vand.u32 %v114, 4294901760
    %v5935 = vsub.f32 %v114, %v5934
    %v5936 = vand.u32 %v5935, 4294901760
    %v5937 = vsub.f32 %v5935, %v5936
    %v5938 = vand.u32 %v5937, 4294901760
    %5939 = vmatpush.msra.mxu0 %v5938
    %v5940 = vand.u32 %v111, 4294901760
    %v5941 = vsub.f32 %v111, %v5940
    %v5942 = vand.u32 %v5941, 4294901760
    %v5943 = vsub.f32 %v5941, %v5942
    %v5944 = vand.u32 %v5943, 4294901760
    %5945 = vmatpush.msra.mxu0 %v5944
    %v5946 = vand.u32 %v108, 4294901760
    %v5947 = vsub.f32 %v108, %v5946
    %v5948 = vand.u32 %v5947, 4294901760
    %v5949 = vsub.f32 %v5947, %v5948
    %v5950 = vand.u32 %v5949, 4294901760
    %5951 = vmatpush.msra.mxu0 %v5950
    %v5952 = vand.u32 %v105, 4294901760
    %v5953 = vsub.f32 %v105, %v5952
    %v5954 = vand.u32 %v5953, 4294901760
    %v5955 = vsub.f32 %v5953, %v5954
    %v5956 = vand.u32 %v5955, 4294901760
    %5957 = vmatpush.msra.mxu0 %v5956
    %v5958 = vand.u32 %v102, 4294901760
    %v5959 = vsub.f32 %v102, %v5958
    %v5960 = vand.u32 %v5959, 4294901760
    %v5961 = vsub.f32 %v5959, %v5960
    %v5962 = vand.u32 %v5961, 4294901760
    %5963 = vmatpush.msra.mxu0 %v5962
    %v5964 = vand.u32 %v99, 4294901760
    %v5965 = vsub.f32 %v99, %v5964
    %v5966 = vand.u32 %v5965, 4294901760
    %v5967 = vsub.f32 %v5965, %v5966
    %v5968 = vand.u32 %v5967, 4294901760
    %5969 = vmatpush.msra.mxu0 %v5968
    %v5970 = vand.u32 %v96, 4294901760
    %v5971 = vsub.f32 %v96, %v5970
    %v5972 = vand.u32 %v5971, 4294901760
    %v5973 = vsub.f32 %v5971, %v5972
    %v5974 = vand.u32 %v5973, 4294901760
    %5975 = vmatpush.msra.mxu0 %v5974
    %v5976 = vand.u32 %v93, 4294901760
    %v5977 = vsub.f32 %v93, %v5976
    %v5978 = vand.u32 %v5977, 4294901760
    %v5979 = vsub.f32 %v5977, %v5978
    %v5980 = vand.u32 %v5979, 4294901760
    %5981 = vmatpush.msra.mxu0 %v5980
    %v5982 = vand.u32 %v90, 4294901760
    %v5983 = vsub.f32 %v90, %v5982
    %v5984 = vand.u32 %v5983, 4294901760
    %v5985 = vsub.f32 %v5983, %v5984
    %v5986 = vand.u32 %v5985, 4294901760
    %5987 = vmatpush.msra.mxu0 %v5986
    %v5988 = vand.u32 %v87, 4294901760
    %v5989 = vsub.f32 %v87, %v5988
    %v5990 = vand.u32 %v5989, 4294901760
    %v5991 = vsub.f32 %v5989, %v5990
    %v5992 = vand.u32 %v5991, 4294901760
    %5993 = vmatpush.msra.mxu0 %v5992
    %v5994 = vand.u32 %v84, 4294901760
    %v5995 = vsub.f32 %v84, %v5994
    %v5996 = vand.u32 %v5995, 4294901760
    %v5997 = vsub.f32 %v5995, %v5996
    %v5998 = vand.u32 %v5997, 4294901760
    %5999 = vmatpush.msra.mxu0 %v5998
    %v6000 = vand.u32 %v5515, 4294901760
    %6001 = vmatmul.f32.gmra.mxu0 %v6000
    %v6002 = vpop.f32.mrf.mxu0
    %v6003 = vadd.f32 %v5902, %v6002
    %6004 = vdwg.mxu0
    %v6005 = vand.u32 %v129, 4294901760
    %v6006 = vsub.f32 %v129, %v6005
    %6007 = vmatpush.msra.mxu0 %v6006
    %v6008 = vand.u32 %v126, 4294901760
    %v6009 = vsub.f32 %v126, %v6008
    %6010 = vmatpush.msra.mxu0 %v6009
    %v6011 = vand.u32 %v123, 4294901760
    %v6012 = vsub.f32 %v123, %v6011
    %6013 = vmatpush.msra.mxu0 %v6012
    %v6014 = vand.u32 %v120, 4294901760
    %v6015 = vsub.f32 %v120, %v6014
    %6016 = vmatpush.msra.mxu0 %v6015
    %v6017 = vand.u32 %v117, 4294901760
    %v6018 = vsub.f32 %v117, %v6017
    %6019 = vmatpush.msra.mxu0 %v6018
    %v6020 = vand.u32 %v114, 4294901760
    %v6021 = vsub.f32 %v114, %v6020
    %6022 = vmatpush.msra.mxu0 %v6021
    %v6023 = vand.u32 %v111, 4294901760
    %v6024 = vsub.f32 %v111, %v6023
    %6025 = vmatpush.msra.mxu0 %v6024
    %v6026 = vand.u32 %v108, 4294901760
    %v6027 = vsub.f32 %v108, %v6026
    %6028 = vmatpush.msra.mxu0 %v6027
    %v6029 = vand.u32 %v105, 4294901760
    %v6030 = vsub.f32 %v105, %v6029
    %6031 = vmatpush.msra.mxu0 %v6030
    %v6032 = vand.u32 %v102, 4294901760
    %v6033 = vsub.f32 %v102, %v6032
    %6034 = vmatpush.msra.mxu0 %v6033
    %v6035 = vand.u32 %v99, 4294901760
    %v6036 = vsub.f32 %v99, %v6035
    %6037 = vmatpush.msra.mxu0 %v6036
    %v6038 = vand.u32 %v96, 4294901760
    %v6039 = vsub.f32 %v96, %v6038
    %6040 = vmatpush.msra.mxu0 %v6039
    %v6041 = vand.u32 %v93, 4294901760
    %v6042 = vsub.f32 %v93, %v6041
    %6043 = vmatpush.msra.mxu0 %v6042
    %v6044 = vand.u32 %v90, 4294901760
    %v6045 = vsub.f32 %v90, %v6044
    %6046 = vmatpush.msra.mxu0 %v6045
    %v6047 = vand.u32 %v87, 4294901760
    %v6048 = vsub.f32 %v87, %v6047
    %6049 = vmatpush.msra.mxu0 %v6048
    %v6050 = vand.u32 %v84, 4294901760
    %v6051 = vsub.f32 %v84, %v6050
    %6052 = vmatpush.msra.mxu0 %v6051
    %v6053 = vand.u32 %v5515, 4294901760
    %v6054 = vsub.f32 %v5515, %v6053
    %6055 = vmatmul.f32.gmra.mxu0 %v6054
    %v6056 = vpop.f32.mrf.mxu0
    %v6057 = vadd.f32 %v6003, %v6056
    %6058 = vdwg.mxu0
    %v6059 = vand.u32 %v129, 4294901760
    %6060 = vmatpush.msra.mxu0 %v6059
    %v6061 = vand.u32 %v126, 4294901760
    %6062 = vmatpush.msra.mxu0 %v6061
    %v6063 = vand.u32 %v123, 4294901760
    %6064 = vmatpush.msra.mxu0 %v6063
    %v6065 = vand.u32 %v120, 4294901760
    %6066 = vmatpush.msra.mxu0 %v6065
    %v6067 = vand.u32 %v117, 4294901760
    %6068 = vmatpush.msra.mxu0 %v6067
    %v6069 = vand.u32 %v114, 4294901760
    %6070 = vmatpush.msra.mxu0 %v6069
    %v6071 = vand.u32 %v111, 4294901760
    %6072 = vmatpush.msra.mxu0 %v6071
    %v6073 = vand.u32 %v108, 4294901760
    %6074 = vmatpush.msra.mxu0 %v6073
    %v6075 = vand.u32 %v105, 4294901760
    %6076 = vmatpush.msra.mxu0 %v6075
    %v6077 = vand.u32 %v102, 4294901760
    %6078 = vmatpush.msra.mxu0 %v6077
    %v6079 = vand.u32 %v99, 4294901760
    %6080 = vmatpush.msra.mxu0 %v6079
    %v6081 = vand.u32 %v96, 4294901760
    %6082 = vmatpush.msra.mxu0 %v6081
    %v6083 = vand.u32 %v93, 4294901760
    %6084 = vmatpush.msra.mxu0 %v6083
    %v6085 = vand.u32 %v90, 4294901760
    %6086 = vmatpush.msra.mxu0 %v6085
    %v6087 = vand.u32 %v87, 4294901760
    %6088 = vmatpush.msra.mxu0 %v6087
    %v6089 = vand.u32 %v84, 4294901760
    %6090 = vmatpush.msra.mxu0 %v6089
    %v6091 = vand.u32 %v5515, 4294901760
    %v6092 = vsub.f32 %v5515, %v6091
    %v6093 = vand.u32 %v6092, 4294901760
    %6094 = vmatmul.f32.gmra.mxu0 %v6093
    %v6095 = vpop.f32.mrf.mxu0
    %v6096 = vadd.f32 %v6057, %v6095
    %6097 = vdwg.mxu0
    %v6098 = vand.u32 %v129, 4294901760
    %v6099 = vsub.f32 %v129, %v6098
    %v6100 = vand.u32 %v6099, 4294901760
    %6101 = vmatpush.msra.mxu0 %v6100
    %v6102 = vand.u32 %v126, 4294901760
    %v6103 = vsub.f32 %v126, %v6102
    %v6104 = vand.u32 %v6103, 4294901760
    %6105 = vmatpush.msra.mxu0 %v6104
    %v6106 = vand.u32 %v123, 4294901760
    %v6107 = vsub.f32 %v123, %v6106
    %v6108 = vand.u32 %v6107, 4294901760
    %6109 = vmatpush.msra.mxu0 %v6108
    %v6110 = vand.u32 %v120, 4294901760
    %v6111 = vsub.f32 %v120, %v6110
    %v6112 = vand.u32 %v6111, 4294901760
    %6113 = vmatpush.msra.mxu0 %v6112
    %v6114 = vand.u32 %v117, 4294901760
    %v6115 = vsub.f32 %v117, %v6114
    %v6116 = vand.u32 %v6115, 4294901760
    %6117 = vmatpush.msra.mxu0 %v6116
    %v6118 = vand.u32 %v114, 4294901760
    %v6119 = vsub.f32 %v114, %v6118
    %v6120 = vand.u32 %v6119, 4294901760
    %6121 = vmatpush.msra.mxu0 %v6120
    %v6122 = vand.u32 %v111, 4294901760
    %v6123 = vsub.f32 %v111, %v6122
    %v6124 = vand.u32 %v6123, 4294901760
    %6125 = vmatpush.msra.mxu0 %v6124
    %v6126 = vand.u32 %v108, 4294901760
    %v6127 = vsub.f32 %v108, %v6126
    %v6128 = vand.u32 %v6127, 4294901760
    %6129 = vmatpush.msra.mxu0 %v6128
    %v6130 = vand.u32 %v105, 4294901760
    %v6131 = vsub.f32 %v105, %v6130
    %v6132 = vand.u32 %v6131, 4294901760
    %6133 = vmatpush.msra.mxu0 %v6132
    %v6134 = vand.u32 %v102, 4294901760
    %v6135 = vsub.f32 %v102, %v6134
    %v6136 = vand.u32 %v6135, 4294901760
    %6137 = vmatpush.msra.mxu0 %v6136
    %v6138 = vand.u32 %v99, 4294901760
    %v6139 = vsub.f32 %v99, %v6138
    %v6140 = vand.u32 %v6139, 4294901760
    %6141 = vmatpush.msra.mxu0 %v6140
    %v6142 = vand.u32 %v96, 4294901760
    %v6143 = vsub.f32 %v96, %v6142
    %v6144 = vand.u32 %v6143, 4294901760
    %6145 = vmatpush.msra.mxu0 %v6144
    %v6146 = vand.u32 %v93, 4294901760
    %v6147 = vsub.f32 %v93, %v6146
    %v6148 = vand.u32 %v6147, 4294901760
    %6149 = vmatpush.msra.mxu0 %v6148
    %v6150 = vand.u32 %v90, 4294901760
    %v6151 = vsub.f32 %v90, %v6150
    %v6152 = vand.u32 %v6151, 4294901760
    %6153 = vmatpush.msra.mxu0 %v6152
    %v6154 = vand.u32 %v87, 4294901760
    %v6155 = vsub.f32 %v87, %v6154
    %v6156 = vand.u32 %v6155, 4294901760
    %6157 = vmatpush.msra.mxu0 %v6156
    %v6158 = vand.u32 %v84, 4294901760
    %v6159 = vsub.f32 %v84, %v6158
    %v6160 = vand.u32 %v6159, 4294901760
    %6161 = vmatpush.msra.mxu0 %v6160
    %v6162 = vand.u32 %v5515, 4294901760
    %6163 = vmatmul.f32.gmra.mxu0 %v6162
    %v6164 = vpop.f32.mrf.mxu0
    %v6165 = vadd.f32 %v6096, %v6164
    %6166 = vdwg.mxu0
    %v6167 = vand.u32 %v129, 4294901760
    %6168 = vmatpush.msra.mxu0 %v6167
    %v6169 = vand.u32 %v126, 4294901760
    %6170 = vmatpush.msra.mxu0 %v6169
    %v6171 = vand.u32 %v123, 4294901760
    %6172 = vmatpush.msra.mxu0 %v6171
    %v6173 = vand.u32 %v120, 4294901760
    %6174 = vmatpush.msra.mxu0 %v6173
    %v6175 = vand.u32 %v117, 4294901760
    %6176 = vmatpush.msra.mxu0 %v6175
    %v6177 = vand.u32 %v114, 4294901760
    %6178 = vmatpush.msra.mxu0 %v6177
    %v6179 = vand.u32 %v111, 4294901760
    %6180 = vmatpush.msra.mxu0 %v6179
    %v6181 = vand.u32 %v108, 4294901760
    %6182 = vmatpush.msra.mxu0 %v6181
    %v6183 = vand.u32 %v105, 4294901760
    %6184 = vmatpush.msra.mxu0 %v6183
    %v6185 = vand.u32 %v102, 4294901760
    %6186 = vmatpush.msra.mxu0 %v6185
    %v6187 = vand.u32 %v99, 4294901760
    %6188 = vmatpush.msra.mxu0 %v6187
    %v6189 = vand.u32 %v96, 4294901760
    %6190 = vmatpush.msra.mxu0 %v6189
    %v6191 = vand.u32 %v93, 4294901760
    %6192 = vmatpush.msra.mxu0 %v6191
    %v6193 = vand.u32 %v90, 4294901760
    %6194 = vmatpush.msra.mxu0 %v6193
    %v6195 = vand.u32 %v87, 4294901760
    %6196 = vmatpush.msra.mxu0 %v6195
    %v6197 = vand.u32 %v84, 4294901760
    %6198 = vmatpush.msra.mxu0 %v6197
    %v6199 = vand.u32 %v5515, 4294901760
    %6200 = vmatmul.f32.gmra.mxu0 %v6199
    %v6201 = vpop.f32.mrf.mxu0
    %v6202 = vadd.f32 %v6165, %v6201
    %6203 = vdwg.mxu0
    %v6204 = vand.u32 %v130, 4294901760
    %6205 = vmatpush.msra.mxu0 %v6204
    %v6206 = vand.u32 %v127, 4294901760
    %6207 = vmatpush.msra.mxu0 %v6206
    %v6208 = vand.u32 %v124, 4294901760
    %6209 = vmatpush.msra.mxu0 %v6208
    %v6210 = vand.u32 %v121, 4294901760
    %6211 = vmatpush.msra.mxu0 %v6210
    %v6212 = vand.u32 %v118, 4294901760
    %6213 = vmatpush.msra.mxu0 %v6212
    %v6214 = vand.u32 %v115, 4294901760
    %6215 = vmatpush.msra.mxu0 %v6214
    %v6216 = vand.u32 %v112, 4294901760
    %6217 = vmatpush.msra.mxu0 %v6216
    %v6218 = vand.u32 %v109, 4294901760
    %6219 = vmatpush.msra.mxu0 %v6218
    %v6220 = vand.u32 %v106, 4294901760
    %6221 = vmatpush.msra.mxu0 %v6220
    %v6222 = vand.u32 %v103, 4294901760
    %6223 = vmatpush.msra.mxu0 %v6222
    %v6224 = vand.u32 %v100, 4294901760
    %6225 = vmatpush.msra.mxu0 %v6224
    %v6226 = vand.u32 %v97, 4294901760
    %6227 = vmatpush.msra.mxu0 %v6226
    %v6228 = vand.u32 %v94, 4294901760
    %6229 = vmatpush.msra.mxu0 %v6228
    %v6230 = vand.u32 %v91, 4294901760
    %6231 = vmatpush.msra.mxu0 %v6230
    %v6232 = vand.u32 %v88, 4294901760
    %6233 = vmatpush.msra.mxu0 %v6232
    %v6234 = vand.u32 %v85, 4294901760
    %6235 = vmatpush.msra.mxu0 %v6234
    %v6236 = vand.u32 %v5515, 4294901760
    %v6237 = vsub.f32 %v5515, %v6236
    %v6238 = vand.u32 %v6237, 4294901760
    %v6239 = vsub.f32 %v6237, %v6238
    %v6240 = vand.u32 %v6239, 4294901760
    %6241 = vmatmul.f32.gmra.mxu0 %v6240
    %v6242 = vpop.f32.mrf.mxu0
    %v6243 = vadd.f32 %v139, %v6242
    %6244 = vdwg.mxu0
    %v6245 = vand.u32 %v130, 4294901760
    %v6246 = vsub.f32 %v130, %v6245
    %v6247 = vand.u32 %v6246, 4294901760
    %v6248 = vsub.f32 %v6246, %v6247
    %v6249 = vand.u32 %v6248, 4294901760
    %6250 = vmatpush.msra.mxu0 %v6249
    %v6251 = vand.u32 %v127, 4294901760
    %v6252 = vsub.f32 %v127, %v6251
    %v6253 = vand.u32 %v6252, 4294901760
    %v6254 = vsub.f32 %v6252, %v6253
    %v6255 = vand.u32 %v6254, 4294901760
    %6256 = vmatpush.msra.mxu0 %v6255
    %v6257 = vand.u32 %v124, 4294901760
    %v6258 = vsub.f32 %v124, %v6257
    %v6259 = vand.u32 %v6258, 4294901760
    %v6260 = vsub.f32 %v6258, %v6259
    %v6261 = vand.u32 %v6260, 4294901760
    %6262 = vmatpush.msra.mxu0 %v6261
    %v6263 = vand.u32 %v121, 4294901760
    %v6264 = vsub.f32 %v121, %v6263
    %v6265 = vand.u32 %v6264, 4294901760
    %v6266 = vsub.f32 %v6264, %v6265
    %v6267 = vand.u32 %v6266, 4294901760
    %6268 = vmatpush.msra.mxu0 %v6267
    %v6269 = vand.u32 %v118, 4294901760
    %v6270 = vsub.f32 %v118, %v6269
    %v6271 = vand.u32 %v6270, 4294901760
    %v6272 = vsub.f32 %v6270, %v6271
    %v6273 = vand.u32 %v6272, 4294901760
    %6274 = vmatpush.msra.mxu0 %v6273
    %v6275 = vand.u32 %v115, 4294901760
    %v6276 = vsub.f32 %v115, %v6275
    %v6277 = vand.u32 %v6276, 4294901760
    %v6278 = vsub.f32 %v6276, %v6277
    %v6279 = vand.u32 %v6278, 4294901760
    %6280 = vmatpush.msra.mxu0 %v6279
    %v6281 = vand.u32 %v112, 4294901760
    %v6282 = vsub.f32 %v112, %v6281
    %v6283 = vand.u32 %v6282, 4294901760
    %v6284 = vsub.f32 %v6282, %v6283
    %v6285 = vand.u32 %v6284, 4294901760
    %6286 = vmatpush.msra.mxu0 %v6285
    %v6287 = vand.u32 %v109, 4294901760
    %v6288 = vsub.f32 %v109, %v6287
    %v6289 = vand.u32 %v6288, 4294901760
    %v6290 = vsub.f32 %v6288, %v6289
    %v6291 = vand.u32 %v6290, 4294901760
    %6292 = vmatpush.msra.mxu0 %v6291
    %v6293 = vand.u32 %v106, 4294901760
    %v6294 = vsub.f32 %v106, %v6293
    %v6295 = vand.u32 %v6294, 4294901760
    %v6296 = vsub.f32 %v6294, %v6295
    %v6297 = vand.u32 %v6296, 4294901760
    %6298 = vmatpush.msra.mxu0 %v6297
    %v6299 = vand.u32 %v103, 4294901760
    %v6300 = vsub.f32 %v103, %v6299
    %v6301 = vand.u32 %v6300, 4294901760
    %v6302 = vsub.f32 %v6300, %v6301
    %v6303 = vand.u32 %v6302, 4294901760
    %6304 = vmatpush.msra.mxu0 %v6303
    %v6305 = vand.u32 %v100, 4294901760
    %v6306 = vsub.f32 %v100, %v6305
    %v6307 = vand.u32 %v6306, 4294901760
    %v6308 = vsub.f32 %v6306, %v6307
    %v6309 = vand.u32 %v6308, 4294901760
    %6310 = vmatpush.msra.mxu0 %v6309
    %v6311 = vand.u32 %v97, 4294901760
    %v6312 = vsub.f32 %v97, %v6311
    %v6313 = vand.u32 %v6312, 4294901760
    %v6314 = vsub.f32 %v6312, %v6313
    %v6315 = vand.u32 %v6314, 4294901760
    %6316 = vmatpush.msra.mxu0 %v6315
    %v6317 = vand.u32 %v94, 4294901760
    %v6318 = vsub.f32 %v94, %v6317
    %v6319 = vand.u32 %v6318, 4294901760
    %v6320 = vsub.f32 %v6318, %v6319
    %v6321 = vand.u32 %v6320, 4294901760
    %6322 = vmatpush.msra.mxu0 %v6321
    %v6323 = vand.u32 %v91, 4294901760
    %v6324 = vsub.f32 %v91, %v6323
    %v6325 = vand.u32 %v6324, 4294901760
    %v6326 = vsub.f32 %v6324, %v6325
    %v6327 = vand.u32 %v6326, 4294901760
    %6328 = vmatpush.msra.mxu0 %v6327
    %v6329 = vand.u32 %v88, 4294901760
    %v6330 = vsub.f32 %v88, %v6329
    %v6331 = vand.u32 %v6330, 4294901760
    %v6332 = vsub.f32 %v6330, %v6331
    %v6333 = vand.u32 %v6332, 4294901760
    %6334 = vmatpush.msra.mxu0 %v6333
    %v6335 = vand.u32 %v85, 4294901760
    %v6336 = vsub.f32 %v85, %v6335
    %v6337 = vand.u32 %v6336, 4294901760
    %v6338 = vsub.f32 %v6336, %v6337
    %v6339 = vand.u32 %v6338, 4294901760
    %6340 = vmatpush.msra.mxu0 %v6339
    %v6341 = vand.u32 %v5515, 4294901760
    %6342 = vmatmul.f32.gmra.mxu0 %v6341
    %v6343 = vpop.f32.mrf.mxu0
    %v6344 = vadd.f32 %v6243, %v6343
    %6345 = vdwg.mxu0
    %v6346 = vand.u32 %v130, 4294901760
    %v6347 = vsub.f32 %v130, %v6346
    %6348 = vmatpush.msra.mxu0 %v6347
    %v6349 = vand.u32 %v127, 4294901760
    %v6350 = vsub.f32 %v127, %v6349
    %6351 = vmatpush.msra.mxu0 %v6350
    %v6352 = vand.u32 %v124, 4294901760
    %v6353 = vsub.f32 %v124, %v6352
    %6354 = vmatpush.msra.mxu0 %v6353
    %v6355 = vand.u32 %v121, 4294901760
    %v6356 = vsub.f32 %v121, %v6355
    %6357 = vmatpush.msra.mxu0 %v6356
    %v6358 = vand.u32 %v118, 4294901760
    %v6359 = vsub.f32 %v118, %v6358
    %6360 = vmatpush.msra.mxu0 %v6359
    %v6361 = vand.u32 %v115, 4294901760
    %v6362 = vsub.f32 %v115, %v6361
    %6363 = vmatpush.msra.mxu0 %v6362
    %v6364 = vand.u32 %v112, 4294901760
    %v6365 = vsub.f32 %v112, %v6364
    %6366 = vmatpush.msra.mxu0 %v6365
    %v6367 = vand.u32 %v109, 4294901760
    %v6368 = vsub.f32 %v109, %v6367
    %6369 = vmatpush.msra.mxu0 %v6368
    %v6370 = vand.u32 %v106, 4294901760
    %v6371 = vsub.f32 %v106, %v6370
    %6372 = vmatpush.msra.mxu0 %v6371
    %v6373 = vand.u32 %v103, 4294901760
    %v6374 = vsub.f32 %v103, %v6373
    %6375 = vmatpush.msra.mxu0 %v6374
    %v6376 = vand.u32 %v100, 4294901760
    %v6377 = vsub.f32 %v100, %v6376
    %6378 = vmatpush.msra.mxu0 %v6377
    %v6379 = vand.u32 %v97, 4294901760
    %v6380 = vsub.f32 %v97, %v6379
    %6381 = vmatpush.msra.mxu0 %v6380
    %v6382 = vand.u32 %v94, 4294901760
    %v6383 = vsub.f32 %v94, %v6382
    %6384 = vmatpush.msra.mxu0 %v6383
    %v6385 = vand.u32 %v91, 4294901760
    %v6386 = vsub.f32 %v91, %v6385
    %6387 = vmatpush.msra.mxu0 %v6386
    %v6388 = vand.u32 %v88, 4294901760
    %v6389 = vsub.f32 %v88, %v6388
    %6390 = vmatpush.msra.mxu0 %v6389
    %v6391 = vand.u32 %v85, 4294901760
    %v6392 = vsub.f32 %v85, %v6391
    %6393 = vmatpush.msra.mxu0 %v6392
    %v6394 = vand.u32 %v5515, 4294901760
    %v6395 = vsub.f32 %v5515, %v6394
    %6396 = vmatmul.f32.gmra.mxu0 %v6395
    %v6397 = vpop.f32.mrf.mxu0
    %v6398 = vadd.f32 %v6344, %v6397
    %6399 = vdwg.mxu0
    %v6400 = vand.u32 %v130, 4294901760
    %6401 = vmatpush.msra.mxu0 %v6400
    %v6402 = vand.u32 %v127, 4294901760
    %6403 = vmatpush.msra.mxu0 %v6402
    %v6404 = vand.u32 %v124, 4294901760
    %6405 = vmatpush.msra.mxu0 %v6404
    %v6406 = vand.u32 %v121, 4294901760
    %6407 = vmatpush.msra.mxu0 %v6406
    %v6408 = vand.u32 %v118, 4294901760
    %6409 = vmatpush.msra.mxu0 %v6408
    %v6410 = vand.u32 %v115, 4294901760
    %6411 = vmatpush.msra.mxu0 %v6410
    %v6412 = vand.u32 %v112, 4294901760
    %6413 = vmatpush.msra.mxu0 %v6412
    %v6414 = vand.u32 %v109, 4294901760
    %6415 = vmatpush.msra.mxu0 %v6414
    %v6416 = vand.u32 %v106, 4294901760
    %6417 = vmatpush.msra.mxu0 %v6416
    %v6418 = vand.u32 %v103, 4294901760
    %6419 = vmatpush.msra.mxu0 %v6418
    %v6420 = vand.u32 %v100, 4294901760
    %6421 = vmatpush.msra.mxu0 %v6420
    %v6422 = vand.u32 %v97, 4294901760
    %6423 = vmatpush.msra.mxu0 %v6422
    %v6424 = vand.u32 %v94, 4294901760
    %6425 = vmatpush.msra.mxu0 %v6424
    %v6426 = vand.u32 %v91, 4294901760
    %6427 = vmatpush.msra.mxu0 %v6426
    %v6428 = vand.u32 %v88, 4294901760
    %6429 = vmatpush.msra.mxu0 %v6428
    %v6430 = vand.u32 %v85, 4294901760
    %6431 = vmatpush.msra.mxu0 %v6430
    %v6432 = vand.u32 %v5515, 4294901760
    %v6433 = vsub.f32 %v5515, %v6432
    %v6434 = vand.u32 %v6433, 4294901760
    %6435 = vmatmul.f32.gmra.mxu0 %v6434
    %v6436 = vpop.f32.mrf.mxu0
    %v6437 = vadd.f32 %v6398, %v6436
    %6438 = vdwg.mxu0
    %v6439 = vand.u32 %v130, 4294901760
    %v6440 = vsub.f32 %v130, %v6439
    %v6441 = vand.u32 %v6440, 4294901760
    %6442 = vmatpush.msra.mxu0 %v6441
    %v6443 = vand.u32 %v127, 4294901760
    %v6444 = vsub.f32 %v127, %v6443
    %v6445 = vand.u32 %v6444, 4294901760
    %6446 = vmatpush.msra.mxu0 %v6445
    %v6447 = vand.u32 %v124, 4294901760
    %v6448 = vsub.f32 %v124, %v6447
    %v6449 = vand.u32 %v6448, 4294901760
    %6450 = vmatpush.msra.mxu0 %v6449
    %v6451 = vand.u32 %v121, 4294901760
    %v6452 = vsub.f32 %v121, %v6451
    %v6453 = vand.u32 %v6452, 4294901760
    %6454 = vmatpush.msra.mxu0 %v6453
    %v6455 = vand.u32 %v118, 4294901760
    %v6456 = vsub.f32 %v118, %v6455
    %v6457 = vand.u32 %v6456, 4294901760
    %6458 = vmatpush.msra.mxu0 %v6457
    %v6459 = vand.u32 %v115, 4294901760
    %v6460 = vsub.f32 %v115, %v6459
    %v6461 = vand.u32 %v6460, 4294901760
    %6462 = vmatpush.msra.mxu0 %v6461
    %v6463 = vand.u32 %v112, 4294901760
    %v6464 = vsub.f32 %v112, %v6463
    %v6465 = vand.u32 %v6464, 4294901760
    %6466 = vmatpush.msra.mxu0 %v6465
    %v6467 = vand.u32 %v109, 4294901760
    %v6468 = vsub.f32 %v109, %v6467
    %v6469 = vand.u32 %v6468, 4294901760
    %6470 = vmatpush.msra.mxu0 %v6469
    %v6471 = vand.u32 %v106, 4294901760
    %v6472 = vsub.f32 %v106, %v6471
    %v6473 = vand.u32 %v6472, 4294901760
    %6474 = vmatpush.msra.mxu0 %v6473
    %v6475 = vand.u32 %v103, 4294901760
    %v6476 = vsub.f32 %v103, %v6475
    %v6477 = vand.u32 %v6476, 4294901760
    %6478 = vmatpush.msra.mxu0 %v6477
    %v6479 = vand.u32 %v100, 4294901760
    %v6480 = vsub.f32 %v100, %v6479
    %v6481 = vand.u32 %v6480, 4294901760
    %6482 = vmatpush.msra.mxu0 %v6481
    %v6483 = vand.u32 %v97, 4294901760
    %v6484 = vsub.f32 %v97, %v6483
    %v6485 = vand.u32 %v6484, 4294901760
    %6486 = vmatpush.msra.mxu0 %v6485
    %v6487 = vand.u32 %v94, 4294901760
    %v6488 = vsub.f32 %v94, %v6487
    %v6489 = vand.u32 %v6488, 4294901760
    %6490 = vmatpush.msra.mxu0 %v6489
    %v6491 = vand.u32 %v91, 4294901760
    %v6492 = vsub.f32 %v91, %v6491
    %v6493 = vand.u32 %v6492, 4294901760
    %6494 = vmatpush.msra.mxu0 %v6493
    %v6495 = vand.u32 %v88, 4294901760
    %v6496 = vsub.f32 %v88, %v6495
    %v6497 = vand.u32 %v6496, 4294901760
    %6498 = vmatpush.msra.mxu0 %v6497
    %v6499 = vand.u32 %v85, 4294901760
    %v6500 = vsub.f32 %v85, %v6499
    %v6501 = vand.u32 %v6500, 4294901760
    %6502 = vmatpush.msra.mxu0 %v6501
    %v6503 = vand.u32 %v5515, 4294901760
    %6504 = vmatmul.f32.gmra.mxu0 %v6503
    %v6505 = vpop.f32.mrf.mxu0
    %v6506 = vadd.f32 %v6437, %v6505
    %6507 = vdwg.mxu0
    %v6508 = vand.u32 %v130, 4294901760
    %6509 = vmatpush.msra.mxu0 %v6508
    %v6510 = vand.u32 %v127, 4294901760
    %6511 = vmatpush.msra.mxu0 %v6510
    %v6512 = vand.u32 %v124, 4294901760
    %6513 = vmatpush.msra.mxu0 %v6512
    %v6514 = vand.u32 %v121, 4294901760
    %6515 = vmatpush.msra.mxu0 %v6514
    %v6516 = vand.u32 %v118, 4294901760
    %6517 = vmatpush.msra.mxu0 %v6516
    %v6518 = vand.u32 %v115, 4294901760
    %6519 = vmatpush.msra.mxu0 %v6518
    %v6520 = vand.u32 %v112, 4294901760
    %6521 = vmatpush.msra.mxu0 %v6520
    %v6522 = vand.u32 %v109, 4294901760
    %6523 = vmatpush.msra.mxu0 %v6522
    %v6524 = vand.u32 %v106, 4294901760
    %6525 = vmatpush.msra.mxu0 %v6524
    %v6526 = vand.u32 %v103, 4294901760
    %6527 = vmatpush.msra.mxu0 %v6526
    %v6528 = vand.u32 %v100, 4294901760
    %6529 = vmatpush.msra.mxu0 %v6528
    %v6530 = vand.u32 %v97, 4294901760
    %6531 = vmatpush.msra.mxu0 %v6530
    %v6532 = vand.u32 %v94, 4294901760
    %6533 = vmatpush.msra.mxu0 %v6532
    %v6534 = vand.u32 %v91, 4294901760
    %6535 = vmatpush.msra.mxu0 %v6534
    %v6536 = vand.u32 %v88, 4294901760
    %6537 = vmatpush.msra.mxu0 %v6536
    %v6538 = vand.u32 %v85, 4294901760
    %6539 = vmatpush.msra.mxu0 %v6538
    %v6540 = vand.u32 %v5515, 4294901760
    %6541 = vmatmul.f32.gmra.mxu0 %v6540
    %v6542 = vpop.f32.mrf.mxu0
    %v6543 = vadd.f32 %v6506, %v6542
    %6544 = vdwg.mxu0
    %v6545 = vadd.f32 %v5519, %v5861
    %v6546 = vadd.f32 %v5520, %v6202
    %v6547 = vxor.u32 %v6545, 2147483648
    %v6548 = vxor.u32 %v6546, 2147483648
    %v6549 = vmul.f32 %v6547, 1.442695
    %v6550 = vpow.pop %v6549
    %v6551 = vmul.f32 %v6548, 1.442695
    %v6552 = vpow.pop %v6551
    %v6553 = vadd.f32 %v6550, 1.0
    %v6554 = vadd.f32 %v6552, 1.0
    %v6555 = vrcp.pop %v6553
    %v6556 = vmul.f32 %v6553, %v6555
    %v6557 = vsub.f32 1.0, %v6556
    %v6558 = vmul.f32 %v6555, %v6557
    %v6559 = vadd.f32 %v6555, %v6558
    %vm6560 = vweird.f32 %v6553
    %vm6561 = vweird.f32 %v6555
    %vm6562 = vmor %vm6560, %vm6561
    %v6563 = vsel %vm6562, %v6555, %v6559
    %v6564 = vand.u32 2147483647, %v6553
    %vm6565 = vcmp.eq.f32.partialorder %v6564, 8.507059e+37
    %v6566 = vand.u32 %v6553, 2147483648
    %v6567 = vor.u32 1.1754944e-38, %v6566
    %v6568 = vsel %vm6565, %v6567, %v6563
    %v6569 = vmul.f32 1.0, %v6568
    %v6570 = vrcp.pop %v6554
    %v6571 = vmul.f32 %v6554, %v6570
    %v6572 = vsub.f32 1.0, %v6571
    %v6573 = vmul.f32 %v6570, %v6572
    %v6574 = vadd.f32 %v6570, %v6573
    %vm6575 = vweird.f32 %v6554
    %vm6576 = vweird.f32 %v6570
    %vm6577 = vmor %vm6575, %vm6576
    %v6578 = vsel %vm6577, %v6570, %v6574
    %v6579 = vand.u32 2147483647, %v6554
    %vm6580 = vcmp.eq.f32.partialorder %v6579, 8.507059e+37
    %v6581 = vand.u32 %v6554, 2147483648
    %v6582 = vor.u32 1.1754944e-38, %v6581
    %v6583 = vsel %vm6580, %v6582, %v6578
    %v6584 = vmul.f32 1.0, %v6583
    %v6585 = vmul.f32 %v6569, %v6543
    %v6586 = vadd.f32 %v5521, %v6585
    %v6587 = vtanh.pop %v6586
    %v6588 = vsub.f32 1.0, %v6584
    %v6589 = vmul.f32 %v6588, %v6587
    %v6590 = vmul.f32 %v6584, %v5515
    %v6591 = vadd.f32 %v6589, %v6590
    %s6592 = scalar_lea.vmem [#allocation11], 40
    %6593 = vst [vmem:[%s6592] sm:$0xff] %v6591
    %s6594 = scalar_lea.vmem [#allocation3], 144
    %v6595 = vld [vmem:[%s6594] sm:$0xff]
    %v6596 = vld [vmem:[%s6594 + $0x8] sm:$0xff]
    %v6597 = vld [vmem:[%s6594 + $0x10] sm:$0xff]
    %v6598 = vand.u32 %v128, 4294901760
    %6599 = vmatpush.msra.mxu0 %v6598
    %v6600 = vand.u32 %v125, 4294901760
    %6601 = vmatpush.msra.mxu0 %v6600
    %v6602 = vand.u32 %v122, 4294901760
    %6603 = vmatpush.msra.mxu0 %v6602
    %v6604 = vand.u32 %v119, 4294901760
    %6605 = vmatpush.msra.mxu0 %v6604
    %v6606 = vand.u32 %v116, 4294901760
    %6607 = vmatpush.msra.mxu0 %v6606
    %v6608 = vand.u32 %v113, 4294901760
    %6609 = vmatpush.msra.mxu0 %v6608
    %v6610 = vand.u32 %v110, 4294901760
    %6611 = vmatpush.msra.mxu0 %v6610
    %v6612 = vand.u32 %v107, 4294901760
    %6613 = vmatpush.msra.mxu0 %v6612
    %v6614 = vand.u32 %v104, 4294901760
    %6615 = vmatpush.msra.mxu0 %v6614
    %v6616 = vand.u32 %v101, 4294901760
    %6617 = vmatpush.msra.mxu0 %v6616
    %v6618 = vand.u32 %v98, 4294901760
    %6619 = vmatpush.msra.mxu0 %v6618
    %v6620 = vand.u32 %v95, 4294901760
    %6621 = vmatpush.msra.mxu0 %v6620
    %v6622 = vand.u32 %v92, 4294901760
    %6623 = vmatpush.msra.mxu0 %v6622
    %v6624 = vand.u32 %v89, 4294901760
    %6625 = vmatpush.msra.mxu0 %v6624
    %v6626 = vand.u32 %v86, 4294901760
    %6627 = vmatpush.msra.mxu0 %v6626
    %v6628 = vand.u32 %v83, 4294901760
    %6629 = vmatpush.msra.mxu0 %v6628
    %v6630 = vand.u32 %v6591, 4294901760
    %v6631 = vsub.f32 %v6591, %v6630
    %v6632 = vand.u32 %v6631, 4294901760
    %v6633 = vsub.f32 %v6631, %v6632
    %v6634 = vand.u32 %v6633, 4294901760
    %6635 = vmatmul.f32.gmra.mxu0 %v6634
    %v6636 = vpop.f32.mrf.mxu0
    %v6637 = vadd.f32 %v137, %v6636
    %6638 = vdwg.mxu0
    %v6639 = vand.u32 %v128, 4294901760
    %v6640 = vsub.f32 %v128, %v6639
    %v6641 = vand.u32 %v6640, 4294901760
    %v6642 = vsub.f32 %v6640, %v6641
    %v6643 = vand.u32 %v6642, 4294901760
    %6644 = vmatpush.msra.mxu0 %v6643
    %v6645 = vand.u32 %v125, 4294901760
    %v6646 = vsub.f32 %v125, %v6645
    %v6647 = vand.u32 %v6646, 4294901760
    %v6648 = vsub.f32 %v6646, %v6647
    %v6649 = vand.u32 %v6648, 4294901760
    %6650 = vmatpush.msra.mxu0 %v6649
    %v6651 = vand.u32 %v122, 4294901760
    %v6652 = vsub.f32 %v122, %v6651
    %v6653 = vand.u32 %v6652, 4294901760
    %v6654 = vsub.f32 %v6652, %v6653
    %v6655 = vand.u32 %v6654, 4294901760
    %6656 = vmatpush.msra.mxu0 %v6655
    %v6657 = vand.u32 %v119, 4294901760
    %v6658 = vsub.f32 %v119, %v6657
    %v6659 = vand.u32 %v6658, 4294901760
    %v6660 = vsub.f32 %v6658, %v6659
    %v6661 = vand.u32 %v6660, 4294901760
    %6662 = vmatpush.msra.mxu0 %v6661
    %v6663 = vand.u32 %v116, 4294901760
    %v6664 = vsub.f32 %v116, %v6663
    %v6665 = vand.u32 %v6664, 4294901760
    %v6666 = vsub.f32 %v6664, %v6665
    %v6667 = vand.u32 %v6666, 4294901760
    %6668 = vmatpush.msra.mxu0 %v6667
    %v6669 = vand.u32 %v113, 4294901760
    %v6670 = vsub.f32 %v113, %v6669
    %v6671 = vand.u32 %v6670, 4294901760
    %v6672 = vsub.f32 %v6670, %v6671
    %v6673 = vand.u32 %v6672, 4294901760
    %6674 = vmatpush.msra.mxu0 %v6673
    %v6675 = vand.u32 %v110, 4294901760
    %v6676 = vsub.f32 %v110, %v6675
    %v6677 = vand.u32 %v6676, 4294901760
    %v6678 = vsub.f32 %v6676, %v6677
    %v6679 = vand.u32 %v6678, 4294901760
    %6680 = vmatpush.msra.mxu0 %v6679
    %v6681 = vand.u32 %v107, 4294901760
    %v6682 = vsub.f32 %v107, %v6681
    %v6683 = vand.u32 %v6682, 4294901760
    %v6684 = vsub.f32 %v6682, %v6683
    %v6685 = vand.u32 %v6684, 4294901760
    %6686 = vmatpush.msra.mxu0 %v6685
    %v6687 = vand.u32 %v104, 4294901760
    %v6688 = vsub.f32 %v104, %v6687
    %v6689 = vand.u32 %v6688, 4294901760
    %v6690 = vsub.f32 %v6688, %v6689
    %v6691 = vand.u32 %v6690, 4294901760
    %6692 = vmatpush.msra.mxu0 %v6691
    %v6693 = vand.u32 %v101, 4294901760
    %v6694 = vsub.f32 %v101, %v6693
    %v6695 = vand.u32 %v6694, 4294901760
    %v6696 = vsub.f32 %v6694, %v6695
    %v6697 = vand.u32 %v6696, 4294901760
    %6698 = vmatpush.msra.mxu0 %v6697
    %v6699 = vand.u32 %v98, 4294901760
    %v6700 = vsub.f32 %v98, %v6699
    %v6701 = vand.u32 %v6700, 4294901760
    %v6702 = vsub.f32 %v6700, %v6701
    %v6703 = vand.u32 %v6702, 4294901760
    %6704 = vmatpush.msra.mxu0 %v6703
    %v6705 = vand.u32 %v95, 4294901760
    %v6706 = vsub.f32 %v95, %v6705
    %v6707 = vand.u32 %v6706, 4294901760
    %v6708 = vsub.f32 %v6706, %v6707
    %v6709 = vand.u32 %v6708, 4294901760
    %6710 = vmatpush.msra.mxu0 %v6709
    %v6711 = vand.u32 %v92, 4294901760
    %v6712 = vsub.f32 %v92, %v6711
    %v6713 = vand.u32 %v6712, 4294901760
    %v6714 = vsub.f32 %v6712, %v6713
    %v6715 = vand.u32 %v6714, 4294901760
    %6716 = vmatpush.msra.mxu0 %v6715
    %v6717 = vand.u32 %v89, 4294901760
    %v6718 = vsub.f32 %v89, %v6717
    %v6719 = vand.u32 %v6718, 4294901760
    %v6720 = vsub.f32 %v6718, %v6719
    %v6721 = vand.u32 %v6720, 4294901760
    %6722 = vmatpush.msra.mxu0 %v6721
    %v6723 = vand.u32 %v86, 4294901760
    %v6724 = vsub.f32 %v86, %v6723
    %v6725 = vand.u32 %v6724, 4294901760
    %v6726 = vsub.f32 %v6724, %v6725
    %v6727 = vand.u32 %v6726, 4294901760
    %6728 = vmatpush.msra.mxu0 %v6727
    %v6729 = vand.u32 %v83, 4294901760
    %v6730 = vsub.f32 %v83, %v6729
    %v6731 = vand.u32 %v6730, 4294901760
    %v6732 = vsub.f32 %v6730, %v6731
    %v6733 = vand.u32 %v6732, 4294901760
    %6734 = vmatpush.msra.mxu0 %v6733
    %v6735 = vand.u32 %v6591, 4294901760
    %6736 = vmatmul.f32.gmra.mxu0 %v6735
    %v6737 = vpop.f32.mrf.mxu0
    %v6738 = vadd.f32 %v6637, %v6737
    %6739 = vdwg.mxu0
    %v6740 = vand.u32 %v128, 4294901760
    %v6741 = vsub.f32 %v128, %v6740
    %6742 = vmatpush.msra.mxu0 %v6741
    %v6743 = vand.u32 %v125, 4294901760
    %v6744 = vsub.f32 %v125, %v6743
    %6745 = vmatpush.msra.mxu0 %v6744
    %v6746 = vand.u32 %v122, 4294901760
    %v6747 = vsub.f32 %v122, %v6746
    %6748 = vmatpush.msra.mxu0 %v6747
    %v6749 = vand.u32 %v119, 4294901760
    %v6750 = vsub.f32 %v119, %v6749
    %6751 = vmatpush.msra.mxu0 %v6750
    %v6752 = vand.u32 %v116, 4294901760
    %v6753 = vsub.f32 %v116, %v6752
    %6754 = vmatpush.msra.mxu0 %v6753
    %v6755 = vand.u32 %v113, 4294901760
    %v6756 = vsub.f32 %v113, %v6755
    %6757 = vmatpush.msra.mxu0 %v6756
    %v6758 = vand.u32 %v110, 4294901760
    %v6759 = vsub.f32 %v110, %v6758
    %6760 = vmatpush.msra.mxu0 %v6759
    %v6761 = vand.u32 %v107, 4294901760
    %v6762 = vsub.f32 %v107, %v6761
    %6763 = vmatpush.msra.mxu0 %v6762
    %v6764 = vand.u32 %v104, 4294901760
    %v6765 = vsub.f32 %v104, %v6764
    %6766 = vmatpush.msra.mxu0 %v6765
    %v6767 = vand.u32 %v101, 4294901760
    %v6768 = vsub.f32 %v101, %v6767
    %6769 = vmatpush.msra.mxu0 %v6768
    %v6770 = vand.u32 %v98, 4294901760
    %v6771 = vsub.f32 %v98, %v6770
    %6772 = vmatpush.msra.mxu0 %v6771
    %v6773 = vand.u32 %v95, 4294901760
    %v6774 = vsub.f32 %v95, %v6773
    %6775 = vmatpush.msra.mxu0 %v6774
    %v6776 = vand.u32 %v92, 4294901760
    %v6777 = vsub.f32 %v92, %v6776
    %6778 = vmatpush.msra.mxu0 %v6777
    %v6779 = vand.u32 %v89, 4294901760
    %v6780 = vsub.f32 %v89, %v6779
    %6781 = vmatpush.msra.mxu0 %v6780
    %v6782 = vand.u32 %v86, 4294901760
    %v6783 = vsub.f32 %v86, %v6782
    %6784 = vmatpush.msra.mxu0 %v6783
    %v6785 = vand.u32 %v83, 4294901760
    %v6786 = vsub.f32 %v83, %v6785
    %6787 = vmatpush.msra.mxu0 %v6786
    %v6788 = vand.u32 %v6591, 4294901760
    %v6789 = vsub.f32 %v6591, %v6788
    %6790 = vmatmul.f32.gmra.mxu0 %v6789
    %v6791 = vpop.f32.mrf.mxu0
    %v6792 = vadd.f32 %v6738, %v6791
    %6793 = vdwg.mxu0
    %v6794 = vand.u32 %v128, 4294901760
    %6795 = vmatpush.msra.mxu0 %v6794
    %v6796 = vand.u32 %v125, 4294901760
    %6797 = vmatpush.msra.mxu0 %v6796
    %v6798 = vand.u32 %v122, 4294901760
    %6799 = vmatpush.msra.mxu0 %v6798
    %v6800 = vand.u32 %v119, 4294901760
    %6801 = vmatpush.msra.mxu0 %v6800
    %v6802 = vand.u32 %v116, 4294901760
    %6803 = vmatpush.msra.mxu0 %v6802
    %v6804 = vand.u32 %v113, 4294901760
    %6805 = vmatpush.msra.mxu0 %v6804
    %v6806 = vand.u32 %v110, 4294901760
    %6807 = vmatpush.msra.mxu0 %v6806
    %v6808 = vand.u32 %v107, 4294901760
    %6809 = vmatpush.msra.mxu0 %v6808
    %v6810 = vand.u32 %v104, 4294901760
    %6811 = vmatpush.msra.mxu0 %v6810
    %v6812 = vand.u32 %v101, 4294901760
    %6813 = vmatpush.msra.mxu0 %v6812
    %v6814 = vand.u32 %v98, 4294901760
    %6815 = vmatpush.msra.mxu0 %v6814
    %v6816 = vand.u32 %v95, 4294901760
    %6817 = vmatpush.msra.mxu0 %v6816
    %v6818 = vand.u32 %v92, 4294901760
    %6819 = vmatpush.msra.mxu0 %v6818
    %v6820 = vand.u32 %v89, 4294901760
    %6821 = vmatpush.msra.mxu0 %v6820
    %v6822 = vand.u32 %v86, 4294901760
    %6823 = vmatpush.msra.mxu0 %v6822
    %v6824 = vand.u32 %v83, 4294901760
    %6825 = vmatpush.msra.mxu0 %v6824
    %v6826 = vand.u32 %v6591, 4294901760
    %v6827 = vsub.f32 %v6591, %v6826
    %v6828 = vand.u32 %v6827, 4294901760
    %6829 = vmatmul.f32.gmra.mxu0 %v6828
    %v6830 = vpop.f32.mrf.mxu0
    %v6831 = vadd.f32 %v6792, %v6830
    %6832 = vdwg.mxu0
    %v6833 = vand.u32 %v128, 4294901760
    %v6834 = vsub.f32 %v128, %v6833
    %v6835 = vand.u32 %v6834, 4294901760
    %6836 = vmatpush.msra.mxu0 %v6835
    %v6837 = vand.u32 %v125, 4294901760
    %v6838 = vsub.f32 %v125, %v6837
    %v6839 = vand.u32 %v6838, 4294901760
    %6840 = vmatpush.msra.mxu0 %v6839
    %v6841 = vand.u32 %v122, 4294901760
    %v6842 = vsub.f32 %v122, %v6841
    %v6843 = vand.u32 %v6842, 4294901760
    %6844 = vmatpush.msra.mxu0 %v6843
    %v6845 = vand.u32 %v119, 4294901760
    %v6846 = vsub.f32 %v119, %v6845
    %v6847 = vand.u32 %v6846, 4294901760
    %6848 = vmatpush.msra.mxu0 %v6847
    %v6849 = vand.u32 %v116, 4294901760
    %v6850 = vsub.f32 %v116, %v6849
    %v6851 = vand.u32 %v6850, 4294901760
    %6852 = vmatpush.msra.mxu0 %v6851
    %v6853 = vand.u32 %v113, 4294901760
    %v6854 = vsub.f32 %v113, %v6853
    %v6855 = vand.u32 %v6854, 4294901760
    %6856 = vmatpush.msra.mxu0 %v6855
    %v6857 = vand.u32 %v110, 4294901760
    %v6858 = vsub.f32 %v110, %v6857
    %v6859 = vand.u32 %v6858, 4294901760
    %6860 = vmatpush.msra.mxu0 %v6859
    %v6861 = vand.u32 %v107, 4294901760
    %v6862 = vsub.f32 %v107, %v6861
    %v6863 = vand.u32 %v6862, 4294901760
    %6864 = vmatpush.msra.mxu0 %v6863
    %v6865 = vand.u32 %v104, 4294901760
    %v6866 = vsub.f32 %v104, %v6865
    %v6867 = vand.u32 %v6866, 4294901760
    %6868 = vmatpush.msra.mxu0 %v6867
    %v6869 = vand.u32 %v101, 4294901760
    %v6870 = vsub.f32 %v101, %v6869
    %v6871 = vand.u32 %v6870, 4294901760
    %6872 = vmatpush.msra.mxu0 %v6871
    %v6873 = vand.u32 %v98, 4294901760
    %v6874 = vsub.f32 %v98, %v6873
    %v6875 = vand.u32 %v6874, 4294901760
    %6876 = vmatpush.msra.mxu0 %v6875
    %v6877 = vand.u32 %v95, 4294901760
    %v6878 = vsub.f32 %v95, %v6877
    %v6879 = vand.u32 %v6878, 4294901760
    %6880 = vmatpush.msra.mxu0 %v6879
    %v6881 = vand.u32 %v92, 4294901760
    %v6882 = vsub.f32 %v92, %v6881
    %v6883 = vand.u32 %v6882, 4294901760
    %6884 = vmatpush.msra.mxu0 %v6883
    %v6885 = vand.u32 %v89, 4294901760
    %v6886 = vsub.f32 %v89, %v6885
    %v6887 = vand.u32 %v6886, 4294901760
    %6888 = vmatpush.msra.mxu0 %v6887
    %v6889 = vand.u32 %v86, 4294901760
    %v6890 = vsub.f32 %v86, %v6889
    %v6891 = vand.u32 %v6890, 4294901760
    %6892 = vmatpush.msra.mxu0 %v6891
    %v6893 = vand.u32 %v83, 4294901760
    %v6894 = vsub.f32 %v83, %v6893
    %v6895 = vand.u32 %v6894, 4294901760
    %6896 = vmatpush.msra.mxu0 %v6895
    %v6897 = vand.u32 %v6591, 4294901760
    %6898 = vmatmul.f32.gmra.mxu0 %v6897
    %v6899 = vpop.f32.mrf.mxu0
    %v6900 = vadd.f32 %v6831, %v6899
    %6901 = vdwg.mxu0
    %v6902 = vand.u32 %v128, 4294901760
    %6903 = vmatpush.msra.mxu0 %v6902
    %v6904 = vand.u32 %v125, 4294901760
    %6905 = vmatpush.msra.mxu0 %v6904
    %v6906 = vand.u32 %v122, 4294901760
    %6907 = vmatpush.msra.mxu0 %v6906
    %v6908 = vand.u32 %v119, 4294901760
    %6909 = vmatpush.msra.mxu0 %v6908
    %v6910 = vand.u32 %v116, 4294901760
    %6911 = vmatpush.msra.mxu0 %v6910
    %v6912 = vand.u32 %v113, 4294901760
    %6913 = vmatpush.msra.mxu0 %v6912
    %v6914 = vand.u32 %v110, 4294901760
    %6915 = vmatpush.msra.mxu0 %v6914
    %v6916 = vand.u32 %v107, 4294901760
    %6917 = vmatpush.msra.mxu0 %v6916
    %v6918 = vand.u32 %v104, 4294901760
    %6919 = vmatpush.msra.mxu0 %v6918
    %v6920 = vand.u32 %v101, 4294901760
    %6921 = vmatpush.msra.mxu0 %v6920
    %v6922 = vand.u32 %v98, 4294901760
    %6923 = vmatpush.msra.mxu0 %v6922
    %v6924 = vand.u32 %v95, 4294901760
    %6925 = vmatpush.msra.mxu0 %v6924
    %v6926 = vand.u32 %v92, 4294901760
    %6927 = vmatpush.msra.mxu0 %v6926
    %v6928 = vand.u32 %v89, 4294901760
    %6929 = vmatpush.msra.mxu0 %v6928
    %v6930 = vand.u32 %v86, 4294901760
    %6931 = vmatpush.msra.mxu0 %v6930
    %v6932 = vand.u32 %v83, 4294901760
    %6933 = vmatpush.msra.mxu0 %v6932
    %v6934 = vand.u32 %v6591, 4294901760
    %6935 = vmatmul.f32.gmra.mxu0 %v6934
    %v6936 = vpop.f32.mrf.mxu0
    %v6937 = vadd.f32 %v6900, %v6936
    %6938 = vdwg.mxu0
    %v6939 = vand.u32 %v129, 4294901760
    %6940 = vmatpush.msra.mxu0 %v6939
    %v6941 = vand.u32 %v126, 4294901760
    %6942 = vmatpush.msra.mxu0 %v6941
    %v6943 = vand.u32 %v123, 4294901760
    %6944 = vmatpush.msra.mxu0 %v6943
    %v6945 = vand.u32 %v120, 4294901760
    %6946 = vmatpush.msra.mxu0 %v6945
    %v6947 = vand.u32 %v117, 4294901760
    %6948 = vmatpush.msra.mxu0 %v6947
    %v6949 = vand.u32 %v114, 4294901760
    %6950 = vmatpush.msra.mxu0 %v6949
    %v6951 = vand.u32 %v111, 4294901760
    %6952 = vmatpush.msra.mxu0 %v6951
    %v6953 = vand.u32 %v108, 4294901760
    %6954 = vmatpush.msra.mxu0 %v6953
    %v6955 = vand.u32 %v105, 4294901760
    %6956 = vmatpush.msra.mxu0 %v6955
    %v6957 = vand.u32 %v102, 4294901760
    %6958 = vmatpush.msra.mxu0 %v6957
    %v6959 = vand.u32 %v99, 4294901760
    %6960 = vmatpush.msra.mxu0 %v6959
    %v6961 = vand.u32 %v96, 4294901760
    %6962 = vmatpush.msra.mxu0 %v6961
    %v6963 = vand.u32 %v93, 4294901760
    %6964 = vmatpush.msra.mxu0 %v6963
    %v6965 = vand.u32 %v90, 4294901760
    %6966 = vmatpush.msra.mxu0 %v6965
    %v6967 = vand.u32 %v87, 4294901760
    %6968 = vmatpush.msra.mxu0 %v6967
    %v6969 = vand.u32 %v84, 4294901760
    %6970 = vmatpush.msra.mxu0 %v6969
    %v6971 = vand.u32 %v6591, 4294901760
    %v6972 = vsub.f32 %v6591, %v6971
    %v6973 = vand.u32 %v6972, 4294901760
    %v6974 = vsub.f32 %v6972, %v6973
    %v6975 = vand.u32 %v6974, 4294901760
    %6976 = vmatmul.f32.gmra.mxu0 %v6975
    %v6977 = vpop.f32.mrf.mxu0
    %v6978 = vadd.f32 %v138, %v6977
    %6979 = vdwg.mxu0
    %v6980 = vand.u32 %v129, 4294901760
    %v6981 = vsub.f32 %v129, %v6980
    %v6982 = vand.u32 %v6981, 4294901760
    %v6983 = vsub.f32 %v6981, %v6982
    %v6984 = vand.u32 %v6983, 4294901760
    %6985 = vmatpush.msra.mxu0 %v6984
    %v6986 = vand.u32 %v126, 4294901760
    %v6987 = vsub.f32 %v126, %v6986
    %v6988 = vand.u32 %v6987, 4294901760
    %v6989 = vsub.f32 %v6987, %v6988
    %v6990 = vand.u32 %v6989, 4294901760
    %6991 = vmatpush.msra.mxu0 %v6990
    %v6992 = vand.u32 %v123, 4294901760
    %v6993 = vsub.f32 %v123, %v6992
    %v6994 = vand.u32 %v6993, 4294901760
    %v6995 = vsub.f32 %v6993, %v6994
    %v6996 = vand.u32 %v6995, 4294901760
    %6997 = vmatpush.msra.mxu0 %v6996
    %v6998 = vand.u32 %v120, 4294901760
    %v6999 = vsub.f32 %v120, %v6998
    %v7000 = vand.u32 %v6999, 4294901760
    %v7001 = vsub.f32 %v6999, %v7000
    %v7002 = vand.u32 %v7001, 4294901760
    %7003 = vmatpush.msra.mxu0 %v7002
    %v7004 = vand.u32 %v117, 4294901760
    %v7005 = vsub.f32 %v117, %v7004
    %v7006 = vand.u32 %v7005, 4294901760
    %v7007 = vsub.f32 %v7005, %v7006
    %v7008 = vand.u32 %v7007, 4294901760
    %7009 = vmatpush.msra.mxu0 %v7008
    %v7010 = vand.u32 %v114, 4294901760
    %v7011 = vsub.f32 %v114, %v7010
    %v7012 = vand.u32 %v7011, 4294901760
    %v7013 = vsub.f32 %v7011, %v7012
    %v7014 = vand.u32 %v7013, 4294901760
    %7015 = vmatpush.msra.mxu0 %v7014
    %v7016 = vand.u32 %v111, 4294901760
    %v7017 = vsub.f32 %v111, %v7016
    %v7018 = vand.u32 %v7017, 4294901760
    %v7019 = vsub.f32 %v7017, %v7018
    %v7020 = vand.u32 %v7019, 4294901760
    %7021 = vmatpush.msra.mxu0 %v7020
    %v7022 = vand.u32 %v108, 4294901760
    %v7023 = vsub.f32 %v108, %v7022
    %v7024 = vand.u32 %v7023, 4294901760
    %v7025 = vsub.f32 %v7023, %v7024
    %v7026 = vand.u32 %v7025, 4294901760
    %7027 = vmatpush.msra.mxu0 %v7026
    %v7028 = vand.u32 %v105, 4294901760
    %v7029 = vsub.f32 %v105, %v7028
    %v7030 = vand.u32 %v7029, 4294901760
    %v7031 = vsub.f32 %v7029, %v7030
    %v7032 = vand.u32 %v7031, 4294901760
    %7033 = vmatpush.msra.mxu0 %v7032
    %v7034 = vand.u32 %v102, 4294901760
    %v7035 = vsub.f32 %v102, %v7034
    %v7036 = vand.u32 %v7035, 4294901760
    %v7037 = vsub.f32 %v7035, %v7036
    %v7038 = vand.u32 %v7037, 4294901760
    %7039 = vmatpush.msra.mxu0 %v7038
    %v7040 = vand.u32 %v99, 4294901760
    %v7041 = vsub.f32 %v99, %v7040
    %v7042 = vand.u32 %v7041, 4294901760
    %v7043 = vsub.f32 %v7041, %v7042
    %v7044 = vand.u32 %v7043, 4294901760
    %7045 = vmatpush.msra.mxu0 %v7044
    %v7046 = vand.u32 %v96, 4294901760
    %v7047 = vsub.f32 %v96, %v7046
    %v7048 = vand.u32 %v7047, 4294901760
    %v7049 = vsub.f32 %v7047, %v7048
    %v7050 = vand.u32 %v7049, 4294901760
    %7051 = vmatpush.msra.mxu0 %v7050
    %v7052 = vand.u32 %v93, 4294901760
    %v7053 = vsub.f32 %v93, %v7052
    %v7054 = vand.u32 %v7053, 4294901760
    %v7055 = vsub.f32 %v7053, %v7054
    %v7056 = vand.u32 %v7055, 4294901760
    %7057 = vmatpush.msra.mxu0 %v7056
    %v7058 = vand.u32 %v90, 4294901760
    %v7059 = vsub.f32 %v90, %v7058
    %v7060 = vand.u32 %v7059, 4294901760
    %v7061 = vsub.f32 %v7059, %v7060
    %v7062 = vand.u32 %v7061, 4294901760
    %7063 = vmatpush.msra.mxu0 %v7062
    %v7064 = vand.u32 %v87, 4294901760
    %v7065 = vsub.f32 %v87, %v7064
    %v7066 = vand.u32 %v7065, 4294901760
    %v7067 = vsub.f32 %v7065, %v7066
    %v7068 = vand.u32 %v7067, 4294901760
    %7069 = vmatpush.msra.mxu0 %v7068
    %v7070 = vand.u32 %v84, 4294901760
    %v7071 = vsub.f32 %v84, %v7070
    %v7072 = vand.u32 %v7071, 4294901760
    %v7073 = vsub.f32 %v7071, %v7072
    %v7074 = vand.u32 %v7073, 4294901760
    %7075 = vmatpush.msra.mxu0 %v7074
    %v7076 = vand.u32 %v6591, 4294901760
    %7077 = vmatmul.f32.gmra.mxu0 %v7076
    %v7078 = vpop.f32.mrf.mxu0
    %v7079 = vadd.f32 %v6978, %v7078
    %7080 = vdwg.mxu0
    %v7081 = vand.u32 %v129, 4294901760
    %v7082 = vsub.f32 %v129, %v7081
    %7083 = vmatpush.msra.mxu0 %v7082
    %v7084 = vand.u32 %v126, 4294901760
    %v7085 = vsub.f32 %v126, %v7084
    %7086 = vmatpush.msra.mxu0 %v7085
    %v7087 = vand.u32 %v123, 4294901760
    %v7088 = vsub.f32 %v123, %v7087
    %7089 = vmatpush.msra.mxu0 %v7088
    %v7090 = vand.u32 %v120, 4294901760
    %v7091 = vsub.f32 %v120, %v7090
    %7092 = vmatpush.msra.mxu0 %v7091
    %v7093 = vand.u32 %v117, 4294901760
    %v7094 = vsub.f32 %v117, %v7093
    %7095 = vmatpush.msra.mxu0 %v7094
    %v7096 = vand.u32 %v114, 4294901760
    %v7097 = vsub.f32 %v114, %v7096
    %7098 = vmatpush.msra.mxu0 %v7097
    %v7099 = vand.u32 %v111, 4294901760
    %v7100 = vsub.f32 %v111, %v7099
    %7101 = vmatpush.msra.mxu0 %v7100
    %v7102 = vand.u32 %v108, 4294901760
    %v7103 = vsub.f32 %v108, %v7102
    %7104 = vmatpush.msra.mxu0 %v7103
    %v7105 = vand.u32 %v105, 4294901760
    %v7106 = vsub.f32 %v105, %v7105
    %7107 = vmatpush.msra.mxu0 %v7106
    %v7108 = vand.u32 %v102, 4294901760
    %v7109 = vsub.f32 %v102, %v7108
    %7110 = vmatpush.msra.mxu0 %v7109
    %v7111 = vand.u32 %v99, 4294901760
    %v7112 = vsub.f32 %v99, %v7111
    %7113 = vmatpush.msra.mxu0 %v7112
    %v7114 = vand.u32 %v96, 4294901760
    %v7115 = vsub.f32 %v96, %v7114
    %7116 = vmatpush.msra.mxu0 %v7115
    %v7117 = vand.u32 %v93, 4294901760
    %v7118 = vsub.f32 %v93, %v7117
    %7119 = vmatpush.msra.mxu0 %v7118
    %v7120 = vand.u32 %v90, 4294901760
    %v7121 = vsub.f32 %v90, %v7120
    %7122 = vmatpush.msra.mxu0 %v7121
    %v7123 = vand.u32 %v87, 4294901760
    %v7124 = vsub.f32 %v87, %v7123
    %7125 = vmatpush.msra.mxu0 %v7124
    %v7126 = vand.u32 %v84, 4294901760
    %v7127 = vsub.f32 %v84, %v7126
    %7128 = vmatpush.msra.mxu0 %v7127
    %v7129 = vand.u32 %v6591, 4294901760
    %v7130 = vsub.f32 %v6591, %v7129
    %7131 = vmatmul.f32.gmra.mxu0 %v7130
    %v7132 = vpop.f32.mrf.mxu0
    %v7133 = vadd.f32 %v7079, %v7132
    %7134 = vdwg.mxu0
    %v7135 = vand.u32 %v129, 4294901760
    %7136 = vmatpush.msra.mxu0 %v7135
    %v7137 = vand.u32 %v126, 4294901760
    %7138 = vmatpush.msra.mxu0 %v7137
    %v7139 = vand.u32 %v123, 4294901760
    %7140 = vmatpush.msra.mxu0 %v7139
    %v7141 = vand.u32 %v120, 4294901760
    %7142 = vmatpush.msra.mxu0 %v7141
    %v7143 = vand.u32 %v117, 4294901760
    %7144 = vmatpush.msra.mxu0 %v7143
    %v7145 = vand.u32 %v114, 4294901760
    %7146 = vmatpush.msra.mxu0 %v7145
    %v7147 = vand.u32 %v111, 4294901760
    %7148 = vmatpush.msra.mxu0 %v7147
    %v7149 = vand.u32 %v108, 4294901760
    %7150 = vmatpush.msra.mxu0 %v7149
    %v7151 = vand.u32 %v105, 4294901760
    %7152 = vmatpush.msra.mxu0 %v7151
    %v7153 = vand.u32 %v102, 4294901760
    %7154 = vmatpush.msra.mxu0 %v7153
    %v7155 = vand.u32 %v99, 4294901760
    %7156 = vmatpush.msra.mxu0 %v7155
    %v7157 = vand.u32 %v96, 4294901760
    %7158 = vmatpush.msra.mxu0 %v7157
    %v7159 = vand.u32 %v93, 4294901760
    %7160 = vmatpush.msra.mxu0 %v7159
    %v7161 = vand.u32 %v90, 4294901760
    %7162 = vmatpush.msra.mxu0 %v7161
    %v7163 = vand.u32 %v87, 4294901760
    %7164 = vmatpush.msra.mxu0 %v7163
    %v7165 = vand.u32 %v84, 4294901760
    %7166 = vmatpush.msra.mxu0 %v7165
    %v7167 = vand.u32 %v6591, 4294901760
    %v7168 = vsub.f32 %v6591, %v7167
    %v7169 = vand.u32 %v7168, 4294901760
    %7170 = vmatmul.f32.gmra.mxu0 %v7169
    %v7171 = vpop.f32.mrf.mxu0
    %v7172 = vadd.f32 %v7133, %v7171
    %7173 = vdwg.mxu0
    %v7174 = vand.u32 %v129, 4294901760
    %v7175 = vsub.f32 %v129, %v7174
    %v7176 = vand.u32 %v7175, 4294901760
    %7177 = vmatpush.msra.mxu0 %v7176
    %v7178 = vand.u32 %v126, 4294901760
    %v7179 = vsub.f32 %v126, %v7178
    %v7180 = vand.u32 %v7179, 4294901760
    %7181 = vmatpush.msra.mxu0 %v7180
    %v7182 = vand.u32 %v123, 4294901760
    %v7183 = vsub.f32 %v123, %v7182
    %v7184 = vand.u32 %v7183, 4294901760
    %7185 = vmatpush.msra.mxu0 %v7184
    %v7186 = vand.u32 %v120, 4294901760
    %v7187 = vsub.f32 %v120, %v7186
    %v7188 = vand.u32 %v7187, 4294901760
    %7189 = vmatpush.msra.mxu0 %v7188
    %v7190 = vand.u32 %v117, 4294901760
    %v7191 = vsub.f32 %v117, %v7190
    %v7192 = vand.u32 %v7191, 4294901760
    %7193 = vmatpush.msra.mxu0 %v7192
    %v7194 = vand.u32 %v114, 4294901760
    %v7195 = vsub.f32 %v114, %v7194
    %v7196 = vand.u32 %v7195, 4294901760
    %7197 = vmatpush.msra.mxu0 %v7196
    %v7198 = vand.u32 %v111, 4294901760
    %v7199 = vsub.f32 %v111, %v7198
    %v7200 = vand.u32 %v7199, 4294901760
    %7201 = vmatpush.msra.mxu0 %v7200
    %v7202 = vand.u32 %v108, 4294901760
    %v7203 = vsub.f32 %v108, %v7202
    %v7204 = vand.u32 %v7203, 4294901760
    %7205 = vmatpush.msra.mxu0 %v7204
    %v7206 = vand.u32 %v105, 4294901760
    %v7207 = vsub.f32 %v105, %v7206
    %v7208 = vand.u32 %v7207, 4294901760
    %7209 = vmatpush.msra.mxu0 %v7208
    %v7210 = vand.u32 %v102, 4294901760
    %v7211 = vsub.f32 %v102, %v7210
    %v7212 = vand.u32 %v7211, 4294901760
    %7213 = vmatpush.msra.mxu0 %v7212
    %v7214 = vand.u32 %v99, 4294901760
    %v7215 = vsub.f32 %v99, %v7214
    %v7216 = vand.u32 %v7215, 4294901760
    %7217 = vmatpush.msra.mxu0 %v7216
    %v7218 = vand.u32 %v96, 4294901760
    %v7219 = vsub.f32 %v96, %v7218
    %v7220 = vand.u32 %v7219, 4294901760
    %7221 = vmatpush.msra.mxu0 %v7220
    %v7222 = vand.u32 %v93, 4294901760
    %v7223 = vsub.f32 %v93, %v7222
    %v7224 = vand.u32 %v7223, 4294901760
    %7225 = vmatpush.msra.mxu0 %v7224
    %v7226 = vand.u32 %v90, 4294901760
    %v7227 = vsub.f32 %v90, %v7226
    %v7228 = vand.u32 %v7227, 4294901760
    %7229 = vmatpush.msra.mxu0 %v7228
    %v7230 = vand.u32 %v87, 4294901760
    %v7231 = vsub.f32 %v87, %v7230
    %v7232 = vand.u32 %v7231, 4294901760
    %7233 = vmatpush.msra.mxu0 %v7232
    %v7234 = vand.u32 %v84, 4294901760
    %v7235 = vsub.f32 %v84, %v7234
    %v7236 = vand.u32 %v7235, 4294901760
    %7237 = vmatpush.msra.mxu0 %v7236
    %v7238 = vand.u32 %v6591, 4294901760
    %7239 = vmatmul.f32.gmra.mxu0 %v7238
    %v7240 = vpop.f32.mrf.mxu0
    %v7241 = vadd.f32 %v7172, %v7240
    %7242 = vdwg.mxu0
    %v7243 = vand.u32 %v129, 4294901760
    %7244 = vmatpush.msra.mxu0 %v7243
    %v7245 = vand.u32 %v126, 4294901760
    %7246 = vmatpush.msra.mxu0 %v7245
    %v7247 = vand.u32 %v123, 4294901760
    %7248 = vmatpush.msra.mxu0 %v7247
    %v7249 = vand.u32 %v120, 4294901760
    %7250 = vmatpush.msra.mxu0 %v7249
    %v7251 = vand.u32 %v117, 4294901760
    %7252 = vmatpush.msra.mxu0 %v7251
    %v7253 = vand.u32 %v114, 4294901760
    %7254 = vmatpush.msra.mxu0 %v7253
    %v7255 = vand.u32 %v111, 4294901760
    %7256 = vmatpush.msra.mxu0 %v7255
    %v7257 = vand.u32 %v108, 4294901760
    %7258 = vmatpush.msra.mxu0 %v7257
    %v7259 = vand.u32 %v105, 4294901760
    %7260 = vmatpush.msra.mxu0 %v7259
    %v7261 = vand.u32 %v102, 4294901760
    %7262 = vmatpush.msra.mxu0 %v7261
    %v7263 = vand.u32 %v99, 4294901760
    %7264 = vmatpush.msra.mxu0 %v7263
    %v7265 = vand.u32 %v96, 4294901760
    %7266 = vmatpush.msra.mxu0 %v7265
    %v7267 = vand.u32 %v93, 4294901760
    %7268 = vmatpush.msra.mxu0 %v7267
    %v7269 = vand.u32 %v90, 4294901760
    %7270 = vmatpush.msra.mxu0 %v7269
    %v7271 = vand.u32 %v87, 4294901760
    %7272 = vmatpush.msra.mxu0 %v7271
    %v7273 = vand.u32 %v84, 4294901760
    %7274 = vmatpush.msra.mxu0 %v7273
    %v7275 = vand.u32 %v6591, 4294901760
    %7276 = vmatmul.f32.gmra.mxu0 %v7275
    %v7277 = vpop.f32.mrf.mxu0
    %v7278 = vadd.f32 %v7241, %v7277
    %7279 = vdwg.mxu0
    %v7280 = vand.u32 %v130, 4294901760
    %7281 = vmatpush.msra.mxu0 %v7280
    %v7282 = vand.u32 %v127, 4294901760
    %7283 = vmatpush.msra.mxu0 %v7282
    %v7284 = vand.u32 %v124, 4294901760
    %7285 = vmatpush.msra.mxu0 %v7284
    %v7286 = vand.u32 %v121, 4294901760
    %7287 = vmatpush.msra.mxu0 %v7286
    %v7288 = vand.u32 %v118, 4294901760
    %7289 = vmatpush.msra.mxu0 %v7288
    %v7290 = vand.u32 %v115, 4294901760
    %7291 = vmatpush.msra.mxu0 %v7290
    %v7292 = vand.u32 %v112, 4294901760
    %7293 = vmatpush.msra.mxu0 %v7292
    %v7294 = vand.u32 %v109, 4294901760
    %7295 = vmatpush.msra.mxu0 %v7294
    %v7296 = vand.u32 %v106, 4294901760
    %7297 = vmatpush.msra.mxu0 %v7296
    %v7298 = vand.u32 %v103, 4294901760
    %7299 = vmatpush.msra.mxu0 %v7298
    %v7300 = vand.u32 %v100, 4294901760
    %7301 = vmatpush.msra.mxu0 %v7300
    %v7302 = vand.u32 %v97, 4294901760
    %7303 = vmatpush.msra.mxu0 %v7302
    %v7304 = vand.u32 %v94, 4294901760
    %7305 = vmatpush.msra.mxu0 %v7304
    %v7306 = vand.u32 %v91, 4294901760
    %7307 = vmatpush.msra.mxu0 %v7306
    %v7308 = vand.u32 %v88, 4294901760
    %7309 = vmatpush.msra.mxu0 %v7308
    %v7310 = vand.u32 %v85, 4294901760
    %7311 = vmatpush.msra.mxu0 %v7310
    %v7312 = vand.u32 %v6591, 4294901760
    %v7313 = vsub.f32 %v6591, %v7312
    %v7314 = vand.u32 %v7313, 4294901760
    %v7315 = vsub.f32 %v7313, %v7314
    %v7316 = vand.u32 %v7315, 4294901760
    %7317 = vmatmul.f32.gmra.mxu0 %v7316
    %v7318 = vpop.f32.mrf.mxu0
    %v7319 = vadd.f32 %v139, %v7318
    %7320 = vdwg.mxu0
    %v7321 = vand.u32 %v130, 4294901760
    %v7322 = vsub.f32 %v130, %v7321
    %v7323 = vand.u32 %v7322, 4294901760
    %v7324 = vsub.f32 %v7322, %v7323
    %v7325 = vand.u32 %v7324, 4294901760
    %7326 = vmatpush.msra.mxu0 %v7325
    %v7327 = vand.u32 %v127, 4294901760
    %v7328 = vsub.f32 %v127, %v7327
    %v7329 = vand.u32 %v7328, 4294901760
    %v7330 = vsub.f32 %v7328, %v7329
    %v7331 = vand.u32 %v7330, 4294901760
    %7332 = vmatpush.msra.mxu0 %v7331
    %v7333 = vand.u32 %v124, 4294901760
    %v7334 = vsub.f32 %v124, %v7333
    %v7335 = vand.u32 %v7334, 4294901760
    %v7336 = vsub.f32 %v7334, %v7335
    %v7337 = vand.u32 %v7336, 4294901760
    %7338 = vmatpush.msra.mxu0 %v7337
    %v7339 = vand.u32 %v121, 4294901760
    %v7340 = vsub.f32 %v121, %v7339
    %v7341 = vand.u32 %v7340, 4294901760
    %v7342 = vsub.f32 %v7340, %v7341
    %v7343 = vand.u32 %v7342, 4294901760
    %7344 = vmatpush.msra.mxu0 %v7343
    %v7345 = vand.u32 %v118, 4294901760
    %v7346 = vsub.f32 %v118, %v7345
    %v7347 = vand.u32 %v7346, 4294901760
    %v7348 = vsub.f32 %v7346, %v7347
    %v7349 = vand.u32 %v7348, 4294901760
    %7350 = vmatpush.msra.mxu0 %v7349
    %v7351 = vand.u32 %v115, 4294901760
    %v7352 = vsub.f32 %v115, %v7351
    %v7353 = vand.u32 %v7352, 4294901760
    %v7354 = vsub.f32 %v7352, %v7353
    %v7355 = vand.u32 %v7354, 4294901760
    %7356 = vmatpush.msra.mxu0 %v7355
    %v7357 = vand.u32 %v112, 4294901760
    %v7358 = vsub.f32 %v112, %v7357
    %v7359 = vand.u32 %v7358, 4294901760
    %v7360 = vsub.f32 %v7358, %v7359
    %v7361 = vand.u32 %v7360, 4294901760
    %7362 = vmatpush.msra.mxu0 %v7361
    %v7363 = vand.u32 %v109, 4294901760
    %v7364 = vsub.f32 %v109, %v7363
    %v7365 = vand.u32 %v7364, 4294901760
    %v7366 = vsub.f32 %v7364, %v7365
    %v7367 = vand.u32 %v7366, 4294901760
    %7368 = vmatpush.msra.mxu0 %v7367
    %v7369 = vand.u32 %v106, 4294901760
    %v7370 = vsub.f32 %v106, %v7369
    %v7371 = vand.u32 %v7370, 4294901760
    %v7372 = vsub.f32 %v7370, %v7371
    %v7373 = vand.u32 %v7372, 4294901760
    %7374 = vmatpush.msra.mxu0 %v7373
    %v7375 = vand.u32 %v103, 4294901760
    %v7376 = vsub.f32 %v103, %v7375
    %v7377 = vand.u32 %v7376, 4294901760
    %v7378 = vsub.f32 %v7376, %v7377
    %v7379 = vand.u32 %v7378, 4294901760
    %7380 = vmatpush.msra.mxu0 %v7379
    %v7381 = vand.u32 %v100, 4294901760
    %v7382 = vsub.f32 %v100, %v7381
    %v7383 = vand.u32 %v7382, 4294901760
    %v7384 = vsub.f32 %v7382, %v7383
    %v7385 = vand.u32 %v7384, 4294901760
    %7386 = vmatpush.msra.mxu0 %v7385
    %v7387 = vand.u32 %v97, 4294901760
    %v7388 = vsub.f32 %v97, %v7387
    %v7389 = vand.u32 %v7388, 4294901760
    %v7390 = vsub.f32 %v7388, %v7389
    %v7391 = vand.u32 %v7390, 4294901760
    %7392 = vmatpush.msra.mxu0 %v7391
    %v7393 = vand.u32 %v94, 4294901760
    %v7394 = vsub.f32 %v94, %v7393
    %v7395 = vand.u32 %v7394, 4294901760
    %v7396 = vsub.f32 %v7394, %v7395
    %v7397 = vand.u32 %v7396, 4294901760
    %7398 = vmatpush.msra.mxu0 %v7397
    %v7399 = vand.u32 %v91, 4294901760
    %v7400 = vsub.f32 %v91, %v7399
    %v7401 = vand.u32 %v7400, 4294901760
    %v7402 = vsub.f32 %v7400, %v7401
    %v7403 = vand.u32 %v7402, 4294901760
    %7404 = vmatpush.msra.mxu0 %v7403
    %v7405 = vand.u32 %v88, 4294901760
    %v7406 = vsub.f32 %v88, %v7405
    %v7407 = vand.u32 %v7406, 4294901760
    %v7408 = vsub.f32 %v7406, %v7407
    %v7409 = vand.u32 %v7408, 4294901760
    %7410 = vmatpush.msra.mxu0 %v7409
    %v7411 = vand.u32 %v85, 4294901760
    %v7412 = vsub.f32 %v85, %v7411
    %v7413 = vand.u32 %v7412, 4294901760
    %v7414 = vsub.f32 %v7412, %v7413
    %v7415 = vand.u32 %v7414, 4294901760
    %7416 = vmatpush.msra.mxu0 %v7415
    %v7417 = vand.u32 %v6591, 4294901760
    %7418 = vmatmul.f32.gmra.mxu0 %v7417
    %v7419 = vpop.f32.mrf.mxu0
    %v7420 = vadd.f32 %v7319, %v7419
    %7421 = vdwg.mxu0
    %v7422 = vand.u32 %v130, 4294901760
    %v7423 = vsub.f32 %v130, %v7422
    %7424 = vmatpush.msra.mxu0 %v7423
    %v7425 = vand.u32 %v127, 4294901760
    %v7426 = vsub.f32 %v127, %v7425
    %7427 = vmatpush.msra.mxu0 %v7426
    %v7428 = vand.u32 %v124, 4294901760
    %v7429 = vsub.f32 %v124, %v7428
    %7430 = vmatpush.msra.mxu0 %v7429
    %v7431 = vand.u32 %v121, 4294901760
    %v7432 = vsub.f32 %v121, %v7431
    %7433 = vmatpush.msra.mxu0 %v7432
    %v7434 = vand.u32 %v118, 4294901760
    %v7435 = vsub.f32 %v118, %v7434
    %7436 = vmatpush.msra.mxu0 %v7435
    %v7437 = vand.u32 %v115, 4294901760
    %v7438 = vsub.f32 %v115, %v7437
    %7439 = vmatpush.msra.mxu0 %v7438
    %v7440 = vand.u32 %v112, 4294901760
    %v7441 = vsub.f32 %v112, %v7440
    %7442 = vmatpush.msra.mxu0 %v7441
    %v7443 = vand.u32 %v109, 4294901760
    %v7444 = vsub.f32 %v109, %v7443
    %7445 = vmatpush.msra.mxu0 %v7444
    %v7446 = vand.u32 %v106, 4294901760
    %v7447 = vsub.f32 %v106, %v7446
    %7448 = vmatpush.msra.mxu0 %v7447
    %v7449 = vand.u32 %v103, 4294901760
    %v7450 = vsub.f32 %v103, %v7449
    %7451 = vmatpush.msra.mxu0 %v7450
    %v7452 = vand.u32 %v100, 4294901760
    %v7453 = vsub.f32 %v100, %v7452
    %7454 = vmatpush.msra.mxu0 %v7453
    %v7455 = vand.u32 %v97, 4294901760
    %v7456 = vsub.f32 %v97, %v7455
    %7457 = vmatpush.msra.mxu0 %v7456
    %v7458 = vand.u32 %v94, 4294901760
    %v7459 = vsub.f32 %v94, %v7458
    %7460 = vmatpush.msra.mxu0 %v7459
    %v7461 = vand.u32 %v91, 4294901760
    %v7462 = vsub.f32 %v91, %v7461
    %7463 = vmatpush.msra.mxu0 %v7462
    %v7464 = vand.u32 %v88, 4294901760
    %v7465 = vsub.f32 %v88, %v7464
    %7466 = vmatpush.msra.mxu0 %v7465
    %v7467 = vand.u32 %v85, 4294901760
    %v7468 = vsub.f32 %v85, %v7467
    %7469 = vmatpush.msra.mxu0 %v7468
    %v7470 = vand.u32 %v6591, 4294901760
    %v7471 = vsub.f32 %v6591, %v7470
    %7472 = vmatmul.f32.gmra.mxu0 %v7471
    %v7473 = vpop.f32.mrf.mxu0
    %v7474 = vadd.f32 %v7420, %v7473
    %7475 = vdwg.mxu0
    %v7476 = vand.u32 %v130, 4294901760
    %7477 = vmatpush.msra.mxu0 %v7476
    %v7478 = vand.u32 %v127, 4294901760
    %7479 = vmatpush.msra.mxu0 %v7478
    %v7480 = vand.u32 %v124, 4294901760
    %7481 = vmatpush.msra.mxu0 %v7480
    %v7482 = vand.u32 %v121, 4294901760
    %7483 = vmatpush.msra.mxu0 %v7482
    %v7484 = vand.u32 %v118, 4294901760
    %7485 = vmatpush.msra.mxu0 %v7484
    %v7486 = vand.u32 %v115, 4294901760
    %7487 = vmatpush.msra.mxu0 %v7486
    %v7488 = vand.u32 %v112, 4294901760
    %7489 = vmatpush.msra.mxu0 %v7488
    %v7490 = vand.u32 %v109, 4294901760
    %7491 = vmatpush.msra.mxu0 %v7490
    %v7492 = vand.u32 %v106, 4294901760
    %7493 = vmatpush.msra.mxu0 %v7492
    %v7494 = vand.u32 %v103, 4294901760
    %7495 = vmatpush.msra.mxu0 %v7494
    %v7496 = vand.u32 %v100, 4294901760
    %7497 = vmatpush.msra.mxu0 %v7496
    %v7498 = vand.u32 %v97, 4294901760
    %7499 = vmatpush.msra.mxu0 %v7498
    %v7500 = vand.u32 %v94, 4294901760
    %7501 = vmatpush.msra.mxu0 %v7500
    %v7502 = vand.u32 %v91, 4294901760
    %7503 = vmatpush.msra.mxu0 %v7502
    %v7504 = vand.u32 %v88, 4294901760
    %7505 = vmatpush.msra.mxu0 %v7504
    %v7506 = vand.u32 %v85, 4294901760
    %7507 = vmatpush.msra.mxu0 %v7506
    %v7508 = vand.u32 %v6591, 4294901760
    %v7509 = vsub.f32 %v6591, %v7508
    %v7510 = vand.u32 %v7509, 4294901760
    %7511 = vmatmul.f32.gmra.mxu0 %v7510
    %v7512 = vpop.f32.mrf.mxu0
    %v7513 = vadd.f32 %v7474, %v7512
    %7514 = vdwg.mxu0
    %v7515 = vand.u32 %v130, 4294901760
    %v7516 = vsub.f32 %v130, %v7515
    %v7517 = vand.u32 %v7516, 4294901760
    %7518 = vmatpush.msra.mxu0 %v7517
    %v7519 = vand.u32 %v127, 4294901760
    %v7520 = vsub.f32 %v127, %v7519
    %v7521 = vand.u32 %v7520, 4294901760
    %7522 = vmatpush.msra.mxu0 %v7521
    %v7523 = vand.u32 %v124, 4294901760
    %v7524 = vsub.f32 %v124, %v7523
    %v7525 = vand.u32 %v7524, 4294901760
    %7526 = vmatpush.msra.mxu0 %v7525
    %v7527 = vand.u32 %v121, 4294901760
    %v7528 = vsub.f32 %v121, %v7527
    %v7529 = vand.u32 %v7528, 4294901760
    %7530 = vmatpush.msra.mxu0 %v7529
    %v7531 = vand.u32 %v118, 4294901760
    %v7532 = vsub.f32 %v118, %v7531
    %v7533 = vand.u32 %v7532, 4294901760
    %7534 = vmatpush.msra.mxu0 %v7533
    %v7535 = vand.u32 %v115, 4294901760
    %v7536 = vsub.f32 %v115, %v7535
    %v7537 = vand.u32 %v7536, 4294901760
    %7538 = vmatpush.msra.mxu0 %v7537
    %v7539 = vand.u32 %v112, 4294901760
    %v7540 = vsub.f32 %v112, %v7539
    %v7541 = vand.u32 %v7540, 4294901760
    %7542 = vmatpush.msra.mxu0 %v7541
    %v7543 = vand.u32 %v109, 4294901760
    %v7544 = vsub.f32 %v109, %v7543
    %v7545 = vand.u32 %v7544, 4294901760
    %7546 = vmatpush.msra.mxu0 %v7545
    %v7547 = vand.u32 %v106, 4294901760
    %v7548 = vsub.f32 %v106, %v7547
    %v7549 = vand.u32 %v7548, 4294901760
    %7550 = vmatpush.msra.mxu0 %v7549
    %v7551 = vand.u32 %v103, 4294901760
    %v7552 = vsub.f32 %v103, %v7551
    %v7553 = vand.u32 %v7552, 4294901760
    %7554 = vmatpush.msra.mxu0 %v7553
    %v7555 = vand.u32 %v100, 4294901760
    %v7556 = vsub.f32 %v100, %v7555
    %v7557 = vand.u32 %v7556, 4294901760
    %7558 = vmatpush.msra.mxu0 %v7557
    %v7559 = vand.u32 %v97, 4294901760
    %v7560 = vsub.f32 %v97, %v7559
    %v7561 = vand.u32 %v7560, 4294901760
    %7562 = vmatpush.msra.mxu0 %v7561
    %v7563 = vand.u32 %v94, 4294901760
    %v7564 = vsub.f32 %v94, %v7563
    %v7565 = vand.u32 %v7564, 4294901760
    %7566 = vmatpush.msra.mxu0 %v7565
    %v7567 = vand.u32 %v91, 4294901760
    %v7568 = vsub.f32 %v91, %v7567
    %v7569 = vand.u32 %v7568, 4294901760
    %7570 = vmatpush.msra.mxu0 %v7569
    %v7571 = vand.u32 %v88, 4294901760
    %v7572 = vsub.f32 %v88, %v7571
    %v7573 = vand.u32 %v7572, 4294901760
    %7574 = vmatpush.msra.mxu0 %v7573
    %v7575 = vand.u32 %v85, 4294901760
    %v7576 = vsub.f32 %v85, %v7575
    %v7577 = vand.u32 %v7576, 4294901760
    %7578 = vmatpush.msra.mxu0 %v7577
    %v7579 = vand.u32 %v6591, 4294901760
    %7580 = vmatmul.f32.gmra.mxu0 %v7579
    %v7581 = vpop.f32.mrf.mxu0
    %v7582 = vadd.f32 %v7513, %v7581
    %7583 = vdwg.mxu0
    %v7584 = vand.u32 %v130, 4294901760
    %7585 = vmatpush.msra.mxu0 %v7584
    %v7586 = vand.u32 %v127, 4294901760
    %7587 = vmatpush.msra.mxu0 %v7586
    %v7588 = vand.u32 %v124, 4294901760
    %7589 = vmatpush.msra.mxu0 %v7588
    %v7590 = vand.u32 %v121, 4294901760
    %7591 = vmatpush.msra.mxu0 %v7590
    %v7592 = vand.u32 %v118, 4294901760
    %7593 = vmatpush.msra.mxu0 %v7592
    %v7594 = vand.u32 %v115, 4294901760
    %7595 = vmatpush.msra.mxu0 %v7594
    %v7596 = vand.u32 %v112, 4294901760
    %7597 = vmatpush.msra.mxu0 %v7596
    %v7598 = vand.u32 %v109, 4294901760
    %7599 = vmatpush.msra.mxu0 %v7598
    %v7600 = vand.u32 %v106, 4294901760
    %7601 = vmatpush.msra.mxu0 %v7600
    %v7602 = vand.u32 %v103, 4294901760
    %7603 = vmatpush.msra.mxu0 %v7602
    %v7604 = vand.u32 %v100, 4294901760
    %7605 = vmatpush.msra.mxu0 %v7604
    %v7606 = vand.u32 %v97, 4294901760
    %7607 = vmatpush.msra.mxu0 %v7606
    %v7608 = vand.u32 %v94, 4294901760
    %7609 = vmatpush.msra.mxu0 %v7608
    %v7610 = vand.u32 %v91, 4294901760
    %7611 = vmatpush.msra.mxu0 %v7610
    %v7612 = vand.u32 %v88, 4294901760
    %7613 = vmatpush.msra.mxu0 %v7612
    %v7614 = vand.u32 %v85, 4294901760
    %7615 = vmatpush.msra.mxu0 %v7614
    %v7616 = vand.u32 %v6591, 4294901760
    %7617 = vmatmul.f32.gmra.mxu0 %v7616
    %v7618 = vpop.f32.mrf.mxu0
    %v7619 = vadd.f32 %v7582, %v7618
    %7620 = vdwg.mxu0
    %v7621 = vadd.f32 %v6595, %v6937
    %v7622 = vadd.f32 %v6596, %v7278
    %v7623 = vxor.u32 %v7621, 2147483648
    %v7624 = vxor.u32 %v7622, 2147483648
    %v7625 = vmul.f32 %v7623, 1.442695
    %v7626 = vpow.pop %v7625
    %v7627 = vmul.f32 %v7624, 1.442695
    %v7628 = vpow.pop %v7627
    %v7629 = vadd.f32 %v7626, 1.0
    %v7630 = vadd.f32 %v7628, 1.0
    %v7631 = vrcp.pop %v7629
    %v7632 = vmul.f32 %v7629, %v7631
    %v7633 = vsub.f32 1.0, %v7632
    %v7634 = vmul.f32 %v7631, %v7633
    %v7635 = vadd.f32 %v7631, %v7634
    %vm7636 = vweird.f32 %v7629
    %vm7637 = vweird.f32 %v7631
    %vm7638 = vmor %vm7636, %vm7637
    %v7639 = vsel %vm7638, %v7631, %v7635
    %v7640 = vand.u32 2147483647, %v7629
    %vm7641 = vcmp.eq.f32.partialorder %v7640, 8.507059e+37
    %v7642 = vand.u32 %v7629, 2147483648
    %v7643 = vor.u32 1.1754944e-38, %v7642
    %v7644 = vsel %vm7641, %v7643, %v7639
    %v7645 = vmul.f32 1.0, %v7644
    %v7646 = vrcp.pop %v7630
    %v7647 = vmul.f32 %v7630, %v7646
    %v7648 = vsub.f32 1.0, %v7647
    %v7649 = vmul.f32 %v7646, %v7648
    %v7650 = vadd.f32 %v7646, %v7649
    %vm7651 = vweird.f32 %v7630
    %vm7652 = vweird.f32 %v7646
    %vm7653 = vmor %vm7651, %vm7652
    %v7654 = vsel %vm7653, %v7646, %v7650
    %v7655 = vand.u32 2147483647, %v7630
    %vm7656 = vcmp.eq.f32.partialorder %v7655, 8.507059e+37
    %v7657 = vand.u32 %v7630, 2147483648
    %v7658 = vor.u32 1.1754944e-38, %v7657
    %v7659 = vsel %vm7656, %v7658, %v7654
    %v7660 = vmul.f32 1.0, %v7659
    %v7661 = vmul.f32 %v7645, %v7619
    %v7662 = vadd.f32 %v6597, %v7661
    %v7663 = vtanh.pop %v7662
    %v7664 = vsub.f32 1.0, %v7660
    %v7665 = vmul.f32 %v7664, %v7663
    %v7666 = vmul.f32 %v7660, %v6591
    %v7667 = vadd.f32 %v7665, %v7666
    %s7668 = scalar_lea.vmem [#allocation11], 48
    %7669 = vst [vmem:[%s7668] sm:$0xff] %v7667
    %s7670 = scalar_lea.vmem [#allocation3], 168
    %v7671 = vld [vmem:[%s7670] sm:$0xff]
    %v7672 = vld [vmem:[%s7670 + $0x8] sm:$0xff]
    %v7673 = vld [vmem:[%s7670 + $0x10] sm:$0xff]
    %v7674 = vand.u32 %v128, 4294901760
    %7675 = vmatpush.msra.mxu0 %v7674
    %v7676 = vand.u32 %v125, 4294901760
    %7677 = vmatpush.msra.mxu0 %v7676
    %v7678 = vand.u32 %v122, 4294901760
    %7679 = vmatpush.msra.mxu0 %v7678
    %v7680 = vand.u32 %v119, 4294901760
    %7681 = vmatpush.msra.mxu0 %v7680
    %v7682 = vand.u32 %v116, 4294901760
    %7683 = vmatpush.msra.mxu0 %v7682
    %v7684 = vand.u32 %v113, 4294901760
    %7685 = vmatpush.msra.mxu0 %v7684
    %v7686 = vand.u32 %v110, 4294901760
    %7687 = vmatpush.msra.mxu0 %v7686
    %v7688 = vand.u32 %v107, 4294901760
    %7689 = vmatpush.msra.mxu0 %v7688
    %v7690 = vand.u32 %v104, 4294901760
    %7691 = vmatpush.msra.mxu0 %v7690
    %v7692 = vand.u32 %v101, 4294901760
    %7693 = vmatpush.msra.mxu0 %v7692
    %v7694 = vand.u32 %v98, 4294901760
    %7695 = vmatpush.msra.mxu0 %v7694
    %v7696 = vand.u32 %v95, 4294901760
    %7697 = vmatpush.msra.mxu0 %v7696
    %v7698 = vand.u32 %v92, 4294901760
    %7699 = vmatpush.msra.mxu0 %v7698
    %v7700 = vand.u32 %v89, 4294901760
    %7701 = vmatpush.msra.mxu0 %v7700
    %v7702 = vand.u32 %v86, 4294901760
    %7703 = vmatpush.msra.mxu0 %v7702
    %v7704 = vand.u32 %v83, 4294901760
    %7705 = vmatpush.msra.mxu0 %v7704
    %v7706 = vand.u32 %v7667, 4294901760
    %v7707 = vsub.f32 %v7667, %v7706
    %v7708 = vand.u32 %v7707, 4294901760
    %v7709 = vsub.f32 %v7707, %v7708
    %v7710 = vand.u32 %v7709, 4294901760
    %7711 = vmatmul.f32.gmra.mxu0 %v7710
    %v7712 = vpop.f32.mrf.mxu0
    %v7713 = vadd.f32 %v137, %v7712
    %7714 = vdwg.mxu0
    %v7715 = vand.u32 %v128, 4294901760
    %v7716 = vsub.f32 %v128, %v7715
    %v7717 = vand.u32 %v7716, 4294901760
    %v7718 = vsub.f32 %v7716, %v7717
    %v7719 = vand.u32 %v7718, 4294901760
    %7720 = vmatpush.msra.mxu0 %v7719
    %v7721 = vand.u32 %v125, 4294901760
    %v7722 = vsub.f32 %v125, %v7721
    %v7723 = vand.u32 %v7722, 4294901760
    %v7724 = vsub.f32 %v7722, %v7723
    %v7725 = vand.u32 %v7724, 4294901760
    %7726 = vmatpush.msra.mxu0 %v7725
    %v7727 = vand.u32 %v122, 4294901760
    %v7728 = vsub.f32 %v122, %v7727
    %v7729 = vand.u32 %v7728, 4294901760
    %v7730 = vsub.f32 %v7728, %v7729
    %v7731 = vand.u32 %v7730, 4294901760
    %7732 = vmatpush.msra.mxu0 %v7731
    %v7733 = vand.u32 %v119, 4294901760
    %v7734 = vsub.f32 %v119, %v7733
    %v7735 = vand.u32 %v7734, 4294901760
    %v7736 = vsub.f32 %v7734, %v7735
    %v7737 = vand.u32 %v7736, 4294901760
    %7738 = vmatpush.msra.mxu0 %v7737
    %v7739 = vand.u32 %v116, 4294901760
    %v7740 = vsub.f32 %v116, %v7739
    %v7741 = vand.u32 %v7740, 4294901760
    %v7742 = vsub.f32 %v7740, %v7741
    %v7743 = vand.u32 %v7742, 4294901760
    %7744 = vmatpush.msra.mxu0 %v7743
    %v7745 = vand.u32 %v113, 4294901760
    %v7746 = vsub.f32 %v113, %v7745
    %v7747 = vand.u32 %v7746, 4294901760
    %v7748 = vsub.f32 %v7746, %v7747
    %v7749 = vand.u32 %v7748, 4294901760
    %7750 = vmatpush.msra.mxu0 %v7749
    %v7751 = vand.u32 %v110, 4294901760
    %v7752 = vsub.f32 %v110, %v7751
    %v7753 = vand.u32 %v7752, 4294901760
    %v7754 = vsub.f32 %v7752, %v7753
    %v7755 = vand.u32 %v7754, 4294901760
    %7756 = vmatpush.msra.mxu0 %v7755
    %v7757 = vand.u32 %v107, 4294901760
    %v7758 = vsub.f32 %v107, %v7757
    %v7759 = vand.u32 %v7758, 4294901760
    %v7760 = vsub.f32 %v7758, %v7759
    %v7761 = vand.u32 %v7760, 4294901760
    %7762 = vmatpush.msra.mxu0 %v7761
    %v7763 = vand.u32 %v104, 4294901760
    %v7764 = vsub.f32 %v104, %v7763
    %v7765 = vand.u32 %v7764, 4294901760
    %v7766 = vsub.f32 %v7764, %v7765
    %v7767 = vand.u32 %v7766, 4294901760
    %7768 = vmatpush.msra.mxu0 %v7767
    %v7769 = vand.u32 %v101, 4294901760
    %v7770 = vsub.f32 %v101, %v7769
    %v7771 = vand.u32 %v7770, 4294901760
    %v7772 = vsub.f32 %v7770, %v7771
    %v7773 = vand.u32 %v7772, 4294901760
    %7774 = vmatpush.msra.mxu0 %v7773
    %v7775 = vand.u32 %v98, 4294901760
    %v7776 = vsub.f32 %v98, %v7775
    %v7777 = vand.u32 %v7776, 4294901760
    %v7778 = vsub.f32 %v7776, %v7777
    %v7779 = vand.u32 %v7778, 4294901760
    %7780 = vmatpush.msra.mxu0 %v7779
    %v7781 = vand.u32 %v95, 4294901760
    %v7782 = vsub.f32 %v95, %v7781
    %v7783 = vand.u32 %v7782, 4294901760
    %v7784 = vsub.f32 %v7782, %v7783
    %v7785 = vand.u32 %v7784, 4294901760
    %7786 = vmatpush.msra.mxu0 %v7785
    %v7787 = vand.u32 %v92, 4294901760
    %v7788 = vsub.f32 %v92, %v7787
    %v7789 = vand.u32 %v7788, 4294901760
    %v7790 = vsub.f32 %v7788, %v7789
    %v7791 = vand.u32 %v7790, 4294901760
    %7792 = vmatpush.msra.mxu0 %v7791
    %v7793 = vand.u32 %v89, 4294901760
    %v7794 = vsub.f32 %v89, %v7793
    %v7795 = vand.u32 %v7794, 4294901760
    %v7796 = vsub.f32 %v7794, %v7795
    %v7797 = vand.u32 %v7796, 4294901760
    %7798 = vmatpush.msra.mxu0 %v7797
    %v7799 = vand.u32 %v86, 4294901760
    %v7800 = vsub.f32 %v86, %v7799
    %v7801 = vand.u32 %v7800, 4294901760
    %v7802 = vsub.f32 %v7800, %v7801
    %v7803 = vand.u32 %v7802, 4294901760
    %7804 = vmatpush.msra.mxu0 %v7803
    %v7805 = vand.u32 %v83, 4294901760
    %v7806 = vsub.f32 %v83, %v7805
    %v7807 = vand.u32 %v7806, 4294901760
    %v7808 = vsub.f32 %v7806, %v7807
    %v7809 = vand.u32 %v7808, 4294901760
    %7810 = vmatpush.msra.mxu0 %v7809
    %v7811 = vand.u32 %v7667, 4294901760
    %7812 = vmatmul.f32.gmra.mxu0 %v7811
    %v7813 = vpop.f32.mrf.mxu0
    %v7814 = vadd.f32 %v7713, %v7813
    %7815 = vdwg.mxu0
    %v7816 = vand.u32 %v128, 4294901760
    %v7817 = vsub.f32 %v128, %v7816
    %7818 = vmatpush.msra.mxu0 %v7817
    %v7819 = vand.u32 %v125, 4294901760
    %v7820 = vsub.f32 %v125, %v7819
    %7821 = vmatpush.msra.mxu0 %v7820
    %v7822 = vand.u32 %v122, 4294901760
    %v7823 = vsub.f32 %v122, %v7822
    %7824 = vmatpush.msra.mxu0 %v7823
    %v7825 = vand.u32 %v119, 4294901760
    %v7826 = vsub.f32 %v119, %v7825
    %7827 = vmatpush.msra.mxu0 %v7826
    %v7828 = vand.u32 %v116, 4294901760
    %v7829 = vsub.f32 %v116, %v7828
    %7830 = vmatpush.msra.mxu0 %v7829
    %v7831 = vand.u32 %v113, 4294901760
    %v7832 = vsub.f32 %v113, %v7831
    %7833 = vmatpush.msra.mxu0 %v7832
    %v7834 = vand.u32 %v110, 4294901760
    %v7835 = vsub.f32 %v110, %v7834
    %7836 = vmatpush.msra.mxu0 %v7835
    %v7837 = vand.u32 %v107, 4294901760
    %v7838 = vsub.f32 %v107, %v7837
    %7839 = vmatpush.msra.mxu0 %v7838
    %v7840 = vand.u32 %v104, 4294901760
    %v7841 = vsub.f32 %v104, %v7840
    %7842 = vmatpush.msra.mxu0 %v7841
    %v7843 = vand.u32 %v101, 4294901760
    %v7844 = vsub.f32 %v101, %v7843
    %7845 = vmatpush.msra.mxu0 %v7844
    %v7846 = vand.u32 %v98, 4294901760
    %v7847 = vsub.f32 %v98, %v7846
    %7848 = vmatpush.msra.mxu0 %v7847
    %v7849 = vand.u32 %v95, 4294901760
    %v7850 = vsub.f32 %v95, %v7849
    %7851 = vmatpush.msra.mxu0 %v7850
    %v7852 = vand.u32 %v92, 4294901760
    %v7853 = vsub.f32 %v92, %v7852
    %7854 = vmatpush.msra.mxu0 %v7853
    %v7855 = vand.u32 %v89, 4294901760
    %v7856 = vsub.f32 %v89, %v7855
    %7857 = vmatpush.msra.mxu0 %v7856
    %v7858 = vand.u32 %v86, 4294901760
    %v7859 = vsub.f32 %v86, %v7858
    %7860 = vmatpush.msra.mxu0 %v7859
    %v7861 = vand.u32 %v83, 4294901760
    %v7862 = vsub.f32 %v83, %v7861
    %7863 = vmatpush.msra.mxu0 %v7862
    %v7864 = vand.u32 %v7667, 4294901760
    %v7865 = vsub.f32 %v7667, %v7864
    %7866 = vmatmul.f32.gmra.mxu0 %v7865
    %v7867 = vpop.f32.mrf.mxu0
    %v7868 = vadd.f32 %v7814, %v7867
    %7869 = vdwg.mxu0
    %v7870 = vand.u32 %v128, 4294901760
    %7871 = vmatpush.msra.mxu0 %v7870
    %v7872 = vand.u32 %v125, 4294901760
    %7873 = vmatpush.msra.mxu0 %v7872
    %v7874 = vand.u32 %v122, 4294901760
    %7875 = vmatpush.msra.mxu0 %v7874
    %v7876 = vand.u32 %v119, 4294901760
    %7877 = vmatpush.msra.mxu0 %v7876
    %v7878 = vand.u32 %v116, 4294901760
    %7879 = vmatpush.msra.mxu0 %v7878
    %v7880 = vand.u32 %v113, 4294901760
    %7881 = vmatpush.msra.mxu0 %v7880
    %v7882 = vand.u32 %v110, 4294901760
    %7883 = vmatpush.msra.mxu0 %v7882
    %v7884 = vand.u32 %v107, 4294901760
    %7885 = vmatpush.msra.mxu0 %v7884
    %v7886 = vand.u32 %v104, 4294901760
    %7887 = vmatpush.msra.mxu0 %v7886
    %v7888 = vand.u32 %v101, 4294901760
    %7889 = vmatpush.msra.mxu0 %v7888
    %v7890 = vand.u32 %v98, 4294901760
    %7891 = vmatpush.msra.mxu0 %v7890
    %v7892 = vand.u32 %v95, 4294901760
    %7893 = vmatpush.msra.mxu0 %v7892
    %v7894 = vand.u32 %v92, 4294901760
    %7895 = vmatpush.msra.mxu0 %v7894
    %v7896 = vand.u32 %v89, 4294901760
    %7897 = vmatpush.msra.mxu0 %v7896
    %v7898 = vand.u32 %v86, 4294901760
    %7899 = vmatpush.msra.mxu0 %v7898
    %v7900 = vand.u32 %v83, 4294901760
    %7901 = vmatpush.msra.mxu0 %v7900
    %v7902 = vand.u32 %v7667, 4294901760
    %v7903 = vsub.f32 %v7667, %v7902
    %v7904 = vand.u32 %v7903, 4294901760
    %7905 = vmatmul.f32.gmra.mxu0 %v7904
    %v7906 = vpop.f32.mrf.mxu0
    %v7907 = vadd.f32 %v7868, %v7906
    %7908 = vdwg.mxu0
    %v7909 = vand.u32 %v128, 4294901760
    %v7910 = vsub.f32 %v128, %v7909
    %v7911 = vand.u32 %v7910, 4294901760
    %7912 = vmatpush.msra.mxu0 %v7911
    %v7913 = vand.u32 %v125, 4294901760
    %v7914 = vsub.f32 %v125, %v7913
    %v7915 = vand.u32 %v7914, 4294901760
    %7916 = vmatpush.msra.mxu0 %v7915
    %v7917 = vand.u32 %v122, 4294901760
    %v7918 = vsub.f32 %v122, %v7917
    %v7919 = vand.u32 %v7918, 4294901760
    %7920 = vmatpush.msra.mxu0 %v7919
    %v7921 = vand.u32 %v119, 4294901760
    %v7922 = vsub.f32 %v119, %v7921
    %v7923 = vand.u32 %v7922, 4294901760
    %7924 = vmatpush.msra.mxu0 %v7923
    %v7925 = vand.u32 %v116, 4294901760
    %v7926 = vsub.f32 %v116, %v7925
    %v7927 = vand.u32 %v7926, 4294901760
    %7928 = vmatpush.msra.mxu0 %v7927
    %v7929 = vand.u32 %v113, 4294901760
    %v7930 = vsub.f32 %v113, %v7929
    %v7931 = vand.u32 %v7930, 4294901760
    %7932 = vmatpush.msra.mxu0 %v7931
    %v7933 = vand.u32 %v110, 4294901760
    %v7934 = vsub.f32 %v110, %v7933
    %v7935 = vand.u32 %v7934, 4294901760
    %7936 = vmatpush.msra.mxu0 %v7935
    %v7937 = vand.u32 %v107, 4294901760
    %v7938 = vsub.f32 %v107, %v7937
    %v7939 = vand.u32 %v7938, 4294901760
    %7940 = vmatpush.msra.mxu0 %v7939
    %v7941 = vand.u32 %v104, 4294901760
    %v7942 = vsub.f32 %v104, %v7941
    %v7943 = vand.u32 %v7942, 4294901760
    %7944 = vmatpush.msra.mxu0 %v7943
    %v7945 = vand.u32 %v101, 4294901760
    %v7946 = vsub.f32 %v101, %v7945
    %v7947 = vand.u32 %v7946, 4294901760
    %7948 = vmatpush.msra.mxu0 %v7947
    %v7949 = vand.u32 %v98, 4294901760
    %v7950 = vsub.f32 %v98, %v7949
    %v7951 = vand.u32 %v7950, 4294901760
    %7952 = vmatpush.msra.mxu0 %v7951
    %v7953 = vand.u32 %v95, 4294901760
    %v7954 = vsub.f32 %v95, %v7953
    %v7955 = vand.u32 %v7954, 4294901760
    %7956 = vmatpush.msra.mxu0 %v7955
    %v7957 = vand.u32 %v92, 4294901760
    %v7958 = vsub.f32 %v92, %v7957
    %v7959 = vand.u32 %v7958, 4294901760
    %7960 = vmatpush.msra.mxu0 %v7959
    %v7961 = vand.u32 %v89, 4294901760
    %v7962 = vsub.f32 %v89, %v7961
    %v7963 = vand.u32 %v7962, 4294901760
    %7964 = vmatpush.msra.mxu0 %v7963
    %v7965 = vand.u32 %v86, 4294901760
    %v7966 = vsub.f32 %v86, %v7965
    %v7967 = vand.u32 %v7966, 4294901760
    %7968 = vmatpush.msra.mxu0 %v7967
    %v7969 = vand.u32 %v83, 4294901760
    %v7970 = vsub.f32 %v83, %v7969
    %v7971 = vand.u32 %v7970, 4294901760
    %7972 = vmatpush.msra.mxu0 %v7971
    %v7973 = vand.u32 %v7667, 4294901760
    %7974 = vmatmul.f32.gmra.mxu0 %v7973
    %v7975 = vpop.f32.mrf.mxu0
    %v7976 = vadd.f32 %v7907, %v7975
    %7977 = vdwg.mxu0
    %v7978 = vand.u32 %v128, 4294901760
    %7979 = vmatpush.msra.mxu0 %v7978
    %v7980 = vand.u32 %v125, 4294901760
    %7981 = vmatpush.msra.mxu0 %v7980
    %v7982 = vand.u32 %v122, 4294901760
    %7983 = vmatpush.msra.mxu0 %v7982
    %v7984 = vand.u32 %v119, 4294901760
    %7985 = vmatpush.msra.mxu0 %v7984
    %v7986 = vand.u32 %v116, 4294901760
    %7987 = vmatpush.msra.mxu0 %v7986
    %v7988 = vand.u32 %v113, 4294901760
    %7989 = vmatpush.msra.mxu0 %v7988
    %v7990 = vand.u32 %v110, 4294901760
    %7991 = vmatpush.msra.mxu0 %v7990
    %v7992 = vand.u32 %v107, 4294901760
    %7993 = vmatpush.msra.mxu0 %v7992
    %v7994 = vand.u32 %v104, 4294901760
    %7995 = vmatpush.msra.mxu0 %v7994
    %v7996 = vand.u32 %v101, 4294901760
    %7997 = vmatpush.msra.mxu0 %v7996
    %v7998 = vand.u32 %v98, 4294901760
    %7999 = vmatpush.msra.mxu0 %v7998
    %v8000 = vand.u32 %v95, 4294901760
    %8001 = vmatpush.msra.mxu0 %v8000
    %v8002 = vand.u32 %v92, 4294901760
    %8003 = vmatpush.msra.mxu0 %v8002
    %v8004 = vand.u32 %v89, 4294901760
    %8005 = vmatpush.msra.mxu0 %v8004
    %v8006 = vand.u32 %v86, 4294901760
    %8007 = vmatpush.msra.mxu0 %v8006
    %v8008 = vand.u32 %v83, 4294901760
    %8009 = vmatpush.msra.mxu0 %v8008
    %v8010 = vand.u32 %v7667, 4294901760
    %8011 = vmatmul.f32.gmra.mxu0 %v8010
    %v8012 = vpop.f32.mrf.mxu0
    %v8013 = vadd.f32 %v7976, %v8012
    %8014 = vdwg.mxu0
    %v8015 = vand.u32 %v129, 4294901760
    %8016 = vmatpush.msra.mxu0 %v8015
    %v8017 = vand.u32 %v126, 4294901760
    %8018 = vmatpush.msra.mxu0 %v8017
    %v8019 = vand.u32 %v123, 4294901760
    %8020 = vmatpush.msra.mxu0 %v8019
    %v8021 = vand.u32 %v120, 4294901760
    %8022 = vmatpush.msra.mxu0 %v8021
    %v8023 = vand.u32 %v117, 4294901760
    %8024 = vmatpush.msra.mxu0 %v8023
    %v8025 = vand.u32 %v114, 4294901760
    %8026 = vmatpush.msra.mxu0 %v8025
    %v8027 = vand.u32 %v111, 4294901760
    %8028 = vmatpush.msra.mxu0 %v8027
    %v8029 = vand.u32 %v108, 4294901760
    %8030 = vmatpush.msra.mxu0 %v8029
    %v8031 = vand.u32 %v105, 4294901760
    %8032 = vmatpush.msra.mxu0 %v8031
    %v8033 = vand.u32 %v102, 4294901760
    %8034 = vmatpush.msra.mxu0 %v8033
    %v8035 = vand.u32 %v99, 4294901760
    %8036 = vmatpush.msra.mxu0 %v8035
    %v8037 = vand.u32 %v96, 4294901760
    %8038 = vmatpush.msra.mxu0 %v8037
    %v8039 = vand.u32 %v93, 4294901760
    %8040 = vmatpush.msra.mxu0 %v8039
    %v8041 = vand.u32 %v90, 4294901760
    %8042 = vmatpush.msra.mxu0 %v8041
    %v8043 = vand.u32 %v87, 4294901760
    %8044 = vmatpush.msra.mxu0 %v8043
    %v8045 = vand.u32 %v84, 4294901760
    %8046 = vmatpush.msra.mxu0 %v8045
    %v8047 = vand.u32 %v7667, 4294901760
    %v8048 = vsub.f32 %v7667, %v8047
    %v8049 = vand.u32 %v8048, 4294901760
    %v8050 = vsub.f32 %v8048, %v8049
    %v8051 = vand.u32 %v8050, 4294901760
    %8052 = vmatmul.f32.gmra.mxu0 %v8051
    %v8053 = vpop.f32.mrf.mxu0
    %v8054 = vadd.f32 %v138, %v8053
    %8055 = vdwg.mxu0
    %v8056 = vand.u32 %v129, 4294901760
    %v8057 = vsub.f32 %v129, %v8056
    %v8058 = vand.u32 %v8057, 4294901760
    %v8059 = vsub.f32 %v8057, %v8058
    %v8060 = vand.u32 %v8059, 4294901760
    %8061 = vmatpush.msra.mxu0 %v8060
    %v8062 = vand.u32 %v126, 4294901760
    %v8063 = vsub.f32 %v126, %v8062
    %v8064 = vand.u32 %v8063, 4294901760
    %v8065 = vsub.f32 %v8063, %v8064
    %v8066 = vand.u32 %v8065, 4294901760
    %8067 = vmatpush.msra.mxu0 %v8066
    %v8068 = vand.u32 %v123, 4294901760
    %v8069 = vsub.f32 %v123, %v8068
    %v8070 = vand.u32 %v8069, 4294901760
    %v8071 = vsub.f32 %v8069, %v8070
    %v8072 = vand.u32 %v8071, 4294901760
    %8073 = vmatpush.msra.mxu0 %v8072
    %v8074 = vand.u32 %v120, 4294901760
    %v8075 = vsub.f32 %v120, %v8074
    %v8076 = vand.u32 %v8075, 4294901760
    %v8077 = vsub.f32 %v8075, %v8076
    %v8078 = vand.u32 %v8077, 4294901760
    %8079 = vmatpush.msra.mxu0 %v8078
    %v8080 = vand.u32 %v117, 4294901760
    %v8081 = vsub.f32 %v117, %v8080
    %v8082 = vand.u32 %v8081, 4294901760
    %v8083 = vsub.f32 %v8081, %v8082
    %v8084 = vand.u32 %v8083, 4294901760
    %8085 = vmatpush.msra.mxu0 %v8084
    %v8086 = vand.u32 %v114, 4294901760
    %v8087 = vsub.f32 %v114, %v8086
    %v8088 = vand.u32 %v8087, 4294901760
    %v8089 = vsub.f32 %v8087, %v8088
    %v8090 = vand.u32 %v8089, 4294901760
    %8091 = vmatpush.msra.mxu0 %v8090
    %v8092 = vand.u32 %v111, 4294901760
    %v8093 = vsub.f32 %v111, %v8092
    %v8094 = vand.u32 %v8093, 4294901760
    %v8095 = vsub.f32 %v8093, %v8094
    %v8096 = vand.u32 %v8095, 4294901760
    %8097 = vmatpush.msra.mxu0 %v8096
    %v8098 = vand.u32 %v108, 4294901760
    %v8099 = vsub.f32 %v108, %v8098
    %v8100 = vand.u32 %v8099, 4294901760
    %v8101 = vsub.f32 %v8099, %v8100
    %v8102 = vand.u32 %v8101, 4294901760
    %8103 = vmatpush.msra.mxu0 %v8102
    %v8104 = vand.u32 %v105, 4294901760
    %v8105 = vsub.f32 %v105, %v8104
    %v8106 = vand.u32 %v8105, 4294901760
    %v8107 = vsub.f32 %v8105, %v8106
    %v8108 = vand.u32 %v8107, 4294901760
    %8109 = vmatpush.msra.mxu0 %v8108
    %v8110 = vand.u32 %v102, 4294901760
    %v8111 = vsub.f32 %v102, %v8110
    %v8112 = vand.u32 %v8111, 4294901760
    %v8113 = vsub.f32 %v8111, %v8112
    %v8114 = vand.u32 %v8113, 4294901760
    %8115 = vmatpush.msra.mxu0 %v8114
    %v8116 = vand.u32 %v99, 4294901760
    %v8117 = vsub.f32 %v99, %v8116
    %v8118 = vand.u32 %v8117, 4294901760
    %v8119 = vsub.f32 %v8117, %v8118
    %v8120 = vand.u32 %v8119, 4294901760
    %8121 = vmatpush.msra.mxu0 %v8120
    %v8122 = vand.u32 %v96, 4294901760
    %v8123 = vsub.f32 %v96, %v8122
    %v8124 = vand.u32 %v8123, 4294901760
    %v8125 = vsub.f32 %v8123, %v8124
    %v8126 = vand.u32 %v8125, 4294901760
    %8127 = vmatpush.msra.mxu0 %v8126
    %v8128 = vand.u32 %v93, 4294901760
    %v8129 = vsub.f32 %v93, %v8128
    %v8130 = vand.u32 %v8129, 4294901760
    %v8131 = vsub.f32 %v8129, %v8130
    %v8132 = vand.u32 %v8131, 4294901760
    %8133 = vmatpush.msra.mxu0 %v8132
    %v8134 = vand.u32 %v90, 4294901760
    %v8135 = vsub.f32 %v90, %v8134
    %v8136 = vand.u32 %v8135, 4294901760
    %v8137 = vsub.f32 %v8135, %v8136
    %v8138 = vand.u32 %v8137, 4294901760
    %8139 = vmatpush.msra.mxu0 %v8138
    %v8140 = vand.u32 %v87, 4294901760
    %v8141 = vsub.f32 %v87, %v8140
    %v8142 = vand.u32 %v8141, 4294901760
    %v8143 = vsub.f32 %v8141, %v8142
    %v8144 = vand.u32 %v8143, 4294901760
    %8145 = vmatpush.msra.mxu0 %v8144
    %v8146 = vand.u32 %v84, 4294901760
    %v8147 = vsub.f32 %v84, %v8146
    %v8148 = vand.u32 %v8147, 4294901760
    %v8149 = vsub.f32 %v8147, %v8148
    %v8150 = vand.u32 %v8149, 4294901760
    %8151 = vmatpush.msra.mxu0 %v8150
    %v8152 = vand.u32 %v7667, 4294901760
    %8153 = vmatmul.f32.gmra.mxu0 %v8152
    %v8154 = vpop.f32.mrf.mxu0
    %v8155 = vadd.f32 %v8054, %v8154
    %8156 = vdwg.mxu0
    %v8157 = vand.u32 %v129, 4294901760
    %v8158 = vsub.f32 %v129, %v8157
    %8159 = vmatpush.msra.mxu0 %v8158
    %v8160 = vand.u32 %v126, 4294901760
    %v8161 = vsub.f32 %v126, %v8160
    %8162 = vmatpush.msra.mxu0 %v8161
    %v8163 = vand.u32 %v123, 4294901760
    %v8164 = vsub.f32 %v123, %v8163
    %8165 = vmatpush.msra.mxu0 %v8164
    %v8166 = vand.u32 %v120, 4294901760
    %v8167 = vsub.f32 %v120, %v8166
    %8168 = vmatpush.msra.mxu0 %v8167
    %v8169 = vand.u32 %v117, 4294901760
    %v8170 = vsub.f32 %v117, %v8169
    %8171 = vmatpush.msra.mxu0 %v8170
    %v8172 = vand.u32 %v114, 4294901760
    %v8173 = vsub.f32 %v114, %v8172
    %8174 = vmatpush.msra.mxu0 %v8173
    %v8175 = vand.u32 %v111, 4294901760
    %v8176 = vsub.f32 %v111, %v8175
    %8177 = vmatpush.msra.mxu0 %v8176
    %v8178 = vand.u32 %v108, 4294901760
    %v8179 = vsub.f32 %v108, %v8178
    %8180 = vmatpush.msra.mxu0 %v8179
    %v8181 = vand.u32 %v105, 4294901760
    %v8182 = vsub.f32 %v105, %v8181
    %8183 = vmatpush.msra.mxu0 %v8182
    %v8184 = vand.u32 %v102, 4294901760
    %v8185 = vsub.f32 %v102, %v8184
    %8186 = vmatpush.msra.mxu0 %v8185
    %v8187 = vand.u32 %v99, 4294901760
    %v8188 = vsub.f32 %v99, %v8187
    %8189 = vmatpush.msra.mxu0 %v8188
    %v8190 = vand.u32 %v96, 4294901760
    %v8191 = vsub.f32 %v96, %v8190
    %8192 = vmatpush.msra.mxu0 %v8191
    %v8193 = vand.u32 %v93, 4294901760
    %v8194 = vsub.f32 %v93, %v8193
    %8195 = vmatpush.msra.mxu0 %v8194
    %v8196 = vand.u32 %v90, 4294901760
    %v8197 = vsub.f32 %v90, %v8196
    %8198 = vmatpush.msra.mxu0 %v8197
    %v8199 = vand.u32 %v87, 4294901760
    %v8200 = vsub.f32 %v87, %v8199
    %8201 = vmatpush.msra.mxu0 %v8200
    %v8202 = vand.u32 %v84, 4294901760
    %v8203 = vsub.f32 %v84, %v8202
    %8204 = vmatpush.msra.mxu0 %v8203
    %v8205 = vand.u32 %v7667, 4294901760
    %v8206 = vsub.f32 %v7667, %v8205
    %8207 = vmatmul.f32.gmra.mxu0 %v8206
    %v8208 = vpop.f32.mrf.mxu0
    %v8209 = vadd.f32 %v8155, %v8208
    %8210 = vdwg.mxu0
    %v8211 = vand.u32 %v129, 4294901760
    %8212 = vmatpush.msra.mxu0 %v8211
    %v8213 = vand.u32 %v126, 4294901760
    %8214 = vmatpush.msra.mxu0 %v8213
    %v8215 = vand.u32 %v123, 4294901760
    %8216 = vmatpush.msra.mxu0 %v8215
    %v8217 = vand.u32 %v120, 4294901760
    %8218 = vmatpush.msra.mxu0 %v8217
    %v8219 = vand.u32 %v117, 4294901760
    %8220 = vmatpush.msra.mxu0 %v8219
    %v8221 = vand.u32 %v114, 4294901760
    %8222 = vmatpush.msra.mxu0 %v8221
    %v8223 = vand.u32 %v111, 4294901760
    %8224 = vmatpush.msra.mxu0 %v8223
    %v8225 = vand.u32 %v108, 4294901760
    %8226 = vmatpush.msra.mxu0 %v8225
    %v8227 = vand.u32 %v105, 4294901760
    %8228 = vmatpush.msra.mxu0 %v8227
    %v8229 = vand.u32 %v102, 4294901760
    %8230 = vmatpush.msra.mxu0 %v8229
    %v8231 = vand.u32 %v99, 4294901760
    %8232 = vmatpush.msra.mxu0 %v8231
    %v8233 = vand.u32 %v96, 4294901760
    %8234 = vmatpush.msra.mxu0 %v8233
    %v8235 = vand.u32 %v93, 4294901760
    %8236 = vmatpush.msra.mxu0 %v8235
    %v8237 = vand.u32 %v90, 4294901760
    %8238 = vmatpush.msra.mxu0 %v8237
    %v8239 = vand.u32 %v87, 4294901760
    %8240 = vmatpush.msra.mxu0 %v8239
    %v8241 = vand.u32 %v84, 4294901760
    %8242 = vmatpush.msra.mxu0 %v8241
    %v8243 = vand.u32 %v7667, 4294901760
    %v8244 = vsub.f32 %v7667, %v8243
    %v8245 = vand.u32 %v8244, 4294901760
    %8246 = vmatmul.f32.gmra.mxu0 %v8245
    %v8247 = vpop.f32.mrf.mxu0
    %v8248 = vadd.f32 %v8209, %v8247
    %8249 = vdwg.mxu0
    %v8250 = vand.u32 %v129, 4294901760
    %v8251 = vsub.f32 %v129, %v8250
    %v8252 = vand.u32 %v8251, 4294901760
    %8253 = vmatpush.msra.mxu0 %v8252
    %v8254 = vand.u32 %v126, 4294901760
    %v8255 = vsub.f32 %v126, %v8254
    %v8256 = vand.u32 %v8255, 4294901760
    %8257 = vmatpush.msra.mxu0 %v8256
    %v8258 = vand.u32 %v123, 4294901760
    %v8259 = vsub.f32 %v123, %v8258
    %v8260 = vand.u32 %v8259, 4294901760
    %8261 = vmatpush.msra.mxu0 %v8260
    %v8262 = vand.u32 %v120, 4294901760
    %v8263 = vsub.f32 %v120, %v8262
    %v8264 = vand.u32 %v8263, 4294901760
    %8265 = vmatpush.msra.mxu0 %v8264
    %v8266 = vand.u32 %v117, 4294901760
    %v8267 = vsub.f32 %v117, %v8266
    %v8268 = vand.u32 %v8267, 4294901760
    %8269 = vmatpush.msra.mxu0 %v8268
    %v8270 = vand.u32 %v114, 4294901760
    %v8271 = vsub.f32 %v114, %v8270
    %v8272 = vand.u32 %v8271, 4294901760
    %8273 = vmatpush.msra.mxu0 %v8272
    %v8274 = vand.u32 %v111, 4294901760
    %v8275 = vsub.f32 %v111, %v8274
    %v8276 = vand.u32 %v8275, 4294901760
    %8277 = vmatpush.msra.mxu0 %v8276
    %v8278 = vand.u32 %v108, 4294901760
    %v8279 = vsub.f32 %v108, %v8278
    %v8280 = vand.u32 %v8279, 4294901760
    %8281 = vmatpush.msra.mxu0 %v8280
    %v8282 = vand.u32 %v105, 4294901760
    %v8283 = vsub.f32 %v105, %v8282
    %v8284 = vand.u32 %v8283, 4294901760
    %8285 = vmatpush.msra.mxu0 %v8284
    %v8286 = vand.u32 %v102, 4294901760
    %v8287 = vsub.f32 %v102, %v8286
    %v8288 = vand.u32 %v8287, 4294901760
    %8289 = vmatpush.msra.mxu0 %v8288
    %v8290 = vand.u32 %v99, 4294901760
    %v8291 = vsub.f32 %v99, %v8290
    %v8292 = vand.u32 %v8291, 4294901760
    %8293 = vmatpush.msra.mxu0 %v8292
    %v8294 = vand.u32 %v96, 4294901760
    %v8295 = vsub.f32 %v96, %v8294
    %v8296 = vand.u32 %v8295, 4294901760
    %8297 = vmatpush.msra.mxu0 %v8296
    %v8298 = vand.u32 %v93, 4294901760
    %v8299 = vsub.f32 %v93, %v8298
    %v8300 = vand.u32 %v8299, 4294901760
    %8301 = vmatpush.msra.mxu0 %v8300
    %v8302 = vand.u32 %v90, 4294901760
    %v8303 = vsub.f32 %v90, %v8302
    %v8304 = vand.u32 %v8303, 4294901760
    %8305 = vmatpush.msra.mxu0 %v8304
    %v8306 = vand.u32 %v87, 4294901760
    %v8307 = vsub.f32 %v87, %v8306
    %v8308 = vand.u32 %v8307, 4294901760
    %8309 = vmatpush.msra.mxu0 %v8308
    %v8310 = vand.u32 %v84, 4294901760
    %v8311 = vsub.f32 %v84, %v8310
    %v8312 = vand.u32 %v8311, 4294901760
    %8313 = vmatpush.msra.mxu0 %v8312
    %v8314 = vand.u32 %v7667, 4294901760
    %8315 = vmatmul.f32.gmra.mxu0 %v8314
    %v8316 = vpop.f32.mrf.mxu0
    %v8317 = vadd.f32 %v8248, %v8316
    %8318 = vdwg.mxu0
    %v8319 = vand.u32 %v129, 4294901760
    %8320 = vmatpush.msra.mxu0 %v8319
    %v8321 = vand.u32 %v126, 4294901760
    %8322 = vmatpush.msra.mxu0 %v8321
    %v8323 = vand.u32 %v123, 4294901760
    %8324 = vmatpush.msra.mxu0 %v8323
    %v8325 = vand.u32 %v120, 4294901760
    %8326 = vmatpush.msra.mxu0 %v8325
    %v8327 = vand.u32 %v117, 4294901760
    %8328 = vmatpush.msra.mxu0 %v8327
    %v8329 = vand.u32 %v114, 4294901760
    %8330 = vmatpush.msra.mxu0 %v8329
    %v8331 = vand.u32 %v111, 4294901760
    %8332 = vmatpush.msra.mxu0 %v8331
    %v8333 = vand.u32 %v108, 4294901760
    %8334 = vmatpush.msra.mxu0 %v8333
    %v8335 = vand.u32 %v105, 4294901760
    %8336 = vmatpush.msra.mxu0 %v8335
    %v8337 = vand.u32 %v102, 4294901760
    %8338 = vmatpush.msra.mxu0 %v8337
    %v8339 = vand.u32 %v99, 4294901760
    %8340 = vmatpush.msra.mxu0 %v8339
    %v8341 = vand.u32 %v96, 4294901760
    %8342 = vmatpush.msra.mxu0 %v8341
    %v8343 = vand.u32 %v93, 4294901760
    %8344 = vmatpush.msra.mxu0 %v8343
    %v8345 = vand.u32 %v90, 4294901760
    %8346 = vmatpush.msra.mxu0 %v8345
    %v8347 = vand.u32 %v87, 4294901760
    %8348 = vmatpush.msra.mxu0 %v8347
    %v8349 = vand.u32 %v84, 4294901760
    %8350 = vmatpush.msra.mxu0 %v8349
    %v8351 = vand.u32 %v7667, 4294901760
    %8352 = vmatmul.f32.gmra.mxu0 %v8351
    %v8353 = vpop.f32.mrf.mxu0
    %v8354 = vadd.f32 %v8317, %v8353
    %8355 = vdwg.mxu0
    %v8356 = vand.u32 %v130, 4294901760
    %8357 = vmatpush.msra.mxu0 %v8356
    %v8358 = vand.u32 %v127, 4294901760
    %8359 = vmatpush.msra.mxu0 %v8358
    %v8360 = vand.u32 %v124, 4294901760
    %8361 = vmatpush.msra.mxu0 %v8360
    %v8362 = vand.u32 %v121, 4294901760
    %8363 = vmatpush.msra.mxu0 %v8362
    %v8364 = vand.u32 %v118, 4294901760
    %8365 = vmatpush.msra.mxu0 %v8364
    %v8366 = vand.u32 %v115, 4294901760
    %8367 = vmatpush.msra.mxu0 %v8366
    %v8368 = vand.u32 %v112, 4294901760
    %8369 = vmatpush.msra.mxu0 %v8368
    %v8370 = vand.u32 %v109, 4294901760
    %8371 = vmatpush.msra.mxu0 %v8370
    %v8372 = vand.u32 %v106, 4294901760
    %8373 = vmatpush.msra.mxu0 %v8372
    %v8374 = vand.u32 %v103, 4294901760
    %8375 = vmatpush.msra.mxu0 %v8374
    %v8376 = vand.u32 %v100, 4294901760
    %8377 = vmatpush.msra.mxu0 %v8376
    %v8378 = vand.u32 %v97, 4294901760
    %8379 = vmatpush.msra.mxu0 %v8378
    %v8380 = vand.u32 %v94, 4294901760
    %8381 = vmatpush.msra.mxu0 %v8380
    %v8382 = vand.u32 %v91, 4294901760
    %8383 = vmatpush.msra.mxu0 %v8382
    %v8384 = vand.u32 %v88, 4294901760
    %8385 = vmatpush.msra.mxu0 %v8384
    %v8386 = vand.u32 %v85, 4294901760
    %8387 = vmatpush.msra.mxu0 %v8386
    %v8388 = vand.u32 %v7667, 4294901760
    %v8389 = vsub.f32 %v7667, %v8388
    %v8390 = vand.u32 %v8389, 4294901760
    %v8391 = vsub.f32 %v8389, %v8390
    %v8392 = vand.u32 %v8391, 4294901760
    %8393 = vmatmul.f32.gmra.mxu0 %v8392
    %v8394 = vpop.f32.mrf.mxu0
    %v8395 = vadd.f32 %v139, %v8394
    %8396 = vdwg.mxu0
    %v8397 = vand.u32 %v130, 4294901760
    %v8398 = vsub.f32 %v130, %v8397
    %v8399 = vand.u32 %v8398, 4294901760
    %v8400 = vsub.f32 %v8398, %v8399
    %v8401 = vand.u32 %v8400, 4294901760
    %8402 = vmatpush.msra.mxu0 %v8401
    %v8403 = vand.u32 %v127, 4294901760
    %v8404 = vsub.f32 %v127, %v8403
    %v8405 = vand.u32 %v8404, 4294901760
    %v8406 = vsub.f32 %v8404, %v8405
    %v8407 = vand.u32 %v8406, 4294901760
    %8408 = vmatpush.msra.mxu0 %v8407
    %v8409 = vand.u32 %v124, 4294901760
    %v8410 = vsub.f32 %v124, %v8409
    %v8411 = vand.u32 %v8410, 4294901760
    %v8412 = vsub.f32 %v8410, %v8411
    %v8413 = vand.u32 %v8412, 4294901760
    %8414 = vmatpush.msra.mxu0 %v8413
    %v8415 = vand.u32 %v121, 4294901760
    %v8416 = vsub.f32 %v121, %v8415
    %v8417 = vand.u32 %v8416, 4294901760
    %v8418 = vsub.f32 %v8416, %v8417
    %v8419 = vand.u32 %v8418, 4294901760
    %8420 = vmatpush.msra.mxu0 %v8419
    %v8421 = vand.u32 %v118, 4294901760
    %v8422 = vsub.f32 %v118, %v8421
    %v8423 = vand.u32 %v8422, 4294901760
    %v8424 = vsub.f32 %v8422, %v8423
    %v8425 = vand.u32 %v8424, 4294901760
    %8426 = vmatpush.msra.mxu0 %v8425
    %v8427 = vand.u32 %v115, 4294901760
    %v8428 = vsub.f32 %v115, %v8427
    %v8429 = vand.u32 %v8428, 4294901760
    %v8430 = vsub.f32 %v8428, %v8429
    %v8431 = vand.u32 %v8430, 4294901760
    %8432 = vmatpush.msra.mxu0 %v8431
    %v8433 = vand.u32 %v112, 4294901760
    %v8434 = vsub.f32 %v112, %v8433
    %v8435 = vand.u32 %v8434, 4294901760
    %v8436 = vsub.f32 %v8434, %v8435
    %v8437 = vand.u32 %v8436, 4294901760
    %8438 = vmatpush.msra.mxu0 %v8437
    %v8439 = vand.u32 %v109, 4294901760
    %v8440 = vsub.f32 %v109, %v8439
    %v8441 = vand.u32 %v8440, 4294901760
    %v8442 = vsub.f32 %v8440, %v8441
    %v8443 = vand.u32 %v8442, 4294901760
    %8444 = vmatpush.msra.mxu0 %v8443
    %v8445 = vand.u32 %v106, 4294901760
    %v8446 = vsub.f32 %v106, %v8445
    %v8447 = vand.u32 %v8446, 4294901760
    %v8448 = vsub.f32 %v8446, %v8447
    %v8449 = vand.u32 %v8448, 4294901760
    %8450 = vmatpush.msra.mxu0 %v8449
    %v8451 = vand.u32 %v103, 4294901760
    %v8452 = vsub.f32 %v103, %v8451
    %v8453 = vand.u32 %v8452, 4294901760
    %v8454 = vsub.f32 %v8452, %v8453
    %v8455 = vand.u32 %v8454, 4294901760
    %8456 = vmatpush.msra.mxu0 %v8455
    %v8457 = vand.u32 %v100, 4294901760
    %v8458 = vsub.f32 %v100, %v8457
    %v8459 = vand.u32 %v8458, 4294901760
    %v8460 = vsub.f32 %v8458, %v8459
    %v8461 = vand.u32 %v8460, 4294901760
    %8462 = vmatpush.msra.mxu0 %v8461
    %v8463 = vand.u32 %v97, 4294901760
    %v8464 = vsub.f32 %v97, %v8463
    %v8465 = vand.u32 %v8464, 4294901760
    %v8466 = vsub.f32 %v8464, %v8465
    %v8467 = vand.u32 %v8466, 4294901760
    %8468 = vmatpush.msra.mxu0 %v8467
    %v8469 = vand.u32 %v94, 4294901760
    %v8470 = vsub.f32 %v94, %v8469
    %v8471 = vand.u32 %v8470, 4294901760
    %v8472 = vsub.f32 %v8470, %v8471
    %v8473 = vand.u32 %v8472, 4294901760
    %8474 = vmatpush.msra.mxu0 %v8473
    %v8475 = vand.u32 %v91, 4294901760
    %v8476 = vsub.f32 %v91, %v8475
    %v8477 = vand.u32 %v8476, 4294901760
    %v8478 = vsub.f32 %v8476, %v8477
    %v8479 = vand.u32 %v8478, 4294901760
    %8480 = vmatpush.msra.mxu0 %v8479
    %v8481 = vand.u32 %v88, 4294901760
    %v8482 = vsub.f32 %v88, %v8481
    %v8483 = vand.u32 %v8482, 4294901760
    %v8484 = vsub.f32 %v8482, %v8483
    %v8485 = vand.u32 %v8484, 4294901760
    %8486 = vmatpush.msra.mxu0 %v8485
    %v8487 = vand.u32 %v85, 4294901760
    %v8488 = vsub.f32 %v85, %v8487
    %v8489 = vand.u32 %v8488, 4294901760
    %v8490 = vsub.f32 %v8488, %v8489
    %v8491 = vand.u32 %v8490, 4294901760
    %8492 = vmatpush.msra.mxu0 %v8491
    %v8493 = vand.u32 %v7667, 4294901760
    %8494 = vmatmul.f32.gmra.mxu0 %v8493
    %v8495 = vpop.f32.mrf.mxu0
    %v8496 = vadd.f32 %v8395, %v8495
    %8497 = vdwg.mxu0
    %v8498 = vand.u32 %v130, 4294901760
    %v8499 = vsub.f32 %v130, %v8498
    %8500 = vmatpush.msra.mxu0 %v8499
    %v8501 = vand.u32 %v127, 4294901760
    %v8502 = vsub.f32 %v127, %v8501
    %8503 = vmatpush.msra.mxu0 %v8502
    %v8504 = vand.u32 %v124, 4294901760
    %v8505 = vsub.f32 %v124, %v8504
    %8506 = vmatpush.msra.mxu0 %v8505
    %v8507 = vand.u32 %v121, 4294901760
    %v8508 = vsub.f32 %v121, %v8507
    %8509 = vmatpush.msra.mxu0 %v8508
    %v8510 = vand.u32 %v118, 4294901760
    %v8511 = vsub.f32 %v118, %v8510
    %8512 = vmatpush.msra.mxu0 %v8511
    %v8513 = vand.u32 %v115, 4294901760
    %v8514 = vsub.f32 %v115, %v8513
    %8515 = vmatpush.msra.mxu0 %v8514
    %v8516 = vand.u32 %v112, 4294901760
    %v8517 = vsub.f32 %v112, %v8516
    %8518 = vmatpush.msra.mxu0 %v8517
    %v8519 = vand.u32 %v109, 4294901760
    %v8520 = vsub.f32 %v109, %v8519
    %8521 = vmatpush.msra.mxu0 %v8520
    %v8522 = vand.u32 %v106, 4294901760
    %v8523 = vsub.f32 %v106, %v8522
    %8524 = vmatpush.msra.mxu0 %v8523
    %v8525 = vand.u32 %v103, 4294901760
    %v8526 = vsub.f32 %v103, %v8525
    %8527 = vmatpush.msra.mxu0 %v8526
    %v8528 = vand.u32 %v100, 4294901760
    %v8529 = vsub.f32 %v100, %v8528
    %8530 = vmatpush.msra.mxu0 %v8529
    %v8531 = vand.u32 %v97, 4294901760
    %v8532 = vsub.f32 %v97, %v8531
    %8533 = vmatpush.msra.mxu0 %v8532
    %v8534 = vand.u32 %v94, 4294901760
    %v8535 = vsub.f32 %v94, %v8534
    %8536 = vmatpush.msra.mxu0 %v8535
    %v8537 = vand.u32 %v91, 4294901760
    %v8538 = vsub.f32 %v91, %v8537
    %8539 = vmatpush.msra.mxu0 %v8538
    %v8540 = vand.u32 %v88, 4294901760
    %v8541 = vsub.f32 %v88, %v8540
    %8542 = vmatpush.msra.mxu0 %v8541
    %v8543 = vand.u32 %v85, 4294901760
    %v8544 = vsub.f32 %v85, %v8543
    %8545 = vmatpush.msra.mxu0 %v8544
    %v8546 = vand.u32 %v7667, 4294901760
    %v8547 = vsub.f32 %v7667, %v8546
    %8548 = vmatmul.f32.gmra.mxu0 %v8547
    %v8549 = vpop.f32.mrf.mxu0
    %v8550 = vadd.f32 %v8496, %v8549
    %8551 = vdwg.mxu0
    %v8552 = vand.u32 %v130, 4294901760
    %8553 = vmatpush.msra.mxu0 %v8552
    %v8554 = vand.u32 %v127, 4294901760
    %8555 = vmatpush.msra.mxu0 %v8554
    %v8556 = vand.u32 %v124, 4294901760
    %8557 = vmatpush.msra.mxu0 %v8556
    %v8558 = vand.u32 %v121, 4294901760
    %8559 = vmatpush.msra.mxu0 %v8558
    %v8560 = vand.u32 %v118, 4294901760
    %8561 = vmatpush.msra.mxu0 %v8560
    %v8562 = vand.u32 %v115, 4294901760
    %8563 = vmatpush.msra.mxu0 %v8562
    %v8564 = vand.u32 %v112, 4294901760
    %8565 = vmatpush.msra.mxu0 %v8564
    %v8566 = vand.u32 %v109, 4294901760
    %8567 = vmatpush.msra.mxu0 %v8566
    %v8568 = vand.u32 %v106, 4294901760
    %8569 = vmatpush.msra.mxu0 %v8568
    %v8570 = vand.u32 %v103, 4294901760
    %8571 = vmatpush.msra.mxu0 %v8570
    %v8572 = vand.u32 %v100, 4294901760
    %8573 = vmatpush.msra.mxu0 %v8572
    %v8574 = vand.u32 %v97, 4294901760
    %8575 = vmatpush.msra.mxu0 %v8574
    %v8576 = vand.u32 %v94, 4294901760
    %8577 = vmatpush.msra.mxu0 %v8576
    %v8578 = vand.u32 %v91, 4294901760
    %8579 = vmatpush.msra.mxu0 %v8578
    %v8580 = vand.u32 %v88, 4294901760
    %8581 = vmatpush.msra.mxu0 %v8580
    %v8582 = vand.u32 %v85, 4294901760
    %8583 = vmatpush.msra.mxu0 %v8582
    %v8584 = vand.u32 %v7667, 4294901760
    %v8585 = vsub.f32 %v7667, %v8584
    %v8586 = vand.u32 %v8585, 4294901760
    %8587 = vmatmul.f32.gmra.mxu0 %v8586
    %v8588 = vpop.f32.mrf.mxu0
    %v8589 = vadd.f32 %v8550, %v8588
    %8590 = vdwg.mxu0
    %v8591 = vand.u32 %v130, 4294901760
    %v8592 = vsub.f32 %v130, %v8591
    %v8593 = vand.u32 %v8592, 4294901760
    %8594 = vmatpush.msra.mxu0 %v8593
    %v8595 = vand.u32 %v127, 4294901760
    %v8596 = vsub.f32 %v127, %v8595
    %v8597 = vand.u32 %v8596, 4294901760
    %8598 = vmatpush.msra.mxu0 %v8597
    %v8599 = vand.u32 %v124, 4294901760
    %v8600 = vsub.f32 %v124, %v8599
    %v8601 = vand.u32 %v8600, 4294901760
    %8602 = vmatpush.msra.mxu0 %v8601
    %v8603 = vand.u32 %v121, 4294901760
    %v8604 = vsub.f32 %v121, %v8603
    %v8605 = vand.u32 %v8604, 4294901760
    %8606 = vmatpush.msra.mxu0 %v8605
    %v8607 = vand.u32 %v118, 4294901760
    %v8608 = vsub.f32 %v118, %v8607
    %v8609 = vand.u32 %v8608, 4294901760
    %8610 = vmatpush.msra.mxu0 %v8609
    %v8611 = vand.u32 %v115, 4294901760
    %v8612 = vsub.f32 %v115, %v8611
    %v8613 = vand.u32 %v8612, 4294901760
    %8614 = vmatpush.msra.mxu0 %v8613
    %v8615 = vand.u32 %v112, 4294901760
    %v8616 = vsub.f32 %v112, %v8615
    %v8617 = vand.u32 %v8616, 4294901760
    %8618 = vmatpush.msra.mxu0 %v8617
    %v8619 = vand.u32 %v109, 4294901760
    %v8620 = vsub.f32 %v109, %v8619
    %v8621 = vand.u32 %v8620, 4294901760
    %8622 = vmatpush.msra.mxu0 %v8621
    %v8623 = vand.u32 %v106, 4294901760
    %v8624 = vsub.f32 %v106, %v8623
    %v8625 = vand.u32 %v8624, 4294901760
    %8626 = vmatpush.msra.mxu0 %v8625
    %v8627 = vand.u32 %v103, 4294901760
    %v8628 = vsub.f32 %v103, %v8627
    %v8629 = vand.u32 %v8628, 4294901760
    %8630 = vmatpush.msra.mxu0 %v8629
    %v8631 = vand.u32 %v100, 4294901760
    %v8632 = vsub.f32 %v100, %v8631
    %v8633 = vand.u32 %v8632, 4294901760
    %8634 = vmatpush.msra.mxu0 %v8633
    %v8635 = vand.u32 %v97, 4294901760
    %v8636 = vsub.f32 %v97, %v8635
    %v8637 = vand.u32 %v8636, 4294901760
    %8638 = vmatpush.msra.mxu0 %v8637
    %v8639 = vand.u32 %v94, 4294901760
    %v8640 = vsub.f32 %v94, %v8639
    %v8641 = vand.u32 %v8640, 4294901760
    %8642 = vmatpush.msra.mxu0 %v8641
    %v8643 = vand.u32 %v91, 4294901760
    %v8644 = vsub.f32 %v91, %v8643
    %v8645 = vand.u32 %v8644, 4294901760
    %8646 = vmatpush.msra.mxu0 %v8645
    %v8647 = vand.u32 %v88, 4294901760
    %v8648 = vsub.f32 %v88, %v8647
    %v8649 = vand.u32 %v8648, 4294901760
    %8650 = vmatpush.msra.mxu0 %v8649
    %v8651 = vand.u32 %v85, 4294901760
    %v8652 = vsub.f32 %v85, %v8651
    %v8653 = vand.u32 %v8652, 4294901760
    %8654 = vmatpush.msra.mxu0 %v8653
    %v8655 = vand.u32 %v7667, 4294901760
    %8656 = vmatmul.f32.gmra.mxu0 %v8655
    %v8657 = vpop.f32.mrf.mxu0
    %v8658 = vadd.f32 %v8589, %v8657
    %8659 = vdwg.mxu0
    %v8660 = vand.u32 %v130, 4294901760
    %8661 = vmatpush.msra.mxu0 %v8660
    %v8662 = vand.u32 %v127, 4294901760
    %8663 = vmatpush.msra.mxu0 %v8662
    %v8664 = vand.u32 %v124, 4294901760
    %8665 = vmatpush.msra.mxu0 %v8664
    %v8666 = vand.u32 %v121, 4294901760
    %8667 = vmatpush.msra.mxu0 %v8666
    %v8668 = vand.u32 %v118, 4294901760
    %8669 = vmatpush.msra.mxu0 %v8668
    %v8670 = vand.u32 %v115, 4294901760
    %8671 = vmatpush.msra.mxu0 %v8670
    %v8672 = vand.u32 %v112, 4294901760
    %8673 = vmatpush.msra.mxu0 %v8672
    %v8674 = vand.u32 %v109, 4294901760
    %8675 = vmatpush.msra.mxu0 %v8674
    %v8676 = vand.u32 %v106, 4294901760
    %8677 = vmatpush.msra.mxu0 %v8676
    %v8678 = vand.u32 %v103, 4294901760
    %8679 = vmatpush.msra.mxu0 %v8678
    %v8680 = vand.u32 %v100, 4294901760
    %8681 = vmatpush.msra.mxu0 %v8680
    %v8682 = vand.u32 %v97, 4294901760
    %8683 = vmatpush.msra.mxu0 %v8682
    %v8684 = vand.u32 %v94, 4294901760
    %8685 = vmatpush.msra.mxu0 %v8684
    %v8686 = vand.u32 %v91, 4294901760
    %8687 = vmatpush.msra.mxu0 %v8686
    %v8688 = vand.u32 %v88, 4294901760
    %8689 = vmatpush.msra.mxu0 %v8688
    %v8690 = vand.u32 %v85, 4294901760
    %8691 = vmatpush.msra.mxu0 %v8690
    %v8692 = vand.u32 %v7667, 4294901760
    %8693 = vmatmul.f32.gmra.mxu0 %v8692
    %v8694 = vpop.f32.mrf.mxu0
    %v8695 = vadd.f32 %v8658, %v8694
    %8696 = vdwg.mxu0
    %v8697 = vadd.f32 %v7671, %v8013
    %v8698 = vadd.f32 %v7672, %v8354
    %v8699 = vxor.u32 %v8697, 2147483648
    %v8700 = vxor.u32 %v8698, 2147483648
    %v8701 = vmul.f32 %v8699, 1.442695
    %v8702 = vpow.pop %v8701
    %v8703 = vmul.f32 %v8700, 1.442695
    %v8704 = vpow.pop %v8703
    %v8705 = vadd.f32 %v8702, 1.0
    %v8706 = vadd.f32 %v8704, 1.0
    %v8707 = vrcp.pop %v8705
    %v8708 = vmul.f32 %v8705, %v8707
    %v8709 = vsub.f32 1.0, %v8708
    %v8710 = vmul.f32 %v8707, %v8709
    %v8711 = vadd.f32 %v8707, %v8710
    %vm8712 = vweird.f32 %v8705
    %vm8713 = vweird.f32 %v8707
    %vm8714 = vmor %vm8712, %vm8713
    %v8715 = vsel %vm8714, %v8707, %v8711
    %v8716 = vand.u32 2147483647, %v8705
    %vm8717 = vcmp.eq.f32.partialorder %v8716, 8.507059e+37
    %v8718 = vand.u32 %v8705, 2147483648
    %v8719 = vor.u32 1.1754944e-38, %v8718
    %v8720 = vsel %vm8717, %v8719, %v8715
    %v8721 = vmul.f32 1.0, %v8720
    %v8722 = vrcp.pop %v8706
    %v8723 = vmul.f32 %v8706, %v8722
    %v8724 = vsub.f32 1.0, %v8723
    %v8725 = vmul.f32 %v8722, %v8724
    %v8726 = vadd.f32 %v8722, %v8725
    %vm8727 = vweird.f32 %v8706
    %vm8728 = vweird.f32 %v8722
    %vm8729 = vmor %vm8727, %vm8728
    %v8730 = vsel %vm8729, %v8722, %v8726
    %v8731 = vand.u32 2147483647, %v8706
    %vm8732 = vcmp.eq.f32.partialorder %v8731, 8.507059e+37
    %v8733 = vand.u32 %v8706, 2147483648
    %v8734 = vor.u32 1.1754944e-38, %v8733
    %v8735 = vsel %vm8732, %v8734, %v8730
    %v8736 = vmul.f32 1.0, %v8735
    %v8737 = vmul.f32 %v8721, %v8695
    %v8738 = vadd.f32 %v7673, %v8737
    %v8739 = vtanh.pop %v8738
    %v8740 = vsub.f32 1.0, %v8736
    %v8741 = vmul.f32 %v8740, %v8739
    %v8742 = vmul.f32 %v8736, %v7667
    %v8743 = vadd.f32 %v8741, %v8742
    %s8744 = scalar_lea.vmem [#allocation11], 56
    %8745 = vst [vmem:[%s8744] sm:$0xff] %v8743
    %8746 = vst [vmem:[#allocation2] sm:$0xff] %v8743
    // Predicated region
    $region38: #{tpu_custom_call.1} parent=1 // pred_check
      _
    $region39: #{tpu_custom_call.1} parent=1 // pred_check_branch
      %8748 = sbr.rel (0) target = $region41
    $region40: #{tpu_custom_call.1} parent=1 // pred_region
      %8750 = vsyncadd [#allocation5], 0
      %s8751 = sshll.u32 [#allocation11], 4
      %s8752 = int_to_ptr.vmem [resolvable:$true] %s8751
      %s8753 = sshll.u32 %s4, 4
      %s8754 = int_to_ptr.hbm [resolvable:$true] %s8753
      %8759 = dma.vmem_to_hbm [thread:$0]  %s8752, 1024, %s8754, [#allocation5], 128, 128, 8
    $region41: #{tpu_custom_call.1} parent=1 // pred_fallthru
      _
    // Predicated region
    $region42: #{tpu_custom_call.1} parent=1 // pred_check
      _
    $region43: #{tpu_custom_call.1} parent=1 // pred_check_branch
      %8761 = sbr.rel (0) target = $region45
    $region44: #{tpu_custom_call.1} parent=1 // pred_region
      %8763 = dma.done [#allocation5], 1024
    $region45: #{tpu_custom_call.1} parent=1 // pred_fallthru
      _
    %8764 = vsyncpa [#allocation4], 1
    %8765 = vsyncpa [#allocation7], 1
    %8766 = vsyncpa [#allocation10], 1
    %8767 = vsyncpa [#allocation5], 1

</llo_original>
